<compile_context>
chip_gen: v7x
topology: tpu7x:2x2x1
jax: 0.10.0
libtpu: 0.0.40
codegen_flags: <defaults>
</compile_context>

<pallas_src>
import jax
import jax.numpy as jnp
import numpy as np
from jax.experimental import pallas as pl
from jax.experimental.pallas import tpu as pltpu

VOCAB = 1000
EMB_DIM = 300            # vocab.vectors.shape[1]
MAX_SEQ = 28             # emb_dim * max_seq_length == 8400 (hardcoded reshape in forward)
BATCH = 32               # hardcoded by .reshape(32, 8400)
K1 = EMB_DIM * MAX_SEQ   # 8400
N1 = 2000
N2 = 4

# lane-aligned padded sizes (zero padding -> math unchanged)
K1P = 8448               # 128 * 66
N1P = 2048               # 128 * 16
N2P = 128                # lane-dense width for linear2 output (cols >= 4 are zero)
TN = 256                 # 8 N tiles, full K per step -> grid (8,); 4 steps per TC on v7x
NT = N1P // TN           # 8

VMEM_LIMIT_BYTES = 32 << 20   # bf16 W1 stripe 4.1 MiB dbl-buffered + x + W2/b1/out ~ 10 MiB


# ------------- fused kernel: per N-tile  y1_j = x@W1[:, j] + b1[j];  out_j = y1_j @ W2[j, :] -------------

def _fused_kernel(x_ref, w1_ref, b1_ref, w2_ref, o_ref):
    # (32, 8448) bf16 @ (8448, 256) bf16 -> f32, plus bias stripe (f32)
    y1 = jnp.dot(x_ref[...], w1_ref[...],
                 preferred_element_type=jnp.float32) + b1_ref[...]
    # TODO(synk): nn.Dropout(0.7) treated as eval-mode identity; a training-mode version would
    # draw the mask in-kernel via pltpu.prng_seed / pltpu.stateful_bernoulli and scale by 1/0.3.
    # partial of linear2 for this N stripe: (32, 256) bf16 @ (256, 128) bf16 -> (32, 128) f32
    o_ref[0] = jnp.dot(y1.astype(jnp.bfloat16), w2_ref[...],
                       preferred_element_type=jnp.float32)


def fused_linear(x_pad, w1_pad, b1_pad, w2_pad):
    return pl.pallas_call(
        _fused_kernel,
        out_shape=jax.ShapeDtypeStruct((NT, BATCH, N2P), jnp.float32),
        grid_spec=pltpu.PrefetchScalarGridSpec(
            num_scalar_prefetch=0,
            grid=(NT,),                                          # 8 steps
            in_specs=[
                pl.BlockSpec((BATCH, K1P), lambda j: (0, 0)),    # x: VMEM-resident, DMA'd once
                pl.BlockSpec((K1P, TN), lambda j: (0, j)),       # W1 column stripe (bf16, ~4.1 MiB)
                pl.BlockSpec((1, TN), lambda j: (0, j)),         # b1 stripe (f32)
                pl.BlockSpec((TN, N2P), lambda j: (j, 0)),       # W2 row stripe (bf16)
            ],
            out_specs=pl.BlockSpec((1, BATCH, N2P), lambda j: (j, 0, 0)),  # distinct block per step
        ),
        compiler_params=pltpu.CompilerParams(
            dimension_semantics=("parallel",),                   # v7x megacore shards the W1 stream
            vmem_limit_bytes=VMEM_LIMIT_BYTES),
    )(x_pad, w1_pad, b1_pad, w2_pad)


# ----------------------------- model -----------------------------

def prepare_params(params):
    """One-time padding + bf16 cast, hoisted OUT of the jitted forward."""
    w1p = jnp.pad(params["w1"], ((0, K1P - K1), (0, N1P - N1))).astype(jnp.bfloat16)  # (8448, 2048)
    b1p = jnp.pad(params["b1"], ((0, N1P - N1),)).reshape(1, N1P)                     # (1, 2048) f32
    w2p = jnp.pad(params["w2"], ((0, N1P - N1), (0, N2P - N2))).astype(jnp.bfloat16)  # (2048, 128)
    return {"emb": params["emb"], "w1": w1p, "b1": b1p, "w2": w2p, "b2": params["b2"]}


def simple_linear_model_forward(token_ids, padded_params):
    # Embedding lookup + reshape = glue (not the matmul hot path).
    embeddings = jnp.take(padded_params["emb"], token_ids, axis=0)    # (32, 28, 300) f32
    x = embeddings.reshape(BATCH, K1).astype(jnp.bfloat16)            # (32, 8400) bf16
    x_pad = jnp.pad(x, ((0, 0), (0, K1P - K1)))                       # (32, 8448) bf16, pad cols = 0

    partials = fused_linear(x_pad, padded_params["w1"],
                            padded_params["b1"], padded_params["w2"]) # (8, 32, 128) f32
    # combine per-stripe partials of linear2, add bias, drop lane padding
    out = jnp.sum(partials, axis=0)[:, :N2] + padded_params["b2"]     # (32, 4) f32
    return out


def make_params(key):
    k_emb, k_w1, k_b1, k_w2, k_b2 = jax.random.split(key, 5)
    emb = jax.random.normal(k_emb, (VOCAB, EMB_DIM), jnp.float32)
    # uniform init mimicking nn.Linear's +-1/sqrt(fan_in) range
    lim1 = 1.0 / np.sqrt(K1)
    lim2 = 1.0 / np.sqrt(N1)
    w1 = jax.random.uniform(k_w1, (K1, N1), jnp.float32, -lim1, lim1)
    b1 = jax.random.uniform(k_b1, (N1,), jnp.float32, -lim1, lim1)
    w2 = jax.random.uniform(k_w2, (N1, N2), jnp.float32, -lim2, lim2)
    b2 = jax.random.uniform(k_b2, (N2,), jnp.float32, -lim2, lim2)
    return {"emb": emb, "w1": w1, "b1": b1, "w2": w2, "b2": b2}


if __name__ == "__main__":
    key = jax.random.PRNGKey(0)
    k_params, k_ids = jax.random.split(key)
    params = make_params(k_params)
    padded_params = prepare_params(params)        # one-time, outside the jitted forward
    token_ids = jax.random.randint(k_ids, (BATCH, MAX_SEQ), 0, VOCAB, jnp.int32)

    fwd = jax.jit(simple_linear_model_forward)
    out = jax.block_until_ready(fwd(token_ids, padded_params))

    # Host float64 reference on the SAME bf16-quantized x / W1 / W2 (eval-mode dropout = identity).
    x_f32 = jnp.take(params["emb"], token_ids, axis=0).reshape(BATCH, K1)
    x_q = np.asarray(x_f32.astype(jnp.bfloat16).astype(jnp.float32), np.float64)
    w1_q = np.asarray(params["w1"].astype(jnp.bfloat16).astype(jnp.float32), np.float64)
    w2_q = np.asarray(params["w2"].astype(jnp.bfloat16).astype(jnp.float32), np.float64)
    y1_ref = x_q @ w1_q + np.asarray(params["b1"], np.float64)
    ref = y1_ref @ w2_q + np.asarray(params["b2"], np.float64)
    # tolerance loosened vs f32 version because y1 is re-quantized to bf16 for the fused 2nd matmul
    np.testing.assert_allclose(np.asarray(out), ref, rtol=1e-2, atol=1e-2)

    assert out.shape == (BATCH, N2) and out.dtype == jnp.float32
    print("KERNEL_OK")
</pallas_src>

<mosaic_0001>
module attributes {stable_mosaic.version = 11 : i64} {
  func.func @_fused_kernel(%arg0: i32, %arg1: memref<32x8448xbf16, #tpu.memory_space<vmem>>, %arg2: memref<8448x256xbf16, #tpu.memory_space<vmem>>, %arg3: memref<1x256xf32, #tpu.memory_space<vmem>>, %arg4: memref<256x128xbf16, #tpu.memory_space<vmem>>, %arg5: memref<1x32x128xf32, #tpu.memory_space<vmem>>) attributes {dimension_semantics = [#tpu.dimension_semantics<parallel>], iteration_bounds = array<i64: 8>, scalar_prefetch = 0 : i64, scratch_operands = 0 : i64, tpu.core_type = #tpu.core_type<tc>, window_params = [{pipeline_mode = #tpu.pipeline_mode<synchronous>, transform_indices = @transform_0, window_bounds = array<i64: 32, 8448>}, {transform_indices = @transform_1, window_bounds = array<i64: 8448, 256>}, {transform_indices = @transform_2, window_bounds = array<i64: 1, 256>}, {transform_indices = @transform_3, window_bounds = array<i64: 256, 128>}, {transform_indices = @transform_4, window_bounds = array<i64: 1, 32, 128>}]} {
    %c0 = arith.constant 0 : index
    %c0_0 = arith.constant 0 : index
    %0 = vector.load %arg1[%c0, %c0_0] : memref<32x8448xbf16, #tpu.memory_space<vmem>>, vector<32x8448xbf16>
    %c0_1 = arith.constant 0 : index
    %c0_2 = arith.constant 0 : index
    %1 = vector.load %arg2[%c0_1, %c0_2] : memref<8448x256xbf16, #tpu.memory_space<vmem>>, vector<8448x256xbf16>
    %cst = arith.constant dense<0.000000e+00> : vector<32x256xf32>
    %2 = tpu.matmul %0, %1, %cst {dimension_numbers = #tpu.dot_dimension_numbers<[1], [0], [0], [1], [0, 0, 1, 1], [], []>} : vector<32x8448xbf16>, vector<8448x256xbf16>, vector<32x256xf32> -> vector<32x256xf32>
    %c0_3 = arith.constant 0 : index
    %c0_4 = arith.constant 0 : index
    %3 = vector.load %arg3[%c0_3, %c0_4] : memref<1x256xf32, #tpu.memory_space<vmem>>, vector<1x256xf32>
    %4 = vector.broadcast %3 : vector<1x256xf32> to vector<32x256xf32>
    %5 = arith.addf %2, %4 : vector<32x256xf32>
    %6 = arith.truncf %5 : vector<32x256xf32> to vector<32x256xbf16>
    %c0_5 = arith.constant 0 : index
    %c0_6 = arith.constant 0 : index
    %7 = vector.load %arg4[%c0_5, %c0_6] : memref<256x128xbf16, #tpu.memory_space<vmem>>, vector<256x128xbf16>
    %cst_7 = arith.constant dense<0.000000e+00> : vector<32x128xf32>
    %8 = tpu.matmul %6, %7, %cst_7 {dimension_numbers = #tpu.dot_dimension_numbers<[1], [0], [0], [1], [0, 0, 1, 1], [], []>} : vector<32x256xbf16>, vector<256x128xbf16>, vector<32x128xf32> -> vector<32x128xf32>
    %c0_8 = arith.constant 0 : index
    %c0_9 = arith.constant 0 : index
    %c0_10 = arith.constant 0 : index
    %9 = vector.load %arg5[%c0_8, %c0_9, %c0_10] : memref<1x32x128xf32, #tpu.memory_space<vmem>>, vector<1x32x128xf32>
    %10 = vector.shape_cast %9 : vector<1x32x128xf32> to vector<32x128xf32>
    %11 = vector.shape_cast %8 : vector<32x128xf32> to vector<1x32x128xf32>
    tpu.vector_store %arg5[%c0_8, %c0_9, %c0_10], %11 {strides = array<i32>} : memref<1x32x128xf32, #tpu.memory_space<vmem>>, vector<1x32x128xf32>,
    return
  }
  func.func @transform_0(%arg0: i32) -> (i32, i32) {
    %c0_i32 = arith.constant 0 : i32
    %c0_i32_0 = arith.constant 0 : i32
    %c0_i32_1 = arith.constant 0 : i32
    return %c0_i32, %c0_i32_0 : i32, i32
  }
  func.func @transform_1(%arg0: i32) -> (i32, i32) {
    %c0_i32 = arith.constant 0 : i32
    %c0_i32_0 = arith.constant 0 : i32
    return %c0_i32, %arg0 : i32, i32
  }
  func.func @transform_2(%arg0: i32) -> (i32, i32) {
    %c0_i32 = arith.constant 0 : i32
    %c0_i32_0 = arith.constant 0 : i32
    return %c0_i32, %arg0 : i32, i32
  }
  func.func @transform_3(%arg0: i32) -> (i32, i32) {
    %c0_i32 = arith.constant 0 : i32
    %c0_i32_0 = arith.constant 0 : i32
    return %arg0, %c0_i32 : i32, i32
  }
  func.func @transform_4(%arg0: i32) -> (i32, i32, i32) {
    %c0_i32 = arith.constant 0 : i32
    %c0_i32_0 = arith.constant 0 : i32
    %c0_i32_1 = arith.constant 0 : i32
    return %arg0, %c0_i32, %c0_i32_0 : i32, i32, i32
  }
}

</mosaic_0001>

<llo_original>
// kernel: simple_linear_model_forward.1
$region0: #{simple_linear_model_forward.1}
  #allocation0 [shape = 'u32[]', space=smem, size = 0x4, offset = 0x4, fixed_abs, tag = 'smem constant byte address 0x4 - core index']
  #allocation1 [shape = 'u32[144,128]{1,0:T(1,128)}', space=vmem, size = 0x12000, scoped, tag = 'internal scratch']
  %s0 = inlined_call_operand.vmem [shape: bf16[32,8448], index: 0, kind: input, shape index: {}]
  %s1 = inlined_call_operand.hbm [shape: bf16[8448,2048], index: 1, kind: input, shape index: {}]
  %s2 = inlined_call_operand.vmem [shape: f32[1,2048], index: 2, kind: input, shape index: {}]
  %s3 = inlined_call_operand.vmem [shape: bf16[2048,128], index: 3, kind: input, shape index: {}]
  %s4 = inlined_call_operand.vmem [shape: f32[8,32,128], index: 4, kind: output, shape index: {}]
  %s5 = sld [smem:[#allocation0]]
  $region53: #{simple_linear_model_forward.1} parent=0
    _
  %s7 = ssub.s32 1, %s5
  %s8 = scalar_select 0, %s7, %s5
  $region1: #{simple_linear_model_forward.1} parent=0
    #allocation2 [shape = 'u8[8650752]{0}', space=vmem, size = 0x840000, scoped, tag = 'input window, operand 1']
    #allocation3 [shape = 's32[2]{0}', space=sflag, size = 0x8, scoped, tag = 'scoped memory for simple_linear_model_forward.1']
    %9 = vsyncpa [#allocation3], 0
    %s10 = scalar_lea.sflag [#allocation3], 1
    %11 = vsyncpa %s10, 0
    loop: start=0, step=1, limit=10
    $region2: #{simple_linear_model_forward.1} parent=1 // loop_pre_header
      _
    $region3: #{simple_linear_model_forward.1} parent=1 // loop_header
      %s13 = sphi 0, %s17
      %p14 = scmp.ge.s32.totalorder %s13, 10
      %s21 = sphi 0, %s21
      %s23 = sphi 0, %s21
      %s24 = sphi 0, %s23
      %s38 = sphi 0, %s24
      %s44 = sphi 0, %s46
      %s47 = sphi 0, %s44
      %s48 = sphi 0, %s47
      %s64 = sphi 0, %s48
      %s70 = sphi 0, %s72
      %s73 = sphi 0, %s70
      %s74 = sphi 0, %s73
      %s90 = sphi 0, %s74
      %s96 = sphi 0, %s98
      %s99 = sphi 0, %s96
      %s100 = sphi 0, %s99
      %s116 = sphi 0, %s100
      %s122 = sphi 0, %s124
      %s125 = sphi 0, %s122
      %s126 = sphi 0, %s125
      %s142 = sphi 0, %s126
    $region4: #{simple_linear_model_forward.1} parent=1 // loop_header_branch
      %16 = sbr.rel (%p14) target = $region8
    $region5: #{simple_linear_model_forward.1} parent=1 // loop_body
      %s18 = ssub.s32 %s13, 1
      %s19 = ssub.s32 %s13, 2
      %s20 = sadd.s32 %s13, 1
      %s22 = sadd.s32 %s21, 1
      %p25 = scmp.eq.s32.totalorder %s13, 7
      %p26 = scmp.ne.s32.totalorder %s21, %s23
      %p27 = scmp.eq.s32.totalorder %s13, 0
      %p28 = por %p26, %p27
      %p29 = scmp.ne.s32.totalorder %s21, %s23
      %p30 = scmp.eq.s32.totalorder %s18, 7
      %p31 = por %p29, %p30
      %p32 = scmp.ne.s32.totalorder %s23, %s24
      %p33 = scmp.eq.s32.totalorder %s18, 0
      %p34 = por %p32, %p33
      %p35 = scmp.ne.s32.totalorder %s23, %s24
      %p36 = scmp.eq.s32.totalorder %s19, 7
      %p37 = por %p35, %p36
      %p39 = scmp.ne.s32.totalorder %s24, %s38
      %p40 = scmp.eq.s32.totalorder %s19, 0
      %p41 = por %p39, %p40
      %s42 = ssub.s32 %s13, %s20
      %p43 = scmp.eq.s32.totalorder %s42, 0
      %s45 = sadd.s32 %s44, 1
      %s46 = scalar_select %p43, %s44, %s45
      %p49 = pneg %p43
      %p50 = scmp.eq.s32.totalorder %s13, 7
      %p51 = por %p49, %p50
      %p52 = scmp.ne.s32.totalorder %s44, %s47
      %p53 = scmp.eq.s32.totalorder %s13, 0
      %p54 = por %p52, %p53
      %p55 = scmp.ne.s32.totalorder %s44, %s47
      %p56 = scmp.eq.s32.totalorder %s18, 7
      %p57 = por %p55, %p56
      %p58 = scmp.ne.s32.totalorder %s47, %s48
      %p59 = scmp.eq.s32.totalorder %s18, 0
      %p60 = por %p58, %p59
      %p61 = scmp.ne.s32.totalorder %s47, %s48
      %p62 = scmp.eq.s32.totalorder %s19, 7
      %p63 = por %p61, %p62
      %p65 = scmp.ne.s32.totalorder %s48, %s64
      %p66 = scmp.eq.s32.totalorder %s19, 0
      %p67 = por %p65, %p66
      %s68 = ssub.s32 %s13, %s20
      %p69 = scmp.eq.s32.totalorder %s68, 0
      %s71 = sadd.s32 %s70, 1
      %s72 = scalar_select %p69, %s70, %s71
      %p75 = pneg %p69
      %p76 = scmp.eq.s32.totalorder %s13, 7
      %p77 = por %p75, %p76
      %p78 = scmp.ne.s32.totalorder %s70, %s73
      %p79 = scmp.eq.s32.totalorder %s13, 0
      %p80 = por %p78, %p79
      %p81 = scmp.ne.s32.totalorder %s70, %s73
      %p82 = scmp.eq.s32.totalorder %s18, 7
      %p83 = por %p81, %p82
      %p84 = scmp.ne.s32.totalorder %s73, %s74
      %p85 = scmp.eq.s32.totalorder %s18, 0
      %p86 = por %p84, %p85
      %p87 = scmp.ne.s32.totalorder %s73, %s74
      %p88 = scmp.eq.s32.totalorder %s19, 7
      %p89 = por %p87, %p88
      %p91 = scmp.ne.s32.totalorder %s74, %s90
      %p92 = scmp.eq.s32.totalorder %s19, 0
      %p93 = por %p91, %p92
      %s94 = ssub.s32 %s13, %s20
      %p95 = scmp.eq.s32.totalorder %s94, 0
      %s97 = sadd.s32 %s96, 1
      %s98 = scalar_select %p95, %s96, %s97
      %p101 = pneg %p95
      %p102 = scmp.eq.s32.totalorder %s13, 7
      %p103 = por %p101, %p102
      %p104 = scmp.ne.s32.totalorder %s96, %s99
      %p105 = scmp.eq.s32.totalorder %s13, 0
      %p106 = por %p104, %p105
      %p107 = scmp.ne.s32.totalorder %s96, %s99
      %p108 = scmp.eq.s32.totalorder %s18, 7
      %p109 = por %p107, %p108
      %p110 = scmp.ne.s32.totalorder %s99, %s100
      %p111 = scmp.eq.s32.totalorder %s18, 0
      %p112 = por %p110, %p111
      %p113 = scmp.ne.s32.totalorder %s99, %s100
      %p114 = scmp.eq.s32.totalorder %s19, 7
      %p115 = por %p113, %p114
      %p117 = scmp.ne.s32.totalorder %s100, %s116
      %p118 = scmp.eq.s32.totalorder %s19, 0
      %p119 = por %p117, %p118
      %s120 = ssub.s32 %s13, %s20
      %p121 = scmp.eq.s32.totalorder %s120, 0
      %s123 = sadd.s32 %s122, 1
      %s124 = scalar_select %p121, %s122, %s123
      %p127 = pneg %p121
      %p128 = scmp.eq.s32.totalorder %s13, 7
      %p129 = por %p127, %p128
      %p130 = scmp.ne.s32.totalorder %s122, %s125
      %p131 = scmp.eq.s32.totalorder %s13, 0
      %p132 = por %p130, %p131
      %p133 = scmp.ne.s32.totalorder %s122, %s125
      %p134 = scmp.eq.s32.totalorder %s18, 7
      %p135 = por %p133, %p134
      %p136 = scmp.ne.s32.totalorder %s125, %s126
      %p137 = scmp.eq.s32.totalorder %s18, 0
      %p138 = por %p136, %p137
      %p139 = scmp.ne.s32.totalorder %s125, %s126
      %p140 = scmp.eq.s32.totalorder %s19, 7
      %p141 = por %p139, %p140
      %p143 = scmp.ne.s32.totalorder %s126, %s142
      %p144 = scmp.eq.s32.totalorder %s19, 0
      %p145 = por %p143, %p144
      %p146 = scmp.le.s32.totalorder 1, %s13
      %p147 = scmp.lt.s32.totalorder %s13, 9
      %p148 = pnand %p146, %p147
      %p149 = pneg %p148
      // Predicated region
      $region9: #{simple_linear_model_forward.1} parent=5 // pred_check
        _
      $region10: #{simple_linear_model_forward.1} parent=5 // pred_check_branch
        %151 = sbr.rel (%p148) target = $region12
      $region11: #{simple_linear_model_forward.1} parent=5 // pred_region
        %s152 = ssub.s32 %s13, 1
        // Predicated region
        $region13: #{simple_linear_model_forward.1} parent=11 // pred_check
          %p153 = pneg %p34
        $region14: #{simple_linear_model_forward.1} parent=11 // pred_check_branch
          %155 = sbr.rel (%p153) target = $region16
        $region15: #{simple_linear_model_forward.1} parent=11 // pred_region
          _
        $region16: #{simple_linear_model_forward.1} parent=11 // pred_fallthru
          _
      $region12: #{simple_linear_model_forward.1} parent=5 // pred_fallthru
        _
      %p156 = scmp.lt.s32.totalorder %s13, 8
      // Predicated region
      $region17: #{simple_linear_model_forward.1} parent=5 // pred_check
        %p157 = pneg %p156
      $region18: #{simple_linear_model_forward.1} parent=5 // pred_check_branch
        %159 = sbr.rel (%p157) target = $region20
      $region19: #{simple_linear_model_forward.1} parent=5 // pred_region
        // Predicated region
        $region21: #{simple_linear_model_forward.1} parent=19 // pred_check
          %p160 = pneg %p54
        $region22: #{simple_linear_model_forward.1} parent=19 // pred_check_branch
          %162 = sbr.rel (%p160) target = $region24
        $region23: #{simple_linear_model_forward.1} parent=19 // pred_region
          %s163 = sand.u32 %s44, 1
          %s164 = scalar_lea.sflag [#allocation3], %s163
          %s165 = sand.u32 %s44, 1
          %s166 = smul.addr %s165, 8448
          %s167 = scalar_lea.vmem [#allocation2], %s166
          %s168 = smul.u32 2, %s13
          %s170 = ssub.s32 135168, 135168
          %171 = vsyncadd %s164, %s170
          %s172 = smul.addr %s168, 64
          %s173 = scalar_lea.hbm %s1, %s172
          %s174 = sshll.u32 %s167, 4
          %s175 = int_to_ptr.vmem [resolvable:$true] %s174
          %180 = dma.hbm_to_vmem [thread:$0]  %s173, 135168, %s175, %s164, 1024, 128, 8
        $region24: #{simple_linear_model_forward.1} parent=19 // pred_fallthru
          _
        // Predicated region
        $region25: #{simple_linear_model_forward.1} parent=19 // pred_check
          %p181 = pneg %p80
        $region26: #{simple_linear_model_forward.1} parent=19 // pred_check_branch
          %183 = sbr.rel (%p181) target = $region28
        $region27: #{simple_linear_model_forward.1} parent=19 // pred_region
          %s184 = smul.u32 2, %s13
          %p185 = scmp.lt.s32.totalorder %s184, 15
          %s186 = scalar_select %p185, %s184, 15
          %s187 = scalar_lea.vmem %s2, %s186
          %s188 = smul.u32 2, %s13
        $region28: #{simple_linear_model_forward.1} parent=19 // pred_fallthru
          _
        // Predicated region
        $region29: #{simple_linear_model_forward.1} parent=19 // pred_check
          %p189 = pneg %p106
        $region30: #{simple_linear_model_forward.1} parent=19 // pred_check_branch
          %191 = sbr.rel (%p189) target = $region32
        $region31: #{simple_linear_model_forward.1} parent=19 // pred_region
          %s192 = smul.u32 32, %s13
          %p193 = scmp.lt.s32.totalorder %s192, 255
          %s194 = scalar_select %p193, %s192, 255
          %s195 = smul.addr %s194, 4
          %s196 = scalar_lea.vmem %s3, %s195
          %s197 = smul.u32 32, %s13
        $region32: #{simple_linear_model_forward.1} parent=19 // pred_fallthru
          _
      $region20: #{simple_linear_model_forward.1} parent=5 // pred_fallthru
        _
      %p198 = scmp.le.s32.totalorder 1, %s13
      %p199 = scmp.lt.s32.totalorder %s13, 9
      %p200 = pnand %p198, %p199
      %p201 = pneg %p200
      // Predicated region
      $region33: #{simple_linear_model_forward.1} parent=5 // pred_check
        _
      $region34: #{simple_linear_model_forward.1} parent=5 // pred_check_branch
        %203 = sbr.rel (%p200) target = $region36
      $region35: #{simple_linear_model_forward.1} parent=5 // pred_region
        %s204 = ssub.s32 %s13, 1
        %s205 = sand.u32 %s47, 1
        %s206 = scalar_lea.sflag [#allocation3], %s205
        %s207 = sand.u32 %s47, 1
        %s208 = smul.addr %s207, 8448
        %s209 = scalar_lea.vmem [#allocation2], %s208
        // Predicated region
        $region37: #{simple_linear_model_forward.1} parent=35 // pred_check
          %p210 = pneg %p60
        $region38: #{simple_linear_model_forward.1} parent=35 // pred_check_branch
          %212 = sbr.rel (%p210) target = $region40
        $region39: #{simple_linear_model_forward.1} parent=35 // pred_region
          %213 = dma.done %s206, 135168
        $region40: #{simple_linear_model_forward.1} parent=35 // pred_fallthru
          _
        %p214 = pneg %p34
        %p215 = pneg %p31
        %s216 = sand.u32 %s47, 1
        %s217 = scalar_lea.sflag [#allocation3], %s216
        %s218 = sand.u32 %s47, 1
        %s219 = smul.addr %s218, 8448
        %s220 = scalar_lea.vmem [#allocation2], %s219
        %p221 = pneg %p60
        %p222 = pneg %p57
        %s223 = smul.u32 2, %s18
        %p224 = scmp.lt.s32.totalorder %s223, 15
        %s225 = scalar_select %p224, %s223, 15
        %s226 = scalar_lea.vmem %s2, %s225
        %p227 = pneg %p86
        %p228 = pneg %p83
        %s229 = smul.u32 32, %s18
        %p230 = scmp.lt.s32.totalorder %s229, 255
        %s231 = scalar_select %p230, %s229, 255
        %s232 = smul.addr %s231, 4
        %s233 = scalar_lea.vmem %s3, %s232
        %p234 = pneg %p112
        %p235 = pneg %p109
        %p236 = pneg %p138
        %p237 = pneg %p135
        %p238 = scmp.lt.s32.totalorder %s18, 7
        %s239 = scalar_select %p238, %s18, 7
        %s240 = smul.addr %s239, 4
        %s241 = smul.addr %s240, 8
        %s242 = scalar_lea.vmem %s4, %s241
        %s243 = smul.u32 2, %s18
        %s244 = smul.u32 2, %s18
        %p245 = scmp.lt.s32.totalorder %s244, 15
        %s246 = scalar_select %p245, %s244, 15
        %s247 = scalar_lea.vmem %s2, %s246
        %s248 = smul.u32 2, %s18
        %s249 = smul.u32 32, %s18
        %p250 = scmp.lt.s32.totalorder %s249, 255
        %s251 = scalar_select %p250, %s249, 255
        %s252 = smul.addr %s251, 4
        %s253 = scalar_lea.vmem %s3, %s252
        %s254 = smul.u32 32, %s18
        %p255 = scmp.lt.s32.totalorder %s18, 7
        %s256 = scalar_select %p255, %s18, 7
        %s257 = smul.addr %s256, 4
        %s258 = smul.addr %s257, 8
        %s259 = scalar_lea.vmem %s4, %s258
        %v261 = vld [vmem:[%s0] sm:$0xff]
        %v262 = vld [vmem:[%s0 + $0x8] sm:$0xff]
        %v263 = vld [vmem:[%s0 + $0x10] sm:$0xff]
        %v264 = vld [vmem:[%s0 + $0x18] sm:$0xff]
        %v265 = vld [vmem:[%s0 + $0x20] sm:$0xff]
        %v266 = vld [vmem:[%s0 + $0x28] sm:$0xff]
        %v267 = vld [vmem:[%s0 + $0x30] sm:$0xff]
        %v268 = vld [vmem:[%s0 + $0x38] sm:$0xff]
        %v269 = vld [vmem:[%s0 + $0x40] sm:$0xff]
        %v270 = vld [vmem:[%s0 + $0x48] sm:$0xff]
        %v271 = vld [vmem:[%s0 + $0x50] sm:$0xff]
        %v272 = vld [vmem:[%s0 + $0x58] sm:$0xff]
        %v273 = vld [vmem:[%s0 + $0x60] sm:$0xff]
        %v274 = vld [vmem:[%s0 + $0x68] sm:$0xff]
        %v275 = vld [vmem:[%s0 + $0x70] sm:$0xff]
        %v276 = vld [vmem:[%s0 + $0x78] sm:$0xff]
        %v277 = vld [vmem:[%s0 + $0x80] sm:$0xff]
        %v278 = vld [vmem:[%s0 + $0x88] sm:$0xff]
        %v279 = vld [vmem:[%s0 + $0x90] sm:$0xff]
        %v280 = vld [vmem:[%s0 + $0x98] sm:$0xff]
        %v281 = vld [vmem:[%s0 + $0xa0] sm:$0xff]
        %v282 = vld [vmem:[%s0 + $0xa8] sm:$0xff]
        %v283 = vld [vmem:[%s0 + $0xb0] sm:$0xff]
        %v284 = vld [vmem:[%s0 + $0xb8] sm:$0xff]
        %v285 = vld [vmem:[%s0 + $0xc0] sm:$0xff]
        %v286 = vld [vmem:[%s0 + $0xc8] sm:$0xff]
        %v287 = vld [vmem:[%s0 + $0xd0] sm:$0xff]
        %v288 = vld [vmem:[%s0 + $0xd8] sm:$0xff]
        %v289 = vld [vmem:[%s0 + $0xe0] sm:$0xff]
        %v290 = vld [vmem:[%s0 + $0xe8] sm:$0xff]
        %v291 = vld [vmem:[%s0 + $0xf0] sm:$0xff]
        %v292 = vld [vmem:[%s0 + $0xf8] sm:$0xff]
        %v293 = vld [vmem:[%s0 + $0x100] sm:$0xff]
        %v294 = vld [vmem:[%s0 + $0x108] sm:$0xff]
        %v295 = vld [vmem:[%s0 + $0x110] sm:$0xff]
        %v296 = vld [vmem:[%s0 + $0x118] sm:$0xff]
        %v297 = vld [vmem:[%s0 + $0x120] sm:$0xff]
        %v298 = vld [vmem:[%s0 + $0x128] sm:$0xff]
        %v299 = vld [vmem:[%s0 + $0x130] sm:$0xff]
        %v300 = vld [vmem:[%s0 + $0x138] sm:$0xff]
        %v301 = vld [vmem:[%s0 + $0x140] sm:$0xff]
        %v302 = vld [vmem:[%s0 + $0x148] sm:$0xff]
        %v303 = vld [vmem:[%s0 + $0x150] sm:$0xff]
        %v304 = vld [vmem:[%s0 + $0x158] sm:$0xff]
        %v305 = vld [vmem:[%s0 + $0x160] sm:$0xff]
        %v306 = vld [vmem:[%s0 + $0x168] sm:$0xff]
        %v307 = vld [vmem:[%s0 + $0x170] sm:$0xff]
        %v308 = vld [vmem:[%s0 + $0x178] sm:$0xff]
        %v309 = vld [vmem:[%s0 + $0x180] sm:$0xff]
        %v310 = vld [vmem:[%s0 + $0x188] sm:$0xff]
        %v311 = vld [vmem:[%s0 + $0x190] sm:$0xff]
        %v312 = vld [vmem:[%s0 + $0x198] sm:$0xff]
        %v313 = vld [vmem:[%s0 + $0x1a0] sm:$0xff]
        %v314 = vld [vmem:[%s0 + $0x1a8] sm:$0xff]
        %v315 = vld [vmem:[%s0 + $0x1b0] sm:$0xff]
        %v316 = vld [vmem:[%s0 + $0x1b8] sm:$0xff]
        %v317 = vld [vmem:[%s0 + $0x1c0] sm:$0xff]
        %v318 = vld [vmem:[%s0 + $0x1c8] sm:$0xff]
        %v319 = vld [vmem:[%s0 + $0x1d0] sm:$0xff]
        %v320 = vld [vmem:[%s0 + $0x1d8] sm:$0xff]
        %v321 = vld [vmem:[%s0 + $0x1e0] sm:$0xff]
        %v322 = vld [vmem:[%s0 + $0x1e8] sm:$0xff]
        %v323 = vld [vmem:[%s0 + $0x1f0] sm:$0xff]
        %v324 = vld [vmem:[%s0 + $0x1f8] sm:$0xff]
        %v325 = vld [vmem:[%s0 + $0x200] sm:$0xff]
        %v326 = vld [vmem:[%s0 + $0x208] sm:$0xff]
        %v327 = vld [vmem:[%s0 + $0x210] sm:$0xff]
        %v328 = vld [vmem:[%s0 + $0x218] sm:$0xff]
        %v329 = vld [vmem:[%s0 + $0x220] sm:$0xff]
        %v330 = vld [vmem:[%s0 + $0x228] sm:$0xff]
        %v331 = vld [vmem:[%s0 + $0x230] sm:$0xff]
        %v332 = vld [vmem:[%s0 + $0x238] sm:$0xff]
        %v333 = vld [vmem:[%s0 + $0x240] sm:$0xff]
        %v334 = vld [vmem:[%s0 + $0x248] sm:$0xff]
        %v335 = vld [vmem:[%s0 + $0x250] sm:$0xff]
        %v336 = vld [vmem:[%s0 + $0x258] sm:$0xff]
        %v337 = vld [vmem:[%s0 + $0x260] sm:$0xff]
        %v338 = vld [vmem:[%s0 + $0x268] sm:$0xff]
        %v339 = vld [vmem:[%s0 + $0x270] sm:$0xff]
        %v340 = vld [vmem:[%s0 + $0x278] sm:$0xff]
        %v341 = vld [vmem:[%s0 + $0x280] sm:$0xff]
        %v342 = vld [vmem:[%s0 + $0x288] sm:$0xff]
        %v343 = vld [vmem:[%s0 + $0x290] sm:$0xff]
        %v344 = vld [vmem:[%s0 + $0x298] sm:$0xff]
        %v345 = vld [vmem:[%s0 + $0x2a0] sm:$0xff]
        %v346 = vld [vmem:[%s0 + $0x2a8] sm:$0xff]
        %v347 = vld [vmem:[%s0 + $0x2b0] sm:$0xff]
        %v348 = vld [vmem:[%s0 + $0x2b8] sm:$0xff]
        %v349 = vld [vmem:[%s0 + $0x2c0] sm:$0xff]
        %v350 = vld [vmem:[%s0 + $0x2c8] sm:$0xff]
        %v351 = vld [vmem:[%s0 + $0x2d0] sm:$0xff]
        %v352 = vld [vmem:[%s0 + $0x2d8] sm:$0xff]
        %v353 = vld [vmem:[%s0 + $0x2e0] sm:$0xff]
        %v354 = vld [vmem:[%s0 + $0x2e8] sm:$0xff]
        %v355 = vld [vmem:[%s0 + $0x2f0] sm:$0xff]
        %v356 = vld [vmem:[%s0 + $0x2f8] sm:$0xff]
        %v357 = vld [vmem:[%s0 + $0x300] sm:$0xff]
        %v358 = vld [vmem:[%s0 + $0x308] sm:$0xff]
        %v359 = vld [vmem:[%s0 + $0x310] sm:$0xff]
        %v360 = vld [vmem:[%s0 + $0x318] sm:$0xff]
        %v361 = vld [vmem:[%s0 + $0x320] sm:$0xff]
        %v362 = vld [vmem:[%s0 + $0x328] sm:$0xff]
        %v363 = vld [vmem:[%s0 + $0x330] sm:$0xff]
        %v364 = vld [vmem:[%s0 + $0x338] sm:$0xff]
        %v365 = vld [vmem:[%s0 + $0x340] sm:$0xff]
        %v366 = vld [vmem:[%s0 + $0x348] sm:$0xff]
        %v367 = vld [vmem:[%s0 + $0x350] sm:$0xff]
        %v368 = vld [vmem:[%s0 + $0x358] sm:$0xff]
        %v369 = vld [vmem:[%s0 + $0x360] sm:$0xff]
        %v370 = vld [vmem:[%s0 + $0x368] sm:$0xff]
        %v371 = vld [vmem:[%s0 + $0x370] sm:$0xff]
        %v372 = vld [vmem:[%s0 + $0x378] sm:$0xff]
        %v373 = vld [vmem:[%s0 + $0x380] sm:$0xff]
        %v374 = vld [vmem:[%s0 + $0x388] sm:$0xff]
        %v375 = vld [vmem:[%s0 + $0x390] sm:$0xff]
        %v376 = vld [vmem:[%s0 + $0x398] sm:$0xff]
        %v377 = vld [vmem:[%s0 + $0x3a0] sm:$0xff]
        %v378 = vld [vmem:[%s0 + $0x3a8] sm:$0xff]
        %v379 = vld [vmem:[%s0 + $0x3b0] sm:$0xff]
        %v380 = vld [vmem:[%s0 + $0x3b8] sm:$0xff]
        %v381 = vld [vmem:[%s0 + $0x3c0] sm:$0xff]
        %v382 = vld [vmem:[%s0 + $0x3c8] sm:$0xff]
        %v383 = vld [vmem:[%s0 + $0x3d0] sm:$0xff]
        %v384 = vld [vmem:[%s0 + $0x3d8] sm:$0xff]
        %v385 = vld [vmem:[%s0 + $0x3e0] sm:$0xff]
        %v386 = vld [vmem:[%s0 + $0x3e8] sm:$0xff]
        %v387 = vld [vmem:[%s0 + $0x3f0] sm:$0xff]
        %v388 = vld [vmem:[%s0 + $0x3f8] sm:$0xff]
        %v389 = vld [vmem:[%s0 + $0x400] sm:$0xff]
        %v390 = vld [vmem:[%s0 + $0x408] sm:$0xff]
        %v391 = vld [vmem:[%s0 + $0x410] sm:$0xff]
        %v392 = vld [vmem:[%s0 + $0x418] sm:$0xff]
        %v393 = vld [vmem:[%s209] sm:$0xff]
        %v394 = vld [vmem:[%s209 + $0x8] sm:$0xff]
        %v395 = vld [vmem:[%s209 + $0x10] sm:$0xff]
        %v396 = vld [vmem:[%s209 + $0x18] sm:$0xff]
        %v397 = vld [vmem:[%s209 + $0x20] sm:$0xff]
        %v398 = vld [vmem:[%s209 + $0x28] sm:$0xff]
        %v399 = vld [vmem:[%s209 + $0x30] sm:$0xff]
        %v400 = vld [vmem:[%s209 + $0x38] sm:$0xff]
        %v401 = vld [vmem:[%s209 + $0x40] sm:$0xff]
        %v402 = vld [vmem:[%s209 + $0x48] sm:$0xff]
        %v403 = vld [vmem:[%s209 + $0x50] sm:$0xff]
        %v404 = vld [vmem:[%s209 + $0x58] sm:$0xff]
        %v405 = vld [vmem:[%s209 + $0x60] sm:$0xff]
        %v406 = vld [vmem:[%s209 + $0x68] sm:$0xff]
        %v407 = vld [vmem:[%s209 + $0x70] sm:$0xff]
        %v408 = vld [vmem:[%s209 + $0x78] sm:$0xff]
        %v409 = vld [vmem:[%s209 + $0x80] sm:$0xff]
        %v410 = vld [vmem:[%s209 + $0x88] sm:$0xff]
        %v411 = vld [vmem:[%s209 + $0x90] sm:$0xff]
        %v412 = vld [vmem:[%s209 + $0x98] sm:$0xff]
        %v413 = vld [vmem:[%s209 + $0xa0] sm:$0xff]
        %v414 = vld [vmem:[%s209 + $0xa8] sm:$0xff]
        %v415 = vld [vmem:[%s209 + $0xb0] sm:$0xff]
        %v416 = vld [vmem:[%s209 + $0xb8] sm:$0xff]
        %v417 = vld [vmem:[%s209 + $0xc0] sm:$0xff]
        %v418 = vld [vmem:[%s209 + $0xc8] sm:$0xff]
        %v419 = vld [vmem:[%s209 + $0xd0] sm:$0xff]
        %v420 = vld [vmem:[%s209 + $0xd8] sm:$0xff]
        %v421 = vld [vmem:[%s209 + $0xe0] sm:$0xff]
        %v422 = vld [vmem:[%s209 + $0xe8] sm:$0xff]
        %v423 = vld [vmem:[%s209 + $0xf0] sm:$0xff]
        %v424 = vld [vmem:[%s209 + $0xf8] sm:$0xff]
        %v425 = vld [vmem:[%s209 + $0x100] sm:$0xff]
        %v426 = vld [vmem:[%s209 + $0x108] sm:$0xff]
        %v427 = vld [vmem:[%s209 + $0x110] sm:$0xff]
        %v428 = vld [vmem:[%s209 + $0x118] sm:$0xff]
        %v429 = vld [vmem:[%s209 + $0x120] sm:$0xff]
        %v430 = vld [vmem:[%s209 + $0x128] sm:$0xff]
        %v431 = vld [vmem:[%s209 + $0x130] sm:$0xff]
        %v432 = vld [vmem:[%s209 + $0x138] sm:$0xff]
        %v433 = vld [vmem:[%s209 + $0x140] sm:$0xff]
        %v434 = vld [vmem:[%s209 + $0x148] sm:$0xff]
        %v435 = vld [vmem:[%s209 + $0x150] sm:$0xff]
        %v436 = vld [vmem:[%s209 + $0x158] sm:$0xff]
        %v437 = vld [vmem:[%s209 + $0x160] sm:$0xff]
        %v438 = vld [vmem:[%s209 + $0x168] sm:$0xff]
        %v439 = vld [vmem:[%s209 + $0x170] sm:$0xff]
        %v440 = vld [vmem:[%s209 + $0x178] sm:$0xff]
        %v441 = vld [vmem:[%s209 + $0x180] sm:$0xff]
        %v442 = vld [vmem:[%s209 + $0x188] sm:$0xff]
        %v443 = vld [vmem:[%s209 + $0x190] sm:$0xff]
        %v444 = vld [vmem:[%s209 + $0x198] sm:$0xff]
        %v445 = vld [vmem:[%s209 + $0x1a0] sm:$0xff]
        %v446 = vld [vmem:[%s209 + $0x1a8] sm:$0xff]
        %v447 = vld [vmem:[%s209 + $0x1b0] sm:$0xff]
        %v448 = vld [vmem:[%s209 + $0x1b8] sm:$0xff]
        %v449 = vld [vmem:[%s209 + $0x1c0] sm:$0xff]
        %v450 = vld [vmem:[%s209 + $0x1c8] sm:$0xff]
        %v451 = vld [vmem:[%s209 + $0x1d0] sm:$0xff]
        %v452 = vld [vmem:[%s209 + $0x1d8] sm:$0xff]
        %v453 = vld [vmem:[%s209 + $0x1e0] sm:$0xff]
        %v454 = vld [vmem:[%s209 + $0x1e8] sm:$0xff]
        %v455 = vld [vmem:[%s209 + $0x1f0] sm:$0xff]
        %v456 = vld [vmem:[%s209 + $0x1f8] sm:$0xff]
        %v457 = vld [vmem:[%s209 + $0x200] sm:$0xff]
        %v458 = vld [vmem:[%s209 + $0x208] sm:$0xff]
        %v459 = vld [vmem:[%s209 + $0x210] sm:$0xff]
        %v460 = vld [vmem:[%s209 + $0x218] sm:$0xff]
        %v461 = vld [vmem:[%s209 + $0x220] sm:$0xff]
        %v462 = vld [vmem:[%s209 + $0x228] sm:$0xff]
        %v463 = vld [vmem:[%s209 + $0x230] sm:$0xff]
        %v464 = vld [vmem:[%s209 + $0x238] sm:$0xff]
        %v465 = vld [vmem:[%s209 + $0x240] sm:$0xff]
        %v466 = vld [vmem:[%s209 + $0x248] sm:$0xff]
        %v467 = vld [vmem:[%s209 + $0x250] sm:$0xff]
        %v468 = vld [vmem:[%s209 + $0x258] sm:$0xff]
        %v469 = vld [vmem:[%s209 + $0x260] sm:$0xff]
        %v470 = vld [vmem:[%s209 + $0x268] sm:$0xff]
        %v471 = vld [vmem:[%s209 + $0x270] sm:$0xff]
        %v472 = vld [vmem:[%s209 + $0x278] sm:$0xff]
        %v473 = vld [vmem:[%s209 + $0x280] sm:$0xff]
        %v474 = vld [vmem:[%s209 + $0x288] sm:$0xff]
        %v475 = vld [vmem:[%s209 + $0x290] sm:$0xff]
        %v476 = vld [vmem:[%s209 + $0x298] sm:$0xff]
        %v477 = vld [vmem:[%s209 + $0x2a0] sm:$0xff]
        %v478 = vld [vmem:[%s209 + $0x2a8] sm:$0xff]
        %v479 = vld [vmem:[%s209 + $0x2b0] sm:$0xff]
        %v480 = vld [vmem:[%s209 + $0x2b8] sm:$0xff]
        %v481 = vld [vmem:[%s209 + $0x2c0] sm:$0xff]
        %v482 = vld [vmem:[%s209 + $0x2c8] sm:$0xff]
        %v483 = vld [vmem:[%s209 + $0x2d0] sm:$0xff]
        %v484 = vld [vmem:[%s209 + $0x2d8] sm:$0xff]
        %v485 = vld [vmem:[%s209 + $0x2e0] sm:$0xff]
        %v486 = vld [vmem:[%s209 + $0x2e8] sm:$0xff]
        %v487 = vld [vmem:[%s209 + $0x2f0] sm:$0xff]
        %v488 = vld [vmem:[%s209 + $0x2f8] sm:$0xff]
        %v489 = vld [vmem:[%s209 + $0x300] sm:$0xff]
        %v490 = vld [vmem:[%s209 + $0x308] sm:$0xff]
        %v491 = vld [vmem:[%s209 + $0x310] sm:$0xff]
        %v492 = vld [vmem:[%s209 + $0x318] sm:$0xff]
        %v493 = vld [vmem:[%s209 + $0x320] sm:$0xff]
        %v494 = vld [vmem:[%s209 + $0x328] sm:$0xff]
        %v495 = vld [vmem:[%s209 + $0x330] sm:$0xff]
        %v496 = vld [vmem:[%s209 + $0x338] sm:$0xff]
        %v497 = vld [vmem:[%s209 + $0x340] sm:$0xff]
        %v498 = vld [vmem:[%s209 + $0x348] sm:$0xff]
        %v499 = vld [vmem:[%s209 + $0x350] sm:$0xff]
        %v500 = vld [vmem:[%s209 + $0x358] sm:$0xff]
        %v501 = vld [vmem:[%s209 + $0x360] sm:$0xff]
        %v502 = vld [vmem:[%s209 + $0x368] sm:$0xff]
        %v503 = vld [vmem:[%s209 + $0x370] sm:$0xff]
        %v504 = vld [vmem:[%s209 + $0x378] sm:$0xff]
        %v505 = vld [vmem:[%s209 + $0x380] sm:$0xff]
        %v506 = vld [vmem:[%s209 + $0x388] sm:$0xff]
        %v507 = vld [vmem:[%s209 + $0x390] sm:$0xff]
        %v508 = vld [vmem:[%s209 + $0x398] sm:$0xff]
        %v509 = vld [vmem:[%s209 + $0x3a0] sm:$0xff]
        %v510 = vld [vmem:[%s209 + $0x3a8] sm:$0xff]
        %v511 = vld [vmem:[%s209 + $0x3b0] sm:$0xff]
        %v512 = vld [vmem:[%s209 + $0x3b8] sm:$0xff]
        %v513 = vld [vmem:[%s209 + $0x3c0] sm:$0xff]
        %v514 = vld [vmem:[%s209 + $0x3c8] sm:$0xff]
        %v515 = vld [vmem:[%s209 + $0x3d0] sm:$0xff]
        %v516 = vld [vmem:[%s209 + $0x3d8] sm:$0xff]
        %v517 = vld [vmem:[%s209 + $0x3e0] sm:$0xff]
        %v518 = vld [vmem:[%s209 + $0x3e8] sm:$0xff]
        %v519 = vld [vmem:[%s209 + $0x3f0] sm:$0xff]
        %v520 = vld [vmem:[%s209 + $0x3f8] sm:$0xff]
        %v521 = vld [vmem:[%s209 + $0x400] sm:$0xff]
        %v522 = vld [vmem:[%s209 + $0x408] sm:$0xff]
        %v523 = vld [vmem:[%s209 + $0x410] sm:$0xff]
        %v524 = vld [vmem:[%s209 + $0x418] sm:$0xff]
        %v525 = vld [vmem:[%s209 + $0x420] sm:$0xff]
        %v526 = vld [vmem:[%s209 + $0x428] sm:$0xff]
        %v527 = vld [vmem:[%s209 + $0x430] sm:$0xff]
        %v528 = vld [vmem:[%s209 + $0x438] sm:$0xff]
        %v529 = vld [vmem:[%s209 + $0x440] sm:$0xff]
        %v530 = vld [vmem:[%s209 + $0x448] sm:$0xff]
        %v531 = vld [vmem:[%s209 + $0x450] sm:$0xff]
        %v532 = vld [vmem:[%s209 + $0x458] sm:$0xff]
        %v533 = vld [vmem:[%s209 + $0x460] sm:$0xff]
        %v534 = vld [vmem:[%s209 + $0x468] sm:$0xff]
        %v535 = vld [vmem:[%s209 + $0x470] sm:$0xff]
        %v536 = vld [vmem:[%s209 + $0x478] sm:$0xff]
        %v537 = vld [vmem:[%s209 + $0x480] sm:$0xff]
        %v538 = vld [vmem:[%s209 + $0x488] sm:$0xff]
        %v539 = vld [vmem:[%s209 + $0x490] sm:$0xff]
        %v540 = vld [vmem:[%s209 + $0x498] sm:$0xff]
        %v541 = vld [vmem:[%s209 + $0x4a0] sm:$0xff]
        %v542 = vld [vmem:[%s209 + $0x4a8] sm:$0xff]
        %v543 = vld [vmem:[%s209 + $0x4b0] sm:$0xff]
        %v544 = vld [vmem:[%s209 + $0x4b8] sm:$0xff]
        %v545 = vld [vmem:[%s209 + $0x4c0] sm:$0xff]
        %v546 = vld [vmem:[%s209 + $0x4c8] sm:$0xff]
        %v547 = vld [vmem:[%s209 + $0x4d0] sm:$0xff]
        %v548 = vld [vmem:[%s209 + $0x4d8] sm:$0xff]
        %v549 = vld [vmem:[%s209 + $0x4e0] sm:$0xff]
        %v550 = vld [vmem:[%s209 + $0x4e8] sm:$0xff]
        %v551 = vld [vmem:[%s209 + $0x4f0] sm:$0xff]
        %v552 = vld [vmem:[%s209 + $0x4f8] sm:$0xff]
        %v553 = vld [vmem:[%s209 + $0x500] sm:$0xff]
        %v554 = vld [vmem:[%s209 + $0x508] sm:$0xff]
        %v555 = vld [vmem:[%s209 + $0x510] sm:$0xff]
        %v556 = vld [vmem:[%s209 + $0x518] sm:$0xff]
        %v557 = vld [vmem:[%s209 + $0x520] sm:$0xff]
        %v558 = vld [vmem:[%s209 + $0x528] sm:$0xff]
        %v559 = vld [vmem:[%s209 + $0x530] sm:$0xff]
        %v560 = vld [vmem:[%s209 + $0x538] sm:$0xff]
        %v561 = vld [vmem:[%s209 + $0x540] sm:$0xff]
        %v562 = vld [vmem:[%s209 + $0x548] sm:$0xff]
        %v563 = vld [vmem:[%s209 + $0x550] sm:$0xff]
        %v564 = vld [vmem:[%s209 + $0x558] sm:$0xff]
        %v565 = vld [vmem:[%s209 + $0x560] sm:$0xff]
        %v566 = vld [vmem:[%s209 + $0x568] sm:$0xff]
        %v567 = vld [vmem:[%s209 + $0x570] sm:$0xff]
        %v568 = vld [vmem:[%s209 + $0x578] sm:$0xff]
        %v569 = vld [vmem:[%s209 + $0x580] sm:$0xff]
        %v570 = vld [vmem:[%s209 + $0x588] sm:$0xff]
        %v571 = vld [vmem:[%s209 + $0x590] sm:$0xff]
        %v572 = vld [vmem:[%s209 + $0x598] sm:$0xff]
        %v573 = vld [vmem:[%s209 + $0x5a0] sm:$0xff]
        %v574 = vld [vmem:[%s209 + $0x5a8] sm:$0xff]
        %v575 = vld [vmem:[%s209 + $0x5b0] sm:$0xff]
        %v576 = vld [vmem:[%s209 + $0x5b8] sm:$0xff]
        %v577 = vld [vmem:[%s209 + $0x5c0] sm:$0xff]
        %v578 = vld [vmem:[%s209 + $0x5c8] sm:$0xff]
        %v579 = vld [vmem:[%s209 + $0x5d0] sm:$0xff]
        %v580 = vld [vmem:[%s209 + $0x5d8] sm:$0xff]
        %v581 = vld [vmem:[%s209 + $0x5e0] sm:$0xff]
        %v582 = vld [vmem:[%s209 + $0x5e8] sm:$0xff]
        %v583 = vld [vmem:[%s209 + $0x5f0] sm:$0xff]
        %v584 = vld [vmem:[%s209 + $0x5f8] sm:$0xff]
        %v585 = vld [vmem:[%s209 + $0x600] sm:$0xff]
        %v586 = vld [vmem:[%s209 + $0x608] sm:$0xff]
        %v587 = vld [vmem:[%s209 + $0x610] sm:$0xff]
        %v588 = vld [vmem:[%s209 + $0x618] sm:$0xff]
        %v589 = vld [vmem:[%s209 + $0x620] sm:$0xff]
        %v590 = vld [vmem:[%s209 + $0x628] sm:$0xff]
        %v591 = vld [vmem:[%s209 + $0x630] sm:$0xff]
        %v592 = vld [vmem:[%s209 + $0x638] sm:$0xff]
        %v593 = vld [vmem:[%s209 + $0x640] sm:$0xff]
        %v594 = vld [vmem:[%s209 + $0x648] sm:$0xff]
        %v595 = vld [vmem:[%s209 + $0x650] sm:$0xff]
        %v596 = vld [vmem:[%s209 + $0x658] sm:$0xff]
        %v597 = vld [vmem:[%s209 + $0x660] sm:$0xff]
        %v598 = vld [vmem:[%s209 + $0x668] sm:$0xff]
        %v599 = vld [vmem:[%s209 + $0x670] sm:$0xff]
        %v600 = vld [vmem:[%s209 + $0x678] sm:$0xff]
        %v601 = vld [vmem:[%s209 + $0x680] sm:$0xff]
        %v602 = vld [vmem:[%s209 + $0x688] sm:$0xff]
        %v603 = vld [vmem:[%s209 + $0x690] sm:$0xff]
        %v604 = vld [vmem:[%s209 + $0x698] sm:$0xff]
        %v605 = vld [vmem:[%s209 + $0x6a0] sm:$0xff]
        %v606 = vld [vmem:[%s209 + $0x6a8] sm:$0xff]
        %v607 = vld [vmem:[%s209 + $0x6b0] sm:$0xff]
        %v608 = vld [vmem:[%s209 + $0x6b8] sm:$0xff]
        %v609 = vld [vmem:[%s209 + $0x6c0] sm:$0xff]
        %v610 = vld [vmem:[%s209 + $0x6c8] sm:$0xff]
        %v611 = vld [vmem:[%s209 + $0x6d0] sm:$0xff]
        %v612 = vld [vmem:[%s209 + $0x6d8] sm:$0xff]
        %v613 = vld [vmem:[%s209 + $0x6e0] sm:$0xff]
        %v614 = vld [vmem:[%s209 + $0x6e8] sm:$0xff]
        %v615 = vld [vmem:[%s209 + $0x6f0] sm:$0xff]
        %v616 = vld [vmem:[%s209 + $0x6f8] sm:$0xff]
        %v617 = vld [vmem:[%s209 + $0x700] sm:$0xff]
        %v618 = vld [vmem:[%s209 + $0x708] sm:$0xff]
        %v619 = vld [vmem:[%s209 + $0x710] sm:$0xff]
        %v620 = vld [vmem:[%s209 + $0x718] sm:$0xff]
        %v621 = vld [vmem:[%s209 + $0x720] sm:$0xff]
        %v622 = vld [vmem:[%s209 + $0x728] sm:$0xff]
        %v623 = vld [vmem:[%s209 + $0x730] sm:$0xff]
        %v624 = vld [vmem:[%s209 + $0x738] sm:$0xff]
        %v625 = vld [vmem:[%s209 + $0x740] sm:$0xff]
        %v626 = vld [vmem:[%s209 + $0x748] sm:$0xff]
        %v627 = vld [vmem:[%s209 + $0x750] sm:$0xff]
        %v628 = vld [vmem:[%s209 + $0x758] sm:$0xff]
        %v629 = vld [vmem:[%s209 + $0x760] sm:$0xff]
        %v630 = vld [vmem:[%s209 + $0x768] sm:$0xff]
        %v631 = vld [vmem:[%s209 + $0x770] sm:$0xff]
        %v632 = vld [vmem:[%s209 + $0x778] sm:$0xff]
        %v633 = vld [vmem:[%s209 + $0x780] sm:$0xff]
        %v634 = vld [vmem:[%s209 + $0x788] sm:$0xff]
        %v635 = vld [vmem:[%s209 + $0x790] sm:$0xff]
        %v636 = vld [vmem:[%s209 + $0x798] sm:$0xff]
        %v637 = vld [vmem:[%s209 + $0x7a0] sm:$0xff]
        %v638 = vld [vmem:[%s209 + $0x7a8] sm:$0xff]
        %v639 = vld [vmem:[%s209 + $0x7b0] sm:$0xff]
        %v640 = vld [vmem:[%s209 + $0x7b8] sm:$0xff]
        %v641 = vld [vmem:[%s209 + $0x7c0] sm:$0xff]
        %v642 = vld [vmem:[%s209 + $0x7c8] sm:$0xff]
        %v643 = vld [vmem:[%s209 + $0x7d0] sm:$0xff]
        %v644 = vld [vmem:[%s209 + $0x7d8] sm:$0xff]
        %v645 = vld [vmem:[%s209 + $0x7e0] sm:$0xff]
        %v646 = vld [vmem:[%s209 + $0x7e8] sm:$0xff]
        %v647 = vld [vmem:[%s209 + $0x7f0] sm:$0xff]
        %v648 = vld [vmem:[%s209 + $0x7f8] sm:$0xff]
        %v649 = vld [vmem:[%s209 + $0x800] sm:$0xff]
        %v650 = vld [vmem:[%s209 + $0x808] sm:$0xff]
        %v651 = vld [vmem:[%s209 + $0x810] sm:$0xff]
        %v652 = vld [vmem:[%s209 + $0x818] sm:$0xff]
        %v653 = vld [vmem:[%s209 + $0x820] sm:$0xff]
        %v654 = vld [vmem:[%s209 + $0x828] sm:$0xff]
        %v655 = vld [vmem:[%s209 + $0x830] sm:$0xff]
        %v656 = vld [vmem:[%s209 + $0x838] sm:$0xff]
        %v657 = vld [vmem:[%s209 + $0x840] sm:$0xff]
        %v658 = vld [vmem:[%s209 + $0x848] sm:$0xff]
        %v659 = vld [vmem:[%s209 + $0x850] sm:$0xff]
        %v660 = vld [vmem:[%s209 + $0x858] sm:$0xff]
        %v661 = vld [vmem:[%s209 + $0x860] sm:$0xff]
        %v662 = vld [vmem:[%s209 + $0x868] sm:$0xff]
        %v663 = vld [vmem:[%s209 + $0x870] sm:$0xff]
        %v664 = vld [vmem:[%s209 + $0x878] sm:$0xff]
        %v665 = vld [vmem:[%s209 + $0x880] sm:$0xff]
        %v666 = vld [vmem:[%s209 + $0x888] sm:$0xff]
        %v667 = vld [vmem:[%s209 + $0x890] sm:$0xff]
        %v668 = vld [vmem:[%s209 + $0x898] sm:$0xff]
        %v669 = vld [vmem:[%s209 + $0x8a0] sm:$0xff]
        %v670 = vld [vmem:[%s209 + $0x8a8] sm:$0xff]
        %v671 = vld [vmem:[%s209 + $0x8b0] sm:$0xff]
        %v672 = vld [vmem:[%s209 + $0x8b8] sm:$0xff]
        %v673 = vld [vmem:[%s209 + $0x8c0] sm:$0xff]
        %v674 = vld [vmem:[%s209 + $0x8c8] sm:$0xff]
        %v675 = vld [vmem:[%s209 + $0x8d0] sm:$0xff]
        %v676 = vld [vmem:[%s209 + $0x8d8] sm:$0xff]
        %v677 = vld [vmem:[%s209 + $0x8e0] sm:$0xff]
        %v678 = vld [vmem:[%s209 + $0x8e8] sm:$0xff]
        %v679 = vld [vmem:[%s209 + $0x8f0] sm:$0xff]
        %v680 = vld [vmem:[%s209 + $0x8f8] sm:$0xff]
        %v681 = vld [vmem:[%s209 + $0x900] sm:$0xff]
        %v682 = vld [vmem:[%s209 + $0x908] sm:$0xff]
        %v683 = vld [vmem:[%s209 + $0x910] sm:$0xff]
        %v684 = vld [vmem:[%s209 + $0x918] sm:$0xff]
        %v685 = vld [vmem:[%s209 + $0x920] sm:$0xff]
        %v686 = vld [vmem:[%s209 + $0x928] sm:$0xff]
        %v687 = vld [vmem:[%s209 + $0x930] sm:$0xff]
        %v688 = vld [vmem:[%s209 + $0x938] sm:$0xff]
        %v689 = vld [vmem:[%s209 + $0x940] sm:$0xff]
        %v690 = vld [vmem:[%s209 + $0x948] sm:$0xff]
        %v691 = vld [vmem:[%s209 + $0x950] sm:$0xff]
        %v692 = vld [vmem:[%s209 + $0x958] sm:$0xff]
        %v693 = vld [vmem:[%s209 + $0x960] sm:$0xff]
        %v694 = vld [vmem:[%s209 + $0x968] sm:$0xff]
        %v695 = vld [vmem:[%s209 + $0x970] sm:$0xff]
        %v696 = vld [vmem:[%s209 + $0x978] sm:$0xff]
        %v697 = vld [vmem:[%s209 + $0x980] sm:$0xff]
        %v698 = vld [vmem:[%s209 + $0x988] sm:$0xff]
        %v699 = vld [vmem:[%s209 + $0x990] sm:$0xff]
        %v700 = vld [vmem:[%s209 + $0x998] sm:$0xff]
        %v701 = vld [vmem:[%s209 + $0x9a0] sm:$0xff]
        %v702 = vld [vmem:[%s209 + $0x9a8] sm:$0xff]
        %v703 = vld [vmem:[%s209 + $0x9b0] sm:$0xff]
        %v704 = vld [vmem:[%s209 + $0x9b8] sm:$0xff]
        %v705 = vld [vmem:[%s209 + $0x9c0] sm:$0xff]
        %v706 = vld [vmem:[%s209 + $0x9c8] sm:$0xff]
        %v707 = vld [vmem:[%s209 + $0x9d0] sm:$0xff]
        %v708 = vld [vmem:[%s209 + $0x9d8] sm:$0xff]
        %v709 = vld [vmem:[%s209 + $0x9e0] sm:$0xff]
        %v710 = vld [vmem:[%s209 + $0x9e8] sm:$0xff]
        %v711 = vld [vmem:[%s209 + $0x9f0] sm:$0xff]
        %v712 = vld [vmem:[%s209 + $0x9f8] sm:$0xff]
        %v713 = vld [vmem:[%s209 + $0xa00] sm:$0xff]
        %v714 = vld [vmem:[%s209 + $0xa08] sm:$0xff]
        %v715 = vld [vmem:[%s209 + $0xa10] sm:$0xff]
        %v716 = vld [vmem:[%s209 + $0xa18] sm:$0xff]
        %v717 = vld [vmem:[%s209 + $0xa20] sm:$0xff]
        %v718 = vld [vmem:[%s209 + $0xa28] sm:$0xff]
        %v719 = vld [vmem:[%s209 + $0xa30] sm:$0xff]
        %v720 = vld [vmem:[%s209 + $0xa38] sm:$0xff]
        %v721 = vld [vmem:[%s209 + $0xa40] sm:$0xff]
        %v722 = vld [vmem:[%s209 + $0xa48] sm:$0xff]
        %v723 = vld [vmem:[%s209 + $0xa50] sm:$0xff]
        %v724 = vld [vmem:[%s209 + $0xa58] sm:$0xff]
        %v725 = vld [vmem:[%s209 + $0xa60] sm:$0xff]
        %v726 = vld [vmem:[%s209 + $0xa68] sm:$0xff]
        %v727 = vld [vmem:[%s209 + $0xa70] sm:$0xff]
        %v728 = vld [vmem:[%s209 + $0xa78] sm:$0xff]
        %v729 = vld [vmem:[%s209 + $0xa80] sm:$0xff]
        %v730 = vld [vmem:[%s209 + $0xa88] sm:$0xff]
        %v731 = vld [vmem:[%s209 + $0xa90] sm:$0xff]
        %v732 = vld [vmem:[%s209 + $0xa98] sm:$0xff]
        %v733 = vld [vmem:[%s209 + $0xaa0] sm:$0xff]
        %v734 = vld [vmem:[%s209 + $0xaa8] sm:$0xff]
        %v735 = vld [vmem:[%s209 + $0xab0] sm:$0xff]
        %v736 = vld [vmem:[%s209 + $0xab8] sm:$0xff]
        %v737 = vld [vmem:[%s209 + $0xac0] sm:$0xff]
        %v738 = vld [vmem:[%s209 + $0xac8] sm:$0xff]
        %v739 = vld [vmem:[%s209 + $0xad0] sm:$0xff]
        %v740 = vld [vmem:[%s209 + $0xad8] sm:$0xff]
        %v741 = vld [vmem:[%s209 + $0xae0] sm:$0xff]
        %v742 = vld [vmem:[%s209 + $0xae8] sm:$0xff]
        %v743 = vld [vmem:[%s209 + $0xaf0] sm:$0xff]
        %v744 = vld [vmem:[%s209 + $0xaf8] sm:$0xff]
        %v745 = vld [vmem:[%s209 + $0xb00] sm:$0xff]
        %v746 = vld [vmem:[%s209 + $0xb08] sm:$0xff]
        %v747 = vld [vmem:[%s209 + $0xb10] sm:$0xff]
        %v748 = vld [vmem:[%s209 + $0xb18] sm:$0xff]
        %v749 = vld [vmem:[%s209 + $0xb20] sm:$0xff]
        %v750 = vld [vmem:[%s209 + $0xb28] sm:$0xff]
        %v751 = vld [vmem:[%s209 + $0xb30] sm:$0xff]
        %v752 = vld [vmem:[%s209 + $0xb38] sm:$0xff]
        %v753 = vld [vmem:[%s209 + $0xb40] sm:$0xff]
        %v754 = vld [vmem:[%s209 + $0xb48] sm:$0xff]
        %v755 = vld [vmem:[%s209 + $0xb50] sm:$0xff]
        %v756 = vld [vmem:[%s209 + $0xb58] sm:$0xff]
        %v757 = vld [vmem:[%s209 + $0xb60] sm:$0xff]
        %v758 = vld [vmem:[%s209 + $0xb68] sm:$0xff]
        %v759 = vld [vmem:[%s209 + $0xb70] sm:$0xff]
        %v760 = vld [vmem:[%s209 + $0xb78] sm:$0xff]
        %v761 = vld [vmem:[%s209 + $0xb80] sm:$0xff]
        %v762 = vld [vmem:[%s209 + $0xb88] sm:$0xff]
        %v763 = vld [vmem:[%s209 + $0xb90] sm:$0xff]
        %v764 = vld [vmem:[%s209 + $0xb98] sm:$0xff]
        %v765 = vld [vmem:[%s209 + $0xba0] sm:$0xff]
        %v766 = vld [vmem:[%s209 + $0xba8] sm:$0xff]
        %v767 = vld [vmem:[%s209 + $0xbb0] sm:$0xff]
        %v768 = vld [vmem:[%s209 + $0xbb8] sm:$0xff]
        %v769 = vld [vmem:[%s209 + $0xbc0] sm:$0xff]
        %v770 = vld [vmem:[%s209 + $0xbc8] sm:$0xff]
        %v771 = vld [vmem:[%s209 + $0xbd0] sm:$0xff]
        %v772 = vld [vmem:[%s209 + $0xbd8] sm:$0xff]
        %v773 = vld [vmem:[%s209 + $0xbe0] sm:$0xff]
        %v774 = vld [vmem:[%s209 + $0xbe8] sm:$0xff]
        %v775 = vld [vmem:[%s209 + $0xbf0] sm:$0xff]
        %v776 = vld [vmem:[%s209 + $0xbf8] sm:$0xff]
        %v777 = vld [vmem:[%s209 + $0xc00] sm:$0xff]
        %v778 = vld [vmem:[%s209 + $0xc08] sm:$0xff]
        %v779 = vld [vmem:[%s209 + $0xc10] sm:$0xff]
        %v780 = vld [vmem:[%s209 + $0xc18] sm:$0xff]
        %v781 = vld [vmem:[%s209 + $0xc20] sm:$0xff]
        %v782 = vld [vmem:[%s209 + $0xc28] sm:$0xff]
        %v783 = vld [vmem:[%s209 + $0xc30] sm:$0xff]
        %v784 = vld [vmem:[%s209 + $0xc38] sm:$0xff]
        %v785 = vld [vmem:[%s209 + $0xc40] sm:$0xff]
        %v786 = vld [vmem:[%s209 + $0xc48] sm:$0xff]
        %v787 = vld [vmem:[%s209 + $0xc50] sm:$0xff]
        %v788 = vld [vmem:[%s209 + $0xc58] sm:$0xff]
        %v789 = vld [vmem:[%s209 + $0xc60] sm:$0xff]
        %v790 = vld [vmem:[%s209 + $0xc68] sm:$0xff]
        %v791 = vld [vmem:[%s209 + $0xc70] sm:$0xff]
        %v792 = vld [vmem:[%s209 + $0xc78] sm:$0xff]
        %v793 = vld [vmem:[%s209 + $0xc80] sm:$0xff]
        %v794 = vld [vmem:[%s209 + $0xc88] sm:$0xff]
        %v795 = vld [vmem:[%s209 + $0xc90] sm:$0xff]
        %v796 = vld [vmem:[%s209 + $0xc98] sm:$0xff]
        %v797 = vld [vmem:[%s209 + $0xca0] sm:$0xff]
        %v798 = vld [vmem:[%s209 + $0xca8] sm:$0xff]
        %v799 = vld [vmem:[%s209 + $0xcb0] sm:$0xff]
        %v800 = vld [vmem:[%s209 + $0xcb8] sm:$0xff]
        %v801 = vld [vmem:[%s209 + $0xcc0] sm:$0xff]
        %v802 = vld [vmem:[%s209 + $0xcc8] sm:$0xff]
        %v803 = vld [vmem:[%s209 + $0xcd0] sm:$0xff]
        %v804 = vld [vmem:[%s209 + $0xcd8] sm:$0xff]
        %v805 = vld [vmem:[%s209 + $0xce0] sm:$0xff]
        %v806 = vld [vmem:[%s209 + $0xce8] sm:$0xff]
        %v807 = vld [vmem:[%s209 + $0xcf0] sm:$0xff]
        %v808 = vld [vmem:[%s209 + $0xcf8] sm:$0xff]
        %v809 = vld [vmem:[%s209 + $0xd00] sm:$0xff]
        %v810 = vld [vmem:[%s209 + $0xd08] sm:$0xff]
        %v811 = vld [vmem:[%s209 + $0xd10] sm:$0xff]
        %v812 = vld [vmem:[%s209 + $0xd18] sm:$0xff]
        %v813 = vld [vmem:[%s209 + $0xd20] sm:$0xff]
        %v814 = vld [vmem:[%s209 + $0xd28] sm:$0xff]
        %v815 = vld [vmem:[%s209 + $0xd30] sm:$0xff]
        %v816 = vld [vmem:[%s209 + $0xd38] sm:$0xff]
        %v817 = vld [vmem:[%s209 + $0xd40] sm:$0xff]
        %v818 = vld [vmem:[%s209 + $0xd48] sm:$0xff]
        %v819 = vld [vmem:[%s209 + $0xd50] sm:$0xff]
        %v820 = vld [vmem:[%s209 + $0xd58] sm:$0xff]
        %v821 = vld [vmem:[%s209 + $0xd60] sm:$0xff]
        %v822 = vld [vmem:[%s209 + $0xd68] sm:$0xff]
        %v823 = vld [vmem:[%s209 + $0xd70] sm:$0xff]
        %v824 = vld [vmem:[%s209 + $0xd78] sm:$0xff]
        %v825 = vld [vmem:[%s209 + $0xd80] sm:$0xff]
        %v826 = vld [vmem:[%s209 + $0xd88] sm:$0xff]
        %v827 = vld [vmem:[%s209 + $0xd90] sm:$0xff]
        %v828 = vld [vmem:[%s209 + $0xd98] sm:$0xff]
        %v829 = vld [vmem:[%s209 + $0xda0] sm:$0xff]
        %v830 = vld [vmem:[%s209 + $0xda8] sm:$0xff]
        %v831 = vld [vmem:[%s209 + $0xdb0] sm:$0xff]
        %v832 = vld [vmem:[%s209 + $0xdb8] sm:$0xff]
        %v833 = vld [vmem:[%s209 + $0xdc0] sm:$0xff]
        %v834 = vld [vmem:[%s209 + $0xdc8] sm:$0xff]
        %v835 = vld [vmem:[%s209 + $0xdd0] sm:$0xff]
        %v836 = vld [vmem:[%s209 + $0xdd8] sm:$0xff]
        %v837 = vld [vmem:[%s209 + $0xde0] sm:$0xff]
        %v838 = vld [vmem:[%s209 + $0xde8] sm:$0xff]
        %v839 = vld [vmem:[%s209 + $0xdf0] sm:$0xff]
        %v840 = vld [vmem:[%s209 + $0xdf8] sm:$0xff]
        %v841 = vld [vmem:[%s209 + $0xe00] sm:$0xff]
        %v842 = vld [vmem:[%s209 + $0xe08] sm:$0xff]
        %v843 = vld [vmem:[%s209 + $0xe10] sm:$0xff]
        %v844 = vld [vmem:[%s209 + $0xe18] sm:$0xff]
        %v845 = vld [vmem:[%s209 + $0xe20] sm:$0xff]
        %v846 = vld [vmem:[%s209 + $0xe28] sm:$0xff]
        %v847 = vld [vmem:[%s209 + $0xe30] sm:$0xff]
        %v848 = vld [vmem:[%s209 + $0xe38] sm:$0xff]
        %v849 = vld [vmem:[%s209 + $0xe40] sm:$0xff]
        %v850 = vld [vmem:[%s209 + $0xe48] sm:$0xff]
        %v851 = vld [vmem:[%s209 + $0xe50] sm:$0xff]
        %v852 = vld [vmem:[%s209 + $0xe58] sm:$0xff]
        %v853 = vld [vmem:[%s209 + $0xe60] sm:$0xff]
        %v854 = vld [vmem:[%s209 + $0xe68] sm:$0xff]
        %v855 = vld [vmem:[%s209 + $0xe70] sm:$0xff]
        %v856 = vld [vmem:[%s209 + $0xe78] sm:$0xff]
        %v857 = vld [vmem:[%s209 + $0xe80] sm:$0xff]
        %v858 = vld [vmem:[%s209 + $0xe88] sm:$0xff]
        %v859 = vld [vmem:[%s209 + $0xe90] sm:$0xff]
        %v860 = vld [vmem:[%s209 + $0xe98] sm:$0xff]
        %v861 = vld [vmem:[%s209 + $0xea0] sm:$0xff]
        %v862 = vld [vmem:[%s209 + $0xea8] sm:$0xff]
        %v863 = vld [vmem:[%s209 + $0xeb0] sm:$0xff]
        %v864 = vld [vmem:[%s209 + $0xeb8] sm:$0xff]
        %v865 = vld [vmem:[%s209 + $0xec0] sm:$0xff]
        %v866 = vld [vmem:[%s209 + $0xec8] sm:$0xff]
        %v867 = vld [vmem:[%s209 + $0xed0] sm:$0xff]
        %v868 = vld [vmem:[%s209 + $0xed8] sm:$0xff]
        %v869 = vld [vmem:[%s209 + $0xee0] sm:$0xff]
        %v870 = vld [vmem:[%s209 + $0xee8] sm:$0xff]
        %v871 = vld [vmem:[%s209 + $0xef0] sm:$0xff]
        %v872 = vld [vmem:[%s209 + $0xef8] sm:$0xff]
        %v873 = vld [vmem:[%s209 + $0xf00] sm:$0xff]
        %v874 = vld [vmem:[%s209 + $0xf08] sm:$0xff]
        %v875 = vld [vmem:[%s209 + $0xf10] sm:$0xff]
        %v876 = vld [vmem:[%s209 + $0xf18] sm:$0xff]
        %v877 = vld [vmem:[%s209 + $0xf20] sm:$0xff]
        %v878 = vld [vmem:[%s209 + $0xf28] sm:$0xff]
        %v879 = vld [vmem:[%s209 + $0xf30] sm:$0xff]
        %v880 = vld [vmem:[%s209 + $0xf38] sm:$0xff]
        %v881 = vld [vmem:[%s209 + $0xf40] sm:$0xff]
        %v882 = vld [vmem:[%s209 + $0xf48] sm:$0xff]
        %v883 = vld [vmem:[%s209 + $0xf50] sm:$0xff]
        %v884 = vld [vmem:[%s209 + $0xf58] sm:$0xff]
        %v885 = vld [vmem:[%s209 + $0xf60] sm:$0xff]
        %v886 = vld [vmem:[%s209 + $0xf68] sm:$0xff]
        %v887 = vld [vmem:[%s209 + $0xf70] sm:$0xff]
        %v888 = vld [vmem:[%s209 + $0xf78] sm:$0xff]
        %v889 = vld [vmem:[%s209 + $0xf80] sm:$0xff]
        %v890 = vld [vmem:[%s209 + $0xf88] sm:$0xff]
        %v891 = vld [vmem:[%s209 + $0xf90] sm:$0xff]
        %v892 = vld [vmem:[%s209 + $0xf98] sm:$0xff]
        %v893 = vld [vmem:[%s209 + $0xfa0] sm:$0xff]
        %v894 = vld [vmem:[%s209 + $0xfa8] sm:$0xff]
        %v895 = vld [vmem:[%s209 + $0xfb0] sm:$0xff]
        %v896 = vld [vmem:[%s209 + $0xfb8] sm:$0xff]
        %v897 = vld [vmem:[%s209 + $0xfc0] sm:$0xff]
        %v898 = vld [vmem:[%s209 + $0xfc8] sm:$0xff]
        %v899 = vld [vmem:[%s209 + $0xfd0] sm:$0xff]
        %v900 = vld [vmem:[%s209 + $0xfd8] sm:$0xff]
        %v901 = vld [vmem:[%s209 + $0xfe0] sm:$0xff]
        %v902 = vld [vmem:[%s209 + $0xfe8] sm:$0xff]
        %v903 = vld [vmem:[%s209 + $0xff0] sm:$0xff]
        %v904 = vld [vmem:[%s209 + $0xff8] sm:$0xff]
        %v905 = vld [vmem:[%s209 + $0x1000] sm:$0xff]
        %v906 = vld [vmem:[%s209 + $0x1008] sm:$0xff]
        %v907 = vld [vmem:[%s209 + $0x1010] sm:$0xff]
        %v908 = vld [vmem:[%s209 + $0x1018] sm:$0xff]
        %v909 = vld [vmem:[%s209 + $0x1020] sm:$0xff]
        %v910 = vld [vmem:[%s209 + $0x1028] sm:$0xff]
        %v911 = vld [vmem:[%s209 + $0x1030] sm:$0xff]
        %v912 = vld [vmem:[%s209 + $0x1038] sm:$0xff]
        %v913 = vld [vmem:[%s209 + $0x1040] sm:$0xff]
        %v914 = vld [vmem:[%s209 + $0x1048] sm:$0xff]
        %v915 = vld [vmem:[%s209 + $0x1050] sm:$0xff]
        %v916 = vld [vmem:[%s209 + $0x1058] sm:$0xff]
        %v917 = vld [vmem:[%s209 + $0x1060] sm:$0xff]
        %v918 = vld [vmem:[%s209 + $0x1068] sm:$0xff]
        %v919 = vld [vmem:[%s209 + $0x1070] sm:$0xff]
        %v920 = vld [vmem:[%s209 + $0x1078] sm:$0xff]
        %v921 = vld [vmem:[%s209 + $0x1080] sm:$0xff]
        %v922 = vld [vmem:[%s209 + $0x1088] sm:$0xff]
        %v923 = vld [vmem:[%s209 + $0x1090] sm:$0xff]
        %v924 = vld [vmem:[%s209 + $0x1098] sm:$0xff]
        %v925 = vld [vmem:[%s209 + $0x10a0] sm:$0xff]
        %v926 = vld [vmem:[%s209 + $0x10a8] sm:$0xff]
        %v927 = vld [vmem:[%s209 + $0x10b0] sm:$0xff]
        %v928 = vld [vmem:[%s209 + $0x10b8] sm:$0xff]
        %v929 = vld [vmem:[%s209 + $0x10c0] sm:$0xff]
        %v930 = vld [vmem:[%s209 + $0x10c8] sm:$0xff]
        %v931 = vld [vmem:[%s209 + $0x10d0] sm:$0xff]
        %v932 = vld [vmem:[%s209 + $0x10d8] sm:$0xff]
        %v933 = vld [vmem:[%s209 + $0x10e0] sm:$0xff]
        %v934 = vld [vmem:[%s209 + $0x10e8] sm:$0xff]
        %v935 = vld [vmem:[%s209 + $0x10f0] sm:$0xff]
        %v936 = vld [vmem:[%s209 + $0x10f8] sm:$0xff]
        %v937 = vld [vmem:[%s209 + $0x1100] sm:$0xff]
        %v938 = vld [vmem:[%s209 + $0x1108] sm:$0xff]
        %v939 = vld [vmem:[%s209 + $0x1110] sm:$0xff]
        %v940 = vld [vmem:[%s209 + $0x1118] sm:$0xff]
        %v941 = vld [vmem:[%s209 + $0x1120] sm:$0xff]
        %v942 = vld [vmem:[%s209 + $0x1128] sm:$0xff]
        %v943 = vld [vmem:[%s209 + $0x1130] sm:$0xff]
        %v944 = vld [vmem:[%s209 + $0x1138] sm:$0xff]
        %v945 = vld [vmem:[%s209 + $0x1140] sm:$0xff]
        %v946 = vld [vmem:[%s209 + $0x1148] sm:$0xff]
        %v947 = vld [vmem:[%s209 + $0x1150] sm:$0xff]
        %v948 = vld [vmem:[%s209 + $0x1158] sm:$0xff]
        %v949 = vld [vmem:[%s209 + $0x1160] sm:$0xff]
        %v950 = vld [vmem:[%s209 + $0x1168] sm:$0xff]
        %v951 = vld [vmem:[%s209 + $0x1170] sm:$0xff]
        %v952 = vld [vmem:[%s209 + $0x1178] sm:$0xff]
        %v953 = vld [vmem:[%s209 + $0x1180] sm:$0xff]
        %v954 = vld [vmem:[%s209 + $0x1188] sm:$0xff]
        %v955 = vld [vmem:[%s209 + $0x1190] sm:$0xff]
        %v956 = vld [vmem:[%s209 + $0x1198] sm:$0xff]
        %v957 = vld [vmem:[%s209 + $0x11a0] sm:$0xff]
        %v958 = vld [vmem:[%s209 + $0x11a8] sm:$0xff]
        %v959 = vld [vmem:[%s209 + $0x11b0] sm:$0xff]
        %v960 = vld [vmem:[%s209 + $0x11b8] sm:$0xff]
        %v961 = vld [vmem:[%s209 + $0x11c0] sm:$0xff]
        %v962 = vld [vmem:[%s209 + $0x11c8] sm:$0xff]
        %v963 = vld [vmem:[%s209 + $0x11d0] sm:$0xff]
        %v964 = vld [vmem:[%s209 + $0x11d8] sm:$0xff]
        %v965 = vld [vmem:[%s209 + $0x11e0] sm:$0xff]
        %v966 = vld [vmem:[%s209 + $0x11e8] sm:$0xff]
        %v967 = vld [vmem:[%s209 + $0x11f0] sm:$0xff]
        %v968 = vld [vmem:[%s209 + $0x11f8] sm:$0xff]
        %v969 = vld [vmem:[%s209 + $0x1200] sm:$0xff]
        %v970 = vld [vmem:[%s209 + $0x1208] sm:$0xff]
        %v971 = vld [vmem:[%s209 + $0x1210] sm:$0xff]
        %v972 = vld [vmem:[%s209 + $0x1218] sm:$0xff]
        %v973 = vld [vmem:[%s209 + $0x1220] sm:$0xff]
        %v974 = vld [vmem:[%s209 + $0x1228] sm:$0xff]
        %v975 = vld [vmem:[%s209 + $0x1230] sm:$0xff]
        %v976 = vld [vmem:[%s209 + $0x1238] sm:$0xff]
        %v977 = vld [vmem:[%s209 + $0x1240] sm:$0xff]
        %v978 = vld [vmem:[%s209 + $0x1248] sm:$0xff]
        %v979 = vld [vmem:[%s209 + $0x1250] sm:$0xff]
        %v980 = vld [vmem:[%s209 + $0x1258] sm:$0xff]
        %v981 = vld [vmem:[%s209 + $0x1260] sm:$0xff]
        %v982 = vld [vmem:[%s209 + $0x1268] sm:$0xff]
        %v983 = vld [vmem:[%s209 + $0x1270] sm:$0xff]
        %v984 = vld [vmem:[%s209 + $0x1278] sm:$0xff]
        %v985 = vld [vmem:[%s209 + $0x1280] sm:$0xff]
        %v986 = vld [vmem:[%s209 + $0x1288] sm:$0xff]
        %v987 = vld [vmem:[%s209 + $0x1290] sm:$0xff]
        %v988 = vld [vmem:[%s209 + $0x1298] sm:$0xff]
        %v989 = vld [vmem:[%s209 + $0x12a0] sm:$0xff]
        %v990 = vld [vmem:[%s209 + $0x12a8] sm:$0xff]
        %v991 = vld [vmem:[%s209 + $0x12b0] sm:$0xff]
        %v992 = vld [vmem:[%s209 + $0x12b8] sm:$0xff]
        %v993 = vld [vmem:[%s209 + $0x12c0] sm:$0xff]
        %v994 = vld [vmem:[%s209 + $0x12c8] sm:$0xff]
        %v995 = vld [vmem:[%s209 + $0x12d0] sm:$0xff]
        %v996 = vld [vmem:[%s209 + $0x12d8] sm:$0xff]
        %v997 = vld [vmem:[%s209 + $0x12e0] sm:$0xff]
        %v998 = vld [vmem:[%s209 + $0x12e8] sm:$0xff]
        %v999 = vld [vmem:[%s209 + $0x12f0] sm:$0xff]
        %v1000 = vld [vmem:[%s209 + $0x12f8] sm:$0xff]
        %v1001 = vld [vmem:[%s209 + $0x1300] sm:$0xff]
        %v1002 = vld [vmem:[%s209 + $0x1308] sm:$0xff]
        %v1003 = vld [vmem:[%s209 + $0x1310] sm:$0xff]
        %v1004 = vld [vmem:[%s209 + $0x1318] sm:$0xff]
        %v1005 = vld [vmem:[%s209 + $0x1320] sm:$0xff]
        %v1006 = vld [vmem:[%s209 + $0x1328] sm:$0xff]
        %v1007 = vld [vmem:[%s209 + $0x1330] sm:$0xff]
        %v1008 = vld [vmem:[%s209 + $0x1338] sm:$0xff]
        %v1009 = vld [vmem:[%s209 + $0x1340] sm:$0xff]
        %v1010 = vld [vmem:[%s209 + $0x1348] sm:$0xff]
        %v1011 = vld [vmem:[%s209 + $0x1350] sm:$0xff]
        %v1012 = vld [vmem:[%s209 + $0x1358] sm:$0xff]
        %v1013 = vld [vmem:[%s209 + $0x1360] sm:$0xff]
        %v1014 = vld [vmem:[%s209 + $0x1368] sm:$0xff]
        %v1015 = vld [vmem:[%s209 + $0x1370] sm:$0xff]
        %v1016 = vld [vmem:[%s209 + $0x1378] sm:$0xff]
        %v1017 = vld [vmem:[%s209 + $0x1380] sm:$0xff]
        %v1018 = vld [vmem:[%s209 + $0x1388] sm:$0xff]
        %v1019 = vld [vmem:[%s209 + $0x1390] sm:$0xff]
        %v1020 = vld [vmem:[%s209 + $0x1398] sm:$0xff]
        %v1021 = vld [vmem:[%s209 + $0x13a0] sm:$0xff]
        %v1022 = vld [vmem:[%s209 + $0x13a8] sm:$0xff]
        %v1023 = vld [vmem:[%s209 + $0x13b0] sm:$0xff]
        %v1024 = vld [vmem:[%s209 + $0x13b8] sm:$0xff]
        %v1025 = vld [vmem:[%s209 + $0x13c0] sm:$0xff]
        %v1026 = vld [vmem:[%s209 + $0x13c8] sm:$0xff]
        %v1027 = vld [vmem:[%s209 + $0x13d0] sm:$0xff]
        %v1028 = vld [vmem:[%s209 + $0x13d8] sm:$0xff]
        %v1029 = vld [vmem:[%s209 + $0x13e0] sm:$0xff]
        %v1030 = vld [vmem:[%s209 + $0x13e8] sm:$0xff]
        %v1031 = vld [vmem:[%s209 + $0x13f0] sm:$0xff]
        %v1032 = vld [vmem:[%s209 + $0x13f8] sm:$0xff]
        %v1033 = vld [vmem:[%s209 + $0x1400] sm:$0xff]
        %v1034 = vld [vmem:[%s209 + $0x1408] sm:$0xff]
        %v1035 = vld [vmem:[%s209 + $0x1410] sm:$0xff]
        %v1036 = vld [vmem:[%s209 + $0x1418] sm:$0xff]
        %v1037 = vld [vmem:[%s209 + $0x1420] sm:$0xff]
        %v1038 = vld [vmem:[%s209 + $0x1428] sm:$0xff]
        %v1039 = vld [vmem:[%s209 + $0x1430] sm:$0xff]
        %v1040 = vld [vmem:[%s209 + $0x1438] sm:$0xff]
        %v1041 = vld [vmem:[%s209 + $0x1440] sm:$0xff]
        %v1042 = vld [vmem:[%s209 + $0x1448] sm:$0xff]
        %v1043 = vld [vmem:[%s209 + $0x1450] sm:$0xff]
        %v1044 = vld [vmem:[%s209 + $0x1458] sm:$0xff]
        %v1045 = vld [vmem:[%s209 + $0x1460] sm:$0xff]
        %v1046 = vld [vmem:[%s209 + $0x1468] sm:$0xff]
        %v1047 = vld [vmem:[%s209 + $0x1470] sm:$0xff]
        %v1048 = vld [vmem:[%s209 + $0x1478] sm:$0xff]
        %v1049 = vld [vmem:[%s209 + $0x1480] sm:$0xff]
        %v1050 = vld [vmem:[%s209 + $0x1488] sm:$0xff]
        %v1051 = vld [vmem:[%s209 + $0x1490] sm:$0xff]
        %v1052 = vld [vmem:[%s209 + $0x1498] sm:$0xff]
        %v1053 = vld [vmem:[%s209 + $0x14a0] sm:$0xff]
        %v1054 = vld [vmem:[%s209 + $0x14a8] sm:$0xff]
        %v1055 = vld [vmem:[%s209 + $0x14b0] sm:$0xff]
        %v1056 = vld [vmem:[%s209 + $0x14b8] sm:$0xff]
        %v1057 = vld [vmem:[%s209 + $0x14c0] sm:$0xff]
        %v1058 = vld [vmem:[%s209 + $0x14c8] sm:$0xff]
        %v1059 = vld [vmem:[%s209 + $0x14d0] sm:$0xff]
        %v1060 = vld [vmem:[%s209 + $0x14d8] sm:$0xff]
        %v1061 = vld [vmem:[%s209 + $0x14e0] sm:$0xff]
        %v1062 = vld [vmem:[%s209 + $0x14e8] sm:$0xff]
        %v1063 = vld [vmem:[%s209 + $0x14f0] sm:$0xff]
        %v1064 = vld [vmem:[%s209 + $0x14f8] sm:$0xff]
        %v1065 = vld [vmem:[%s209 + $0x1500] sm:$0xff]
        %v1066 = vld [vmem:[%s209 + $0x1508] sm:$0xff]
        %v1067 = vld [vmem:[%s209 + $0x1510] sm:$0xff]
        %v1068 = vld [vmem:[%s209 + $0x1518] sm:$0xff]
        %v1069 = vld [vmem:[%s209 + $0x1520] sm:$0xff]
        %v1070 = vld [vmem:[%s209 + $0x1528] sm:$0xff]
        %v1071 = vld [vmem:[%s209 + $0x1530] sm:$0xff]
        %v1072 = vld [vmem:[%s209 + $0x1538] sm:$0xff]
        %v1073 = vld [vmem:[%s209 + $0x1540] sm:$0xff]
        %v1074 = vld [vmem:[%s209 + $0x1548] sm:$0xff]
        %v1075 = vld [vmem:[%s209 + $0x1550] sm:$0xff]
        %v1076 = vld [vmem:[%s209 + $0x1558] sm:$0xff]
        %v1077 = vld [vmem:[%s209 + $0x1560] sm:$0xff]
        %v1078 = vld [vmem:[%s209 + $0x1568] sm:$0xff]
        %v1079 = vld [vmem:[%s209 + $0x1570] sm:$0xff]
        %v1080 = vld [vmem:[%s209 + $0x1578] sm:$0xff]
        %v1081 = vld [vmem:[%s209 + $0x1580] sm:$0xff]
        %v1082 = vld [vmem:[%s209 + $0x1588] sm:$0xff]
        %v1083 = vld [vmem:[%s209 + $0x1590] sm:$0xff]
        %v1084 = vld [vmem:[%s209 + $0x1598] sm:$0xff]
        %v1085 = vld [vmem:[%s209 + $0x15a0] sm:$0xff]
        %v1086 = vld [vmem:[%s209 + $0x15a8] sm:$0xff]
        %v1087 = vld [vmem:[%s209 + $0x15b0] sm:$0xff]
        %v1088 = vld [vmem:[%s209 + $0x15b8] sm:$0xff]
        %v1089 = vld [vmem:[%s209 + $0x15c0] sm:$0xff]
        %v1090 = vld [vmem:[%s209 + $0x15c8] sm:$0xff]
        %v1091 = vld [vmem:[%s209 + $0x15d0] sm:$0xff]
        %v1092 = vld [vmem:[%s209 + $0x15d8] sm:$0xff]
        %v1093 = vld [vmem:[%s209 + $0x15e0] sm:$0xff]
        %v1094 = vld [vmem:[%s209 + $0x15e8] sm:$0xff]
        %v1095 = vld [vmem:[%s209 + $0x15f0] sm:$0xff]
        %v1096 = vld [vmem:[%s209 + $0x15f8] sm:$0xff]
        %v1097 = vld [vmem:[%s209 + $0x1600] sm:$0xff]
        %v1098 = vld [vmem:[%s209 + $0x1608] sm:$0xff]
        %v1099 = vld [vmem:[%s209 + $0x1610] sm:$0xff]
        %v1100 = vld [vmem:[%s209 + $0x1618] sm:$0xff]
        %v1101 = vld [vmem:[%s209 + $0x1620] sm:$0xff]
        %v1102 = vld [vmem:[%s209 + $0x1628] sm:$0xff]
        %v1103 = vld [vmem:[%s209 + $0x1630] sm:$0xff]
        %v1104 = vld [vmem:[%s209 + $0x1638] sm:$0xff]
        %v1105 = vld [vmem:[%s209 + $0x1640] sm:$0xff]
        %v1106 = vld [vmem:[%s209 + $0x1648] sm:$0xff]
        %v1107 = vld [vmem:[%s209 + $0x1650] sm:$0xff]
        %v1108 = vld [vmem:[%s209 + $0x1658] sm:$0xff]
        %v1109 = vld [vmem:[%s209 + $0x1660] sm:$0xff]
        %v1110 = vld [vmem:[%s209 + $0x1668] sm:$0xff]
        %v1111 = vld [vmem:[%s209 + $0x1670] sm:$0xff]
        %v1112 = vld [vmem:[%s209 + $0x1678] sm:$0xff]
        %v1113 = vld [vmem:[%s209 + $0x1680] sm:$0xff]
        %v1114 = vld [vmem:[%s209 + $0x1688] sm:$0xff]
        %v1115 = vld [vmem:[%s209 + $0x1690] sm:$0xff]
        %v1116 = vld [vmem:[%s209 + $0x1698] sm:$0xff]
        %v1117 = vld [vmem:[%s209 + $0x16a0] sm:$0xff]
        %v1118 = vld [vmem:[%s209 + $0x16a8] sm:$0xff]
        %v1119 = vld [vmem:[%s209 + $0x16b0] sm:$0xff]
        %v1120 = vld [vmem:[%s209 + $0x16b8] sm:$0xff]
        %v1121 = vld [vmem:[%s209 + $0x16c0] sm:$0xff]
        %v1122 = vld [vmem:[%s209 + $0x16c8] sm:$0xff]
        %v1123 = vld [vmem:[%s209 + $0x16d0] sm:$0xff]
        %v1124 = vld [vmem:[%s209 + $0x16d8] sm:$0xff]
        %v1125 = vld [vmem:[%s209 + $0x16e0] sm:$0xff]
        %v1126 = vld [vmem:[%s209 + $0x16e8] sm:$0xff]
        %v1127 = vld [vmem:[%s209 + $0x16f0] sm:$0xff]
        %v1128 = vld [vmem:[%s209 + $0x16f8] sm:$0xff]
        %v1129 = vld [vmem:[%s209 + $0x1700] sm:$0xff]
        %v1130 = vld [vmem:[%s209 + $0x1708] sm:$0xff]
        %v1131 = vld [vmem:[%s209 + $0x1710] sm:$0xff]
        %v1132 = vld [vmem:[%s209 + $0x1718] sm:$0xff]
        %v1133 = vld [vmem:[%s209 + $0x1720] sm:$0xff]
        %v1134 = vld [vmem:[%s209 + $0x1728] sm:$0xff]
        %v1135 = vld [vmem:[%s209 + $0x1730] sm:$0xff]
        %v1136 = vld [vmem:[%s209 + $0x1738] sm:$0xff]
        %v1137 = vld [vmem:[%s209 + $0x1740] sm:$0xff]
        %v1138 = vld [vmem:[%s209 + $0x1748] sm:$0xff]
        %v1139 = vld [vmem:[%s209 + $0x1750] sm:$0xff]
        %v1140 = vld [vmem:[%s209 + $0x1758] sm:$0xff]
        %v1141 = vld [vmem:[%s209 + $0x1760] sm:$0xff]
        %v1142 = vld [vmem:[%s209 + $0x1768] sm:$0xff]
        %v1143 = vld [vmem:[%s209 + $0x1770] sm:$0xff]
        %v1144 = vld [vmem:[%s209 + $0x1778] sm:$0xff]
        %v1145 = vld [vmem:[%s209 + $0x1780] sm:$0xff]
        %v1146 = vld [vmem:[%s209 + $0x1788] sm:$0xff]
        %v1147 = vld [vmem:[%s209 + $0x1790] sm:$0xff]
        %v1148 = vld [vmem:[%s209 + $0x1798] sm:$0xff]
        %v1149 = vld [vmem:[%s209 + $0x17a0] sm:$0xff]
        %v1150 = vld [vmem:[%s209 + $0x17a8] sm:$0xff]
        %v1151 = vld [vmem:[%s209 + $0x17b0] sm:$0xff]
        %v1152 = vld [vmem:[%s209 + $0x17b8] sm:$0xff]
        %v1153 = vld [vmem:[%s209 + $0x17c0] sm:$0xff]
        %v1154 = vld [vmem:[%s209 + $0x17c8] sm:$0xff]
        %v1155 = vld [vmem:[%s209 + $0x17d0] sm:$0xff]
        %v1156 = vld [vmem:[%s209 + $0x17d8] sm:$0xff]
        %v1157 = vld [vmem:[%s209 + $0x17e0] sm:$0xff]
        %v1158 = vld [vmem:[%s209 + $0x17e8] sm:$0xff]
        %v1159 = vld [vmem:[%s209 + $0x17f0] sm:$0xff]
        %v1160 = vld [vmem:[%s209 + $0x17f8] sm:$0xff]
        %v1161 = vld [vmem:[%s209 + $0x1800] sm:$0xff]
        %v1162 = vld [vmem:[%s209 + $0x1808] sm:$0xff]
        %v1163 = vld [vmem:[%s209 + $0x1810] sm:$0xff]
        %v1164 = vld [vmem:[%s209 + $0x1818] sm:$0xff]
        %v1165 = vld [vmem:[%s209 + $0x1820] sm:$0xff]
        %v1166 = vld [vmem:[%s209 + $0x1828] sm:$0xff]
        %v1167 = vld [vmem:[%s209 + $0x1830] sm:$0xff]
        %v1168 = vld [vmem:[%s209 + $0x1838] sm:$0xff]
        %v1169 = vld [vmem:[%s209 + $0x1840] sm:$0xff]
        %v1170 = vld [vmem:[%s209 + $0x1848] sm:$0xff]
        %v1171 = vld [vmem:[%s209 + $0x1850] sm:$0xff]
        %v1172 = vld [vmem:[%s209 + $0x1858] sm:$0xff]
        %v1173 = vld [vmem:[%s209 + $0x1860] sm:$0xff]
        %v1174 = vld [vmem:[%s209 + $0x1868] sm:$0xff]
        %v1175 = vld [vmem:[%s209 + $0x1870] sm:$0xff]
        %v1176 = vld [vmem:[%s209 + $0x1878] sm:$0xff]
        %v1177 = vld [vmem:[%s209 + $0x1880] sm:$0xff]
        %v1178 = vld [vmem:[%s209 + $0x1888] sm:$0xff]
        %v1179 = vld [vmem:[%s209 + $0x1890] sm:$0xff]
        %v1180 = vld [vmem:[%s209 + $0x1898] sm:$0xff]
        %v1181 = vld [vmem:[%s209 + $0x18a0] sm:$0xff]
        %v1182 = vld [vmem:[%s209 + $0x18a8] sm:$0xff]
        %v1183 = vld [vmem:[%s209 + $0x18b0] sm:$0xff]
        %v1184 = vld [vmem:[%s209 + $0x18b8] sm:$0xff]
        %v1185 = vld [vmem:[%s209 + $0x18c0] sm:$0xff]
        %v1186 = vld [vmem:[%s209 + $0x18c8] sm:$0xff]
        %v1187 = vld [vmem:[%s209 + $0x18d0] sm:$0xff]
        %v1188 = vld [vmem:[%s209 + $0x18d8] sm:$0xff]
        %v1189 = vld [vmem:[%s209 + $0x18e0] sm:$0xff]
        %v1190 = vld [vmem:[%s209 + $0x18e8] sm:$0xff]
        %v1191 = vld [vmem:[%s209 + $0x18f0] sm:$0xff]
        %v1192 = vld [vmem:[%s209 + $0x18f8] sm:$0xff]
        %v1193 = vld [vmem:[%s209 + $0x1900] sm:$0xff]
        %v1194 = vld [vmem:[%s209 + $0x1908] sm:$0xff]
        %v1195 = vld [vmem:[%s209 + $0x1910] sm:$0xff]
        %v1196 = vld [vmem:[%s209 + $0x1918] sm:$0xff]
        %v1197 = vld [vmem:[%s209 + $0x1920] sm:$0xff]
        %v1198 = vld [vmem:[%s209 + $0x1928] sm:$0xff]
        %v1199 = vld [vmem:[%s209 + $0x1930] sm:$0xff]
        %v1200 = vld [vmem:[%s209 + $0x1938] sm:$0xff]
        %v1201 = vld [vmem:[%s209 + $0x1940] sm:$0xff]
        %v1202 = vld [vmem:[%s209 + $0x1948] sm:$0xff]
        %v1203 = vld [vmem:[%s209 + $0x1950] sm:$0xff]
        %v1204 = vld [vmem:[%s209 + $0x1958] sm:$0xff]
        %v1205 = vld [vmem:[%s209 + $0x1960] sm:$0xff]
        %v1206 = vld [vmem:[%s209 + $0x1968] sm:$0xff]
        %v1207 = vld [vmem:[%s209 + $0x1970] sm:$0xff]
        %v1208 = vld [vmem:[%s209 + $0x1978] sm:$0xff]
        %v1209 = vld [vmem:[%s209 + $0x1980] sm:$0xff]
        %v1210 = vld [vmem:[%s209 + $0x1988] sm:$0xff]
        %v1211 = vld [vmem:[%s209 + $0x1990] sm:$0xff]
        %v1212 = vld [vmem:[%s209 + $0x1998] sm:$0xff]
        %v1213 = vld [vmem:[%s209 + $0x19a0] sm:$0xff]
        %v1214 = vld [vmem:[%s209 + $0x19a8] sm:$0xff]
        %v1215 = vld [vmem:[%s209 + $0x19b0] sm:$0xff]
        %v1216 = vld [vmem:[%s209 + $0x19b8] sm:$0xff]
        %v1217 = vld [vmem:[%s209 + $0x19c0] sm:$0xff]
        %v1218 = vld [vmem:[%s209 + $0x19c8] sm:$0xff]
        %v1219 = vld [vmem:[%s209 + $0x19d0] sm:$0xff]
        %v1220 = vld [vmem:[%s209 + $0x19d8] sm:$0xff]
        %v1221 = vld [vmem:[%s209 + $0x19e0] sm:$0xff]
        %v1222 = vld [vmem:[%s209 + $0x19e8] sm:$0xff]
        %v1223 = vld [vmem:[%s209 + $0x19f0] sm:$0xff]
        %v1224 = vld [vmem:[%s209 + $0x19f8] sm:$0xff]
        %v1225 = vld [vmem:[%s209 + $0x1a00] sm:$0xff]
        %v1226 = vld [vmem:[%s209 + $0x1a08] sm:$0xff]
        %v1227 = vld [vmem:[%s209 + $0x1a10] sm:$0xff]
        %v1228 = vld [vmem:[%s209 + $0x1a18] sm:$0xff]
        %v1229 = vld [vmem:[%s209 + $0x1a20] sm:$0xff]
        %v1230 = vld [vmem:[%s209 + $0x1a28] sm:$0xff]
        %v1231 = vld [vmem:[%s209 + $0x1a30] sm:$0xff]
        %v1232 = vld [vmem:[%s209 + $0x1a38] sm:$0xff]
        %v1233 = vld [vmem:[%s209 + $0x1a40] sm:$0xff]
        %v1234 = vld [vmem:[%s209 + $0x1a48] sm:$0xff]
        %v1235 = vld [vmem:[%s209 + $0x1a50] sm:$0xff]
        %v1236 = vld [vmem:[%s209 + $0x1a58] sm:$0xff]
        %v1237 = vld [vmem:[%s209 + $0x1a60] sm:$0xff]
        %v1238 = vld [vmem:[%s209 + $0x1a68] sm:$0xff]
        %v1239 = vld [vmem:[%s209 + $0x1a70] sm:$0xff]
        %v1240 = vld [vmem:[%s209 + $0x1a78] sm:$0xff]
        %v1241 = vld [vmem:[%s209 + $0x1a80] sm:$0xff]
        %v1242 = vld [vmem:[%s209 + $0x1a88] sm:$0xff]
        %v1243 = vld [vmem:[%s209 + $0x1a90] sm:$0xff]
        %v1244 = vld [vmem:[%s209 + $0x1a98] sm:$0xff]
        %v1245 = vld [vmem:[%s209 + $0x1aa0] sm:$0xff]
        %v1246 = vld [vmem:[%s209 + $0x1aa8] sm:$0xff]
        %v1247 = vld [vmem:[%s209 + $0x1ab0] sm:$0xff]
        %v1248 = vld [vmem:[%s209 + $0x1ab8] sm:$0xff]
        %v1249 = vld [vmem:[%s209 + $0x1ac0] sm:$0xff]
        %v1250 = vld [vmem:[%s209 + $0x1ac8] sm:$0xff]
        %v1251 = vld [vmem:[%s209 + $0x1ad0] sm:$0xff]
        %v1252 = vld [vmem:[%s209 + $0x1ad8] sm:$0xff]
        %v1253 = vld [vmem:[%s209 + $0x1ae0] sm:$0xff]
        %v1254 = vld [vmem:[%s209 + $0x1ae8] sm:$0xff]
        %v1255 = vld [vmem:[%s209 + $0x1af0] sm:$0xff]
        %v1256 = vld [vmem:[%s209 + $0x1af8] sm:$0xff]
        %v1257 = vld [vmem:[%s209 + $0x1b00] sm:$0xff]
        %v1258 = vld [vmem:[%s209 + $0x1b08] sm:$0xff]
        %v1259 = vld [vmem:[%s209 + $0x1b10] sm:$0xff]
        %v1260 = vld [vmem:[%s209 + $0x1b18] sm:$0xff]
        %v1261 = vld [vmem:[%s209 + $0x1b20] sm:$0xff]
        %v1262 = vld [vmem:[%s209 + $0x1b28] sm:$0xff]
        %v1263 = vld [vmem:[%s209 + $0x1b30] sm:$0xff]
        %v1264 = vld [vmem:[%s209 + $0x1b38] sm:$0xff]
        %v1265 = vld [vmem:[%s209 + $0x1b40] sm:$0xff]
        %v1266 = vld [vmem:[%s209 + $0x1b48] sm:$0xff]
        %v1267 = vld [vmem:[%s209 + $0x1b50] sm:$0xff]
        %v1268 = vld [vmem:[%s209 + $0x1b58] sm:$0xff]
        %v1269 = vld [vmem:[%s209 + $0x1b60] sm:$0xff]
        %v1270 = vld [vmem:[%s209 + $0x1b68] sm:$0xff]
        %v1271 = vld [vmem:[%s209 + $0x1b70] sm:$0xff]
        %v1272 = vld [vmem:[%s209 + $0x1b78] sm:$0xff]
        %v1273 = vld [vmem:[%s209 + $0x1b80] sm:$0xff]
        %v1274 = vld [vmem:[%s209 + $0x1b88] sm:$0xff]
        %v1275 = vld [vmem:[%s209 + $0x1b90] sm:$0xff]
        %v1276 = vld [vmem:[%s209 + $0x1b98] sm:$0xff]
        %v1277 = vld [vmem:[%s209 + $0x1ba0] sm:$0xff]
        %v1278 = vld [vmem:[%s209 + $0x1ba8] sm:$0xff]
        %v1279 = vld [vmem:[%s209 + $0x1bb0] sm:$0xff]
        %v1280 = vld [vmem:[%s209 + $0x1bb8] sm:$0xff]
        %v1281 = vld [vmem:[%s209 + $0x1bc0] sm:$0xff]
        %v1282 = vld [vmem:[%s209 + $0x1bc8] sm:$0xff]
        %v1283 = vld [vmem:[%s209 + $0x1bd0] sm:$0xff]
        %v1284 = vld [vmem:[%s209 + $0x1bd8] sm:$0xff]
        %v1285 = vld [vmem:[%s209 + $0x1be0] sm:$0xff]
        %v1286 = vld [vmem:[%s209 + $0x1be8] sm:$0xff]
        %v1287 = vld [vmem:[%s209 + $0x1bf0] sm:$0xff]
        %v1288 = vld [vmem:[%s209 + $0x1bf8] sm:$0xff]
        %v1289 = vld [vmem:[%s209 + $0x1c00] sm:$0xff]
        %v1290 = vld [vmem:[%s209 + $0x1c08] sm:$0xff]
        %v1291 = vld [vmem:[%s209 + $0x1c10] sm:$0xff]
        %v1292 = vld [vmem:[%s209 + $0x1c18] sm:$0xff]
        %v1293 = vld [vmem:[%s209 + $0x1c20] sm:$0xff]
        %v1294 = vld [vmem:[%s209 + $0x1c28] sm:$0xff]
        %v1295 = vld [vmem:[%s209 + $0x1c30] sm:$0xff]
        %v1296 = vld [vmem:[%s209 + $0x1c38] sm:$0xff]
        %v1297 = vld [vmem:[%s209 + $0x1c40] sm:$0xff]
        %v1298 = vld [vmem:[%s209 + $0x1c48] sm:$0xff]
        %v1299 = vld [vmem:[%s209 + $0x1c50] sm:$0xff]
        %v1300 = vld [vmem:[%s209 + $0x1c58] sm:$0xff]
        %v1301 = vld [vmem:[%s209 + $0x1c60] sm:$0xff]
        %v1302 = vld [vmem:[%s209 + $0x1c68] sm:$0xff]
        %v1303 = vld [vmem:[%s209 + $0x1c70] sm:$0xff]
        %v1304 = vld [vmem:[%s209 + $0x1c78] sm:$0xff]
        %v1305 = vld [vmem:[%s209 + $0x1c80] sm:$0xff]
        %v1306 = vld [vmem:[%s209 + $0x1c88] sm:$0xff]
        %v1307 = vld [vmem:[%s209 + $0x1c90] sm:$0xff]
        %v1308 = vld [vmem:[%s209 + $0x1c98] sm:$0xff]
        %v1309 = vld [vmem:[%s209 + $0x1ca0] sm:$0xff]
        %v1310 = vld [vmem:[%s209 + $0x1ca8] sm:$0xff]
        %v1311 = vld [vmem:[%s209 + $0x1cb0] sm:$0xff]
        %v1312 = vld [vmem:[%s209 + $0x1cb8] sm:$0xff]
        %v1313 = vld [vmem:[%s209 + $0x1cc0] sm:$0xff]
        %v1314 = vld [vmem:[%s209 + $0x1cc8] sm:$0xff]
        %v1315 = vld [vmem:[%s209 + $0x1cd0] sm:$0xff]
        %v1316 = vld [vmem:[%s209 + $0x1cd8] sm:$0xff]
        %v1317 = vld [vmem:[%s209 + $0x1ce0] sm:$0xff]
        %v1318 = vld [vmem:[%s209 + $0x1ce8] sm:$0xff]
        %v1319 = vld [vmem:[%s209 + $0x1cf0] sm:$0xff]
        %v1320 = vld [vmem:[%s209 + $0x1cf8] sm:$0xff]
        %v1321 = vld [vmem:[%s209 + $0x1d00] sm:$0xff]
        %v1322 = vld [vmem:[%s209 + $0x1d08] sm:$0xff]
        %v1323 = vld [vmem:[%s209 + $0x1d10] sm:$0xff]
        %v1324 = vld [vmem:[%s209 + $0x1d18] sm:$0xff]
        %v1325 = vld [vmem:[%s209 + $0x1d20] sm:$0xff]
        %v1326 = vld [vmem:[%s209 + $0x1d28] sm:$0xff]
        %v1327 = vld [vmem:[%s209 + $0x1d30] sm:$0xff]
        %v1328 = vld [vmem:[%s209 + $0x1d38] sm:$0xff]
        %v1329 = vld [vmem:[%s209 + $0x1d40] sm:$0xff]
        %v1330 = vld [vmem:[%s209 + $0x1d48] sm:$0xff]
        %v1331 = vld [vmem:[%s209 + $0x1d50] sm:$0xff]
        %v1332 = vld [vmem:[%s209 + $0x1d58] sm:$0xff]
        %v1333 = vld [vmem:[%s209 + $0x1d60] sm:$0xff]
        %v1334 = vld [vmem:[%s209 + $0x1d68] sm:$0xff]
        %v1335 = vld [vmem:[%s209 + $0x1d70] sm:$0xff]
        %v1336 = vld [vmem:[%s209 + $0x1d78] sm:$0xff]
        %v1337 = vld [vmem:[%s209 + $0x1d80] sm:$0xff]
        %v1338 = vld [vmem:[%s209 + $0x1d88] sm:$0xff]
        %v1339 = vld [vmem:[%s209 + $0x1d90] sm:$0xff]
        %v1340 = vld [vmem:[%s209 + $0x1d98] sm:$0xff]
        %v1341 = vld [vmem:[%s209 + $0x1da0] sm:$0xff]
        %v1342 = vld [vmem:[%s209 + $0x1da8] sm:$0xff]
        %v1343 = vld [vmem:[%s209 + $0x1db0] sm:$0xff]
        %v1344 = vld [vmem:[%s209 + $0x1db8] sm:$0xff]
        %v1345 = vld [vmem:[%s209 + $0x1dc0] sm:$0xff]
        %v1346 = vld [vmem:[%s209 + $0x1dc8] sm:$0xff]
        %v1347 = vld [vmem:[%s209 + $0x1dd0] sm:$0xff]
        %v1348 = vld [vmem:[%s209 + $0x1dd8] sm:$0xff]
        %v1349 = vld [vmem:[%s209 + $0x1de0] sm:$0xff]
        %v1350 = vld [vmem:[%s209 + $0x1de8] sm:$0xff]
        %v1351 = vld [vmem:[%s209 + $0x1df0] sm:$0xff]
        %v1352 = vld [vmem:[%s209 + $0x1df8] sm:$0xff]
        %v1353 = vld [vmem:[%s209 + $0x1e00] sm:$0xff]
        %v1354 = vld [vmem:[%s209 + $0x1e08] sm:$0xff]
        %v1355 = vld [vmem:[%s209 + $0x1e10] sm:$0xff]
        %v1356 = vld [vmem:[%s209 + $0x1e18] sm:$0xff]
        %v1357 = vld [vmem:[%s209 + $0x1e20] sm:$0xff]
        %v1358 = vld [vmem:[%s209 + $0x1e28] sm:$0xff]
        %v1359 = vld [vmem:[%s209 + $0x1e30] sm:$0xff]
        %v1360 = vld [vmem:[%s209 + $0x1e38] sm:$0xff]
        %v1361 = vld [vmem:[%s209 + $0x1e40] sm:$0xff]
        %v1362 = vld [vmem:[%s209 + $0x1e48] sm:$0xff]
        %v1363 = vld [vmem:[%s209 + $0x1e50] sm:$0xff]
        %v1364 = vld [vmem:[%s209 + $0x1e58] sm:$0xff]
        %v1365 = vld [vmem:[%s209 + $0x1e60] sm:$0xff]
        %v1366 = vld [vmem:[%s209 + $0x1e68] sm:$0xff]
        %v1367 = vld [vmem:[%s209 + $0x1e70] sm:$0xff]
        %v1368 = vld [vmem:[%s209 + $0x1e78] sm:$0xff]
        %v1369 = vld [vmem:[%s209 + $0x1e80] sm:$0xff]
        %v1370 = vld [vmem:[%s209 + $0x1e88] sm:$0xff]
        %v1371 = vld [vmem:[%s209 + $0x1e90] sm:$0xff]
        %v1372 = vld [vmem:[%s209 + $0x1e98] sm:$0xff]
        %v1373 = vld [vmem:[%s209 + $0x1ea0] sm:$0xff]
        %v1374 = vld [vmem:[%s209 + $0x1ea8] sm:$0xff]
        %v1375 = vld [vmem:[%s209 + $0x1eb0] sm:$0xff]
        %v1376 = vld [vmem:[%s209 + $0x1eb8] sm:$0xff]
        %v1377 = vld [vmem:[%s209 + $0x1ec0] sm:$0xff]
        %v1378 = vld [vmem:[%s209 + $0x1ec8] sm:$0xff]
        %v1379 = vld [vmem:[%s209 + $0x1ed0] sm:$0xff]
        %v1380 = vld [vmem:[%s209 + $0x1ed8] sm:$0xff]
        %v1381 = vld [vmem:[%s209 + $0x1ee0] sm:$0xff]
        %v1382 = vld [vmem:[%s209 + $0x1ee8] sm:$0xff]
        %v1383 = vld [vmem:[%s209 + $0x1ef0] sm:$0xff]
        %v1384 = vld [vmem:[%s209 + $0x1ef8] sm:$0xff]
        %v1385 = vld [vmem:[%s209 + $0x1f00] sm:$0xff]
        %v1386 = vld [vmem:[%s209 + $0x1f08] sm:$0xff]
        %v1387 = vld [vmem:[%s209 + $0x1f10] sm:$0xff]
        %v1388 = vld [vmem:[%s209 + $0x1f18] sm:$0xff]
        %v1389 = vld [vmem:[%s209 + $0x1f20] sm:$0xff]
        %v1390 = vld [vmem:[%s209 + $0x1f28] sm:$0xff]
        %v1391 = vld [vmem:[%s209 + $0x1f30] sm:$0xff]
        %v1392 = vld [vmem:[%s209 + $0x1f38] sm:$0xff]
        %v1393 = vld [vmem:[%s209 + $0x1f40] sm:$0xff]
        %v1394 = vld [vmem:[%s209 + $0x1f48] sm:$0xff]
        %v1395 = vld [vmem:[%s209 + $0x1f50] sm:$0xff]
        %v1396 = vld [vmem:[%s209 + $0x1f58] sm:$0xff]
        %v1397 = vld [vmem:[%s209 + $0x1f60] sm:$0xff]
        %v1398 = vld [vmem:[%s209 + $0x1f68] sm:$0xff]
        %v1399 = vld [vmem:[%s209 + $0x1f70] sm:$0xff]
        %v1400 = vld [vmem:[%s209 + $0x1f78] sm:$0xff]
        %v1401 = vld [vmem:[%s209 + $0x1f80] sm:$0xff]
        %v1402 = vld [vmem:[%s209 + $0x1f88] sm:$0xff]
        %v1403 = vld [vmem:[%s209 + $0x1f90] sm:$0xff]
        %v1404 = vld [vmem:[%s209 + $0x1f98] sm:$0xff]
        %v1405 = vld [vmem:[%s209 + $0x1fa0] sm:$0xff]
        %v1406 = vld [vmem:[%s209 + $0x1fa8] sm:$0xff]
        %v1407 = vld [vmem:[%s209 + $0x1fb0] sm:$0xff]
        %v1408 = vld [vmem:[%s209 + $0x1fb8] sm:$0xff]
        %v1409 = vld [vmem:[%s209 + $0x1fc0] sm:$0xff]
        %v1410 = vld [vmem:[%s209 + $0x1fc8] sm:$0xff]
        %v1411 = vld [vmem:[%s209 + $0x1fd0] sm:$0xff]
        %v1412 = vld [vmem:[%s209 + $0x1fd8] sm:$0xff]
        %v1413 = vld [vmem:[%s209 + $0x1fe0] sm:$0xff]
        %v1414 = vld [vmem:[%s209 + $0x1fe8] sm:$0xff]
        %v1415 = vld [vmem:[%s209 + $0x1ff0] sm:$0xff]
        %v1416 = vld [vmem:[%s209 + $0x1ff8] sm:$0xff]
        %v1417 = vld [vmem:[%s209 + $0x2000] sm:$0xff]
        %v1418 = vld [vmem:[%s209 + $0x2008] sm:$0xff]
        %v1419 = vld [vmem:[%s209 + $0x2010] sm:$0xff]
        %v1420 = vld [vmem:[%s209 + $0x2018] sm:$0xff]
        %v1421 = vld [vmem:[%s209 + $0x2020] sm:$0xff]
        %v1422 = vld [vmem:[%s209 + $0x2028] sm:$0xff]
        %v1423 = vld [vmem:[%s209 + $0x2030] sm:$0xff]
        %v1424 = vld [vmem:[%s209 + $0x2038] sm:$0xff]
        %v1425 = vld [vmem:[%s209 + $0x2040] sm:$0xff]
        %v1426 = vld [vmem:[%s209 + $0x2048] sm:$0xff]
        %v1427 = vld [vmem:[%s209 + $0x2050] sm:$0xff]
        %v1428 = vld [vmem:[%s209 + $0x2058] sm:$0xff]
        %v1429 = vld [vmem:[%s209 + $0x2060] sm:$0xff]
        %v1430 = vld [vmem:[%s209 + $0x2068] sm:$0xff]
        %v1431 = vld [vmem:[%s209 + $0x2070] sm:$0xff]
        %v1432 = vld [vmem:[%s209 + $0x2078] sm:$0xff]
        %v1433 = vld [vmem:[%s209 + $0x2080] sm:$0xff]
        %v1434 = vld [vmem:[%s209 + $0x2088] sm:$0xff]
        %v1435 = vld [vmem:[%s209 + $0x2090] sm:$0xff]
        %v1436 = vld [vmem:[%s209 + $0x2098] sm:$0xff]
        %v1437 = vld [vmem:[%s209 + $0x20a0] sm:$0xff]
        %v1438 = vld [vmem:[%s209 + $0x20a8] sm:$0xff]
        %v1439 = vld [vmem:[%s209 + $0x20b0] sm:$0xff]
        %v1440 = vld [vmem:[%s209 + $0x20b8] sm:$0xff]
        %v1441 = vld [vmem:[%s209 + $0x20c0] sm:$0xff]
        %v1442 = vld [vmem:[%s209 + $0x20c8] sm:$0xff]
        %v1443 = vld [vmem:[%s209 + $0x20d0] sm:$0xff]
        %v1444 = vld [vmem:[%s209 + $0x20d8] sm:$0xff]
        %v1445 = vld [vmem:[%s209 + $0x20e0] sm:$0xff]
        %v1446 = vld [vmem:[%s209 + $0x20e8] sm:$0xff]
        %v1447 = vld [vmem:[%s209 + $0x20f0] sm:$0xff]
        %v1448 = vld [vmem:[%s209 + $0x20f8] sm:$0xff]
        %v1449 = vld [vmem:[%s247] sm:$0x3]
        %v1451 = vlaneseq
        %v1452 = vshrl.u32 %v1451, 7
        %v1453 = vsub.s32 0, %v1452
        %v1454 = vrot.slane %v1449, %v1453
        %v1455 = vlaneseq
        %v1456 = vshrl.u32 %v1455, 7
        %v1457 = vsub.s32 1, %v1456
        %v1458 = vrot.slane %v1449, %v1457
        %v1593 = vunpack.c.l.b16 %v261
        %v1594 = vunpack.c.h.b16 %v261
        %v1595 = vunpack.c.l.b16 %v262
        %v1596 = vunpack.c.h.b16 %v262
        %v1597 = vunpack.c.l.b16 %v263
        %v1598 = vunpack.c.h.b16 %v263
        %v1599 = vunpack.c.l.b16 %v264
        %v1600 = vunpack.c.h.b16 %v264
        %v1601 = vunpack.c.l.b16 %v265
        %v1602 = vunpack.c.h.b16 %v265
        %v1603 = vunpack.c.l.b16 %v266
        %v1604 = vunpack.c.h.b16 %v266
        %v1605 = vunpack.c.l.b16 %v267
        %v1606 = vunpack.c.h.b16 %v267
        %v1607 = vunpack.c.l.b16 %v268
        %v1608 = vunpack.c.h.b16 %v268
        %v1609 = vunpack.c.l.b16 %v269
        %v1610 = vunpack.c.h.b16 %v269
        %v1611 = vunpack.c.l.b16 %v270
        %v1612 = vunpack.c.h.b16 %v270
        %v1613 = vunpack.c.l.b16 %v271
        %v1614 = vunpack.c.h.b16 %v271
        %v1615 = vunpack.c.l.b16 %v272
        %v1616 = vunpack.c.h.b16 %v272
        %v1617 = vunpack.c.l.b16 %v273
        %v1618 = vunpack.c.h.b16 %v273
        %v1619 = vunpack.c.l.b16 %v274
        %v1620 = vunpack.c.h.b16 %v274
        %v1621 = vunpack.c.l.b16 %v275
        %v1622 = vunpack.c.h.b16 %v275
        %v1623 = vunpack.c.l.b16 %v276
        %v1624 = vunpack.c.h.b16 %v276
        %v1625 = vunpack.c.l.b16 %v277
        %v1626 = vunpack.c.h.b16 %v277
        %v1627 = vunpack.c.l.b16 %v278
        %v1628 = vunpack.c.h.b16 %v278
        %v1629 = vunpack.c.l.b16 %v279
        %v1630 = vunpack.c.h.b16 %v279
        %v1631 = vunpack.c.l.b16 %v280
        %v1632 = vunpack.c.h.b16 %v280
        %v1633 = vunpack.c.l.b16 %v281
        %v1634 = vunpack.c.h.b16 %v281
        %v1635 = vunpack.c.l.b16 %v282
        %v1636 = vunpack.c.h.b16 %v282
        %v1637 = vunpack.c.l.b16 %v283
        %v1638 = vunpack.c.h.b16 %v283
        %v1639 = vunpack.c.l.b16 %v284
        %v1640 = vunpack.c.h.b16 %v284
        %v1641 = vunpack.c.l.b16 %v285
        %v1642 = vunpack.c.h.b16 %v285
        %v1643 = vunpack.c.l.b16 %v286
        %v1644 = vunpack.c.h.b16 %v286
        %v1645 = vunpack.c.l.b16 %v287
        %v1646 = vunpack.c.h.b16 %v287
        %v1647 = vunpack.c.l.b16 %v288
        %v1648 = vunpack.c.h.b16 %v288
        %v1649 = vunpack.c.l.b16 %v289
        %v1650 = vunpack.c.h.b16 %v289
        %v1651 = vunpack.c.l.b16 %v290
        %v1652 = vunpack.c.h.b16 %v290
        %v1653 = vunpack.c.l.b16 %v291
        %v1654 = vunpack.c.h.b16 %v291
        %v1655 = vunpack.c.l.b16 %v292
        %v1656 = vunpack.c.h.b16 %v292
        %v1657 = vunpack.c.l.b16 %v293
        %v1658 = vunpack.c.h.b16 %v293
        %v1659 = vunpack.c.l.b16 %v294
        %v1660 = vunpack.c.h.b16 %v294
        %v1661 = vunpack.c.l.b16 %v295
        %v1662 = vunpack.c.h.b16 %v295
        %v1663 = vunpack.c.l.b16 %v296
        %v1664 = vunpack.c.h.b16 %v296
        %v1665 = vunpack.c.l.b16 %v297
        %v1666 = vunpack.c.h.b16 %v297
        %v1667 = vunpack.c.l.b16 %v298
        %v1668 = vunpack.c.h.b16 %v298
        %v1669 = vunpack.c.l.b16 %v299
        %v1670 = vunpack.c.h.b16 %v299
        %v1671 = vunpack.c.l.b16 %v300
        %v1672 = vunpack.c.h.b16 %v300
        %v1673 = vunpack.c.l.b16 %v301
        %v1674 = vunpack.c.h.b16 %v301
        %v1675 = vunpack.c.l.b16 %v302
        %v1676 = vunpack.c.h.b16 %v302
        %v1677 = vunpack.c.l.b16 %v303
        %v1678 = vunpack.c.h.b16 %v303
        %v1679 = vunpack.c.l.b16 %v304
        %v1680 = vunpack.c.h.b16 %v304
        %v1681 = vunpack.c.l.b16 %v305
        %v1682 = vunpack.c.h.b16 %v305
        %v1683 = vunpack.c.l.b16 %v306
        %v1684 = vunpack.c.h.b16 %v306
        %v1685 = vunpack.c.l.b16 %v307
        %v1686 = vunpack.c.h.b16 %v307
        %v1687 = vunpack.c.l.b16 %v308
        %v1688 = vunpack.c.h.b16 %v308
        %v1689 = vunpack.c.l.b16 %v309
        %v1690 = vunpack.c.h.b16 %v309
        %v1691 = vunpack.c.l.b16 %v310
        %v1692 = vunpack.c.h.b16 %v310
        %v1693 = vunpack.c.l.b16 %v311
        %v1694 = vunpack.c.h.b16 %v311
        %v1695 = vunpack.c.l.b16 %v312
        %v1696 = vunpack.c.h.b16 %v312
        %v1697 = vunpack.c.l.b16 %v313
        %v1698 = vunpack.c.h.b16 %v313
        %v1699 = vunpack.c.l.b16 %v314
        %v1700 = vunpack.c.h.b16 %v314
        %v1701 = vunpack.c.l.b16 %v315
        %v1702 = vunpack.c.h.b16 %v315
        %v1703 = vunpack.c.l.b16 %v316
        %v1704 = vunpack.c.h.b16 %v316
        %v1705 = vunpack.c.l.b16 %v317
        %v1706 = vunpack.c.h.b16 %v317
        %v1707 = vunpack.c.l.b16 %v318
        %v1708 = vunpack.c.h.b16 %v318
        %v1709 = vunpack.c.l.b16 %v319
        %v1710 = vunpack.c.h.b16 %v319
        %v1711 = vunpack.c.l.b16 %v320
        %v1712 = vunpack.c.h.b16 %v320
        %v1713 = vunpack.c.l.b16 %v321
        %v1714 = vunpack.c.h.b16 %v321
        %v1715 = vunpack.c.l.b16 %v322
        %v1716 = vunpack.c.h.b16 %v322
        %v1717 = vunpack.c.l.b16 %v323
        %v1718 = vunpack.c.h.b16 %v323
        %v1719 = vunpack.c.l.b16 %v324
        %v1720 = vunpack.c.h.b16 %v324
        %v1721 = vunpack.c.l.b16 %v325
        %v1722 = vunpack.c.h.b16 %v325
        %v1723 = vunpack.c.l.b16 %v326
        %v1724 = vunpack.c.h.b16 %v326
        %v1725 = vunpack.c.l.b16 %v327
        %v1726 = vunpack.c.h.b16 %v327
        %v1727 = vunpack.c.l.b16 %v328
        %v1728 = vunpack.c.h.b16 %v328
        %v1729 = vunpack.c.l.b16 %v329
        %v1730 = vunpack.c.h.b16 %v329
        %v1731 = vunpack.c.l.b16 %v330
        %v1732 = vunpack.c.h.b16 %v330
        %v1733 = vunpack.c.l.b16 %v331
        %v1734 = vunpack.c.h.b16 %v331
        %v1735 = vunpack.c.l.b16 %v332
        %v1736 = vunpack.c.h.b16 %v332
        %v1737 = vunpack.c.l.b16 %v333
        %v1738 = vunpack.c.h.b16 %v333
        %v1739 = vunpack.c.l.b16 %v334
        %v1740 = vunpack.c.h.b16 %v334
        %v1741 = vunpack.c.l.b16 %v335
        %v1742 = vunpack.c.h.b16 %v335
        %v1743 = vunpack.c.l.b16 %v336
        %v1744 = vunpack.c.h.b16 %v336
        %v1745 = vunpack.c.l.b16 %v337
        %v1746 = vunpack.c.h.b16 %v337
        %v1747 = vunpack.c.l.b16 %v338
        %v1748 = vunpack.c.h.b16 %v338
        %v1749 = vunpack.c.l.b16 %v339
        %v1750 = vunpack.c.h.b16 %v339
        %v1751 = vunpack.c.l.b16 %v340
        %v1752 = vunpack.c.h.b16 %v340
        %v1753 = vunpack.c.l.b16 %v341
        %v1754 = vunpack.c.h.b16 %v341
        %v1755 = vunpack.c.l.b16 %v342
        %v1756 = vunpack.c.h.b16 %v342
        %v1757 = vunpack.c.l.b16 %v343
        %v1758 = vunpack.c.h.b16 %v343
        %v1759 = vunpack.c.l.b16 %v344
        %v1760 = vunpack.c.h.b16 %v344
        %v1761 = vunpack.c.l.b16 %v345
        %v1762 = vunpack.c.h.b16 %v345
        %v1763 = vunpack.c.l.b16 %v346
        %v1764 = vunpack.c.h.b16 %v346
        %v1765 = vunpack.c.l.b16 %v347
        %v1766 = vunpack.c.h.b16 %v347
        %v1767 = vunpack.c.l.b16 %v348
        %v1768 = vunpack.c.h.b16 %v348
        %v1769 = vunpack.c.l.b16 %v349
        %v1770 = vunpack.c.h.b16 %v349
        %v1771 = vunpack.c.l.b16 %v350
        %v1772 = vunpack.c.h.b16 %v350
        %v1773 = vunpack.c.l.b16 %v351
        %v1774 = vunpack.c.h.b16 %v351
        %v1775 = vunpack.c.l.b16 %v352
        %v1776 = vunpack.c.h.b16 %v352
        %v1777 = vunpack.c.l.b16 %v353
        %v1778 = vunpack.c.h.b16 %v353
        %v1779 = vunpack.c.l.b16 %v354
        %v1780 = vunpack.c.h.b16 %v354
        %v1781 = vunpack.c.l.b16 %v355
        %v1782 = vunpack.c.h.b16 %v355
        %v1783 = vunpack.c.l.b16 %v356
        %v1784 = vunpack.c.h.b16 %v356
        %v1785 = vunpack.c.l.b16 %v357
        %v1786 = vunpack.c.h.b16 %v357
        %v1787 = vunpack.c.l.b16 %v358
        %v1788 = vunpack.c.h.b16 %v358
        %v1789 = vunpack.c.l.b16 %v359
        %v1790 = vunpack.c.h.b16 %v359
        %v1791 = vunpack.c.l.b16 %v360
        %v1792 = vunpack.c.h.b16 %v360
        %v1793 = vunpack.c.l.b16 %v361
        %v1794 = vunpack.c.h.b16 %v361
        %v1795 = vunpack.c.l.b16 %v362
        %v1796 = vunpack.c.h.b16 %v362
        %v1797 = vunpack.c.l.b16 %v363
        %v1798 = vunpack.c.h.b16 %v363
        %v1799 = vunpack.c.l.b16 %v364
        %v1800 = vunpack.c.h.b16 %v364
        %v1801 = vunpack.c.l.b16 %v365
        %v1802 = vunpack.c.h.b16 %v365
        %v1803 = vunpack.c.l.b16 %v366
        %v1804 = vunpack.c.h.b16 %v366
        %v1805 = vunpack.c.l.b16 %v367
        %v1806 = vunpack.c.h.b16 %v367
        %v1807 = vunpack.c.l.b16 %v368
        %v1808 = vunpack.c.h.b16 %v368
        %v1809 = vunpack.c.l.b16 %v369
        %v1810 = vunpack.c.h.b16 %v369
        %v1811 = vunpack.c.l.b16 %v370
        %v1812 = vunpack.c.h.b16 %v370
        %v1813 = vunpack.c.l.b16 %v371
        %v1814 = vunpack.c.h.b16 %v371
        %v1815 = vunpack.c.l.b16 %v372
        %v1816 = vunpack.c.h.b16 %v372
        %v1817 = vunpack.c.l.b16 %v373
        %v1818 = vunpack.c.h.b16 %v373
        %v1819 = vunpack.c.l.b16 %v374
        %v1820 = vunpack.c.h.b16 %v374
        %v1821 = vunpack.c.l.b16 %v375
        %v1822 = vunpack.c.h.b16 %v375
        %v1823 = vunpack.c.l.b16 %v376
        %v1824 = vunpack.c.h.b16 %v376
        %v1825 = vunpack.c.l.b16 %v377
        %v1826 = vunpack.c.h.b16 %v377
        %v1827 = vunpack.c.l.b16 %v378
        %v1828 = vunpack.c.h.b16 %v378
        %v1829 = vunpack.c.l.b16 %v379
        %v1830 = vunpack.c.h.b16 %v379
        %v1831 = vunpack.c.l.b16 %v380
        %v1832 = vunpack.c.h.b16 %v380
        %v1833 = vunpack.c.l.b16 %v381
        %v1834 = vunpack.c.h.b16 %v381
        %v1835 = vunpack.c.l.b16 %v382
        %v1836 = vunpack.c.h.b16 %v382
        %v1837 = vunpack.c.l.b16 %v383
        %v1838 = vunpack.c.h.b16 %v383
        %v1839 = vunpack.c.l.b16 %v384
        %v1840 = vunpack.c.h.b16 %v384
        %v1841 = vunpack.c.l.b16 %v385
        %v1842 = vunpack.c.h.b16 %v385
        %v1843 = vunpack.c.l.b16 %v386
        %v1844 = vunpack.c.h.b16 %v386
        %v1845 = vunpack.c.l.b16 %v387
        %v1846 = vunpack.c.h.b16 %v387
        %v1847 = vunpack.c.l.b16 %v388
        %v1848 = vunpack.c.h.b16 %v388
        %v1849 = vunpack.c.l.b16 %v389
        %v1850 = vunpack.c.h.b16 %v389
        %v1851 = vunpack.c.l.b16 %v390
        %v1852 = vunpack.c.h.b16 %v390
        %v1853 = vunpack.c.l.b16 %v391
        %v1854 = vunpack.c.h.b16 %v391
        %v1855 = vunpack.c.l.b16 %v392
        %v1856 = vunpack.c.h.b16 %v392
        %v1857 = vpack.c.b16 %v1659, %v1593
        %v1858 = vpack.c.b16 %v1660, %v1594
        %v1859 = vpack.c.b16 %v1661, %v1595
        %v1860 = vpack.c.b16 %v1662, %v1596
        %v1861 = vpack.c.b16 %v1663, %v1597
        %v1862 = vpack.c.b16 %v1664, %v1598
        %v1863 = vpack.c.b16 %v1665, %v1599
        %v1864 = vpack.c.b16 %v1666, %v1600
        %v1865 = vpack.c.b16 %v1667, %v1601
        %v1866 = vpack.c.b16 %v1668, %v1602
        %v1867 = vpack.c.b16 %v1669, %v1603
        %v1868 = vpack.c.b16 %v1670, %v1604
        %v1869 = vpack.c.b16 %v1671, %v1605
        %v1870 = vpack.c.b16 %v1672, %v1606
        %v1871 = vpack.c.b16 %v1673, %v1607
        %v1872 = vpack.c.b16 %v1674, %v1608
        %v1873 = vpack.c.b16 %v1675, %v1609
        %v1874 = vpack.c.b16 %v1676, %v1610
        %v1875 = vpack.c.b16 %v1677, %v1611
        %v1876 = vpack.c.b16 %v1678, %v1612
        %v1877 = vpack.c.b16 %v1679, %v1613
        %v1878 = vpack.c.b16 %v1680, %v1614
        %v1879 = vpack.c.b16 %v1681, %v1615
        %v1880 = vpack.c.b16 %v1682, %v1616
        %v1881 = vpack.c.b16 %v1683, %v1617
        %v1882 = vpack.c.b16 %v1684, %v1618
        %v1883 = vpack.c.b16 %v1685, %v1619
        %v1884 = vpack.c.b16 %v1686, %v1620
        %v1885 = vpack.c.b16 %v1687, %v1621
        %v1886 = vpack.c.b16 %v1688, %v1622
        %v1887 = vpack.c.b16 %v1689, %v1623
        %v1888 = vpack.c.b16 %v1690, %v1624
        %v1889 = vpack.c.b16 %v1691, %v1625
        %v1890 = vpack.c.b16 %v1692, %v1626
        %v1891 = vpack.c.b16 %v1693, %v1627
        %v1892 = vpack.c.b16 %v1694, %v1628
        %v1893 = vpack.c.b16 %v1695, %v1629
        %v1894 = vpack.c.b16 %v1696, %v1630
        %v1895 = vpack.c.b16 %v1697, %v1631
        %v1896 = vpack.c.b16 %v1698, %v1632
        %v1897 = vpack.c.b16 %v1699, %v1633
        %v1898 = vpack.c.b16 %v1700, %v1634
        %v1899 = vpack.c.b16 %v1701, %v1635
        %v1900 = vpack.c.b16 %v1702, %v1636
        %v1901 = vpack.c.b16 %v1703, %v1637
        %v1902 = vpack.c.b16 %v1704, %v1638
        %v1903 = vpack.c.b16 %v1705, %v1639
        %v1904 = vpack.c.b16 %v1706, %v1640
        %v1905 = vpack.c.b16 %v1707, %v1641
        %v1906 = vpack.c.b16 %v1708, %v1642
        %v1907 = vpack.c.b16 %v1709, %v1643
        %v1908 = vpack.c.b16 %v1710, %v1644
        %v1909 = vpack.c.b16 %v1711, %v1645
        %v1910 = vpack.c.b16 %v1712, %v1646
        %v1911 = vpack.c.b16 %v1713, %v1647
        %v1912 = vpack.c.b16 %v1714, %v1648
        %v1913 = vpack.c.b16 %v1715, %v1649
        %v1914 = vpack.c.b16 %v1716, %v1650
        %v1915 = vpack.c.b16 %v1717, %v1651
        %v1916 = vpack.c.b16 %v1718, %v1652
        %v1917 = vpack.c.b16 %v1719, %v1653
        %v1918 = vpack.c.b16 %v1720, %v1654
        %v1919 = vpack.c.b16 %v1721, %v1655
        %v1920 = vpack.c.b16 %v1722, %v1656
        %v1921 = vpack.c.b16 %v1723, %v1657
        %v1922 = vpack.c.b16 %v1724, %v1658
        %v1923 = vpack.c.b16 %v1791, %v1725
        %v1924 = vpack.c.b16 %v1792, %v1726
        %v1925 = vpack.c.b16 %v1793, %v1727
        %v1926 = vpack.c.b16 %v1794, %v1728
        %v1927 = vpack.c.b16 %v1795, %v1729
        %v1928 = vpack.c.b16 %v1796, %v1730
        %v1929 = vpack.c.b16 %v1797, %v1731
        %v1930 = vpack.c.b16 %v1798, %v1732
        %v1931 = vpack.c.b16 %v1799, %v1733
        %v1932 = vpack.c.b16 %v1800, %v1734
        %v1933 = vpack.c.b16 %v1801, %v1735
        %v1934 = vpack.c.b16 %v1802, %v1736
        %v1935 = vpack.c.b16 %v1803, %v1737
        %v1936 = vpack.c.b16 %v1804, %v1738
        %v1937 = vpack.c.b16 %v1805, %v1739
        %v1938 = vpack.c.b16 %v1806, %v1740
        %v1939 = vpack.c.b16 %v1807, %v1741
        %v1940 = vpack.c.b16 %v1808, %v1742
        %v1941 = vpack.c.b16 %v1809, %v1743
        %v1942 = vpack.c.b16 %v1810, %v1744
        %v1943 = vpack.c.b16 %v1811, %v1745
        %v1944 = vpack.c.b16 %v1812, %v1746
        %v1945 = vpack.c.b16 %v1813, %v1747
        %v1946 = vpack.c.b16 %v1814, %v1748
        %v1947 = vpack.c.b16 %v1815, %v1749
        %v1948 = vpack.c.b16 %v1816, %v1750
        %v1949 = vpack.c.b16 %v1817, %v1751
        %v1950 = vpack.c.b16 %v1818, %v1752
        %v1951 = vpack.c.b16 %v1819, %v1753
        %v1952 = vpack.c.b16 %v1820, %v1754
        %v1953 = vpack.c.b16 %v1821, %v1755
        %v1954 = vpack.c.b16 %v1822, %v1756
        %v1955 = vpack.c.b16 %v1823, %v1757
        %v1956 = vpack.c.b16 %v1824, %v1758
        %v1957 = vpack.c.b16 %v1825, %v1759
        %v1958 = vpack.c.b16 %v1826, %v1760
        %v1959 = vpack.c.b16 %v1827, %v1761
        %v1960 = vpack.c.b16 %v1828, %v1762
        %v1961 = vpack.c.b16 %v1829, %v1763
        %v1962 = vpack.c.b16 %v1830, %v1764
        %v1963 = vpack.c.b16 %v1831, %v1765
        %v1964 = vpack.c.b16 %v1832, %v1766
        %v1965 = vpack.c.b16 %v1833, %v1767
        %v1966 = vpack.c.b16 %v1834, %v1768
        %v1967 = vpack.c.b16 %v1835, %v1769
        %v1968 = vpack.c.b16 %v1836, %v1770
        %v1969 = vpack.c.b16 %v1837, %v1771
        %v1970 = vpack.c.b16 %v1838, %v1772
        %v1971 = vpack.c.b16 %v1839, %v1773
        %v1972 = vpack.c.b16 %v1840, %v1774
        %v1973 = vpack.c.b16 %v1841, %v1775
        %v1974 = vpack.c.b16 %v1842, %v1776
        %v1975 = vpack.c.b16 %v1843, %v1777
        %v1976 = vpack.c.b16 %v1844, %v1778
        %v1977 = vpack.c.b16 %v1845, %v1779
        %v1978 = vpack.c.b16 %v1846, %v1780
        %v1979 = vpack.c.b16 %v1847, %v1781
        %v1980 = vpack.c.b16 %v1848, %v1782
        %v1981 = vpack.c.b16 %v1849, %v1783
        %v1982 = vpack.c.b16 %v1850, %v1784
        %v1983 = vpack.c.b16 %v1851, %v1785
        %v1984 = vpack.c.b16 %v1852, %v1786
        %v1985 = vpack.c.b16 %v1853, %v1787
        %v1986 = vpack.c.b16 %v1854, %v1788
        %v1987 = vpack.c.b16 %v1855, %v1789
        %v1988 = vpack.c.b16 %v1856, %v1790
        %v3177 = vunpack.c.l.b16 %v393
        %v3178 = vunpack.c.h.b16 %v393
        %v3179 = vunpack.c.l.b16 %v394
        %v3180 = vunpack.c.h.b16 %v394
        %v3181 = vunpack.c.l.b16 %v395
        %v3182 = vunpack.c.h.b16 %v395
        %v3183 = vunpack.c.l.b16 %v396
        %v3184 = vunpack.c.h.b16 %v396
        %v3185 = vunpack.c.l.b16 %v397
        %v3186 = vunpack.c.h.b16 %v397
        %v3187 = vunpack.c.l.b16 %v398
        %v3188 = vunpack.c.h.b16 %v398
        %v3189 = vunpack.c.l.b16 %v399
        %v3190 = vunpack.c.h.b16 %v399
        %v3191 = vunpack.c.l.b16 %v400
        %v3192 = vunpack.c.h.b16 %v400
        %v3193 = vunpack.c.l.b16 %v401
        %v3194 = vunpack.c.h.b16 %v401
        %v3195 = vunpack.c.l.b16 %v402
        %v3196 = vunpack.c.h.b16 %v402
        %v3197 = vunpack.c.l.b16 %v403
        %v3198 = vunpack.c.h.b16 %v403
        %v3199 = vunpack.c.l.b16 %v404
        %v3200 = vunpack.c.h.b16 %v404
        %v3201 = vunpack.c.l.b16 %v405
        %v3202 = vunpack.c.h.b16 %v405
        %v3203 = vunpack.c.l.b16 %v406
        %v3204 = vunpack.c.h.b16 %v406
        %v3205 = vunpack.c.l.b16 %v407
        %v3206 = vunpack.c.h.b16 %v407
        %v3207 = vunpack.c.l.b16 %v408
        %v3208 = vunpack.c.h.b16 %v408
        %v3209 = vunpack.c.l.b16 %v409
        %v3210 = vunpack.c.h.b16 %v409
        %v3211 = vunpack.c.l.b16 %v410
        %v3212 = vunpack.c.h.b16 %v410
        %v3213 = vunpack.c.l.b16 %v411
        %v3214 = vunpack.c.h.b16 %v411
        %v3215 = vunpack.c.l.b16 %v412
        %v3216 = vunpack.c.h.b16 %v412
        %v3217 = vunpack.c.l.b16 %v413
        %v3218 = vunpack.c.h.b16 %v413
        %v3219 = vunpack.c.l.b16 %v414
        %v3220 = vunpack.c.h.b16 %v414
        %v3221 = vunpack.c.l.b16 %v415
        %v3222 = vunpack.c.h.b16 %v415
        %v3223 = vunpack.c.l.b16 %v416
        %v3224 = vunpack.c.h.b16 %v416
        %v3225 = vunpack.c.l.b16 %v417
        %v3226 = vunpack.c.h.b16 %v417
        %v3227 = vunpack.c.l.b16 %v418
        %v3228 = vunpack.c.h.b16 %v418
        %v3229 = vunpack.c.l.b16 %v419
        %v3230 = vunpack.c.h.b16 %v419
        %v3231 = vunpack.c.l.b16 %v420
        %v3232 = vunpack.c.h.b16 %v420
        %v3233 = vunpack.c.l.b16 %v421
        %v3234 = vunpack.c.h.b16 %v421
        %v3235 = vunpack.c.l.b16 %v422
        %v3236 = vunpack.c.h.b16 %v422
        %v3237 = vunpack.c.l.b16 %v423
        %v3238 = vunpack.c.h.b16 %v423
        %v3239 = vunpack.c.l.b16 %v424
        %v3240 = vunpack.c.h.b16 %v424
        %v3241 = vunpack.c.l.b16 %v425
        %v3242 = vunpack.c.h.b16 %v425
        %v3243 = vunpack.c.l.b16 %v426
        %v3244 = vunpack.c.h.b16 %v426
        %v3245 = vunpack.c.l.b16 %v427
        %v3246 = vunpack.c.h.b16 %v427
        %v3247 = vunpack.c.l.b16 %v428
        %v3248 = vunpack.c.h.b16 %v428
        %v3249 = vunpack.c.l.b16 %v429
        %v3250 = vunpack.c.h.b16 %v429
        %v3251 = vunpack.c.l.b16 %v430
        %v3252 = vunpack.c.h.b16 %v430
        %v3253 = vunpack.c.l.b16 %v431
        %v3254 = vunpack.c.h.b16 %v431
        %v3255 = vunpack.c.l.b16 %v432
        %v3256 = vunpack.c.h.b16 %v432
        %v3257 = vunpack.c.l.b16 %v433
        %v3258 = vunpack.c.h.b16 %v433
        %v3259 = vunpack.c.l.b16 %v434
        %v3260 = vunpack.c.h.b16 %v434
        %v3261 = vunpack.c.l.b16 %v435
        %v3262 = vunpack.c.h.b16 %v435
        %v3263 = vunpack.c.l.b16 %v436
        %v3264 = vunpack.c.h.b16 %v436
        %v3265 = vunpack.c.l.b16 %v437
        %v3266 = vunpack.c.h.b16 %v437
        %v3267 = vunpack.c.l.b16 %v438
        %v3268 = vunpack.c.h.b16 %v438
        %v3269 = vunpack.c.l.b16 %v439
        %v3270 = vunpack.c.h.b16 %v439
        %v3271 = vunpack.c.l.b16 %v440
        %v3272 = vunpack.c.h.b16 %v440
        %v3273 = vunpack.c.l.b16 %v441
        %v3274 = vunpack.c.h.b16 %v441
        %v3275 = vunpack.c.l.b16 %v442
        %v3276 = vunpack.c.h.b16 %v442
        %v3277 = vunpack.c.l.b16 %v443
        %v3278 = vunpack.c.h.b16 %v443
        %v3279 = vunpack.c.l.b16 %v444
        %v3280 = vunpack.c.h.b16 %v444
        %v3281 = vunpack.c.l.b16 %v445
        %v3282 = vunpack.c.h.b16 %v445
        %v3283 = vunpack.c.l.b16 %v446
        %v3284 = vunpack.c.h.b16 %v446
        %v3285 = vunpack.c.l.b16 %v447
        %v3286 = vunpack.c.h.b16 %v447
        %v3287 = vunpack.c.l.b16 %v448
        %v3288 = vunpack.c.h.b16 %v448
        %v3289 = vunpack.c.l.b16 %v449
        %v3290 = vunpack.c.h.b16 %v449
        %v3291 = vunpack.c.l.b16 %v450
        %v3292 = vunpack.c.h.b16 %v450
        %v3293 = vunpack.c.l.b16 %v451
        %v3294 = vunpack.c.h.b16 %v451
        %v3295 = vunpack.c.l.b16 %v452
        %v3296 = vunpack.c.h.b16 %v452
        %v3297 = vunpack.c.l.b16 %v453
        %v3298 = vunpack.c.h.b16 %v453
        %v3299 = vunpack.c.l.b16 %v454
        %v3300 = vunpack.c.h.b16 %v454
        %v3301 = vunpack.c.l.b16 %v455
        %v3302 = vunpack.c.h.b16 %v455
        %v3303 = vunpack.c.l.b16 %v456
        %v3304 = vunpack.c.h.b16 %v456
        %v3305 = vunpack.c.l.b16 %v457
        %v3306 = vunpack.c.h.b16 %v457
        %v3307 = vunpack.c.l.b16 %v458
        %v3308 = vunpack.c.h.b16 %v458
        %v3309 = vunpack.c.l.b16 %v459
        %v3310 = vunpack.c.h.b16 %v459
        %v3311 = vunpack.c.l.b16 %v460
        %v3312 = vunpack.c.h.b16 %v460
        %v3313 = vunpack.c.l.b16 %v461
        %v3314 = vunpack.c.h.b16 %v461
        %v3315 = vunpack.c.l.b16 %v462
        %v3316 = vunpack.c.h.b16 %v462
        %v3317 = vunpack.c.l.b16 %v463
        %v3318 = vunpack.c.h.b16 %v463
        %v3319 = vunpack.c.l.b16 %v464
        %v3320 = vunpack.c.h.b16 %v464
        %v3321 = vunpack.c.l.b16 %v465
        %v3322 = vunpack.c.h.b16 %v465
        %v3323 = vunpack.c.l.b16 %v466
        %v3324 = vunpack.c.h.b16 %v466
        %v3325 = vunpack.c.l.b16 %v467
        %v3326 = vunpack.c.h.b16 %v467
        %v3327 = vunpack.c.l.b16 %v468
        %v3328 = vunpack.c.h.b16 %v468
        %v3329 = vunpack.c.l.b16 %v469
        %v3330 = vunpack.c.h.b16 %v469
        %v3331 = vunpack.c.l.b16 %v470
        %v3332 = vunpack.c.h.b16 %v470
        %v3333 = vunpack.c.l.b16 %v471
        %v3334 = vunpack.c.h.b16 %v471
        %v3335 = vunpack.c.l.b16 %v472
        %v3336 = vunpack.c.h.b16 %v472
        %v3337 = vunpack.c.l.b16 %v473
        %v3338 = vunpack.c.h.b16 %v473
        %v3339 = vunpack.c.l.b16 %v474
        %v3340 = vunpack.c.h.b16 %v474
        %v3341 = vunpack.c.l.b16 %v475
        %v3342 = vunpack.c.h.b16 %v475
        %v3343 = vunpack.c.l.b16 %v476
        %v3344 = vunpack.c.h.b16 %v476
        %v3345 = vunpack.c.l.b16 %v477
        %v3346 = vunpack.c.h.b16 %v477
        %v3347 = vunpack.c.l.b16 %v478
        %v3348 = vunpack.c.h.b16 %v478
        %v3349 = vunpack.c.l.b16 %v479
        %v3350 = vunpack.c.h.b16 %v479
        %v3351 = vunpack.c.l.b16 %v480
        %v3352 = vunpack.c.h.b16 %v480
        %v3353 = vunpack.c.l.b16 %v481
        %v3354 = vunpack.c.h.b16 %v481
        %v3355 = vunpack.c.l.b16 %v482
        %v3356 = vunpack.c.h.b16 %v482
        %v3357 = vunpack.c.l.b16 %v483
        %v3358 = vunpack.c.h.b16 %v483
        %v3359 = vunpack.c.l.b16 %v484
        %v3360 = vunpack.c.h.b16 %v484
        %v3361 = vunpack.c.l.b16 %v485
        %v3362 = vunpack.c.h.b16 %v485
        %v3363 = vunpack.c.l.b16 %v486
        %v3364 = vunpack.c.h.b16 %v486
        %v3365 = vunpack.c.l.b16 %v487
        %v3366 = vunpack.c.h.b16 %v487
        %v3367 = vunpack.c.l.b16 %v488
        %v3368 = vunpack.c.h.b16 %v488
        %v3369 = vunpack.c.l.b16 %v489
        %v3370 = vunpack.c.h.b16 %v489
        %v3371 = vunpack.c.l.b16 %v490
        %v3372 = vunpack.c.h.b16 %v490
        %v3373 = vunpack.c.l.b16 %v491
        %v3374 = vunpack.c.h.b16 %v491
        %v3375 = vunpack.c.l.b16 %v492
        %v3376 = vunpack.c.h.b16 %v492
        %v3377 = vunpack.c.l.b16 %v493
        %v3378 = vunpack.c.h.b16 %v493
        %v3379 = vunpack.c.l.b16 %v494
        %v3380 = vunpack.c.h.b16 %v494
        %v3381 = vunpack.c.l.b16 %v495
        %v3382 = vunpack.c.h.b16 %v495
        %v3383 = vunpack.c.l.b16 %v496
        %v3384 = vunpack.c.h.b16 %v496
        %v3385 = vunpack.c.l.b16 %v497
        %v3386 = vunpack.c.h.b16 %v497
        %v3387 = vunpack.c.l.b16 %v498
        %v3388 = vunpack.c.h.b16 %v498
        %v3389 = vunpack.c.l.b16 %v499
        %v3390 = vunpack.c.h.b16 %v499
        %v3391 = vunpack.c.l.b16 %v500
        %v3392 = vunpack.c.h.b16 %v500
        %v3393 = vunpack.c.l.b16 %v501
        %v3394 = vunpack.c.h.b16 %v501
        %v3395 = vunpack.c.l.b16 %v502
        %v3396 = vunpack.c.h.b16 %v502
        %v3397 = vunpack.c.l.b16 %v503
        %v3398 = vunpack.c.h.b16 %v503
        %v3399 = vunpack.c.l.b16 %v504
        %v3400 = vunpack.c.h.b16 %v504
        %v3401 = vunpack.c.l.b16 %v505
        %v3402 = vunpack.c.h.b16 %v505
        %v3403 = vunpack.c.l.b16 %v506
        %v3404 = vunpack.c.h.b16 %v506
        %v3405 = vunpack.c.l.b16 %v507
        %v3406 = vunpack.c.h.b16 %v507
        %v3407 = vunpack.c.l.b16 %v508
        %v3408 = vunpack.c.h.b16 %v508
        %v3409 = vunpack.c.l.b16 %v509
        %v3410 = vunpack.c.h.b16 %v509
        %v3411 = vunpack.c.l.b16 %v510
        %v3412 = vunpack.c.h.b16 %v510
        %v3413 = vunpack.c.l.b16 %v511
        %v3414 = vunpack.c.h.b16 %v511
        %v3415 = vunpack.c.l.b16 %v512
        %v3416 = vunpack.c.h.b16 %v512
        %v3417 = vunpack.c.l.b16 %v513
        %v3418 = vunpack.c.h.b16 %v513
        %v3419 = vunpack.c.l.b16 %v514
        %v3420 = vunpack.c.h.b16 %v514
        %v3421 = vunpack.c.l.b16 %v515
        %v3422 = vunpack.c.h.b16 %v515
        %v3423 = vunpack.c.l.b16 %v516
        %v3424 = vunpack.c.h.b16 %v516
        %v3425 = vunpack.c.l.b16 %v517
        %v3426 = vunpack.c.h.b16 %v517
        %v3427 = vunpack.c.l.b16 %v518
        %v3428 = vunpack.c.h.b16 %v518
        %v3429 = vunpack.c.l.b16 %v519
        %v3430 = vunpack.c.h.b16 %v519
        %v3431 = vunpack.c.l.b16 %v520
        %v3432 = vunpack.c.h.b16 %v520
        %v3433 = vunpack.c.l.b16 %v521
        %v3434 = vunpack.c.h.b16 %v521
        %v3435 = vunpack.c.l.b16 %v522
        %v3436 = vunpack.c.h.b16 %v522
        %v3437 = vunpack.c.l.b16 %v523
        %v3438 = vunpack.c.h.b16 %v523
        %v3439 = vunpack.c.l.b16 %v524
        %v3440 = vunpack.c.h.b16 %v524
        %v3441 = vunpack.c.l.b16 %v525
        %v3442 = vunpack.c.h.b16 %v525
        %v3443 = vunpack.c.l.b16 %v526
        %v3444 = vunpack.c.h.b16 %v526
        %v3445 = vunpack.c.l.b16 %v527
        %v3446 = vunpack.c.h.b16 %v527
        %v3447 = vunpack.c.l.b16 %v528
        %v3448 = vunpack.c.h.b16 %v528
        %v3449 = vunpack.c.l.b16 %v529
        %v3450 = vunpack.c.h.b16 %v529
        %v3451 = vunpack.c.l.b16 %v530
        %v3452 = vunpack.c.h.b16 %v530
        %v3453 = vunpack.c.l.b16 %v531
        %v3454 = vunpack.c.h.b16 %v531
        %v3455 = vunpack.c.l.b16 %v532
        %v3456 = vunpack.c.h.b16 %v532
        %v3457 = vunpack.c.l.b16 %v533
        %v3458 = vunpack.c.h.b16 %v533
        %v3459 = vunpack.c.l.b16 %v534
        %v3460 = vunpack.c.h.b16 %v534
        %v3461 = vunpack.c.l.b16 %v535
        %v3462 = vunpack.c.h.b16 %v535
        %v3463 = vunpack.c.l.b16 %v536
        %v3464 = vunpack.c.h.b16 %v536
        %v3465 = vunpack.c.l.b16 %v537
        %v3466 = vunpack.c.h.b16 %v537
        %v3467 = vunpack.c.l.b16 %v538
        %v3468 = vunpack.c.h.b16 %v538
        %v3469 = vunpack.c.l.b16 %v539
        %v3470 = vunpack.c.h.b16 %v539
        %v3471 = vunpack.c.l.b16 %v540
        %v3472 = vunpack.c.h.b16 %v540
        %v3473 = vunpack.c.l.b16 %v541
        %v3474 = vunpack.c.h.b16 %v541
        %v3475 = vunpack.c.l.b16 %v542
        %v3476 = vunpack.c.h.b16 %v542
        %v3477 = vunpack.c.l.b16 %v543
        %v3478 = vunpack.c.h.b16 %v543
        %v3479 = vunpack.c.l.b16 %v544
        %v3480 = vunpack.c.h.b16 %v544
        %v3481 = vunpack.c.l.b16 %v545
        %v3482 = vunpack.c.h.b16 %v545
        %v3483 = vunpack.c.l.b16 %v546
        %v3484 = vunpack.c.h.b16 %v546
        %v3485 = vunpack.c.l.b16 %v547
        %v3486 = vunpack.c.h.b16 %v547
        %v3487 = vunpack.c.l.b16 %v548
        %v3488 = vunpack.c.h.b16 %v548
        %v3489 = vunpack.c.l.b16 %v549
        %v3490 = vunpack.c.h.b16 %v549
        %v3491 = vunpack.c.l.b16 %v550
        %v3492 = vunpack.c.h.b16 %v550
        %v3493 = vunpack.c.l.b16 %v551
        %v3494 = vunpack.c.h.b16 %v551
        %v3495 = vunpack.c.l.b16 %v552
        %v3496 = vunpack.c.h.b16 %v552
        %v3497 = vunpack.c.l.b16 %v553
        %v3498 = vunpack.c.h.b16 %v553
        %v3499 = vunpack.c.l.b16 %v554
        %v3500 = vunpack.c.h.b16 %v554
        %v3501 = vunpack.c.l.b16 %v555
        %v3502 = vunpack.c.h.b16 %v555
        %v3503 = vunpack.c.l.b16 %v556
        %v3504 = vunpack.c.h.b16 %v556
        %v3505 = vunpack.c.l.b16 %v557
        %v3506 = vunpack.c.h.b16 %v557
        %v3507 = vunpack.c.l.b16 %v558
        %v3508 = vunpack.c.h.b16 %v558
        %v3509 = vunpack.c.l.b16 %v559
        %v3510 = vunpack.c.h.b16 %v559
        %v3511 = vunpack.c.l.b16 %v560
        %v3512 = vunpack.c.h.b16 %v560
        %v3513 = vunpack.c.l.b16 %v561
        %v3514 = vunpack.c.h.b16 %v561
        %v3515 = vunpack.c.l.b16 %v562
        %v3516 = vunpack.c.h.b16 %v562
        %v3517 = vunpack.c.l.b16 %v563
        %v3518 = vunpack.c.h.b16 %v563
        %v3519 = vunpack.c.l.b16 %v564
        %v3520 = vunpack.c.h.b16 %v564
        %v3521 = vunpack.c.l.b16 %v565
        %v3522 = vunpack.c.h.b16 %v565
        %v3523 = vunpack.c.l.b16 %v566
        %v3524 = vunpack.c.h.b16 %v566
        %v3525 = vunpack.c.l.b16 %v567
        %v3526 = vunpack.c.h.b16 %v567
        %v3527 = vunpack.c.l.b16 %v568
        %v3528 = vunpack.c.h.b16 %v568
        %v3529 = vunpack.c.l.b16 %v569
        %v3530 = vunpack.c.h.b16 %v569
        %v3531 = vunpack.c.l.b16 %v570
        %v3532 = vunpack.c.h.b16 %v570
        %v3533 = vunpack.c.l.b16 %v571
        %v3534 = vunpack.c.h.b16 %v571
        %v3535 = vunpack.c.l.b16 %v572
        %v3536 = vunpack.c.h.b16 %v572
        %v3537 = vunpack.c.l.b16 %v573
        %v3538 = vunpack.c.h.b16 %v573
        %v3539 = vunpack.c.l.b16 %v574
        %v3540 = vunpack.c.h.b16 %v574
        %v3541 = vunpack.c.l.b16 %v575
        %v3542 = vunpack.c.h.b16 %v575
        %v3543 = vunpack.c.l.b16 %v576
        %v3544 = vunpack.c.h.b16 %v576
        %v3545 = vunpack.c.l.b16 %v577
        %v3546 = vunpack.c.h.b16 %v577
        %v3547 = vunpack.c.l.b16 %v578
        %v3548 = vunpack.c.h.b16 %v578
        %v3549 = vunpack.c.l.b16 %v579
        %v3550 = vunpack.c.h.b16 %v579
        %v3551 = vunpack.c.l.b16 %v580
        %v3552 = vunpack.c.h.b16 %v580
        %v3553 = vunpack.c.l.b16 %v581
        %v3554 = vunpack.c.h.b16 %v581
        %v3555 = vunpack.c.l.b16 %v582
        %v3556 = vunpack.c.h.b16 %v582
        %v3557 = vunpack.c.l.b16 %v583
        %v3558 = vunpack.c.h.b16 %v583
        %v3559 = vunpack.c.l.b16 %v584
        %v3560 = vunpack.c.h.b16 %v584
        %v3561 = vunpack.c.l.b16 %v585
        %v3562 = vunpack.c.h.b16 %v585
        %v3563 = vunpack.c.l.b16 %v586
        %v3564 = vunpack.c.h.b16 %v586
        %v3565 = vunpack.c.l.b16 %v587
        %v3566 = vunpack.c.h.b16 %v587
        %v3567 = vunpack.c.l.b16 %v588
        %v3568 = vunpack.c.h.b16 %v588
        %v3569 = vunpack.c.l.b16 %v589
        %v3570 = vunpack.c.h.b16 %v589
        %v3571 = vunpack.c.l.b16 %v590
        %v3572 = vunpack.c.h.b16 %v590
        %v3573 = vunpack.c.l.b16 %v591
        %v3574 = vunpack.c.h.b16 %v591
        %v3575 = vunpack.c.l.b16 %v592
        %v3576 = vunpack.c.h.b16 %v592
        %v3577 = vunpack.c.l.b16 %v593
        %v3578 = vunpack.c.h.b16 %v593
        %v3579 = vunpack.c.l.b16 %v594
        %v3580 = vunpack.c.h.b16 %v594
        %v3581 = vunpack.c.l.b16 %v595
        %v3582 = vunpack.c.h.b16 %v595
        %v3583 = vunpack.c.l.b16 %v596
        %v3584 = vunpack.c.h.b16 %v596
        %v3585 = vunpack.c.l.b16 %v597
        %v3586 = vunpack.c.h.b16 %v597
        %v3587 = vunpack.c.l.b16 %v598
        %v3588 = vunpack.c.h.b16 %v598
        %v3589 = vunpack.c.l.b16 %v599
        %v3590 = vunpack.c.h.b16 %v599
        %v3591 = vunpack.c.l.b16 %v600
        %v3592 = vunpack.c.h.b16 %v600
        %v3593 = vunpack.c.l.b16 %v601
        %v3594 = vunpack.c.h.b16 %v601
        %v3595 = vunpack.c.l.b16 %v602
        %v3596 = vunpack.c.h.b16 %v602
        %v3597 = vunpack.c.l.b16 %v603
        %v3598 = vunpack.c.h.b16 %v603
        %v3599 = vunpack.c.l.b16 %v604
        %v3600 = vunpack.c.h.b16 %v604
        %v3601 = vunpack.c.l.b16 %v605
        %v3602 = vunpack.c.h.b16 %v605
        %v3603 = vunpack.c.l.b16 %v606
        %v3604 = vunpack.c.h.b16 %v606
        %v3605 = vunpack.c.l.b16 %v607
        %v3606 = vunpack.c.h.b16 %v607
        %v3607 = vunpack.c.l.b16 %v608
        %v3608 = vunpack.c.h.b16 %v608
        %v3609 = vunpack.c.l.b16 %v609
        %v3610 = vunpack.c.h.b16 %v609
        %v3611 = vunpack.c.l.b16 %v610
        %v3612 = vunpack.c.h.b16 %v610
        %v3613 = vunpack.c.l.b16 %v611
        %v3614 = vunpack.c.h.b16 %v611
        %v3615 = vunpack.c.l.b16 %v612
        %v3616 = vunpack.c.h.b16 %v612
        %v3617 = vunpack.c.l.b16 %v613
        %v3618 = vunpack.c.h.b16 %v613
        %v3619 = vunpack.c.l.b16 %v614
        %v3620 = vunpack.c.h.b16 %v614
        %v3621 = vunpack.c.l.b16 %v615
        %v3622 = vunpack.c.h.b16 %v615
        %v3623 = vunpack.c.l.b16 %v616
        %v3624 = vunpack.c.h.b16 %v616
        %v3625 = vunpack.c.l.b16 %v617
        %v3626 = vunpack.c.h.b16 %v617
        %v3627 = vunpack.c.l.b16 %v618
        %v3628 = vunpack.c.h.b16 %v618
        %v3629 = vunpack.c.l.b16 %v619
        %v3630 = vunpack.c.h.b16 %v619
        %v3631 = vunpack.c.l.b16 %v620
        %v3632 = vunpack.c.h.b16 %v620
        %v3633 = vunpack.c.l.b16 %v621
        %v3634 = vunpack.c.h.b16 %v621
        %v3635 = vunpack.c.l.b16 %v622
        %v3636 = vunpack.c.h.b16 %v622
        %v3637 = vunpack.c.l.b16 %v623
        %v3638 = vunpack.c.h.b16 %v623
        %v3639 = vunpack.c.l.b16 %v624
        %v3640 = vunpack.c.h.b16 %v624
        %v3641 = vunpack.c.l.b16 %v625
        %v3642 = vunpack.c.h.b16 %v625
        %v3643 = vunpack.c.l.b16 %v626
        %v3644 = vunpack.c.h.b16 %v626
        %v3645 = vunpack.c.l.b16 %v627
        %v3646 = vunpack.c.h.b16 %v627
        %v3647 = vunpack.c.l.b16 %v628
        %v3648 = vunpack.c.h.b16 %v628
        %v3649 = vunpack.c.l.b16 %v629
        %v3650 = vunpack.c.h.b16 %v629
        %v3651 = vunpack.c.l.b16 %v630
        %v3652 = vunpack.c.h.b16 %v630
        %v3653 = vunpack.c.l.b16 %v631
        %v3654 = vunpack.c.h.b16 %v631
        %v3655 = vunpack.c.l.b16 %v632
        %v3656 = vunpack.c.h.b16 %v632
        %v3657 = vunpack.c.l.b16 %v633
        %v3658 = vunpack.c.h.b16 %v633
        %v3659 = vunpack.c.l.b16 %v634
        %v3660 = vunpack.c.h.b16 %v634
        %v3661 = vunpack.c.l.b16 %v635
        %v3662 = vunpack.c.h.b16 %v635
        %v3663 = vunpack.c.l.b16 %v636
        %v3664 = vunpack.c.h.b16 %v636
        %v3665 = vunpack.c.l.b16 %v637
        %v3666 = vunpack.c.h.b16 %v637
        %v3667 = vunpack.c.l.b16 %v638
        %v3668 = vunpack.c.h.b16 %v638
        %v3669 = vunpack.c.l.b16 %v639
        %v3670 = vunpack.c.h.b16 %v639
        %v3671 = vunpack.c.l.b16 %v640
        %v3672 = vunpack.c.h.b16 %v640
        %v3673 = vunpack.c.l.b16 %v641
        %v3674 = vunpack.c.h.b16 %v641
        %v3675 = vunpack.c.l.b16 %v642
        %v3676 = vunpack.c.h.b16 %v642
        %v3677 = vunpack.c.l.b16 %v643
        %v3678 = vunpack.c.h.b16 %v643
        %v3679 = vunpack.c.l.b16 %v644
        %v3680 = vunpack.c.h.b16 %v644
        %v3681 = vunpack.c.l.b16 %v645
        %v3682 = vunpack.c.h.b16 %v645
        %v3683 = vunpack.c.l.b16 %v646
        %v3684 = vunpack.c.h.b16 %v646
        %v3685 = vunpack.c.l.b16 %v647
        %v3686 = vunpack.c.h.b16 %v647
        %v3687 = vunpack.c.l.b16 %v648
        %v3688 = vunpack.c.h.b16 %v648
        %v3689 = vunpack.c.l.b16 %v649
        %v3690 = vunpack.c.h.b16 %v649
        %v3691 = vunpack.c.l.b16 %v650
        %v3692 = vunpack.c.h.b16 %v650
        %v3693 = vunpack.c.l.b16 %v651
        %v3694 = vunpack.c.h.b16 %v651
        %v3695 = vunpack.c.l.b16 %v652
        %v3696 = vunpack.c.h.b16 %v652
        %v3697 = vunpack.c.l.b16 %v653
        %v3698 = vunpack.c.h.b16 %v653
        %v3699 = vunpack.c.l.b16 %v654
        %v3700 = vunpack.c.h.b16 %v654
        %v3701 = vunpack.c.l.b16 %v655
        %v3702 = vunpack.c.h.b16 %v655
        %v3703 = vunpack.c.l.b16 %v656
        %v3704 = vunpack.c.h.b16 %v656
        %v3705 = vunpack.c.l.b16 %v657
        %v3706 = vunpack.c.h.b16 %v657
        %v3707 = vunpack.c.l.b16 %v658
        %v3708 = vunpack.c.h.b16 %v658
        %v3709 = vunpack.c.l.b16 %v659
        %v3710 = vunpack.c.h.b16 %v659
        %v3711 = vunpack.c.l.b16 %v660
        %v3712 = vunpack.c.h.b16 %v660
        %v3713 = vunpack.c.l.b16 %v661
        %v3714 = vunpack.c.h.b16 %v661
        %v3715 = vunpack.c.l.b16 %v662
        %v3716 = vunpack.c.h.b16 %v662
        %v3717 = vunpack.c.l.b16 %v663
        %v3718 = vunpack.c.h.b16 %v663
        %v3719 = vunpack.c.l.b16 %v664
        %v3720 = vunpack.c.h.b16 %v664
        %v3721 = vunpack.c.l.b16 %v665
        %v3722 = vunpack.c.h.b16 %v665
        %v3723 = vunpack.c.l.b16 %v666
        %v3724 = vunpack.c.h.b16 %v666
        %v3725 = vunpack.c.l.b16 %v667
        %v3726 = vunpack.c.h.b16 %v667
        %v3727 = vunpack.c.l.b16 %v668
        %v3728 = vunpack.c.h.b16 %v668
        %v3729 = vunpack.c.l.b16 %v669
        %v3730 = vunpack.c.h.b16 %v669
        %v3731 = vunpack.c.l.b16 %v670
        %v3732 = vunpack.c.h.b16 %v670
        %v3733 = vunpack.c.l.b16 %v671
        %v3734 = vunpack.c.h.b16 %v671
        %v3735 = vunpack.c.l.b16 %v672
        %v3736 = vunpack.c.h.b16 %v672
        %v3737 = vunpack.c.l.b16 %v673
        %v3738 = vunpack.c.h.b16 %v673
        %v3739 = vunpack.c.l.b16 %v674
        %v3740 = vunpack.c.h.b16 %v674
        %v3741 = vunpack.c.l.b16 %v675
        %v3742 = vunpack.c.h.b16 %v675
        %v3743 = vunpack.c.l.b16 %v676
        %v3744 = vunpack.c.h.b16 %v676
        %v3745 = vunpack.c.l.b16 %v677
        %v3746 = vunpack.c.h.b16 %v677
        %v3747 = vunpack.c.l.b16 %v678
        %v3748 = vunpack.c.h.b16 %v678
        %v3749 = vunpack.c.l.b16 %v679
        %v3750 = vunpack.c.h.b16 %v679
        %v3751 = vunpack.c.l.b16 %v680
        %v3752 = vunpack.c.h.b16 %v680
        %v3753 = vunpack.c.l.b16 %v681
        %v3754 = vunpack.c.h.b16 %v681
        %v3755 = vunpack.c.l.b16 %v682
        %v3756 = vunpack.c.h.b16 %v682
        %v3757 = vunpack.c.l.b16 %v683
        %v3758 = vunpack.c.h.b16 %v683
        %v3759 = vunpack.c.l.b16 %v684
        %v3760 = vunpack.c.h.b16 %v684
        %v3761 = vunpack.c.l.b16 %v685
        %v3762 = vunpack.c.h.b16 %v685
        %v3763 = vunpack.c.l.b16 %v686
        %v3764 = vunpack.c.h.b16 %v686
        %v3765 = vunpack.c.l.b16 %v687
        %v3766 = vunpack.c.h.b16 %v687
        %v3767 = vunpack.c.l.b16 %v688
        %v3768 = vunpack.c.h.b16 %v688
        %v3769 = vunpack.c.l.b16 %v689
        %v3770 = vunpack.c.h.b16 %v689
        %v3771 = vunpack.c.l.b16 %v690
        %v3772 = vunpack.c.h.b16 %v690
        %v3773 = vunpack.c.l.b16 %v691
        %v3774 = vunpack.c.h.b16 %v691
        %v3775 = vunpack.c.l.b16 %v692
        %v3776 = vunpack.c.h.b16 %v692
        %v3777 = vunpack.c.l.b16 %v693
        %v3778 = vunpack.c.h.b16 %v693
        %v3779 = vunpack.c.l.b16 %v694
        %v3780 = vunpack.c.h.b16 %v694
        %v3781 = vunpack.c.l.b16 %v695
        %v3782 = vunpack.c.h.b16 %v695
        %v3783 = vunpack.c.l.b16 %v696
        %v3784 = vunpack.c.h.b16 %v696
        %v3785 = vunpack.c.l.b16 %v697
        %v3786 = vunpack.c.h.b16 %v697
        %v3787 = vunpack.c.l.b16 %v698
        %v3788 = vunpack.c.h.b16 %v698
        %v3789 = vunpack.c.l.b16 %v699
        %v3790 = vunpack.c.h.b16 %v699
        %v3791 = vunpack.c.l.b16 %v700
        %v3792 = vunpack.c.h.b16 %v700
        %v3793 = vunpack.c.l.b16 %v701
        %v3794 = vunpack.c.h.b16 %v701
        %v3795 = vunpack.c.l.b16 %v702
        %v3796 = vunpack.c.h.b16 %v702
        %v3797 = vunpack.c.l.b16 %v703
        %v3798 = vunpack.c.h.b16 %v703
        %v3799 = vunpack.c.l.b16 %v704
        %v3800 = vunpack.c.h.b16 %v704
        %v3801 = vunpack.c.l.b16 %v705
        %v3802 = vunpack.c.h.b16 %v705
        %v3803 = vunpack.c.l.b16 %v706
        %v3804 = vunpack.c.h.b16 %v706
        %v3805 = vunpack.c.l.b16 %v707
        %v3806 = vunpack.c.h.b16 %v707
        %v3807 = vunpack.c.l.b16 %v708
        %v3808 = vunpack.c.h.b16 %v708
        %v3809 = vunpack.c.l.b16 %v709
        %v3810 = vunpack.c.h.b16 %v709
        %v3811 = vunpack.c.l.b16 %v710
        %v3812 = vunpack.c.h.b16 %v710
        %v3813 = vunpack.c.l.b16 %v711
        %v3814 = vunpack.c.h.b16 %v711
        %v3815 = vunpack.c.l.b16 %v712
        %v3816 = vunpack.c.h.b16 %v712
        %v3817 = vunpack.c.l.b16 %v713
        %v3818 = vunpack.c.h.b16 %v713
        %v3819 = vunpack.c.l.b16 %v714
        %v3820 = vunpack.c.h.b16 %v714
        %v3821 = vunpack.c.l.b16 %v715
        %v3822 = vunpack.c.h.b16 %v715
        %v3823 = vunpack.c.l.b16 %v716
        %v3824 = vunpack.c.h.b16 %v716
        %v3825 = vunpack.c.l.b16 %v717
        %v3826 = vunpack.c.h.b16 %v717
        %v3827 = vunpack.c.l.b16 %v718
        %v3828 = vunpack.c.h.b16 %v718
        %v3829 = vunpack.c.l.b16 %v719
        %v3830 = vunpack.c.h.b16 %v719
        %v3831 = vunpack.c.l.b16 %v720
        %v3832 = vunpack.c.h.b16 %v720
        %v3833 = vunpack.c.l.b16 %v721
        %v3834 = vunpack.c.h.b16 %v721
        %v3835 = vunpack.c.l.b16 %v722
        %v3836 = vunpack.c.h.b16 %v722
        %v3837 = vunpack.c.l.b16 %v723
        %v3838 = vunpack.c.h.b16 %v723
        %v3839 = vunpack.c.l.b16 %v724
        %v3840 = vunpack.c.h.b16 %v724
        %v3841 = vunpack.c.l.b16 %v725
        %v3842 = vunpack.c.h.b16 %v725
        %v3843 = vunpack.c.l.b16 %v726
        %v3844 = vunpack.c.h.b16 %v726
        %v3845 = vunpack.c.l.b16 %v727
        %v3846 = vunpack.c.h.b16 %v727
        %v3847 = vunpack.c.l.b16 %v728
        %v3848 = vunpack.c.h.b16 %v728
        %v3849 = vunpack.c.l.b16 %v729
        %v3850 = vunpack.c.h.b16 %v729
        %v3851 = vunpack.c.l.b16 %v730
        %v3852 = vunpack.c.h.b16 %v730
        %v3853 = vunpack.c.l.b16 %v731
        %v3854 = vunpack.c.h.b16 %v731
        %v3855 = vunpack.c.l.b16 %v732
        %v3856 = vunpack.c.h.b16 %v732
        %v3857 = vunpack.c.l.b16 %v733
        %v3858 = vunpack.c.h.b16 %v733
        %v3859 = vunpack.c.l.b16 %v734
        %v3860 = vunpack.c.h.b16 %v734
        %v3861 = vunpack.c.l.b16 %v735
        %v3862 = vunpack.c.h.b16 %v735
        %v3863 = vunpack.c.l.b16 %v736
        %v3864 = vunpack.c.h.b16 %v736
        %v3865 = vunpack.c.l.b16 %v737
        %v3866 = vunpack.c.h.b16 %v737
        %v3867 = vunpack.c.l.b16 %v738
        %v3868 = vunpack.c.h.b16 %v738
        %v3869 = vunpack.c.l.b16 %v739
        %v3870 = vunpack.c.h.b16 %v739
        %v3871 = vunpack.c.l.b16 %v740
        %v3872 = vunpack.c.h.b16 %v740
        %v3873 = vunpack.c.l.b16 %v741
        %v3874 = vunpack.c.h.b16 %v741
        %v3875 = vunpack.c.l.b16 %v742
        %v3876 = vunpack.c.h.b16 %v742
        %v3877 = vunpack.c.l.b16 %v743
        %v3878 = vunpack.c.h.b16 %v743
        %v3879 = vunpack.c.l.b16 %v744
        %v3880 = vunpack.c.h.b16 %v744
        %v3881 = vunpack.c.l.b16 %v745
        %v3882 = vunpack.c.h.b16 %v745
        %v3883 = vunpack.c.l.b16 %v746
        %v3884 = vunpack.c.h.b16 %v746
        %v3885 = vunpack.c.l.b16 %v747
        %v3886 = vunpack.c.h.b16 %v747
        %v3887 = vunpack.c.l.b16 %v748
        %v3888 = vunpack.c.h.b16 %v748
        %v3889 = vunpack.c.l.b16 %v749
        %v3890 = vunpack.c.h.b16 %v749
        %v3891 = vunpack.c.l.b16 %v750
        %v3892 = vunpack.c.h.b16 %v750
        %v3893 = vunpack.c.l.b16 %v751
        %v3894 = vunpack.c.h.b16 %v751
        %v3895 = vunpack.c.l.b16 %v752
        %v3896 = vunpack.c.h.b16 %v752
        %v3897 = vunpack.c.l.b16 %v753
        %v3898 = vunpack.c.h.b16 %v753
        %v3899 = vunpack.c.l.b16 %v754
        %v3900 = vunpack.c.h.b16 %v754
        %v3901 = vunpack.c.l.b16 %v755
        %v3902 = vunpack.c.h.b16 %v755
        %v3903 = vunpack.c.l.b16 %v756
        %v3904 = vunpack.c.h.b16 %v756
        %v3905 = vunpack.c.l.b16 %v757
        %v3906 = vunpack.c.h.b16 %v757
        %v3907 = vunpack.c.l.b16 %v758
        %v3908 = vunpack.c.h.b16 %v758
        %v3909 = vunpack.c.l.b16 %v759
        %v3910 = vunpack.c.h.b16 %v759
        %v3911 = vunpack.c.l.b16 %v760
        %v3912 = vunpack.c.h.b16 %v760
        %v3913 = vunpack.c.l.b16 %v761
        %v3914 = vunpack.c.h.b16 %v761
        %v3915 = vunpack.c.l.b16 %v762
        %v3916 = vunpack.c.h.b16 %v762
        %v3917 = vunpack.c.l.b16 %v763
        %v3918 = vunpack.c.h.b16 %v763
        %v3919 = vunpack.c.l.b16 %v764
        %v3920 = vunpack.c.h.b16 %v764
        %v3921 = vunpack.c.l.b16 %v765
        %v3922 = vunpack.c.h.b16 %v765
        %v3923 = vunpack.c.l.b16 %v766
        %v3924 = vunpack.c.h.b16 %v766
        %v3925 = vunpack.c.l.b16 %v767
        %v3926 = vunpack.c.h.b16 %v767
        %v3927 = vunpack.c.l.b16 %v768
        %v3928 = vunpack.c.h.b16 %v768
        %v3929 = vunpack.c.l.b16 %v769
        %v3930 = vunpack.c.h.b16 %v769
        %v3931 = vunpack.c.l.b16 %v770
        %v3932 = vunpack.c.h.b16 %v770
        %v3933 = vunpack.c.l.b16 %v771
        %v3934 = vunpack.c.h.b16 %v771
        %v3935 = vunpack.c.l.b16 %v772
        %v3936 = vunpack.c.h.b16 %v772
        %v3937 = vunpack.c.l.b16 %v773
        %v3938 = vunpack.c.h.b16 %v773
        %v3939 = vunpack.c.l.b16 %v774
        %v3940 = vunpack.c.h.b16 %v774
        %v3941 = vunpack.c.l.b16 %v775
        %v3942 = vunpack.c.h.b16 %v775
        %v3943 = vunpack.c.l.b16 %v776
        %v3944 = vunpack.c.h.b16 %v776
        %v3945 = vunpack.c.l.b16 %v777
        %v3946 = vunpack.c.h.b16 %v777
        %v3947 = vunpack.c.l.b16 %v778
        %v3948 = vunpack.c.h.b16 %v778
        %v3949 = vunpack.c.l.b16 %v779
        %v3950 = vunpack.c.h.b16 %v779
        %v3951 = vunpack.c.l.b16 %v780
        %v3952 = vunpack.c.h.b16 %v780
        %v3953 = vunpack.c.l.b16 %v781
        %v3954 = vunpack.c.h.b16 %v781
        %v3955 = vunpack.c.l.b16 %v782
        %v3956 = vunpack.c.h.b16 %v782
        %v3957 = vunpack.c.l.b16 %v783
        %v3958 = vunpack.c.h.b16 %v783
        %v3959 = vunpack.c.l.b16 %v784
        %v3960 = vunpack.c.h.b16 %v784
        %v3961 = vunpack.c.l.b16 %v785
        %v3962 = vunpack.c.h.b16 %v785
        %v3963 = vunpack.c.l.b16 %v786
        %v3964 = vunpack.c.h.b16 %v786
        %v3965 = vunpack.c.l.b16 %v787
        %v3966 = vunpack.c.h.b16 %v787
        %v3967 = vunpack.c.l.b16 %v788
        %v3968 = vunpack.c.h.b16 %v788
        %v3969 = vunpack.c.l.b16 %v789
        %v3970 = vunpack.c.h.b16 %v789
        %v3971 = vunpack.c.l.b16 %v790
        %v3972 = vunpack.c.h.b16 %v790
        %v3973 = vunpack.c.l.b16 %v791
        %v3974 = vunpack.c.h.b16 %v791
        %v3975 = vunpack.c.l.b16 %v792
        %v3976 = vunpack.c.h.b16 %v792
        %v3977 = vunpack.c.l.b16 %v793
        %v3978 = vunpack.c.h.b16 %v793
        %v3979 = vunpack.c.l.b16 %v794
        %v3980 = vunpack.c.h.b16 %v794
        %v3981 = vunpack.c.l.b16 %v795
        %v3982 = vunpack.c.h.b16 %v795
        %v3983 = vunpack.c.l.b16 %v796
        %v3984 = vunpack.c.h.b16 %v796
        %v3985 = vunpack.c.l.b16 %v797
        %v3986 = vunpack.c.h.b16 %v797
        %v3987 = vunpack.c.l.b16 %v798
        %v3988 = vunpack.c.h.b16 %v798
        %v3989 = vunpack.c.l.b16 %v799
        %v3990 = vunpack.c.h.b16 %v799
        %v3991 = vunpack.c.l.b16 %v800
        %v3992 = vunpack.c.h.b16 %v800
        %v3993 = vunpack.c.l.b16 %v801
        %v3994 = vunpack.c.h.b16 %v801
        %v3995 = vunpack.c.l.b16 %v802
        %v3996 = vunpack.c.h.b16 %v802
        %v3997 = vunpack.c.l.b16 %v803
        %v3998 = vunpack.c.h.b16 %v803
        %v3999 = vunpack.c.l.b16 %v804
        %v4000 = vunpack.c.h.b16 %v804
        %v4001 = vunpack.c.l.b16 %v805
        %v4002 = vunpack.c.h.b16 %v805
        %v4003 = vunpack.c.l.b16 %v806
        %v4004 = vunpack.c.h.b16 %v806
        %v4005 = vunpack.c.l.b16 %v807
        %v4006 = vunpack.c.h.b16 %v807
        %v4007 = vunpack.c.l.b16 %v808
        %v4008 = vunpack.c.h.b16 %v808
        %v4009 = vunpack.c.l.b16 %v809
        %v4010 = vunpack.c.h.b16 %v809
        %v4011 = vunpack.c.l.b16 %v810
        %v4012 = vunpack.c.h.b16 %v810
        %v4013 = vunpack.c.l.b16 %v811
        %v4014 = vunpack.c.h.b16 %v811
        %v4015 = vunpack.c.l.b16 %v812
        %v4016 = vunpack.c.h.b16 %v812
        %v4017 = vunpack.c.l.b16 %v813
        %v4018 = vunpack.c.h.b16 %v813
        %v4019 = vunpack.c.l.b16 %v814
        %v4020 = vunpack.c.h.b16 %v814
        %v4021 = vunpack.c.l.b16 %v815
        %v4022 = vunpack.c.h.b16 %v815
        %v4023 = vunpack.c.l.b16 %v816
        %v4024 = vunpack.c.h.b16 %v816
        %v4025 = vunpack.c.l.b16 %v817
        %v4026 = vunpack.c.h.b16 %v817
        %v4027 = vunpack.c.l.b16 %v818
        %v4028 = vunpack.c.h.b16 %v818
        %v4029 = vunpack.c.l.b16 %v819
        %v4030 = vunpack.c.h.b16 %v819
        %v4031 = vunpack.c.l.b16 %v820
        %v4032 = vunpack.c.h.b16 %v820
        %v4033 = vunpack.c.l.b16 %v821
        %v4034 = vunpack.c.h.b16 %v821
        %v4035 = vunpack.c.l.b16 %v822
        %v4036 = vunpack.c.h.b16 %v822
        %v4037 = vunpack.c.l.b16 %v823
        %v4038 = vunpack.c.h.b16 %v823
        %v4039 = vunpack.c.l.b16 %v824
        %v4040 = vunpack.c.h.b16 %v824
        %v4041 = vunpack.c.l.b16 %v825
        %v4042 = vunpack.c.h.b16 %v825
        %v4043 = vunpack.c.l.b16 %v826
        %v4044 = vunpack.c.h.b16 %v826
        %v4045 = vunpack.c.l.b16 %v827
        %v4046 = vunpack.c.h.b16 %v827
        %v4047 = vunpack.c.l.b16 %v828
        %v4048 = vunpack.c.h.b16 %v828
        %v4049 = vunpack.c.l.b16 %v829
        %v4050 = vunpack.c.h.b16 %v829
        %v4051 = vunpack.c.l.b16 %v830
        %v4052 = vunpack.c.h.b16 %v830
        %v4053 = vunpack.c.l.b16 %v831
        %v4054 = vunpack.c.h.b16 %v831
        %v4055 = vunpack.c.l.b16 %v832
        %v4056 = vunpack.c.h.b16 %v832
        %v4057 = vunpack.c.l.b16 %v833
        %v4058 = vunpack.c.h.b16 %v833
        %v4059 = vunpack.c.l.b16 %v834
        %v4060 = vunpack.c.h.b16 %v834
        %v4061 = vunpack.c.l.b16 %v835
        %v4062 = vunpack.c.h.b16 %v835
        %v4063 = vunpack.c.l.b16 %v836
        %v4064 = vunpack.c.h.b16 %v836
        %v4065 = vunpack.c.l.b16 %v837
        %v4066 = vunpack.c.h.b16 %v837
        %v4067 = vunpack.c.l.b16 %v838
        %v4068 = vunpack.c.h.b16 %v838
        %v4069 = vunpack.c.l.b16 %v839
        %v4070 = vunpack.c.h.b16 %v839
        %v4071 = vunpack.c.l.b16 %v840
        %v4072 = vunpack.c.h.b16 %v840
        %v4073 = vunpack.c.l.b16 %v841
        %v4074 = vunpack.c.h.b16 %v841
        %v4075 = vunpack.c.l.b16 %v842
        %v4076 = vunpack.c.h.b16 %v842
        %v4077 = vunpack.c.l.b16 %v843
        %v4078 = vunpack.c.h.b16 %v843
        %v4079 = vunpack.c.l.b16 %v844
        %v4080 = vunpack.c.h.b16 %v844
        %v4081 = vunpack.c.l.b16 %v845
        %v4082 = vunpack.c.h.b16 %v845
        %v4083 = vunpack.c.l.b16 %v846
        %v4084 = vunpack.c.h.b16 %v846
        %v4085 = vunpack.c.l.b16 %v847
        %v4086 = vunpack.c.h.b16 %v847
        %v4087 = vunpack.c.l.b16 %v848
        %v4088 = vunpack.c.h.b16 %v848
        %v4089 = vunpack.c.l.b16 %v849
        %v4090 = vunpack.c.h.b16 %v849
        %v4091 = vunpack.c.l.b16 %v850
        %v4092 = vunpack.c.h.b16 %v850
        %v4093 = vunpack.c.l.b16 %v851
        %v4094 = vunpack.c.h.b16 %v851
        %v4095 = vunpack.c.l.b16 %v852
        %v4096 = vunpack.c.h.b16 %v852
        %v4097 = vunpack.c.l.b16 %v853
        %v4098 = vunpack.c.h.b16 %v853
        %v4099 = vunpack.c.l.b16 %v854
        %v4100 = vunpack.c.h.b16 %v854
        %v4101 = vunpack.c.l.b16 %v855
        %v4102 = vunpack.c.h.b16 %v855
        %v4103 = vunpack.c.l.b16 %v856
        %v4104 = vunpack.c.h.b16 %v856
        %v4105 = vunpack.c.l.b16 %v857
        %v4106 = vunpack.c.h.b16 %v857
        %v4107 = vunpack.c.l.b16 %v858
        %v4108 = vunpack.c.h.b16 %v858
        %v4109 = vunpack.c.l.b16 %v859
        %v4110 = vunpack.c.h.b16 %v859
        %v4111 = vunpack.c.l.b16 %v860
        %v4112 = vunpack.c.h.b16 %v860
        %v4113 = vunpack.c.l.b16 %v861
        %v4114 = vunpack.c.h.b16 %v861
        %v4115 = vunpack.c.l.b16 %v862
        %v4116 = vunpack.c.h.b16 %v862
        %v4117 = vunpack.c.l.b16 %v863
        %v4118 = vunpack.c.h.b16 %v863
        %v4119 = vunpack.c.l.b16 %v864
        %v4120 = vunpack.c.h.b16 %v864
        %v4121 = vunpack.c.l.b16 %v865
        %v4122 = vunpack.c.h.b16 %v865
        %v4123 = vunpack.c.l.b16 %v866
        %v4124 = vunpack.c.h.b16 %v866
        %v4125 = vunpack.c.l.b16 %v867
        %v4126 = vunpack.c.h.b16 %v867
        %v4127 = vunpack.c.l.b16 %v868
        %v4128 = vunpack.c.h.b16 %v868
        %v4129 = vunpack.c.l.b16 %v869
        %v4130 = vunpack.c.h.b16 %v869
        %v4131 = vunpack.c.l.b16 %v870
        %v4132 = vunpack.c.h.b16 %v870
        %v4133 = vunpack.c.l.b16 %v871
        %v4134 = vunpack.c.h.b16 %v871
        %v4135 = vunpack.c.l.b16 %v872
        %v4136 = vunpack.c.h.b16 %v872
        %v4137 = vunpack.c.l.b16 %v873
        %v4138 = vunpack.c.h.b16 %v873
        %v4139 = vunpack.c.l.b16 %v874
        %v4140 = vunpack.c.h.b16 %v874
        %v4141 = vunpack.c.l.b16 %v875
        %v4142 = vunpack.c.h.b16 %v875
        %v4143 = vunpack.c.l.b16 %v876
        %v4144 = vunpack.c.h.b16 %v876
        %v4145 = vunpack.c.l.b16 %v877
        %v4146 = vunpack.c.h.b16 %v877
        %v4147 = vunpack.c.l.b16 %v878
        %v4148 = vunpack.c.h.b16 %v878
        %v4149 = vunpack.c.l.b16 %v879
        %v4150 = vunpack.c.h.b16 %v879
        %v4151 = vunpack.c.l.b16 %v880
        %v4152 = vunpack.c.h.b16 %v880
        %v4153 = vunpack.c.l.b16 %v881
        %v4154 = vunpack.c.h.b16 %v881
        %v4155 = vunpack.c.l.b16 %v882
        %v4156 = vunpack.c.h.b16 %v882
        %v4157 = vunpack.c.l.b16 %v883
        %v4158 = vunpack.c.h.b16 %v883
        %v4159 = vunpack.c.l.b16 %v884
        %v4160 = vunpack.c.h.b16 %v884
        %v4161 = vunpack.c.l.b16 %v885
        %v4162 = vunpack.c.h.b16 %v885
        %v4163 = vunpack.c.l.b16 %v886
        %v4164 = vunpack.c.h.b16 %v886
        %v4165 = vunpack.c.l.b16 %v887
        %v4166 = vunpack.c.h.b16 %v887
        %v4167 = vunpack.c.l.b16 %v888
        %v4168 = vunpack.c.h.b16 %v888
        %v4169 = vunpack.c.l.b16 %v889
        %v4170 = vunpack.c.h.b16 %v889
        %v4171 = vunpack.c.l.b16 %v890
        %v4172 = vunpack.c.h.b16 %v890
        %v4173 = vunpack.c.l.b16 %v891
        %v4174 = vunpack.c.h.b16 %v891
        %v4175 = vunpack.c.l.b16 %v892
        %v4176 = vunpack.c.h.b16 %v892
        %v4177 = vunpack.c.l.b16 %v893
        %v4178 = vunpack.c.h.b16 %v893
        %v4179 = vunpack.c.l.b16 %v894
        %v4180 = vunpack.c.h.b16 %v894
        %v4181 = vunpack.c.l.b16 %v895
        %v4182 = vunpack.c.h.b16 %v895
        %v4183 = vunpack.c.l.b16 %v896
        %v4184 = vunpack.c.h.b16 %v896
        %v4185 = vunpack.c.l.b16 %v897
        %v4186 = vunpack.c.h.b16 %v897
        %v4187 = vunpack.c.l.b16 %v898
        %v4188 = vunpack.c.h.b16 %v898
        %v4189 = vunpack.c.l.b16 %v899
        %v4190 = vunpack.c.h.b16 %v899
        %v4191 = vunpack.c.l.b16 %v900
        %v4192 = vunpack.c.h.b16 %v900
        %v4193 = vunpack.c.l.b16 %v901
        %v4194 = vunpack.c.h.b16 %v901
        %v4195 = vunpack.c.l.b16 %v902
        %v4196 = vunpack.c.h.b16 %v902
        %v4197 = vunpack.c.l.b16 %v903
        %v4198 = vunpack.c.h.b16 %v903
        %v4199 = vunpack.c.l.b16 %v904
        %v4200 = vunpack.c.h.b16 %v904
        %v4201 = vunpack.c.l.b16 %v905
        %v4202 = vunpack.c.h.b16 %v905
        %v4203 = vunpack.c.l.b16 %v906
        %v4204 = vunpack.c.h.b16 %v906
        %v4205 = vunpack.c.l.b16 %v907
        %v4206 = vunpack.c.h.b16 %v907
        %v4207 = vunpack.c.l.b16 %v908
        %v4208 = vunpack.c.h.b16 %v908
        %v4209 = vunpack.c.l.b16 %v909
        %v4210 = vunpack.c.h.b16 %v909
        %v4211 = vunpack.c.l.b16 %v910
        %v4212 = vunpack.c.h.b16 %v910
        %v4213 = vunpack.c.l.b16 %v911
        %v4214 = vunpack.c.h.b16 %v911
        %v4215 = vunpack.c.l.b16 %v912
        %v4216 = vunpack.c.h.b16 %v912
        %v4217 = vunpack.c.l.b16 %v913
        %v4218 = vunpack.c.h.b16 %v913
        %v4219 = vunpack.c.l.b16 %v914
        %v4220 = vunpack.c.h.b16 %v914
        %v4221 = vunpack.c.l.b16 %v915
        %v4222 = vunpack.c.h.b16 %v915
        %v4223 = vunpack.c.l.b16 %v916
        %v4224 = vunpack.c.h.b16 %v916
        %v4225 = vunpack.c.l.b16 %v917
        %v4226 = vunpack.c.h.b16 %v917
        %v4227 = vunpack.c.l.b16 %v918
        %v4228 = vunpack.c.h.b16 %v918
        %v4229 = vunpack.c.l.b16 %v919
        %v4230 = vunpack.c.h.b16 %v919
        %v4231 = vunpack.c.l.b16 %v920
        %v4232 = vunpack.c.h.b16 %v920
        %v4233 = vunpack.c.l.b16 %v921
        %v4234 = vunpack.c.h.b16 %v921
        %v4235 = vunpack.c.l.b16 %v922
        %v4236 = vunpack.c.h.b16 %v922
        %v4237 = vunpack.c.l.b16 %v923
        %v4238 = vunpack.c.h.b16 %v923
        %v4239 = vunpack.c.l.b16 %v924
        %v4240 = vunpack.c.h.b16 %v924
        %v4241 = vunpack.c.l.b16 %v925
        %v4242 = vunpack.c.h.b16 %v925
        %v4243 = vunpack.c.l.b16 %v926
        %v4244 = vunpack.c.h.b16 %v926
        %v4245 = vunpack.c.l.b16 %v927
        %v4246 = vunpack.c.h.b16 %v927
        %v4247 = vunpack.c.l.b16 %v928
        %v4248 = vunpack.c.h.b16 %v928
        %v4249 = vunpack.c.l.b16 %v929
        %v4250 = vunpack.c.h.b16 %v929
        %v4251 = vunpack.c.l.b16 %v930
        %v4252 = vunpack.c.h.b16 %v930
        %v4253 = vunpack.c.l.b16 %v931
        %v4254 = vunpack.c.h.b16 %v931
        %v4255 = vunpack.c.l.b16 %v932
        %v4256 = vunpack.c.h.b16 %v932
        %v4257 = vunpack.c.l.b16 %v933
        %v4258 = vunpack.c.h.b16 %v933
        %v4259 = vunpack.c.l.b16 %v934
        %v4260 = vunpack.c.h.b16 %v934
        %v4261 = vunpack.c.l.b16 %v935
        %v4262 = vunpack.c.h.b16 %v935
        %v4263 = vunpack.c.l.b16 %v936
        %v4264 = vunpack.c.h.b16 %v936
        %v4265 = vunpack.c.l.b16 %v937
        %v4266 = vunpack.c.h.b16 %v937
        %v4267 = vunpack.c.l.b16 %v938
        %v4268 = vunpack.c.h.b16 %v938
        %v4269 = vunpack.c.l.b16 %v939
        %v4270 = vunpack.c.h.b16 %v939
        %v4271 = vunpack.c.l.b16 %v940
        %v4272 = vunpack.c.h.b16 %v940
        %v4273 = vunpack.c.l.b16 %v941
        %v4274 = vunpack.c.h.b16 %v941
        %v4275 = vunpack.c.l.b16 %v942
        %v4276 = vunpack.c.h.b16 %v942
        %v4277 = vunpack.c.l.b16 %v943
        %v4278 = vunpack.c.h.b16 %v943
        %v4279 = vunpack.c.l.b16 %v944
        %v4280 = vunpack.c.h.b16 %v944
        %v4281 = vunpack.c.l.b16 %v945
        %v4282 = vunpack.c.h.b16 %v945
        %v4283 = vunpack.c.l.b16 %v946
        %v4284 = vunpack.c.h.b16 %v946
        %v4285 = vunpack.c.l.b16 %v947
        %v4286 = vunpack.c.h.b16 %v947
        %v4287 = vunpack.c.l.b16 %v948
        %v4288 = vunpack.c.h.b16 %v948
        %v4289 = vunpack.c.l.b16 %v949
        %v4290 = vunpack.c.h.b16 %v949
        %v4291 = vunpack.c.l.b16 %v950
        %v4292 = vunpack.c.h.b16 %v950
        %v4293 = vunpack.c.l.b16 %v951
        %v4294 = vunpack.c.h.b16 %v951
        %v4295 = vunpack.c.l.b16 %v952
        %v4296 = vunpack.c.h.b16 %v952
        %v4297 = vunpack.c.l.b16 %v953
        %v4298 = vunpack.c.h.b16 %v953
        %v4299 = vunpack.c.l.b16 %v954
        %v4300 = vunpack.c.h.b16 %v954
        %v4301 = vunpack.c.l.b16 %v955
        %v4302 = vunpack.c.h.b16 %v955
        %v4303 = vunpack.c.l.b16 %v956
        %v4304 = vunpack.c.h.b16 %v956
        %v4305 = vunpack.c.l.b16 %v957
        %v4306 = vunpack.c.h.b16 %v957
        %v4307 = vunpack.c.l.b16 %v958
        %v4308 = vunpack.c.h.b16 %v958
        %v4309 = vunpack.c.l.b16 %v959
        %v4310 = vunpack.c.h.b16 %v959
        %v4311 = vunpack.c.l.b16 %v960
        %v4312 = vunpack.c.h.b16 %v960
        %v4313 = vunpack.c.l.b16 %v961
        %v4314 = vunpack.c.h.b16 %v961
        %v4315 = vunpack.c.l.b16 %v962
        %v4316 = vunpack.c.h.b16 %v962
        %v4317 = vunpack.c.l.b16 %v963
        %v4318 = vunpack.c.h.b16 %v963
        %v4319 = vunpack.c.l.b16 %v964
        %v4320 = vunpack.c.h.b16 %v964
        %v4321 = vunpack.c.l.b16 %v965
        %v4322 = vunpack.c.h.b16 %v965
        %v4323 = vunpack.c.l.b16 %v966
        %v4324 = vunpack.c.h.b16 %v966
        %v4325 = vunpack.c.l.b16 %v967
        %v4326 = vunpack.c.h.b16 %v967
        %v4327 = vunpack.c.l.b16 %v968
        %v4328 = vunpack.c.h.b16 %v968
        %v4329 = vunpack.c.l.b16 %v969
        %v4330 = vunpack.c.h.b16 %v969
        %v4331 = vunpack.c.l.b16 %v970
        %v4332 = vunpack.c.h.b16 %v970
        %v4333 = vunpack.c.l.b16 %v971
        %v4334 = vunpack.c.h.b16 %v971
        %v4335 = vunpack.c.l.b16 %v972
        %v4336 = vunpack.c.h.b16 %v972
        %v4337 = vunpack.c.l.b16 %v973
        %v4338 = vunpack.c.h.b16 %v973
        %v4339 = vunpack.c.l.b16 %v974
        %v4340 = vunpack.c.h.b16 %v974
        %v4341 = vunpack.c.l.b16 %v975
        %v4342 = vunpack.c.h.b16 %v975
        %v4343 = vunpack.c.l.b16 %v976
        %v4344 = vunpack.c.h.b16 %v976
        %v4345 = vunpack.c.l.b16 %v977
        %v4346 = vunpack.c.h.b16 %v977
        %v4347 = vunpack.c.l.b16 %v978
        %v4348 = vunpack.c.h.b16 %v978
        %v4349 = vunpack.c.l.b16 %v979
        %v4350 = vunpack.c.h.b16 %v979
        %v4351 = vunpack.c.l.b16 %v980
        %v4352 = vunpack.c.h.b16 %v980
        %v4353 = vunpack.c.l.b16 %v981
        %v4354 = vunpack.c.h.b16 %v981
        %v4355 = vunpack.c.l.b16 %v982
        %v4356 = vunpack.c.h.b16 %v982
        %v4357 = vunpack.c.l.b16 %v983
        %v4358 = vunpack.c.h.b16 %v983
        %v4359 = vunpack.c.l.b16 %v984
        %v4360 = vunpack.c.h.b16 %v984
        %v4361 = vunpack.c.l.b16 %v985
        %v4362 = vunpack.c.h.b16 %v985
        %v4363 = vunpack.c.l.b16 %v986
        %v4364 = vunpack.c.h.b16 %v986
        %v4365 = vunpack.c.l.b16 %v987
        %v4366 = vunpack.c.h.b16 %v987
        %v4367 = vunpack.c.l.b16 %v988
        %v4368 = vunpack.c.h.b16 %v988
        %v4369 = vunpack.c.l.b16 %v989
        %v4370 = vunpack.c.h.b16 %v989
        %v4371 = vunpack.c.l.b16 %v990
        %v4372 = vunpack.c.h.b16 %v990
        %v4373 = vunpack.c.l.b16 %v991
        %v4374 = vunpack.c.h.b16 %v991
        %v4375 = vunpack.c.l.b16 %v992
        %v4376 = vunpack.c.h.b16 %v992
        %v4377 = vunpack.c.l.b16 %v993
        %v4378 = vunpack.c.h.b16 %v993
        %v4379 = vunpack.c.l.b16 %v994
        %v4380 = vunpack.c.h.b16 %v994
        %v4381 = vunpack.c.l.b16 %v995
        %v4382 = vunpack.c.h.b16 %v995
        %v4383 = vunpack.c.l.b16 %v996
        %v4384 = vunpack.c.h.b16 %v996
        %v4385 = vunpack.c.l.b16 %v997
        %v4386 = vunpack.c.h.b16 %v997
        %v4387 = vunpack.c.l.b16 %v998
        %v4388 = vunpack.c.h.b16 %v998
        %v4389 = vunpack.c.l.b16 %v999
        %v4390 = vunpack.c.h.b16 %v999
        %v4391 = vunpack.c.l.b16 %v1000
        %v4392 = vunpack.c.h.b16 %v1000
        %v4393 = vunpack.c.l.b16 %v1001
        %v4394 = vunpack.c.h.b16 %v1001
        %v4395 = vunpack.c.l.b16 %v1002
        %v4396 = vunpack.c.h.b16 %v1002
        %v4397 = vunpack.c.l.b16 %v1003
        %v4398 = vunpack.c.h.b16 %v1003
        %v4399 = vunpack.c.l.b16 %v1004
        %v4400 = vunpack.c.h.b16 %v1004
        %v4401 = vunpack.c.l.b16 %v1005
        %v4402 = vunpack.c.h.b16 %v1005
        %v4403 = vunpack.c.l.b16 %v1006
        %v4404 = vunpack.c.h.b16 %v1006
        %v4405 = vunpack.c.l.b16 %v1007
        %v4406 = vunpack.c.h.b16 %v1007
        %v4407 = vunpack.c.l.b16 %v1008
        %v4408 = vunpack.c.h.b16 %v1008
        %v4409 = vunpack.c.l.b16 %v1009
        %v4410 = vunpack.c.h.b16 %v1009
        %v4411 = vunpack.c.l.b16 %v1010
        %v4412 = vunpack.c.h.b16 %v1010
        %v4413 = vunpack.c.l.b16 %v1011
        %v4414 = vunpack.c.h.b16 %v1011
        %v4415 = vunpack.c.l.b16 %v1012
        %v4416 = vunpack.c.h.b16 %v1012
        %v4417 = vunpack.c.l.b16 %v1013
        %v4418 = vunpack.c.h.b16 %v1013
        %v4419 = vunpack.c.l.b16 %v1014
        %v4420 = vunpack.c.h.b16 %v1014
        %v4421 = vunpack.c.l.b16 %v1015
        %v4422 = vunpack.c.h.b16 %v1015
        %v4423 = vunpack.c.l.b16 %v1016
        %v4424 = vunpack.c.h.b16 %v1016
        %v4425 = vunpack.c.l.b16 %v1017
        %v4426 = vunpack.c.h.b16 %v1017
        %v4427 = vunpack.c.l.b16 %v1018
        %v4428 = vunpack.c.h.b16 %v1018
        %v4429 = vunpack.c.l.b16 %v1019
        %v4430 = vunpack.c.h.b16 %v1019
        %v4431 = vunpack.c.l.b16 %v1020
        %v4432 = vunpack.c.h.b16 %v1020
        %v4433 = vunpack.c.l.b16 %v1021
        %v4434 = vunpack.c.h.b16 %v1021
        %v4435 = vunpack.c.l.b16 %v1022
        %v4436 = vunpack.c.h.b16 %v1022
        %v4437 = vunpack.c.l.b16 %v1023
        %v4438 = vunpack.c.h.b16 %v1023
        %v4439 = vunpack.c.l.b16 %v1024
        %v4440 = vunpack.c.h.b16 %v1024
        %v4441 = vunpack.c.l.b16 %v1025
        %v4442 = vunpack.c.h.b16 %v1025
        %v4443 = vunpack.c.l.b16 %v1026
        %v4444 = vunpack.c.h.b16 %v1026
        %v4445 = vunpack.c.l.b16 %v1027
        %v4446 = vunpack.c.h.b16 %v1027
        %v4447 = vunpack.c.l.b16 %v1028
        %v4448 = vunpack.c.h.b16 %v1028
        %v4449 = vunpack.c.l.b16 %v1029
        %v4450 = vunpack.c.h.b16 %v1029
        %v4451 = vunpack.c.l.b16 %v1030
        %v4452 = vunpack.c.h.b16 %v1030
        %v4453 = vunpack.c.l.b16 %v1031
        %v4454 = vunpack.c.h.b16 %v1031
        %v4455 = vunpack.c.l.b16 %v1032
        %v4456 = vunpack.c.h.b16 %v1032
        %v4457 = vunpack.c.l.b16 %v1033
        %v4458 = vunpack.c.h.b16 %v1033
        %v4459 = vunpack.c.l.b16 %v1034
        %v4460 = vunpack.c.h.b16 %v1034
        %v4461 = vunpack.c.l.b16 %v1035
        %v4462 = vunpack.c.h.b16 %v1035
        %v4463 = vunpack.c.l.b16 %v1036
        %v4464 = vunpack.c.h.b16 %v1036
        %v4465 = vunpack.c.l.b16 %v1037
        %v4466 = vunpack.c.h.b16 %v1037
        %v4467 = vunpack.c.l.b16 %v1038
        %v4468 = vunpack.c.h.b16 %v1038
        %v4469 = vunpack.c.l.b16 %v1039
        %v4470 = vunpack.c.h.b16 %v1039
        %v4471 = vunpack.c.l.b16 %v1040
        %v4472 = vunpack.c.h.b16 %v1040
        %v4473 = vunpack.c.l.b16 %v1041
        %v4474 = vunpack.c.h.b16 %v1041
        %v4475 = vunpack.c.l.b16 %v1042
        %v4476 = vunpack.c.h.b16 %v1042
        %v4477 = vunpack.c.l.b16 %v1043
        %v4478 = vunpack.c.h.b16 %v1043
        %v4479 = vunpack.c.l.b16 %v1044
        %v4480 = vunpack.c.h.b16 %v1044
        %v4481 = vunpack.c.l.b16 %v1045
        %v4482 = vunpack.c.h.b16 %v1045
        %v4483 = vunpack.c.l.b16 %v1046
        %v4484 = vunpack.c.h.b16 %v1046
        %v4485 = vunpack.c.l.b16 %v1047
        %v4486 = vunpack.c.h.b16 %v1047
        %v4487 = vunpack.c.l.b16 %v1048
        %v4488 = vunpack.c.h.b16 %v1048
        %v4489 = vunpack.c.l.b16 %v1049
        %v4490 = vunpack.c.h.b16 %v1049
        %v4491 = vunpack.c.l.b16 %v1050
        %v4492 = vunpack.c.h.b16 %v1050
        %v4493 = vunpack.c.l.b16 %v1051
        %v4494 = vunpack.c.h.b16 %v1051
        %v4495 = vunpack.c.l.b16 %v1052
        %v4496 = vunpack.c.h.b16 %v1052
        %v4497 = vunpack.c.l.b16 %v1053
        %v4498 = vunpack.c.h.b16 %v1053
        %v4499 = vunpack.c.l.b16 %v1054
        %v4500 = vunpack.c.h.b16 %v1054
        %v4501 = vunpack.c.l.b16 %v1055
        %v4502 = vunpack.c.h.b16 %v1055
        %v4503 = vunpack.c.l.b16 %v1056
        %v4504 = vunpack.c.h.b16 %v1056
        %v4505 = vunpack.c.l.b16 %v1057
        %v4506 = vunpack.c.h.b16 %v1057
        %v4507 = vunpack.c.l.b16 %v1058
        %v4508 = vunpack.c.h.b16 %v1058
        %v4509 = vunpack.c.l.b16 %v1059
        %v4510 = vunpack.c.h.b16 %v1059
        %v4511 = vunpack.c.l.b16 %v1060
        %v4512 = vunpack.c.h.b16 %v1060
        %v4513 = vunpack.c.l.b16 %v1061
        %v4514 = vunpack.c.h.b16 %v1061
        %v4515 = vunpack.c.l.b16 %v1062
        %v4516 = vunpack.c.h.b16 %v1062
        %v4517 = vunpack.c.l.b16 %v1063
        %v4518 = vunpack.c.h.b16 %v1063
        %v4519 = vunpack.c.l.b16 %v1064
        %v4520 = vunpack.c.h.b16 %v1064
        %v4521 = vunpack.c.l.b16 %v1065
        %v4522 = vunpack.c.h.b16 %v1065
        %v4523 = vunpack.c.l.b16 %v1066
        %v4524 = vunpack.c.h.b16 %v1066
        %v4525 = vunpack.c.l.b16 %v1067
        %v4526 = vunpack.c.h.b16 %v1067
        %v4527 = vunpack.c.l.b16 %v1068
        %v4528 = vunpack.c.h.b16 %v1068
        %v4529 = vunpack.c.l.b16 %v1069
        %v4530 = vunpack.c.h.b16 %v1069
        %v4531 = vunpack.c.l.b16 %v1070
        %v4532 = vunpack.c.h.b16 %v1070
        %v4533 = vunpack.c.l.b16 %v1071
        %v4534 = vunpack.c.h.b16 %v1071
        %v4535 = vunpack.c.l.b16 %v1072
        %v4536 = vunpack.c.h.b16 %v1072
        %v4537 = vunpack.c.l.b16 %v1073
        %v4538 = vunpack.c.h.b16 %v1073
        %v4539 = vunpack.c.l.b16 %v1074
        %v4540 = vunpack.c.h.b16 %v1074
        %v4541 = vunpack.c.l.b16 %v1075
        %v4542 = vunpack.c.h.b16 %v1075
        %v4543 = vunpack.c.l.b16 %v1076
        %v4544 = vunpack.c.h.b16 %v1076
        %v4545 = vunpack.c.l.b16 %v1077
        %v4546 = vunpack.c.h.b16 %v1077
        %v4547 = vunpack.c.l.b16 %v1078
        %v4548 = vunpack.c.h.b16 %v1078
        %v4549 = vunpack.c.l.b16 %v1079
        %v4550 = vunpack.c.h.b16 %v1079
        %v4551 = vunpack.c.l.b16 %v1080
        %v4552 = vunpack.c.h.b16 %v1080
        %v4553 = vunpack.c.l.b16 %v1081
        %v4554 = vunpack.c.h.b16 %v1081
        %v4555 = vunpack.c.l.b16 %v1082
        %v4556 = vunpack.c.h.b16 %v1082
        %v4557 = vunpack.c.l.b16 %v1083
        %v4558 = vunpack.c.h.b16 %v1083
        %v4559 = vunpack.c.l.b16 %v1084
        %v4560 = vunpack.c.h.b16 %v1084
        %v4561 = vunpack.c.l.b16 %v1085
        %v4562 = vunpack.c.h.b16 %v1085
        %v4563 = vunpack.c.l.b16 %v1086
        %v4564 = vunpack.c.h.b16 %v1086
        %v4565 = vunpack.c.l.b16 %v1087
        %v4566 = vunpack.c.h.b16 %v1087
        %v4567 = vunpack.c.l.b16 %v1088
        %v4568 = vunpack.c.h.b16 %v1088
        %v4569 = vunpack.c.l.b16 %v1089
        %v4570 = vunpack.c.h.b16 %v1089
        %v4571 = vunpack.c.l.b16 %v1090
        %v4572 = vunpack.c.h.b16 %v1090
        %v4573 = vunpack.c.l.b16 %v1091
        %v4574 = vunpack.c.h.b16 %v1091
        %v4575 = vunpack.c.l.b16 %v1092
        %v4576 = vunpack.c.h.b16 %v1092
        %v4577 = vunpack.c.l.b16 %v1093
        %v4578 = vunpack.c.h.b16 %v1093
        %v4579 = vunpack.c.l.b16 %v1094
        %v4580 = vunpack.c.h.b16 %v1094
        %v4581 = vunpack.c.l.b16 %v1095
        %v4582 = vunpack.c.h.b16 %v1095
        %v4583 = vunpack.c.l.b16 %v1096
        %v4584 = vunpack.c.h.b16 %v1096
        %v4585 = vunpack.c.l.b16 %v1097
        %v4586 = vunpack.c.h.b16 %v1097
        %v4587 = vunpack.c.l.b16 %v1098
        %v4588 = vunpack.c.h.b16 %v1098
        %v4589 = vunpack.c.l.b16 %v1099
        %v4590 = vunpack.c.h.b16 %v1099
        %v4591 = vunpack.c.l.b16 %v1100
        %v4592 = vunpack.c.h.b16 %v1100
        %v4593 = vunpack.c.l.b16 %v1101
        %v4594 = vunpack.c.h.b16 %v1101
        %v4595 = vunpack.c.l.b16 %v1102
        %v4596 = vunpack.c.h.b16 %v1102
        %v4597 = vunpack.c.l.b16 %v1103
        %v4598 = vunpack.c.h.b16 %v1103
        %v4599 = vunpack.c.l.b16 %v1104
        %v4600 = vunpack.c.h.b16 %v1104
        %v4601 = vunpack.c.l.b16 %v1105
        %v4602 = vunpack.c.h.b16 %v1105
        %v4603 = vunpack.c.l.b16 %v1106
        %v4604 = vunpack.c.h.b16 %v1106
        %v4605 = vunpack.c.l.b16 %v1107
        %v4606 = vunpack.c.h.b16 %v1107
        %v4607 = vunpack.c.l.b16 %v1108
        %v4608 = vunpack.c.h.b16 %v1108
        %v4609 = vunpack.c.l.b16 %v1109
        %v4610 = vunpack.c.h.b16 %v1109
        %v4611 = vunpack.c.l.b16 %v1110
        %v4612 = vunpack.c.h.b16 %v1110
        %v4613 = vunpack.c.l.b16 %v1111
        %v4614 = vunpack.c.h.b16 %v1111
        %v4615 = vunpack.c.l.b16 %v1112
        %v4616 = vunpack.c.h.b16 %v1112
        %v4617 = vunpack.c.l.b16 %v1113
        %v4618 = vunpack.c.h.b16 %v1113
        %v4619 = vunpack.c.l.b16 %v1114
        %v4620 = vunpack.c.h.b16 %v1114
        %v4621 = vunpack.c.l.b16 %v1115
        %v4622 = vunpack.c.h.b16 %v1115
        %v4623 = vunpack.c.l.b16 %v1116
        %v4624 = vunpack.c.h.b16 %v1116
        %v4625 = vunpack.c.l.b16 %v1117
        %v4626 = vunpack.c.h.b16 %v1117
        %v4627 = vunpack.c.l.b16 %v1118
        %v4628 = vunpack.c.h.b16 %v1118
        %v4629 = vunpack.c.l.b16 %v1119
        %v4630 = vunpack.c.h.b16 %v1119
        %v4631 = vunpack.c.l.b16 %v1120
        %v4632 = vunpack.c.h.b16 %v1120
        %v4633 = vunpack.c.l.b16 %v1121
        %v4634 = vunpack.c.h.b16 %v1121
        %v4635 = vunpack.c.l.b16 %v1122
        %v4636 = vunpack.c.h.b16 %v1122
        %v4637 = vunpack.c.l.b16 %v1123
        %v4638 = vunpack.c.h.b16 %v1123
        %v4639 = vunpack.c.l.b16 %v1124
        %v4640 = vunpack.c.h.b16 %v1124
        %v4641 = vunpack.c.l.b16 %v1125
        %v4642 = vunpack.c.h.b16 %v1125
        %v4643 = vunpack.c.l.b16 %v1126
        %v4644 = vunpack.c.h.b16 %v1126
        %v4645 = vunpack.c.l.b16 %v1127
        %v4646 = vunpack.c.h.b16 %v1127
        %v4647 = vunpack.c.l.b16 %v1128
        %v4648 = vunpack.c.h.b16 %v1128
        %v4649 = vunpack.c.l.b16 %v1129
        %v4650 = vunpack.c.h.b16 %v1129
        %v4651 = vunpack.c.l.b16 %v1130
        %v4652 = vunpack.c.h.b16 %v1130
        %v4653 = vunpack.c.l.b16 %v1131
        %v4654 = vunpack.c.h.b16 %v1131
        %v4655 = vunpack.c.l.b16 %v1132
        %v4656 = vunpack.c.h.b16 %v1132
        %v4657 = vunpack.c.l.b16 %v1133
        %v4658 = vunpack.c.h.b16 %v1133
        %v4659 = vunpack.c.l.b16 %v1134
        %v4660 = vunpack.c.h.b16 %v1134
        %v4661 = vunpack.c.l.b16 %v1135
        %v4662 = vunpack.c.h.b16 %v1135
        %v4663 = vunpack.c.l.b16 %v1136
        %v4664 = vunpack.c.h.b16 %v1136
        %v4665 = vunpack.c.l.b16 %v1137
        %v4666 = vunpack.c.h.b16 %v1137
        %v4667 = vunpack.c.l.b16 %v1138
        %v4668 = vunpack.c.h.b16 %v1138
        %v4669 = vunpack.c.l.b16 %v1139
        %v4670 = vunpack.c.h.b16 %v1139
        %v4671 = vunpack.c.l.b16 %v1140
        %v4672 = vunpack.c.h.b16 %v1140
        %v4673 = vunpack.c.l.b16 %v1141
        %v4674 = vunpack.c.h.b16 %v1141
        %v4675 = vunpack.c.l.b16 %v1142
        %v4676 = vunpack.c.h.b16 %v1142
        %v4677 = vunpack.c.l.b16 %v1143
        %v4678 = vunpack.c.h.b16 %v1143
        %v4679 = vunpack.c.l.b16 %v1144
        %v4680 = vunpack.c.h.b16 %v1144
        %v4681 = vunpack.c.l.b16 %v1145
        %v4682 = vunpack.c.h.b16 %v1145
        %v4683 = vunpack.c.l.b16 %v1146
        %v4684 = vunpack.c.h.b16 %v1146
        %v4685 = vunpack.c.l.b16 %v1147
        %v4686 = vunpack.c.h.b16 %v1147
        %v4687 = vunpack.c.l.b16 %v1148
        %v4688 = vunpack.c.h.b16 %v1148
        %v4689 = vunpack.c.l.b16 %v1149
        %v4690 = vunpack.c.h.b16 %v1149
        %v4691 = vunpack.c.l.b16 %v1150
        %v4692 = vunpack.c.h.b16 %v1150
        %v4693 = vunpack.c.l.b16 %v1151
        %v4694 = vunpack.c.h.b16 %v1151
        %v4695 = vunpack.c.l.b16 %v1152
        %v4696 = vunpack.c.h.b16 %v1152
        %v4697 = vunpack.c.l.b16 %v1153
        %v4698 = vunpack.c.h.b16 %v1153
        %v4699 = vunpack.c.l.b16 %v1154
        %v4700 = vunpack.c.h.b16 %v1154
        %v4701 = vunpack.c.l.b16 %v1155
        %v4702 = vunpack.c.h.b16 %v1155
        %v4703 = vunpack.c.l.b16 %v1156
        %v4704 = vunpack.c.h.b16 %v1156
        %v4705 = vunpack.c.l.b16 %v1157
        %v4706 = vunpack.c.h.b16 %v1157
        %v4707 = vunpack.c.l.b16 %v1158
        %v4708 = vunpack.c.h.b16 %v1158
        %v4709 = vunpack.c.l.b16 %v1159
        %v4710 = vunpack.c.h.b16 %v1159
        %v4711 = vunpack.c.l.b16 %v1160
        %v4712 = vunpack.c.h.b16 %v1160
        %v4713 = vunpack.c.l.b16 %v1161
        %v4714 = vunpack.c.h.b16 %v1161
        %v4715 = vunpack.c.l.b16 %v1162
        %v4716 = vunpack.c.h.b16 %v1162
        %v4717 = vunpack.c.l.b16 %v1163
        %v4718 = vunpack.c.h.b16 %v1163
        %v4719 = vunpack.c.l.b16 %v1164
        %v4720 = vunpack.c.h.b16 %v1164
        %v4721 = vunpack.c.l.b16 %v1165
        %v4722 = vunpack.c.h.b16 %v1165
        %v4723 = vunpack.c.l.b16 %v1166
        %v4724 = vunpack.c.h.b16 %v1166
        %v4725 = vunpack.c.l.b16 %v1167
        %v4726 = vunpack.c.h.b16 %v1167
        %v4727 = vunpack.c.l.b16 %v1168
        %v4728 = vunpack.c.h.b16 %v1168
        %v4729 = vunpack.c.l.b16 %v1169
        %v4730 = vunpack.c.h.b16 %v1169
        %v4731 = vunpack.c.l.b16 %v1170
        %v4732 = vunpack.c.h.b16 %v1170
        %v4733 = vunpack.c.l.b16 %v1171
        %v4734 = vunpack.c.h.b16 %v1171
        %v4735 = vunpack.c.l.b16 %v1172
        %v4736 = vunpack.c.h.b16 %v1172
        %v4737 = vunpack.c.l.b16 %v1173
        %v4738 = vunpack.c.h.b16 %v1173
        %v4739 = vunpack.c.l.b16 %v1174
        %v4740 = vunpack.c.h.b16 %v1174
        %v4741 = vunpack.c.l.b16 %v1175
        %v4742 = vunpack.c.h.b16 %v1175
        %v4743 = vunpack.c.l.b16 %v1176
        %v4744 = vunpack.c.h.b16 %v1176
        %v4745 = vunpack.c.l.b16 %v1177
        %v4746 = vunpack.c.h.b16 %v1177
        %v4747 = vunpack.c.l.b16 %v1178
        %v4748 = vunpack.c.h.b16 %v1178
        %v4749 = vunpack.c.l.b16 %v1179
        %v4750 = vunpack.c.h.b16 %v1179
        %v4751 = vunpack.c.l.b16 %v1180
        %v4752 = vunpack.c.h.b16 %v1180
        %v4753 = vunpack.c.l.b16 %v1181
        %v4754 = vunpack.c.h.b16 %v1181
        %v4755 = vunpack.c.l.b16 %v1182
        %v4756 = vunpack.c.h.b16 %v1182
        %v4757 = vunpack.c.l.b16 %v1183
        %v4758 = vunpack.c.h.b16 %v1183
        %v4759 = vunpack.c.l.b16 %v1184
        %v4760 = vunpack.c.h.b16 %v1184
        %v4761 = vunpack.c.l.b16 %v1185
        %v4762 = vunpack.c.h.b16 %v1185
        %v4763 = vunpack.c.l.b16 %v1186
        %v4764 = vunpack.c.h.b16 %v1186
        %v4765 = vunpack.c.l.b16 %v1187
        %v4766 = vunpack.c.h.b16 %v1187
        %v4767 = vunpack.c.l.b16 %v1188
        %v4768 = vunpack.c.h.b16 %v1188
        %v4769 = vunpack.c.l.b16 %v1189
        %v4770 = vunpack.c.h.b16 %v1189
        %v4771 = vunpack.c.l.b16 %v1190
        %v4772 = vunpack.c.h.b16 %v1190
        %v4773 = vunpack.c.l.b16 %v1191
        %v4774 = vunpack.c.h.b16 %v1191
        %v4775 = vunpack.c.l.b16 %v1192
        %v4776 = vunpack.c.h.b16 %v1192
        %v4777 = vunpack.c.l.b16 %v1193
        %v4778 = vunpack.c.h.b16 %v1193
        %v4779 = vunpack.c.l.b16 %v1194
        %v4780 = vunpack.c.h.b16 %v1194
        %v4781 = vunpack.c.l.b16 %v1195
        %v4782 = vunpack.c.h.b16 %v1195
        %v4783 = vunpack.c.l.b16 %v1196
        %v4784 = vunpack.c.h.b16 %v1196
        %v4785 = vunpack.c.l.b16 %v1197
        %v4786 = vunpack.c.h.b16 %v1197
        %v4787 = vunpack.c.l.b16 %v1198
        %v4788 = vunpack.c.h.b16 %v1198
        %v4789 = vunpack.c.l.b16 %v1199
        %v4790 = vunpack.c.h.b16 %v1199
        %v4791 = vunpack.c.l.b16 %v1200
        %v4792 = vunpack.c.h.b16 %v1200
        %v4793 = vunpack.c.l.b16 %v1201
        %v4794 = vunpack.c.h.b16 %v1201
        %v4795 = vunpack.c.l.b16 %v1202
        %v4796 = vunpack.c.h.b16 %v1202
        %v4797 = vunpack.c.l.b16 %v1203
        %v4798 = vunpack.c.h.b16 %v1203
        %v4799 = vunpack.c.l.b16 %v1204
        %v4800 = vunpack.c.h.b16 %v1204
        %v4801 = vunpack.c.l.b16 %v1205
        %v4802 = vunpack.c.h.b16 %v1205
        %v4803 = vunpack.c.l.b16 %v1206
        %v4804 = vunpack.c.h.b16 %v1206
        %v4805 = vunpack.c.l.b16 %v1207
        %v4806 = vunpack.c.h.b16 %v1207
        %v4807 = vunpack.c.l.b16 %v1208
        %v4808 = vunpack.c.h.b16 %v1208
        %v4809 = vunpack.c.l.b16 %v1209
        %v4810 = vunpack.c.h.b16 %v1209
        %v4811 = vunpack.c.l.b16 %v1210
        %v4812 = vunpack.c.h.b16 %v1210
        %v4813 = vunpack.c.l.b16 %v1211
        %v4814 = vunpack.c.h.b16 %v1211
        %v4815 = vunpack.c.l.b16 %v1212
        %v4816 = vunpack.c.h.b16 %v1212
        %v4817 = vunpack.c.l.b16 %v1213
        %v4818 = vunpack.c.h.b16 %v1213
        %v4819 = vunpack.c.l.b16 %v1214
        %v4820 = vunpack.c.h.b16 %v1214
        %v4821 = vunpack.c.l.b16 %v1215
        %v4822 = vunpack.c.h.b16 %v1215
        %v4823 = vunpack.c.l.b16 %v1216
        %v4824 = vunpack.c.h.b16 %v1216
        %v4825 = vunpack.c.l.b16 %v1217
        %v4826 = vunpack.c.h.b16 %v1217
        %v4827 = vunpack.c.l.b16 %v1218
        %v4828 = vunpack.c.h.b16 %v1218
        %v4829 = vunpack.c.l.b16 %v1219
        %v4830 = vunpack.c.h.b16 %v1219
        %v4831 = vunpack.c.l.b16 %v1220
        %v4832 = vunpack.c.h.b16 %v1220
        %v4833 = vunpack.c.l.b16 %v1221
        %v4834 = vunpack.c.h.b16 %v1221
        %v4835 = vunpack.c.l.b16 %v1222
        %v4836 = vunpack.c.h.b16 %v1222
        %v4837 = vunpack.c.l.b16 %v1223
        %v4838 = vunpack.c.h.b16 %v1223
        %v4839 = vunpack.c.l.b16 %v1224
        %v4840 = vunpack.c.h.b16 %v1224
        %v4841 = vunpack.c.l.b16 %v1225
        %v4842 = vunpack.c.h.b16 %v1225
        %v4843 = vunpack.c.l.b16 %v1226
        %v4844 = vunpack.c.h.b16 %v1226
        %v4845 = vunpack.c.l.b16 %v1227
        %v4846 = vunpack.c.h.b16 %v1227
        %v4847 = vunpack.c.l.b16 %v1228
        %v4848 = vunpack.c.h.b16 %v1228
        %v4849 = vunpack.c.l.b16 %v1229
        %v4850 = vunpack.c.h.b16 %v1229
        %v4851 = vunpack.c.l.b16 %v1230
        %v4852 = vunpack.c.h.b16 %v1230
        %v4853 = vunpack.c.l.b16 %v1231
        %v4854 = vunpack.c.h.b16 %v1231
        %v4855 = vunpack.c.l.b16 %v1232
        %v4856 = vunpack.c.h.b16 %v1232
        %v4857 = vunpack.c.l.b16 %v1233
        %v4858 = vunpack.c.h.b16 %v1233
        %v4859 = vunpack.c.l.b16 %v1234
        %v4860 = vunpack.c.h.b16 %v1234
        %v4861 = vunpack.c.l.b16 %v1235
        %v4862 = vunpack.c.h.b16 %v1235
        %v4863 = vunpack.c.l.b16 %v1236
        %v4864 = vunpack.c.h.b16 %v1236
        %v4865 = vunpack.c.l.b16 %v1237
        %v4866 = vunpack.c.h.b16 %v1237
        %v4867 = vunpack.c.l.b16 %v1238
        %v4868 = vunpack.c.h.b16 %v1238
        %v4869 = vunpack.c.l.b16 %v1239
        %v4870 = vunpack.c.h.b16 %v1239
        %v4871 = vunpack.c.l.b16 %v1240
        %v4872 = vunpack.c.h.b16 %v1240
        %v4873 = vunpack.c.l.b16 %v1241
        %v4874 = vunpack.c.h.b16 %v1241
        %v4875 = vunpack.c.l.b16 %v1242
        %v4876 = vunpack.c.h.b16 %v1242
        %v4877 = vunpack.c.l.b16 %v1243
        %v4878 = vunpack.c.h.b16 %v1243
        %v4879 = vunpack.c.l.b16 %v1244
        %v4880 = vunpack.c.h.b16 %v1244
        %v4881 = vunpack.c.l.b16 %v1245
        %v4882 = vunpack.c.h.b16 %v1245
        %v4883 = vunpack.c.l.b16 %v1246
        %v4884 = vunpack.c.h.b16 %v1246
        %v4885 = vunpack.c.l.b16 %v1247
        %v4886 = vunpack.c.h.b16 %v1247
        %v4887 = vunpack.c.l.b16 %v1248
        %v4888 = vunpack.c.h.b16 %v1248
        %v4889 = vunpack.c.l.b16 %v1249
        %v4890 = vunpack.c.h.b16 %v1249
        %v4891 = vunpack.c.l.b16 %v1250
        %v4892 = vunpack.c.h.b16 %v1250
        %v4893 = vunpack.c.l.b16 %v1251
        %v4894 = vunpack.c.h.b16 %v1251
        %v4895 = vunpack.c.l.b16 %v1252
        %v4896 = vunpack.c.h.b16 %v1252
        %v4897 = vunpack.c.l.b16 %v1253
        %v4898 = vunpack.c.h.b16 %v1253
        %v4899 = vunpack.c.l.b16 %v1254
        %v4900 = vunpack.c.h.b16 %v1254
        %v4901 = vunpack.c.l.b16 %v1255
        %v4902 = vunpack.c.h.b16 %v1255
        %v4903 = vunpack.c.l.b16 %v1256
        %v4904 = vunpack.c.h.b16 %v1256
        %v4905 = vunpack.c.l.b16 %v1257
        %v4906 = vunpack.c.h.b16 %v1257
        %v4907 = vunpack.c.l.b16 %v1258
        %v4908 = vunpack.c.h.b16 %v1258
        %v4909 = vunpack.c.l.b16 %v1259
        %v4910 = vunpack.c.h.b16 %v1259
        %v4911 = vunpack.c.l.b16 %v1260
        %v4912 = vunpack.c.h.b16 %v1260
        %v4913 = vunpack.c.l.b16 %v1261
        %v4914 = vunpack.c.h.b16 %v1261
        %v4915 = vunpack.c.l.b16 %v1262
        %v4916 = vunpack.c.h.b16 %v1262
        %v4917 = vunpack.c.l.b16 %v1263
        %v4918 = vunpack.c.h.b16 %v1263
        %v4919 = vunpack.c.l.b16 %v1264
        %v4920 = vunpack.c.h.b16 %v1264
        %v4921 = vunpack.c.l.b16 %v1265
        %v4922 = vunpack.c.h.b16 %v1265
        %v4923 = vunpack.c.l.b16 %v1266
        %v4924 = vunpack.c.h.b16 %v1266
        %v4925 = vunpack.c.l.b16 %v1267
        %v4926 = vunpack.c.h.b16 %v1267
        %v4927 = vunpack.c.l.b16 %v1268
        %v4928 = vunpack.c.h.b16 %v1268
        %v4929 = vunpack.c.l.b16 %v1269
        %v4930 = vunpack.c.h.b16 %v1269
        %v4931 = vunpack.c.l.b16 %v1270
        %v4932 = vunpack.c.h.b16 %v1270
        %v4933 = vunpack.c.l.b16 %v1271
        %v4934 = vunpack.c.h.b16 %v1271
        %v4935 = vunpack.c.l.b16 %v1272
        %v4936 = vunpack.c.h.b16 %v1272
        %v4937 = vunpack.c.l.b16 %v1273
        %v4938 = vunpack.c.h.b16 %v1273
        %v4939 = vunpack.c.l.b16 %v1274
        %v4940 = vunpack.c.h.b16 %v1274
        %v4941 = vunpack.c.l.b16 %v1275
        %v4942 = vunpack.c.h.b16 %v1275
        %v4943 = vunpack.c.l.b16 %v1276
        %v4944 = vunpack.c.h.b16 %v1276
        %v4945 = vunpack.c.l.b16 %v1277
        %v4946 = vunpack.c.h.b16 %v1277
        %v4947 = vunpack.c.l.b16 %v1278
        %v4948 = vunpack.c.h.b16 %v1278
        %v4949 = vunpack.c.l.b16 %v1279
        %v4950 = vunpack.c.h.b16 %v1279
        %v4951 = vunpack.c.l.b16 %v1280
        %v4952 = vunpack.c.h.b16 %v1280
        %v4953 = vunpack.c.l.b16 %v1281
        %v4954 = vunpack.c.h.b16 %v1281
        %v4955 = vunpack.c.l.b16 %v1282
        %v4956 = vunpack.c.h.b16 %v1282
        %v4957 = vunpack.c.l.b16 %v1283
        %v4958 = vunpack.c.h.b16 %v1283
        %v4959 = vunpack.c.l.b16 %v1284
        %v4960 = vunpack.c.h.b16 %v1284
        %v4961 = vunpack.c.l.b16 %v1285
        %v4962 = vunpack.c.h.b16 %v1285
        %v4963 = vunpack.c.l.b16 %v1286
        %v4964 = vunpack.c.h.b16 %v1286
        %v4965 = vunpack.c.l.b16 %v1287
        %v4966 = vunpack.c.h.b16 %v1287
        %v4967 = vunpack.c.l.b16 %v1288
        %v4968 = vunpack.c.h.b16 %v1288
        %v4969 = vunpack.c.l.b16 %v1289
        %v4970 = vunpack.c.h.b16 %v1289
        %v4971 = vunpack.c.l.b16 %v1290
        %v4972 = vunpack.c.h.b16 %v1290
        %v4973 = vunpack.c.l.b16 %v1291
        %v4974 = vunpack.c.h.b16 %v1291
        %v4975 = vunpack.c.l.b16 %v1292
        %v4976 = vunpack.c.h.b16 %v1292
        %v4977 = vunpack.c.l.b16 %v1293
        %v4978 = vunpack.c.h.b16 %v1293
        %v4979 = vunpack.c.l.b16 %v1294
        %v4980 = vunpack.c.h.b16 %v1294
        %v4981 = vunpack.c.l.b16 %v1295
        %v4982 = vunpack.c.h.b16 %v1295
        %v4983 = vunpack.c.l.b16 %v1296
        %v4984 = vunpack.c.h.b16 %v1296
        %v4985 = vunpack.c.l.b16 %v1297
        %v4986 = vunpack.c.h.b16 %v1297
        %v4987 = vunpack.c.l.b16 %v1298
        %v4988 = vunpack.c.h.b16 %v1298
        %v4989 = vunpack.c.l.b16 %v1299
        %v4990 = vunpack.c.h.b16 %v1299
        %v4991 = vunpack.c.l.b16 %v1300
        %v4992 = vunpack.c.h.b16 %v1300
        %v4993 = vunpack.c.l.b16 %v1301
        %v4994 = vunpack.c.h.b16 %v1301
        %v4995 = vunpack.c.l.b16 %v1302
        %v4996 = vunpack.c.h.b16 %v1302
        %v4997 = vunpack.c.l.b16 %v1303
        %v4998 = vunpack.c.h.b16 %v1303
        %v4999 = vunpack.c.l.b16 %v1304
        %v5000 = vunpack.c.h.b16 %v1304
        %v5001 = vunpack.c.l.b16 %v1305
        %v5002 = vunpack.c.h.b16 %v1305
        %v5003 = vunpack.c.l.b16 %v1306
        %v5004 = vunpack.c.h.b16 %v1306
        %v5005 = vunpack.c.l.b16 %v1307
        %v5006 = vunpack.c.h.b16 %v1307
        %v5007 = vunpack.c.l.b16 %v1308
        %v5008 = vunpack.c.h.b16 %v1308
        %v5009 = vunpack.c.l.b16 %v1309
        %v5010 = vunpack.c.h.b16 %v1309
        %v5011 = vunpack.c.l.b16 %v1310
        %v5012 = vunpack.c.h.b16 %v1310
        %v5013 = vunpack.c.l.b16 %v1311
        %v5014 = vunpack.c.h.b16 %v1311
        %v5015 = vunpack.c.l.b16 %v1312
        %v5016 = vunpack.c.h.b16 %v1312
        %v5017 = vunpack.c.l.b16 %v1313
        %v5018 = vunpack.c.h.b16 %v1313
        %v5019 = vunpack.c.l.b16 %v1314
        %v5020 = vunpack.c.h.b16 %v1314
        %v5021 = vunpack.c.l.b16 %v1315
        %v5022 = vunpack.c.h.b16 %v1315
        %v5023 = vunpack.c.l.b16 %v1316
        %v5024 = vunpack.c.h.b16 %v1316
        %v5025 = vunpack.c.l.b16 %v1317
        %v5026 = vunpack.c.h.b16 %v1317
        %v5027 = vunpack.c.l.b16 %v1318
        %v5028 = vunpack.c.h.b16 %v1318
        %v5029 = vunpack.c.l.b16 %v1319
        %v5030 = vunpack.c.h.b16 %v1319
        %v5031 = vunpack.c.l.b16 %v1320
        %v5032 = vunpack.c.h.b16 %v1320
        %v5033 = vunpack.c.l.b16 %v1321
        %v5034 = vunpack.c.h.b16 %v1321
        %v5035 = vunpack.c.l.b16 %v1322
        %v5036 = vunpack.c.h.b16 %v1322
        %v5037 = vunpack.c.l.b16 %v1323
        %v5038 = vunpack.c.h.b16 %v1323
        %v5039 = vunpack.c.l.b16 %v1324
        %v5040 = vunpack.c.h.b16 %v1324
        %v5041 = vunpack.c.l.b16 %v1325
        %v5042 = vunpack.c.h.b16 %v1325
        %v5043 = vunpack.c.l.b16 %v1326
        %v5044 = vunpack.c.h.b16 %v1326
        %v5045 = vunpack.c.l.b16 %v1327
        %v5046 = vunpack.c.h.b16 %v1327
        %v5047 = vunpack.c.l.b16 %v1328
        %v5048 = vunpack.c.h.b16 %v1328
        %v5049 = vunpack.c.l.b16 %v1329
        %v5050 = vunpack.c.h.b16 %v1329
        %v5051 = vunpack.c.l.b16 %v1330
        %v5052 = vunpack.c.h.b16 %v1330
        %v5053 = vunpack.c.l.b16 %v1331
        %v5054 = vunpack.c.h.b16 %v1331
        %v5055 = vunpack.c.l.b16 %v1332
        %v5056 = vunpack.c.h.b16 %v1332
        %v5057 = vunpack.c.l.b16 %v1333
        %v5058 = vunpack.c.h.b16 %v1333
        %v5059 = vunpack.c.l.b16 %v1334
        %v5060 = vunpack.c.h.b16 %v1334
        %v5061 = vunpack.c.l.b16 %v1335
        %v5062 = vunpack.c.h.b16 %v1335
        %v5063 = vunpack.c.l.b16 %v1336
        %v5064 = vunpack.c.h.b16 %v1336
        %v5065 = vunpack.c.l.b16 %v1337
        %v5066 = vunpack.c.h.b16 %v1337
        %v5067 = vunpack.c.l.b16 %v1338
        %v5068 = vunpack.c.h.b16 %v1338
        %v5069 = vunpack.c.l.b16 %v1339
        %v5070 = vunpack.c.h.b16 %v1339
        %v5071 = vunpack.c.l.b16 %v1340
        %v5072 = vunpack.c.h.b16 %v1340
        %v5073 = vunpack.c.l.b16 %v1341
        %v5074 = vunpack.c.h.b16 %v1341
        %v5075 = vunpack.c.l.b16 %v1342
        %v5076 = vunpack.c.h.b16 %v1342
        %v5077 = vunpack.c.l.b16 %v1343
        %v5078 = vunpack.c.h.b16 %v1343
        %v5079 = vunpack.c.l.b16 %v1344
        %v5080 = vunpack.c.h.b16 %v1344
        %v5081 = vunpack.c.l.b16 %v1345
        %v5082 = vunpack.c.h.b16 %v1345
        %v5083 = vunpack.c.l.b16 %v1346
        %v5084 = vunpack.c.h.b16 %v1346
        %v5085 = vunpack.c.l.b16 %v1347
        %v5086 = vunpack.c.h.b16 %v1347
        %v5087 = vunpack.c.l.b16 %v1348
        %v5088 = vunpack.c.h.b16 %v1348
        %v5089 = vunpack.c.l.b16 %v1349
        %v5090 = vunpack.c.h.b16 %v1349
        %v5091 = vunpack.c.l.b16 %v1350
        %v5092 = vunpack.c.h.b16 %v1350
        %v5093 = vunpack.c.l.b16 %v1351
        %v5094 = vunpack.c.h.b16 %v1351
        %v5095 = vunpack.c.l.b16 %v1352
        %v5096 = vunpack.c.h.b16 %v1352
        %v5097 = vunpack.c.l.b16 %v1353
        %v5098 = vunpack.c.h.b16 %v1353
        %v5099 = vunpack.c.l.b16 %v1354
        %v5100 = vunpack.c.h.b16 %v1354
        %v5101 = vunpack.c.l.b16 %v1355
        %v5102 = vunpack.c.h.b16 %v1355
        %v5103 = vunpack.c.l.b16 %v1356
        %v5104 = vunpack.c.h.b16 %v1356
        %v5105 = vunpack.c.l.b16 %v1357
        %v5106 = vunpack.c.h.b16 %v1357
        %v5107 = vunpack.c.l.b16 %v1358
        %v5108 = vunpack.c.h.b16 %v1358
        %v5109 = vunpack.c.l.b16 %v1359
        %v5110 = vunpack.c.h.b16 %v1359
        %v5111 = vunpack.c.l.b16 %v1360
        %v5112 = vunpack.c.h.b16 %v1360
        %v5113 = vunpack.c.l.b16 %v1361
        %v5114 = vunpack.c.h.b16 %v1361
        %v5115 = vunpack.c.l.b16 %v1362
        %v5116 = vunpack.c.h.b16 %v1362
        %v5117 = vunpack.c.l.b16 %v1363
        %v5118 = vunpack.c.h.b16 %v1363
        %v5119 = vunpack.c.l.b16 %v1364
        %v5120 = vunpack.c.h.b16 %v1364
        %v5121 = vunpack.c.l.b16 %v1365
        %v5122 = vunpack.c.h.b16 %v1365
        %v5123 = vunpack.c.l.b16 %v1366
        %v5124 = vunpack.c.h.b16 %v1366
        %v5125 = vunpack.c.l.b16 %v1367
        %v5126 = vunpack.c.h.b16 %v1367
        %v5127 = vunpack.c.l.b16 %v1368
        %v5128 = vunpack.c.h.b16 %v1368
        %v5129 = vunpack.c.l.b16 %v1369
        %v5130 = vunpack.c.h.b16 %v1369
        %v5131 = vunpack.c.l.b16 %v1370
        %v5132 = vunpack.c.h.b16 %v1370
        %v5133 = vunpack.c.l.b16 %v1371
        %v5134 = vunpack.c.h.b16 %v1371
        %v5135 = vunpack.c.l.b16 %v1372
        %v5136 = vunpack.c.h.b16 %v1372
        %v5137 = vunpack.c.l.b16 %v1373
        %v5138 = vunpack.c.h.b16 %v1373
        %v5139 = vunpack.c.l.b16 %v1374
        %v5140 = vunpack.c.h.b16 %v1374
        %v5141 = vunpack.c.l.b16 %v1375
        %v5142 = vunpack.c.h.b16 %v1375
        %v5143 = vunpack.c.l.b16 %v1376
        %v5144 = vunpack.c.h.b16 %v1376
        %v5145 = vunpack.c.l.b16 %v1377
        %v5146 = vunpack.c.h.b16 %v1377
        %v5147 = vunpack.c.l.b16 %v1378
        %v5148 = vunpack.c.h.b16 %v1378
        %v5149 = vunpack.c.l.b16 %v1379
        %v5150 = vunpack.c.h.b16 %v1379
        %v5151 = vunpack.c.l.b16 %v1380
        %v5152 = vunpack.c.h.b16 %v1380
        %v5153 = vunpack.c.l.b16 %v1381
        %v5154 = vunpack.c.h.b16 %v1381
        %v5155 = vunpack.c.l.b16 %v1382
        %v5156 = vunpack.c.h.b16 %v1382
        %v5157 = vunpack.c.l.b16 %v1383
        %v5158 = vunpack.c.h.b16 %v1383
        %v5159 = vunpack.c.l.b16 %v1384
        %v5160 = vunpack.c.h.b16 %v1384
        %v5161 = vunpack.c.l.b16 %v1385
        %v5162 = vunpack.c.h.b16 %v1385
        %v5163 = vunpack.c.l.b16 %v1386
        %v5164 = vunpack.c.h.b16 %v1386
        %v5165 = vunpack.c.l.b16 %v1387
        %v5166 = vunpack.c.h.b16 %v1387
        %v5167 = vunpack.c.l.b16 %v1388
        %v5168 = vunpack.c.h.b16 %v1388
        %v5169 = vunpack.c.l.b16 %v1389
        %v5170 = vunpack.c.h.b16 %v1389
        %v5171 = vunpack.c.l.b16 %v1390
        %v5172 = vunpack.c.h.b16 %v1390
        %v5173 = vunpack.c.l.b16 %v1391
        %v5174 = vunpack.c.h.b16 %v1391
        %v5175 = vunpack.c.l.b16 %v1392
        %v5176 = vunpack.c.h.b16 %v1392
        %v5177 = vunpack.c.l.b16 %v1393
        %v5178 = vunpack.c.h.b16 %v1393
        %v5179 = vunpack.c.l.b16 %v1394
        %v5180 = vunpack.c.h.b16 %v1394
        %v5181 = vunpack.c.l.b16 %v1395
        %v5182 = vunpack.c.h.b16 %v1395
        %v5183 = vunpack.c.l.b16 %v1396
        %v5184 = vunpack.c.h.b16 %v1396
        %v5185 = vunpack.c.l.b16 %v1397
        %v5186 = vunpack.c.h.b16 %v1397
        %v5187 = vunpack.c.l.b16 %v1398
        %v5188 = vunpack.c.h.b16 %v1398
        %v5189 = vunpack.c.l.b16 %v1399
        %v5190 = vunpack.c.h.b16 %v1399
        %v5191 = vunpack.c.l.b16 %v1400
        %v5192 = vunpack.c.h.b16 %v1400
        %v5193 = vunpack.c.l.b16 %v1401
        %v5194 = vunpack.c.h.b16 %v1401
        %v5195 = vunpack.c.l.b16 %v1402
        %v5196 = vunpack.c.h.b16 %v1402
        %v5197 = vunpack.c.l.b16 %v1403
        %v5198 = vunpack.c.h.b16 %v1403
        %v5199 = vunpack.c.l.b16 %v1404
        %v5200 = vunpack.c.h.b16 %v1404
        %v5201 = vunpack.c.l.b16 %v1405
        %v5202 = vunpack.c.h.b16 %v1405
        %v5203 = vunpack.c.l.b16 %v1406
        %v5204 = vunpack.c.h.b16 %v1406
        %v5205 = vunpack.c.l.b16 %v1407
        %v5206 = vunpack.c.h.b16 %v1407
        %v5207 = vunpack.c.l.b16 %v1408
        %v5208 = vunpack.c.h.b16 %v1408
        %v5209 = vunpack.c.l.b16 %v1409
        %v5210 = vunpack.c.h.b16 %v1409
        %v5211 = vunpack.c.l.b16 %v1410
        %v5212 = vunpack.c.h.b16 %v1410
        %v5213 = vunpack.c.l.b16 %v1411
        %v5214 = vunpack.c.h.b16 %v1411
        %v5215 = vunpack.c.l.b16 %v1412
        %v5216 = vunpack.c.h.b16 %v1412
        %v5217 = vunpack.c.l.b16 %v1413
        %v5218 = vunpack.c.h.b16 %v1413
        %v5219 = vunpack.c.l.b16 %v1414
        %v5220 = vunpack.c.h.b16 %v1414
        %v5221 = vunpack.c.l.b16 %v1415
        %v5222 = vunpack.c.h.b16 %v1415
        %v5223 = vunpack.c.l.b16 %v1416
        %v5224 = vunpack.c.h.b16 %v1416
        %v5225 = vunpack.c.l.b16 %v1417
        %v5226 = vunpack.c.h.b16 %v1417
        %v5227 = vunpack.c.l.b16 %v1418
        %v5228 = vunpack.c.h.b16 %v1418
        %v5229 = vunpack.c.l.b16 %v1419
        %v5230 = vunpack.c.h.b16 %v1419
        %v5231 = vunpack.c.l.b16 %v1420
        %v5232 = vunpack.c.h.b16 %v1420
        %v5233 = vunpack.c.l.b16 %v1421
        %v5234 = vunpack.c.h.b16 %v1421
        %v5235 = vunpack.c.l.b16 %v1422
        %v5236 = vunpack.c.h.b16 %v1422
        %v5237 = vunpack.c.l.b16 %v1423
        %v5238 = vunpack.c.h.b16 %v1423
        %v5239 = vunpack.c.l.b16 %v1424
        %v5240 = vunpack.c.h.b16 %v1424
        %v5241 = vunpack.c.l.b16 %v1425
        %v5242 = vunpack.c.h.b16 %v1425
        %v5243 = vunpack.c.l.b16 %v1426
        %v5244 = vunpack.c.h.b16 %v1426
        %v5245 = vunpack.c.l.b16 %v1427
        %v5246 = vunpack.c.h.b16 %v1427
        %v5247 = vunpack.c.l.b16 %v1428
        %v5248 = vunpack.c.h.b16 %v1428
        %v5249 = vunpack.c.l.b16 %v1429
        %v5250 = vunpack.c.h.b16 %v1429
        %v5251 = vunpack.c.l.b16 %v1430
        %v5252 = vunpack.c.h.b16 %v1430
        %v5253 = vunpack.c.l.b16 %v1431
        %v5254 = vunpack.c.h.b16 %v1431
        %v5255 = vunpack.c.l.b16 %v1432
        %v5256 = vunpack.c.h.b16 %v1432
        %v5257 = vunpack.c.l.b16 %v1433
        %v5258 = vunpack.c.h.b16 %v1433
        %v5259 = vunpack.c.l.b16 %v1434
        %v5260 = vunpack.c.h.b16 %v1434
        %v5261 = vunpack.c.l.b16 %v1435
        %v5262 = vunpack.c.h.b16 %v1435
        %v5263 = vunpack.c.l.b16 %v1436
        %v5264 = vunpack.c.h.b16 %v1436
        %v5265 = vunpack.c.l.b16 %v1437
        %v5266 = vunpack.c.h.b16 %v1437
        %v5267 = vunpack.c.l.b16 %v1438
        %v5268 = vunpack.c.h.b16 %v1438
        %v5269 = vunpack.c.l.b16 %v1439
        %v5270 = vunpack.c.h.b16 %v1439
        %v5271 = vunpack.c.l.b16 %v1440
        %v5272 = vunpack.c.h.b16 %v1440
        %v5273 = vunpack.c.l.b16 %v1441
        %v5274 = vunpack.c.h.b16 %v1441
        %v5275 = vunpack.c.l.b16 %v1442
        %v5276 = vunpack.c.h.b16 %v1442
        %v5277 = vunpack.c.l.b16 %v1443
        %v5278 = vunpack.c.h.b16 %v1443
        %v5279 = vunpack.c.l.b16 %v1444
        %v5280 = vunpack.c.h.b16 %v1444
        %v5281 = vunpack.c.l.b16 %v1445
        %v5282 = vunpack.c.h.b16 %v1445
        %v5283 = vunpack.c.l.b16 %v1446
        %v5284 = vunpack.c.h.b16 %v1446
        %v5285 = vunpack.c.l.b16 %v1447
        %v5286 = vunpack.c.h.b16 %v1447
        %v5287 = vunpack.c.l.b16 %v1448
        %v5288 = vunpack.c.h.b16 %v1448
        %v5289 = vpack.c.b16 %v3179, %v3177
        %v5290 = vpack.c.b16 %v3180, %v3178
        %v5291 = vpack.c.b16 %v3183, %v3181
        %v5292 = vpack.c.b16 %v3184, %v3182
        %v5293 = vpack.c.b16 %v3187, %v3185
        %v5294 = vpack.c.b16 %v3188, %v3186
        %v5295 = vpack.c.b16 %v3191, %v3189
        %v5296 = vpack.c.b16 %v3192, %v3190
        %v5297 = vpack.c.b16 %v3195, %v3193
        %v5298 = vpack.c.b16 %v3196, %v3194
        %v5299 = vpack.c.b16 %v3199, %v3197
        %v5300 = vpack.c.b16 %v3200, %v3198
        %v5301 = vpack.c.b16 %v3203, %v3201
        %v5302 = vpack.c.b16 %v3204, %v3202
        %v5303 = vpack.c.b16 %v3207, %v3205
        %v5304 = vpack.c.b16 %v3208, %v3206
        %v5305 = vpack.c.b16 %v3211, %v3209
        %v5306 = vpack.c.b16 %v3212, %v3210
        %v5307 = vpack.c.b16 %v3215, %v3213
        %v5308 = vpack.c.b16 %v3216, %v3214
        %v5309 = vpack.c.b16 %v3219, %v3217
        %v5310 = vpack.c.b16 %v3220, %v3218
        %v5311 = vpack.c.b16 %v3223, %v3221
        %v5312 = vpack.c.b16 %v3224, %v3222
        %v5313 = vpack.c.b16 %v3227, %v3225
        %v5314 = vpack.c.b16 %v3228, %v3226
        %v5315 = vpack.c.b16 %v3231, %v3229
        %v5316 = vpack.c.b16 %v3232, %v3230
        %v5317 = vpack.c.b16 %v3235, %v3233
        %v5318 = vpack.c.b16 %v3236, %v3234
        %v5319 = vpack.c.b16 %v3239, %v3237
        %v5320 = vpack.c.b16 %v3240, %v3238
        %v5321 = vpack.c.b16 %v3243, %v3241
        %v5322 = vpack.c.b16 %v3244, %v3242
        %v5323 = vpack.c.b16 %v3247, %v3245
        %v5324 = vpack.c.b16 %v3248, %v3246
        %v5325 = vpack.c.b16 %v3251, %v3249
        %v5326 = vpack.c.b16 %v3252, %v3250
        %v5327 = vpack.c.b16 %v3255, %v3253
        %v5328 = vpack.c.b16 %v3256, %v3254
        %v5329 = vpack.c.b16 %v3259, %v3257
        %v5330 = vpack.c.b16 %v3260, %v3258
        %v5331 = vpack.c.b16 %v3263, %v3261
        %v5332 = vpack.c.b16 %v3264, %v3262
        %v5333 = vpack.c.b16 %v3267, %v3265
        %v5334 = vpack.c.b16 %v3268, %v3266
        %v5335 = vpack.c.b16 %v3271, %v3269
        %v5336 = vpack.c.b16 %v3272, %v3270
        %v5337 = vpack.c.b16 %v3275, %v3273
        %v5338 = vpack.c.b16 %v3276, %v3274
        %v5339 = vpack.c.b16 %v3279, %v3277
        %v5340 = vpack.c.b16 %v3280, %v3278
        %v5341 = vpack.c.b16 %v3283, %v3281
        %v5342 = vpack.c.b16 %v3284, %v3282
        %v5343 = vpack.c.b16 %v3287, %v3285
        %v5344 = vpack.c.b16 %v3288, %v3286
        %v5345 = vpack.c.b16 %v3291, %v3289
        %v5346 = vpack.c.b16 %v3292, %v3290
        %v5347 = vpack.c.b16 %v3295, %v3293
        %v5348 = vpack.c.b16 %v3296, %v3294
        %v5349 = vpack.c.b16 %v3299, %v3297
        %v5350 = vpack.c.b16 %v3300, %v3298
        %v5351 = vpack.c.b16 %v3303, %v3301
        %v5352 = vpack.c.b16 %v3304, %v3302
        %v5353 = vpack.c.b16 %v3307, %v3305
        %v5354 = vpack.c.b16 %v3308, %v3306
        %v5355 = vpack.c.b16 %v3311, %v3309
        %v5356 = vpack.c.b16 %v3312, %v3310
        %v5357 = vpack.c.b16 %v3315, %v3313
        %v5358 = vpack.c.b16 %v3316, %v3314
        %v5359 = vpack.c.b16 %v3319, %v3317
        %v5360 = vpack.c.b16 %v3320, %v3318
        %v5361 = vpack.c.b16 %v3323, %v3321
        %v5362 = vpack.c.b16 %v3324, %v3322
        %v5363 = vpack.c.b16 %v3327, %v3325
        %v5364 = vpack.c.b16 %v3328, %v3326
        %v5365 = vpack.c.b16 %v3331, %v3329
        %v5366 = vpack.c.b16 %v3332, %v3330
        %v5367 = vpack.c.b16 %v3335, %v3333
        %v5368 = vpack.c.b16 %v3336, %v3334
        %v5369 = vpack.c.b16 %v3339, %v3337
        %v5370 = vpack.c.b16 %v3340, %v3338
        %v5371 = vpack.c.b16 %v3343, %v3341
        %v5372 = vpack.c.b16 %v3344, %v3342
        %v5373 = vpack.c.b16 %v3347, %v3345
        %v5374 = vpack.c.b16 %v3348, %v3346
        %v5375 = vpack.c.b16 %v3351, %v3349
        %v5376 = vpack.c.b16 %v3352, %v3350
        %v5377 = vpack.c.b16 %v3355, %v3353
        %v5378 = vpack.c.b16 %v3356, %v3354
        %v5379 = vpack.c.b16 %v3359, %v3357
        %v5380 = vpack.c.b16 %v3360, %v3358
        %v5381 = vpack.c.b16 %v3363, %v3361
        %v5382 = vpack.c.b16 %v3364, %v3362
        %v5383 = vpack.c.b16 %v3367, %v3365
        %v5384 = vpack.c.b16 %v3368, %v3366
        %v5385 = vpack.c.b16 %v3371, %v3369
        %v5386 = vpack.c.b16 %v3372, %v3370
        %v5387 = vpack.c.b16 %v3375, %v3373
        %v5388 = vpack.c.b16 %v3376, %v3374
        %v5389 = vpack.c.b16 %v3379, %v3377
        %v5390 = vpack.c.b16 %v3380, %v3378
        %v5391 = vpack.c.b16 %v3383, %v3381
        %v5392 = vpack.c.b16 %v3384, %v3382
        %v5393 = vpack.c.b16 %v3387, %v3385
        %v5394 = vpack.c.b16 %v3388, %v3386
        %v5395 = vpack.c.b16 %v3391, %v3389
        %v5396 = vpack.c.b16 %v3392, %v3390
        %v5397 = vpack.c.b16 %v3395, %v3393
        %v5398 = vpack.c.b16 %v3396, %v3394
        %v5399 = vpack.c.b16 %v3399, %v3397
        %v5400 = vpack.c.b16 %v3400, %v3398
        %v5401 = vpack.c.b16 %v3403, %v3401
        %v5402 = vpack.c.b16 %v3404, %v3402
        %v5403 = vpack.c.b16 %v3407, %v3405
        %v5404 = vpack.c.b16 %v3408, %v3406
        %v5405 = vpack.c.b16 %v3411, %v3409
        %v5406 = vpack.c.b16 %v3412, %v3410
        %v5407 = vpack.c.b16 %v3415, %v3413
        %v5408 = vpack.c.b16 %v3416, %v3414
        %v5409 = vpack.c.b16 %v3419, %v3417
        %v5410 = vpack.c.b16 %v3420, %v3418
        %v5411 = vpack.c.b16 %v3423, %v3421
        %v5412 = vpack.c.b16 %v3424, %v3422
        %v5413 = vpack.c.b16 %v3427, %v3425
        %v5414 = vpack.c.b16 %v3428, %v3426
        %v5415 = vpack.c.b16 %v3431, %v3429
        %v5416 = vpack.c.b16 %v3432, %v3430
        %v5417 = vpack.c.b16 %v3435, %v3433
        %v5418 = vpack.c.b16 %v3436, %v3434
        %v5419 = vpack.c.b16 %v3439, %v3437
        %v5420 = vpack.c.b16 %v3440, %v3438
        %v5421 = vpack.c.b16 %v3443, %v3441
        %v5422 = vpack.c.b16 %v3444, %v3442
        %v5423 = vpack.c.b16 %v3447, %v3445
        %v5424 = vpack.c.b16 %v3448, %v3446
        %v5425 = vpack.c.b16 %v3451, %v3449
        %v5426 = vpack.c.b16 %v3452, %v3450
        %v5427 = vpack.c.b16 %v3455, %v3453
        %v5428 = vpack.c.b16 %v3456, %v3454
        %v5429 = vpack.c.b16 %v3459, %v3457
        %v5430 = vpack.c.b16 %v3460, %v3458
        %v5431 = vpack.c.b16 %v3463, %v3461
        %v5432 = vpack.c.b16 %v3464, %v3462
        %v5433 = vpack.c.b16 %v3467, %v3465
        %v5434 = vpack.c.b16 %v3468, %v3466
        %v5435 = vpack.c.b16 %v3471, %v3469
        %v5436 = vpack.c.b16 %v3472, %v3470
        %v5437 = vpack.c.b16 %v3475, %v3473
        %v5438 = vpack.c.b16 %v3476, %v3474
        %v5439 = vpack.c.b16 %v3479, %v3477
        %v5440 = vpack.c.b16 %v3480, %v3478
        %v5441 = vpack.c.b16 %v3483, %v3481
        %v5442 = vpack.c.b16 %v3484, %v3482
        %v5443 = vpack.c.b16 %v3487, %v3485
        %v5444 = vpack.c.b16 %v3488, %v3486
        %v5445 = vpack.c.b16 %v3491, %v3489
        %v5446 = vpack.c.b16 %v3492, %v3490
        %v5447 = vpack.c.b16 %v3495, %v3493
        %v5448 = vpack.c.b16 %v3496, %v3494
        %v5449 = vpack.c.b16 %v3499, %v3497
        %v5450 = vpack.c.b16 %v3500, %v3498
        %v5451 = vpack.c.b16 %v3503, %v3501
        %v5452 = vpack.c.b16 %v3504, %v3502
        %v5453 = vpack.c.b16 %v3507, %v3505
        %v5454 = vpack.c.b16 %v3508, %v3506
        %v5455 = vpack.c.b16 %v3511, %v3509
        %v5456 = vpack.c.b16 %v3512, %v3510
        %v5457 = vpack.c.b16 %v3515, %v3513
        %v5458 = vpack.c.b16 %v3516, %v3514
        %v5459 = vpack.c.b16 %v3519, %v3517
        %v5460 = vpack.c.b16 %v3520, %v3518
        %v5461 = vpack.c.b16 %v3523, %v3521
        %v5462 = vpack.c.b16 %v3524, %v3522
        %v5463 = vpack.c.b16 %v3527, %v3525
        %v5464 = vpack.c.b16 %v3528, %v3526
        %v5465 = vpack.c.b16 %v3531, %v3529
        %v5466 = vpack.c.b16 %v3532, %v3530
        %v5467 = vpack.c.b16 %v3535, %v3533
        %v5468 = vpack.c.b16 %v3536, %v3534
        %v5469 = vpack.c.b16 %v3539, %v3537
        %v5470 = vpack.c.b16 %v3540, %v3538
        %v5471 = vpack.c.b16 %v3543, %v3541
        %v5472 = vpack.c.b16 %v3544, %v3542
        %v5473 = vpack.c.b16 %v3547, %v3545
        %v5474 = vpack.c.b16 %v3548, %v3546
        %v5475 = vpack.c.b16 %v3551, %v3549
        %v5476 = vpack.c.b16 %v3552, %v3550
        %v5477 = vpack.c.b16 %v3555, %v3553
        %v5478 = vpack.c.b16 %v3556, %v3554
        %v5479 = vpack.c.b16 %v3559, %v3557
        %v5480 = vpack.c.b16 %v3560, %v3558
        %v5481 = vpack.c.b16 %v3563, %v3561
        %v5482 = vpack.c.b16 %v3564, %v3562
        %v5483 = vpack.c.b16 %v3567, %v3565
        %v5484 = vpack.c.b16 %v3568, %v3566
        %v5485 = vpack.c.b16 %v3571, %v3569
        %v5486 = vpack.c.b16 %v3572, %v3570
        %v5487 = vpack.c.b16 %v3575, %v3573
        %v5488 = vpack.c.b16 %v3576, %v3574
        %v5489 = vpack.c.b16 %v3579, %v3577
        %v5490 = vpack.c.b16 %v3580, %v3578
        %v5491 = vpack.c.b16 %v3583, %v3581
        %v5492 = vpack.c.b16 %v3584, %v3582
        %v5493 = vpack.c.b16 %v3587, %v3585
        %v5494 = vpack.c.b16 %v3588, %v3586
        %v5495 = vpack.c.b16 %v3591, %v3589
        %v5496 = vpack.c.b16 %v3592, %v3590
        %v5497 = vpack.c.b16 %v3595, %v3593
        %v5498 = vpack.c.b16 %v3596, %v3594
        %v5499 = vpack.c.b16 %v3599, %v3597
        %v5500 = vpack.c.b16 %v3600, %v3598
        %v5501 = vpack.c.b16 %v3603, %v3601
        %v5502 = vpack.c.b16 %v3604, %v3602
        %v5503 = vpack.c.b16 %v3607, %v3605
        %v5504 = vpack.c.b16 %v3608, %v3606
        %v5505 = vpack.c.b16 %v3611, %v3609
        %v5506 = vpack.c.b16 %v3612, %v3610
        %v5507 = vpack.c.b16 %v3615, %v3613
        %v5508 = vpack.c.b16 %v3616, %v3614
        %v5509 = vpack.c.b16 %v3619, %v3617
        %v5510 = vpack.c.b16 %v3620, %v3618
        %v5511 = vpack.c.b16 %v3623, %v3621
        %v5512 = vpack.c.b16 %v3624, %v3622
        %v5513 = vpack.c.b16 %v3627, %v3625
        %v5514 = vpack.c.b16 %v3628, %v3626
        %v5515 = vpack.c.b16 %v3631, %v3629
        %v5516 = vpack.c.b16 %v3632, %v3630
        %v5517 = vpack.c.b16 %v3635, %v3633
        %v5518 = vpack.c.b16 %v3636, %v3634
        %v5519 = vpack.c.b16 %v3639, %v3637
        %v5520 = vpack.c.b16 %v3640, %v3638
        %v5521 = vpack.c.b16 %v3643, %v3641
        %v5522 = vpack.c.b16 %v3644, %v3642
        %v5523 = vpack.c.b16 %v3647, %v3645
        %v5524 = vpack.c.b16 %v3648, %v3646
        %v5525 = vpack.c.b16 %v3651, %v3649
        %v5526 = vpack.c.b16 %v3652, %v3650
        %v5527 = vpack.c.b16 %v3655, %v3653
        %v5528 = vpack.c.b16 %v3656, %v3654
        %v5529 = vpack.c.b16 %v3659, %v3657
        %v5530 = vpack.c.b16 %v3660, %v3658
        %v5531 = vpack.c.b16 %v3663, %v3661
        %v5532 = vpack.c.b16 %v3664, %v3662
        %v5533 = vpack.c.b16 %v3667, %v3665
        %v5534 = vpack.c.b16 %v3668, %v3666
        %v5535 = vpack.c.b16 %v3671, %v3669
        %v5536 = vpack.c.b16 %v3672, %v3670
        %v5537 = vpack.c.b16 %v3675, %v3673
        %v5538 = vpack.c.b16 %v3676, %v3674
        %v5539 = vpack.c.b16 %v3679, %v3677
        %v5540 = vpack.c.b16 %v3680, %v3678
        %v5541 = vpack.c.b16 %v3683, %v3681
        %v5542 = vpack.c.b16 %v3684, %v3682
        %v5543 = vpack.c.b16 %v3687, %v3685
        %v5544 = vpack.c.b16 %v3688, %v3686
        %v5545 = vpack.c.b16 %v3691, %v3689
        %v5546 = vpack.c.b16 %v3692, %v3690
        %v5547 = vpack.c.b16 %v3695, %v3693
        %v5548 = vpack.c.b16 %v3696, %v3694
        %v5549 = vpack.c.b16 %v3699, %v3697
        %v5550 = vpack.c.b16 %v3700, %v3698
        %v5551 = vpack.c.b16 %v3703, %v3701
        %v5552 = vpack.c.b16 %v3704, %v3702
        %v5553 = vpack.c.b16 %v3707, %v3705
        %v5554 = vpack.c.b16 %v3708, %v3706
        %v5555 = vpack.c.b16 %v3711, %v3709
        %v5556 = vpack.c.b16 %v3712, %v3710
        %v5557 = vpack.c.b16 %v3715, %v3713
        %v5558 = vpack.c.b16 %v3716, %v3714
        %v5559 = vpack.c.b16 %v3719, %v3717
        %v5560 = vpack.c.b16 %v3720, %v3718
        %v5561 = vpack.c.b16 %v3723, %v3721
        %v5562 = vpack.c.b16 %v3724, %v3722
        %v5563 = vpack.c.b16 %v3727, %v3725
        %v5564 = vpack.c.b16 %v3728, %v3726
        %v5565 = vpack.c.b16 %v3731, %v3729
        %v5566 = vpack.c.b16 %v3732, %v3730
        %v5567 = vpack.c.b16 %v3735, %v3733
        %v5568 = vpack.c.b16 %v3736, %v3734
        %v5569 = vpack.c.b16 %v3739, %v3737
        %v5570 = vpack.c.b16 %v3740, %v3738
        %v5571 = vpack.c.b16 %v3743, %v3741
        %v5572 = vpack.c.b16 %v3744, %v3742
        %v5573 = vpack.c.b16 %v3747, %v3745
        %v5574 = vpack.c.b16 %v3748, %v3746
        %v5575 = vpack.c.b16 %v3751, %v3749
        %v5576 = vpack.c.b16 %v3752, %v3750
        %v5577 = vpack.c.b16 %v3755, %v3753
        %v5578 = vpack.c.b16 %v3756, %v3754
        %v5579 = vpack.c.b16 %v3759, %v3757
        %v5580 = vpack.c.b16 %v3760, %v3758
        %v5581 = vpack.c.b16 %v3763, %v3761
        %v5582 = vpack.c.b16 %v3764, %v3762
        %v5583 = vpack.c.b16 %v3767, %v3765
        %v5584 = vpack.c.b16 %v3768, %v3766
        %v5585 = vpack.c.b16 %v3771, %v3769
        %v5586 = vpack.c.b16 %v3772, %v3770
        %v5587 = vpack.c.b16 %v3775, %v3773
        %v5588 = vpack.c.b16 %v3776, %v3774
        %v5589 = vpack.c.b16 %v3779, %v3777
        %v5590 = vpack.c.b16 %v3780, %v3778
        %v5591 = vpack.c.b16 %v3783, %v3781
        %v5592 = vpack.c.b16 %v3784, %v3782
        %v5593 = vpack.c.b16 %v3787, %v3785
        %v5594 = vpack.c.b16 %v3788, %v3786
        %v5595 = vpack.c.b16 %v3791, %v3789
        %v5596 = vpack.c.b16 %v3792, %v3790
        %v5597 = vpack.c.b16 %v3795, %v3793
        %v5598 = vpack.c.b16 %v3796, %v3794
        %v5599 = vpack.c.b16 %v3799, %v3797
        %v5600 = vpack.c.b16 %v3800, %v3798
        %v5601 = vpack.c.b16 %v3803, %v3801
        %v5602 = vpack.c.b16 %v3804, %v3802
        %v5603 = vpack.c.b16 %v3807, %v3805
        %v5604 = vpack.c.b16 %v3808, %v3806
        %v5605 = vpack.c.b16 %v3811, %v3809
        %v5606 = vpack.c.b16 %v3812, %v3810
        %v5607 = vpack.c.b16 %v3815, %v3813
        %v5608 = vpack.c.b16 %v3816, %v3814
        %v5609 = vpack.c.b16 %v3819, %v3817
        %v5610 = vpack.c.b16 %v3820, %v3818
        %v5611 = vpack.c.b16 %v3823, %v3821
        %v5612 = vpack.c.b16 %v3824, %v3822
        %v5613 = vpack.c.b16 %v3827, %v3825
        %v5614 = vpack.c.b16 %v3828, %v3826
        %v5615 = vpack.c.b16 %v3831, %v3829
        %v5616 = vpack.c.b16 %v3832, %v3830
        %v5617 = vpack.c.b16 %v3835, %v3833
        %v5618 = vpack.c.b16 %v3836, %v3834
        %v5619 = vpack.c.b16 %v3839, %v3837
        %v5620 = vpack.c.b16 %v3840, %v3838
        %v5621 = vpack.c.b16 %v3843, %v3841
        %v5622 = vpack.c.b16 %v3844, %v3842
        %v5623 = vpack.c.b16 %v3847, %v3845
        %v5624 = vpack.c.b16 %v3848, %v3846
        %v5625 = vpack.c.b16 %v3851, %v3849
        %v5626 = vpack.c.b16 %v3852, %v3850
        %v5627 = vpack.c.b16 %v3855, %v3853
        %v5628 = vpack.c.b16 %v3856, %v3854
        %v5629 = vpack.c.b16 %v3859, %v3857
        %v5630 = vpack.c.b16 %v3860, %v3858
        %v5631 = vpack.c.b16 %v3863, %v3861
        %v5632 = vpack.c.b16 %v3864, %v3862
        %v5633 = vpack.c.b16 %v3867, %v3865
        %v5634 = vpack.c.b16 %v3868, %v3866
        %v5635 = vpack.c.b16 %v3871, %v3869
        %v5636 = vpack.c.b16 %v3872, %v3870
        %v5637 = vpack.c.b16 %v3875, %v3873
        %v5638 = vpack.c.b16 %v3876, %v3874
        %v5639 = vpack.c.b16 %v3879, %v3877
        %v5640 = vpack.c.b16 %v3880, %v3878
        %v5641 = vpack.c.b16 %v3883, %v3881
        %v5642 = vpack.c.b16 %v3884, %v3882
        %v5643 = vpack.c.b16 %v3887, %v3885
        %v5644 = vpack.c.b16 %v3888, %v3886
        %v5645 = vpack.c.b16 %v3891, %v3889
        %v5646 = vpack.c.b16 %v3892, %v3890
        %v5647 = vpack.c.b16 %v3895, %v3893
        %v5648 = vpack.c.b16 %v3896, %v3894
        %v5649 = vpack.c.b16 %v3899, %v3897
        %v5650 = vpack.c.b16 %v3900, %v3898
        %v5651 = vpack.c.b16 %v3903, %v3901
        %v5652 = vpack.c.b16 %v3904, %v3902
        %v5653 = vpack.c.b16 %v3907, %v3905
        %v5654 = vpack.c.b16 %v3908, %v3906
        %v5655 = vpack.c.b16 %v3911, %v3909
        %v5656 = vpack.c.b16 %v3912, %v3910
        %v5657 = vpack.c.b16 %v3915, %v3913
        %v5658 = vpack.c.b16 %v3916, %v3914
        %v5659 = vpack.c.b16 %v3919, %v3917
        %v5660 = vpack.c.b16 %v3920, %v3918
        %v5661 = vpack.c.b16 %v3923, %v3921
        %v5662 = vpack.c.b16 %v3924, %v3922
        %v5663 = vpack.c.b16 %v3927, %v3925
        %v5664 = vpack.c.b16 %v3928, %v3926
        %v5665 = vpack.c.b16 %v3931, %v3929
        %v5666 = vpack.c.b16 %v3932, %v3930
        %v5667 = vpack.c.b16 %v3935, %v3933
        %v5668 = vpack.c.b16 %v3936, %v3934
        %v5669 = vpack.c.b16 %v3939, %v3937
        %v5670 = vpack.c.b16 %v3940, %v3938
        %v5671 = vpack.c.b16 %v3943, %v3941
        %v5672 = vpack.c.b16 %v3944, %v3942
        %v5673 = vpack.c.b16 %v3947, %v3945
        %v5674 = vpack.c.b16 %v3948, %v3946
        %v5675 = vpack.c.b16 %v3951, %v3949
        %v5676 = vpack.c.b16 %v3952, %v3950
        %v5677 = vpack.c.b16 %v3955, %v3953
        %v5678 = vpack.c.b16 %v3956, %v3954
        %v5679 = vpack.c.b16 %v3959, %v3957
        %v5680 = vpack.c.b16 %v3960, %v3958
        %v5681 = vpack.c.b16 %v3963, %v3961
        %v5682 = vpack.c.b16 %v3964, %v3962
        %v5683 = vpack.c.b16 %v3967, %v3965
        %v5684 = vpack.c.b16 %v3968, %v3966
        %v5685 = vpack.c.b16 %v3971, %v3969
        %v5686 = vpack.c.b16 %v3972, %v3970
        %v5687 = vpack.c.b16 %v3975, %v3973
        %v5688 = vpack.c.b16 %v3976, %v3974
        %v5689 = vpack.c.b16 %v3979, %v3977
        %v5690 = vpack.c.b16 %v3980, %v3978
        %v5691 = vpack.c.b16 %v3983, %v3981
        %v5692 = vpack.c.b16 %v3984, %v3982
        %v5693 = vpack.c.b16 %v3987, %v3985
        %v5694 = vpack.c.b16 %v3988, %v3986
        %v5695 = vpack.c.b16 %v3991, %v3989
        %v5696 = vpack.c.b16 %v3992, %v3990
        %v5697 = vpack.c.b16 %v3995, %v3993
        %v5698 = vpack.c.b16 %v3996, %v3994
        %v5699 = vpack.c.b16 %v3999, %v3997
        %v5700 = vpack.c.b16 %v4000, %v3998
        %v5701 = vpack.c.b16 %v4003, %v4001
        %v5702 = vpack.c.b16 %v4004, %v4002
        %v5703 = vpack.c.b16 %v4007, %v4005
        %v5704 = vpack.c.b16 %v4008, %v4006
        %v5705 = vpack.c.b16 %v4011, %v4009
        %v5706 = vpack.c.b16 %v4012, %v4010
        %v5707 = vpack.c.b16 %v4015, %v4013
        %v5708 = vpack.c.b16 %v4016, %v4014
        %v5709 = vpack.c.b16 %v4019, %v4017
        %v5710 = vpack.c.b16 %v4020, %v4018
        %v5711 = vpack.c.b16 %v4023, %v4021
        %v5712 = vpack.c.b16 %v4024, %v4022
        %v5713 = vpack.c.b16 %v4027, %v4025
        %v5714 = vpack.c.b16 %v4028, %v4026
        %v5715 = vpack.c.b16 %v4031, %v4029
        %v5716 = vpack.c.b16 %v4032, %v4030
        %v5717 = vpack.c.b16 %v4035, %v4033
        %v5718 = vpack.c.b16 %v4036, %v4034
        %v5719 = vpack.c.b16 %v4039, %v4037
        %v5720 = vpack.c.b16 %v4040, %v4038
        %v5721 = vpack.c.b16 %v4043, %v4041
        %v5722 = vpack.c.b16 %v4044, %v4042
        %v5723 = vpack.c.b16 %v4047, %v4045
        %v5724 = vpack.c.b16 %v4048, %v4046
        %v5725 = vpack.c.b16 %v4051, %v4049
        %v5726 = vpack.c.b16 %v4052, %v4050
        %v5727 = vpack.c.b16 %v4055, %v4053
        %v5728 = vpack.c.b16 %v4056, %v4054
        %v5729 = vpack.c.b16 %v4059, %v4057
        %v5730 = vpack.c.b16 %v4060, %v4058
        %v5731 = vpack.c.b16 %v4063, %v4061
        %v5732 = vpack.c.b16 %v4064, %v4062
        %v5733 = vpack.c.b16 %v4067, %v4065
        %v5734 = vpack.c.b16 %v4068, %v4066
        %v5735 = vpack.c.b16 %v4071, %v4069
        %v5736 = vpack.c.b16 %v4072, %v4070
        %v5737 = vpack.c.b16 %v4075, %v4073
        %v5738 = vpack.c.b16 %v4076, %v4074
        %v5739 = vpack.c.b16 %v4079, %v4077
        %v5740 = vpack.c.b16 %v4080, %v4078
        %v5741 = vpack.c.b16 %v4083, %v4081
        %v5742 = vpack.c.b16 %v4084, %v4082
        %v5743 = vpack.c.b16 %v4087, %v4085
        %v5744 = vpack.c.b16 %v4088, %v4086
        %v5745 = vpack.c.b16 %v4091, %v4089
        %v5746 = vpack.c.b16 %v4092, %v4090
        %v5747 = vpack.c.b16 %v4095, %v4093
        %v5748 = vpack.c.b16 %v4096, %v4094
        %v5749 = vpack.c.b16 %v4099, %v4097
        %v5750 = vpack.c.b16 %v4100, %v4098
        %v5751 = vpack.c.b16 %v4103, %v4101
        %v5752 = vpack.c.b16 %v4104, %v4102
        %v5753 = vpack.c.b16 %v4107, %v4105
        %v5754 = vpack.c.b16 %v4108, %v4106
        %v5755 = vpack.c.b16 %v4111, %v4109
        %v5756 = vpack.c.b16 %v4112, %v4110
        %v5757 = vpack.c.b16 %v4115, %v4113
        %v5758 = vpack.c.b16 %v4116, %v4114
        %v5759 = vpack.c.b16 %v4119, %v4117
        %v5760 = vpack.c.b16 %v4120, %v4118
        %v5761 = vpack.c.b16 %v4123, %v4121
        %v5762 = vpack.c.b16 %v4124, %v4122
        %v5763 = vpack.c.b16 %v4127, %v4125
        %v5764 = vpack.c.b16 %v4128, %v4126
        %v5765 = vpack.c.b16 %v4131, %v4129
        %v5766 = vpack.c.b16 %v4132, %v4130
        %v5767 = vpack.c.b16 %v4135, %v4133
        %v5768 = vpack.c.b16 %v4136, %v4134
        %v5769 = vpack.c.b16 %v4139, %v4137
        %v5770 = vpack.c.b16 %v4140, %v4138
        %v5771 = vpack.c.b16 %v4143, %v4141
        %v5772 = vpack.c.b16 %v4144, %v4142
        %v5773 = vpack.c.b16 %v4147, %v4145
        %v5774 = vpack.c.b16 %v4148, %v4146
        %v5775 = vpack.c.b16 %v4151, %v4149
        %v5776 = vpack.c.b16 %v4152, %v4150
        %v5777 = vpack.c.b16 %v4155, %v4153
        %v5778 = vpack.c.b16 %v4156, %v4154
        %v5779 = vpack.c.b16 %v4159, %v4157
        %v5780 = vpack.c.b16 %v4160, %v4158
        %v5781 = vpack.c.b16 %v4163, %v4161
        %v5782 = vpack.c.b16 %v4164, %v4162
        %v5783 = vpack.c.b16 %v4167, %v4165
        %v5784 = vpack.c.b16 %v4168, %v4166
        %v5785 = vpack.c.b16 %v4171, %v4169
        %v5786 = vpack.c.b16 %v4172, %v4170
        %v5787 = vpack.c.b16 %v4175, %v4173
        %v5788 = vpack.c.b16 %v4176, %v4174
        %v5789 = vpack.c.b16 %v4179, %v4177
        %v5790 = vpack.c.b16 %v4180, %v4178
        %v5791 = vpack.c.b16 %v4183, %v4181
        %v5792 = vpack.c.b16 %v4184, %v4182
        %v5793 = vpack.c.b16 %v4187, %v4185
        %v5794 = vpack.c.b16 %v4188, %v4186
        %v5795 = vpack.c.b16 %v4191, %v4189
        %v5796 = vpack.c.b16 %v4192, %v4190
        %v5797 = vpack.c.b16 %v4195, %v4193
        %v5798 = vpack.c.b16 %v4196, %v4194
        %v5799 = vpack.c.b16 %v4199, %v4197
        %v5800 = vpack.c.b16 %v4200, %v4198
        %v5801 = vpack.c.b16 %v4203, %v4201
        %v5802 = vpack.c.b16 %v4204, %v4202
        %v5803 = vpack.c.b16 %v4207, %v4205
        %v5804 = vpack.c.b16 %v4208, %v4206
        %v5805 = vpack.c.b16 %v4211, %v4209
        %v5806 = vpack.c.b16 %v4212, %v4210
        %v5807 = vpack.c.b16 %v4215, %v4213
        %v5808 = vpack.c.b16 %v4216, %v4214
        %v5809 = vpack.c.b16 %v4219, %v4217
        %v5810 = vpack.c.b16 %v4220, %v4218
        %v5811 = vpack.c.b16 %v4223, %v4221
        %v5812 = vpack.c.b16 %v4224, %v4222
        %v5813 = vpack.c.b16 %v4227, %v4225
        %v5814 = vpack.c.b16 %v4228, %v4226
        %v5815 = vpack.c.b16 %v4231, %v4229
        %v5816 = vpack.c.b16 %v4232, %v4230
        %v5817 = vpack.c.b16 %v4235, %v4233
        %v5818 = vpack.c.b16 %v4236, %v4234
        %v5819 = vpack.c.b16 %v4239, %v4237
        %v5820 = vpack.c.b16 %v4240, %v4238
        %v5821 = vpack.c.b16 %v4243, %v4241
        %v5822 = vpack.c.b16 %v4244, %v4242
        %v5823 = vpack.c.b16 %v4247, %v4245
        %v5824 = vpack.c.b16 %v4248, %v4246
        %v5825 = vpack.c.b16 %v4251, %v4249
        %v5826 = vpack.c.b16 %v4252, %v4250
        %v5827 = vpack.c.b16 %v4255, %v4253
        %v5828 = vpack.c.b16 %v4256, %v4254
        %v5829 = vpack.c.b16 %v4259, %v4257
        %v5830 = vpack.c.b16 %v4260, %v4258
        %v5831 = vpack.c.b16 %v4263, %v4261
        %v5832 = vpack.c.b16 %v4264, %v4262
        %v5833 = vpack.c.b16 %v4267, %v4265
        %v5834 = vpack.c.b16 %v4268, %v4266
        %v5835 = vpack.c.b16 %v4271, %v4269
        %v5836 = vpack.c.b16 %v4272, %v4270
        %v5837 = vpack.c.b16 %v4275, %v4273
        %v5838 = vpack.c.b16 %v4276, %v4274
        %v5839 = vpack.c.b16 %v4279, %v4277
        %v5840 = vpack.c.b16 %v4280, %v4278
        %v5841 = vpack.c.b16 %v4283, %v4281
        %v5842 = vpack.c.b16 %v4284, %v4282
        %v5843 = vpack.c.b16 %v4287, %v4285
        %v5844 = vpack.c.b16 %v4288, %v4286
        %v5845 = vpack.c.b16 %v4291, %v4289
        %v5846 = vpack.c.b16 %v4292, %v4290
        %v5847 = vpack.c.b16 %v4295, %v4293
        %v5848 = vpack.c.b16 %v4296, %v4294
        %v5849 = vpack.c.b16 %v4299, %v4297
        %v5850 = vpack.c.b16 %v4300, %v4298
        %v5851 = vpack.c.b16 %v4303, %v4301
        %v5852 = vpack.c.b16 %v4304, %v4302
        %v5853 = vpack.c.b16 %v4307, %v4305
        %v5854 = vpack.c.b16 %v4308, %v4306
        %v5855 = vpack.c.b16 %v4311, %v4309
        %v5856 = vpack.c.b16 %v4312, %v4310
        %v5857 = vpack.c.b16 %v4315, %v4313
        %v5858 = vpack.c.b16 %v4316, %v4314
        %v5859 = vpack.c.b16 %v4319, %v4317
        %v5860 = vpack.c.b16 %v4320, %v4318
        %v5861 = vpack.c.b16 %v4323, %v4321
        %v5862 = vpack.c.b16 %v4324, %v4322
        %v5863 = vpack.c.b16 %v4327, %v4325
        %v5864 = vpack.c.b16 %v4328, %v4326
        %v5865 = vpack.c.b16 %v4331, %v4329
        %v5866 = vpack.c.b16 %v4332, %v4330
        %v5867 = vpack.c.b16 %v4335, %v4333
        %v5868 = vpack.c.b16 %v4336, %v4334
        %v5869 = vpack.c.b16 %v4339, %v4337
        %v5870 = vpack.c.b16 %v4340, %v4338
        %v5871 = vpack.c.b16 %v4343, %v4341
        %v5872 = vpack.c.b16 %v4344, %v4342
        %v5873 = vpack.c.b16 %v4347, %v4345
        %v5874 = vpack.c.b16 %v4348, %v4346
        %v5875 = vpack.c.b16 %v4351, %v4349
        %v5876 = vpack.c.b16 %v4352, %v4350
        %v5877 = vpack.c.b16 %v4355, %v4353
        %v5878 = vpack.c.b16 %v4356, %v4354
        %v5879 = vpack.c.b16 %v4359, %v4357
        %v5880 = vpack.c.b16 %v4360, %v4358
        %v5881 = vpack.c.b16 %v4363, %v4361
        %v5882 = vpack.c.b16 %v4364, %v4362
        %v5883 = vpack.c.b16 %v4367, %v4365
        %v5884 = vpack.c.b16 %v4368, %v4366
        %v5885 = vpack.c.b16 %v4371, %v4369
        %v5886 = vpack.c.b16 %v4372, %v4370
        %v5887 = vpack.c.b16 %v4375, %v4373
        %v5888 = vpack.c.b16 %v4376, %v4374
        %v5889 = vpack.c.b16 %v4379, %v4377
        %v5890 = vpack.c.b16 %v4380, %v4378
        %v5891 = vpack.c.b16 %v4383, %v4381
        %v5892 = vpack.c.b16 %v4384, %v4382
        %v5893 = vpack.c.b16 %v4387, %v4385
        %v5894 = vpack.c.b16 %v4388, %v4386
        %v5895 = vpack.c.b16 %v4391, %v4389
        %v5896 = vpack.c.b16 %v4392, %v4390
        %v5897 = vpack.c.b16 %v4395, %v4393
        %v5898 = vpack.c.b16 %v4396, %v4394
        %v5899 = vpack.c.b16 %v4399, %v4397
        %v5900 = vpack.c.b16 %v4400, %v4398
        %v5901 = vpack.c.b16 %v4403, %v4401
        %v5902 = vpack.c.b16 %v4404, %v4402
        %v5903 = vpack.c.b16 %v4407, %v4405
        %v5904 = vpack.c.b16 %v4408, %v4406
        %v5905 = vpack.c.b16 %v4411, %v4409
        %v5906 = vpack.c.b16 %v4412, %v4410
        %v5907 = vpack.c.b16 %v4415, %v4413
        %v5908 = vpack.c.b16 %v4416, %v4414
        %v5909 = vpack.c.b16 %v4419, %v4417
        %v5910 = vpack.c.b16 %v4420, %v4418
        %v5911 = vpack.c.b16 %v4423, %v4421
        %v5912 = vpack.c.b16 %v4424, %v4422
        %v5913 = vpack.c.b16 %v4427, %v4425
        %v5914 = vpack.c.b16 %v4428, %v4426
        %v5915 = vpack.c.b16 %v4431, %v4429
        %v5916 = vpack.c.b16 %v4432, %v4430
        %v5917 = vpack.c.b16 %v4435, %v4433
        %v5918 = vpack.c.b16 %v4436, %v4434
        %v5919 = vpack.c.b16 %v4439, %v4437
        %v5920 = vpack.c.b16 %v4440, %v4438
        %v5921 = vpack.c.b16 %v4443, %v4441
        %v5922 = vpack.c.b16 %v4444, %v4442
        %v5923 = vpack.c.b16 %v4447, %v4445
        %v5924 = vpack.c.b16 %v4448, %v4446
        %v5925 = vpack.c.b16 %v4451, %v4449
        %v5926 = vpack.c.b16 %v4452, %v4450
        %v5927 = vpack.c.b16 %v4455, %v4453
        %v5928 = vpack.c.b16 %v4456, %v4454
        %v5929 = vpack.c.b16 %v4459, %v4457
        %v5930 = vpack.c.b16 %v4460, %v4458
        %v5931 = vpack.c.b16 %v4463, %v4461
        %v5932 = vpack.c.b16 %v4464, %v4462
        %v5933 = vpack.c.b16 %v4467, %v4465
        %v5934 = vpack.c.b16 %v4468, %v4466
        %v5935 = vpack.c.b16 %v4471, %v4469
        %v5936 = vpack.c.b16 %v4472, %v4470
        %v5937 = vpack.c.b16 %v4475, %v4473
        %v5938 = vpack.c.b16 %v4476, %v4474
        %v5939 = vpack.c.b16 %v4479, %v4477
        %v5940 = vpack.c.b16 %v4480, %v4478
        %v5941 = vpack.c.b16 %v4483, %v4481
        %v5942 = vpack.c.b16 %v4484, %v4482
        %v5943 = vpack.c.b16 %v4487, %v4485
        %v5944 = vpack.c.b16 %v4488, %v4486
        %v5945 = vpack.c.b16 %v4491, %v4489
        %v5946 = vpack.c.b16 %v4492, %v4490
        %v5947 = vpack.c.b16 %v4495, %v4493
        %v5948 = vpack.c.b16 %v4496, %v4494
        %v5949 = vpack.c.b16 %v4499, %v4497
        %v5950 = vpack.c.b16 %v4500, %v4498
        %v5951 = vpack.c.b16 %v4503, %v4501
        %v5952 = vpack.c.b16 %v4504, %v4502
        %v5953 = vpack.c.b16 %v4507, %v4505
        %v5954 = vpack.c.b16 %v4508, %v4506
        %v5955 = vpack.c.b16 %v4511, %v4509
        %v5956 = vpack.c.b16 %v4512, %v4510
        %v5957 = vpack.c.b16 %v4515, %v4513
        %v5958 = vpack.c.b16 %v4516, %v4514
        %v5959 = vpack.c.b16 %v4519, %v4517
        %v5960 = vpack.c.b16 %v4520, %v4518
        %v5961 = vpack.c.b16 %v4523, %v4521
        %v5962 = vpack.c.b16 %v4524, %v4522
        %v5963 = vpack.c.b16 %v4527, %v4525
        %v5964 = vpack.c.b16 %v4528, %v4526
        %v5965 = vpack.c.b16 %v4531, %v4529
        %v5966 = vpack.c.b16 %v4532, %v4530
        %v5967 = vpack.c.b16 %v4535, %v4533
        %v5968 = vpack.c.b16 %v4536, %v4534
        %v5969 = vpack.c.b16 %v4539, %v4537
        %v5970 = vpack.c.b16 %v4540, %v4538
        %v5971 = vpack.c.b16 %v4543, %v4541
        %v5972 = vpack.c.b16 %v4544, %v4542
        %v5973 = vpack.c.b16 %v4547, %v4545
        %v5974 = vpack.c.b16 %v4548, %v4546
        %v5975 = vpack.c.b16 %v4551, %v4549
        %v5976 = vpack.c.b16 %v4552, %v4550
        %v5977 = vpack.c.b16 %v4555, %v4553
        %v5978 = vpack.c.b16 %v4556, %v4554
        %v5979 = vpack.c.b16 %v4559, %v4557
        %v5980 = vpack.c.b16 %v4560, %v4558
        %v5981 = vpack.c.b16 %v4563, %v4561
        %v5982 = vpack.c.b16 %v4564, %v4562
        %v5983 = vpack.c.b16 %v4567, %v4565
        %v5984 = vpack.c.b16 %v4568, %v4566
        %v5985 = vpack.c.b16 %v4571, %v4569
        %v5986 = vpack.c.b16 %v4572, %v4570
        %v5987 = vpack.c.b16 %v4575, %v4573
        %v5988 = vpack.c.b16 %v4576, %v4574
        %v5989 = vpack.c.b16 %v4579, %v4577
        %v5990 = vpack.c.b16 %v4580, %v4578
        %v5991 = vpack.c.b16 %v4583, %v4581
        %v5992 = vpack.c.b16 %v4584, %v4582
        %v5993 = vpack.c.b16 %v4587, %v4585
        %v5994 = vpack.c.b16 %v4588, %v4586
        %v5995 = vpack.c.b16 %v4591, %v4589
        %v5996 = vpack.c.b16 %v4592, %v4590
        %v5997 = vpack.c.b16 %v4595, %v4593
        %v5998 = vpack.c.b16 %v4596, %v4594
        %v5999 = vpack.c.b16 %v4599, %v4597
        %v6000 = vpack.c.b16 %v4600, %v4598
        %v6001 = vpack.c.b16 %v4603, %v4601
        %v6002 = vpack.c.b16 %v4604, %v4602
        %v6003 = vpack.c.b16 %v4607, %v4605
        %v6004 = vpack.c.b16 %v4608, %v4606
        %v6005 = vpack.c.b16 %v4611, %v4609
        %v6006 = vpack.c.b16 %v4612, %v4610
        %v6007 = vpack.c.b16 %v4615, %v4613
        %v6008 = vpack.c.b16 %v4616, %v4614
        %v6009 = vpack.c.b16 %v4619, %v4617
        %v6010 = vpack.c.b16 %v4620, %v4618
        %v6011 = vpack.c.b16 %v4623, %v4621
        %v6012 = vpack.c.b16 %v4624, %v4622
        %v6013 = vpack.c.b16 %v4627, %v4625
        %v6014 = vpack.c.b16 %v4628, %v4626
        %v6015 = vpack.c.b16 %v4631, %v4629
        %v6016 = vpack.c.b16 %v4632, %v4630
        %v6017 = vpack.c.b16 %v4635, %v4633
        %v6018 = vpack.c.b16 %v4636, %v4634
        %v6019 = vpack.c.b16 %v4639, %v4637
        %v6020 = vpack.c.b16 %v4640, %v4638
        %v6021 = vpack.c.b16 %v4643, %v4641
        %v6022 = vpack.c.b16 %v4644, %v4642
        %v6023 = vpack.c.b16 %v4647, %v4645
        %v6024 = vpack.c.b16 %v4648, %v4646
        %v6025 = vpack.c.b16 %v4651, %v4649
        %v6026 = vpack.c.b16 %v4652, %v4650
        %v6027 = vpack.c.b16 %v4655, %v4653
        %v6028 = vpack.c.b16 %v4656, %v4654
        %v6029 = vpack.c.b16 %v4659, %v4657
        %v6030 = vpack.c.b16 %v4660, %v4658
        %v6031 = vpack.c.b16 %v4663, %v4661
        %v6032 = vpack.c.b16 %v4664, %v4662
        %v6033 = vpack.c.b16 %v4667, %v4665
        %v6034 = vpack.c.b16 %v4668, %v4666
        %v6035 = vpack.c.b16 %v4671, %v4669
        %v6036 = vpack.c.b16 %v4672, %v4670
        %v6037 = vpack.c.b16 %v4675, %v4673
        %v6038 = vpack.c.b16 %v4676, %v4674
        %v6039 = vpack.c.b16 %v4679, %v4677
        %v6040 = vpack.c.b16 %v4680, %v4678
        %v6041 = vpack.c.b16 %v4683, %v4681
        %v6042 = vpack.c.b16 %v4684, %v4682
        %v6043 = vpack.c.b16 %v4687, %v4685
        %v6044 = vpack.c.b16 %v4688, %v4686
        %v6045 = vpack.c.b16 %v4691, %v4689
        %v6046 = vpack.c.b16 %v4692, %v4690
        %v6047 = vpack.c.b16 %v4695, %v4693
        %v6048 = vpack.c.b16 %v4696, %v4694
        %v6049 = vpack.c.b16 %v4699, %v4697
        %v6050 = vpack.c.b16 %v4700, %v4698
        %v6051 = vpack.c.b16 %v4703, %v4701
        %v6052 = vpack.c.b16 %v4704, %v4702
        %v6053 = vpack.c.b16 %v4707, %v4705
        %v6054 = vpack.c.b16 %v4708, %v4706
        %v6055 = vpack.c.b16 %v4711, %v4709
        %v6056 = vpack.c.b16 %v4712, %v4710
        %v6057 = vpack.c.b16 %v4715, %v4713
        %v6058 = vpack.c.b16 %v4716, %v4714
        %v6059 = vpack.c.b16 %v4719, %v4717
        %v6060 = vpack.c.b16 %v4720, %v4718
        %v6061 = vpack.c.b16 %v4723, %v4721
        %v6062 = vpack.c.b16 %v4724, %v4722
        %v6063 = vpack.c.b16 %v4727, %v4725
        %v6064 = vpack.c.b16 %v4728, %v4726
        %v6065 = vpack.c.b16 %v4731, %v4729
        %v6066 = vpack.c.b16 %v4732, %v4730
        %v6067 = vpack.c.b16 %v4735, %v4733
        %v6068 = vpack.c.b16 %v4736, %v4734
        %v6069 = vpack.c.b16 %v4739, %v4737
        %v6070 = vpack.c.b16 %v4740, %v4738
        %v6071 = vpack.c.b16 %v4743, %v4741
        %v6072 = vpack.c.b16 %v4744, %v4742
        %v6073 = vpack.c.b16 %v4747, %v4745
        %v6074 = vpack.c.b16 %v4748, %v4746
        %v6075 = vpack.c.b16 %v4751, %v4749
        %v6076 = vpack.c.b16 %v4752, %v4750
        %v6077 = vpack.c.b16 %v4755, %v4753
        %v6078 = vpack.c.b16 %v4756, %v4754
        %v6079 = vpack.c.b16 %v4759, %v4757
        %v6080 = vpack.c.b16 %v4760, %v4758
        %v6081 = vpack.c.b16 %v4763, %v4761
        %v6082 = vpack.c.b16 %v4764, %v4762
        %v6083 = vpack.c.b16 %v4767, %v4765
        %v6084 = vpack.c.b16 %v4768, %v4766
        %v6085 = vpack.c.b16 %v4771, %v4769
        %v6086 = vpack.c.b16 %v4772, %v4770
        %v6087 = vpack.c.b16 %v4775, %v4773
        %v6088 = vpack.c.b16 %v4776, %v4774
        %v6089 = vpack.c.b16 %v4779, %v4777
        %v6090 = vpack.c.b16 %v4780, %v4778
        %v6091 = vpack.c.b16 %v4783, %v4781
        %v6092 = vpack.c.b16 %v4784, %v4782
        %v6093 = vpack.c.b16 %v4787, %v4785
        %v6094 = vpack.c.b16 %v4788, %v4786
        %v6095 = vpack.c.b16 %v4791, %v4789
        %v6096 = vpack.c.b16 %v4792, %v4790
        %v6097 = vpack.c.b16 %v4795, %v4793
        %v6098 = vpack.c.b16 %v4796, %v4794
        %v6099 = vpack.c.b16 %v4799, %v4797
        %v6100 = vpack.c.b16 %v4800, %v4798
        %v6101 = vpack.c.b16 %v4803, %v4801
        %v6102 = vpack.c.b16 %v4804, %v4802
        %v6103 = vpack.c.b16 %v4807, %v4805
        %v6104 = vpack.c.b16 %v4808, %v4806
        %v6105 = vpack.c.b16 %v4811, %v4809
        %v6106 = vpack.c.b16 %v4812, %v4810
        %v6107 = vpack.c.b16 %v4815, %v4813
        %v6108 = vpack.c.b16 %v4816, %v4814
        %v6109 = vpack.c.b16 %v4819, %v4817
        %v6110 = vpack.c.b16 %v4820, %v4818
        %v6111 = vpack.c.b16 %v4823, %v4821
        %v6112 = vpack.c.b16 %v4824, %v4822
        %v6113 = vpack.c.b16 %v4827, %v4825
        %v6114 = vpack.c.b16 %v4828, %v4826
        %v6115 = vpack.c.b16 %v4831, %v4829
        %v6116 = vpack.c.b16 %v4832, %v4830
        %v6117 = vpack.c.b16 %v4835, %v4833
        %v6118 = vpack.c.b16 %v4836, %v4834
        %v6119 = vpack.c.b16 %v4839, %v4837
        %v6120 = vpack.c.b16 %v4840, %v4838
        %v6121 = vpack.c.b16 %v4843, %v4841
        %v6122 = vpack.c.b16 %v4844, %v4842
        %v6123 = vpack.c.b16 %v4847, %v4845
        %v6124 = vpack.c.b16 %v4848, %v4846
        %v6125 = vpack.c.b16 %v4851, %v4849
        %v6126 = vpack.c.b16 %v4852, %v4850
        %v6127 = vpack.c.b16 %v4855, %v4853
        %v6128 = vpack.c.b16 %v4856, %v4854
        %v6129 = vpack.c.b16 %v4859, %v4857
        %v6130 = vpack.c.b16 %v4860, %v4858
        %v6131 = vpack.c.b16 %v4863, %v4861
        %v6132 = vpack.c.b16 %v4864, %v4862
        %v6133 = vpack.c.b16 %v4867, %v4865
        %v6134 = vpack.c.b16 %v4868, %v4866
        %v6135 = vpack.c.b16 %v4871, %v4869
        %v6136 = vpack.c.b16 %v4872, %v4870
        %v6137 = vpack.c.b16 %v4875, %v4873
        %v6138 = vpack.c.b16 %v4876, %v4874
        %v6139 = vpack.c.b16 %v4879, %v4877
        %v6140 = vpack.c.b16 %v4880, %v4878
        %v6141 = vpack.c.b16 %v4883, %v4881
        %v6142 = vpack.c.b16 %v4884, %v4882
        %v6143 = vpack.c.b16 %v4887, %v4885
        %v6144 = vpack.c.b16 %v4888, %v4886
        %v6145 = vpack.c.b16 %v4891, %v4889
        %v6146 = vpack.c.b16 %v4892, %v4890
        %v6147 = vpack.c.b16 %v4895, %v4893
        %v6148 = vpack.c.b16 %v4896, %v4894
        %v6149 = vpack.c.b16 %v4899, %v4897
        %v6150 = vpack.c.b16 %v4900, %v4898
        %v6151 = vpack.c.b16 %v4903, %v4901
        %v6152 = vpack.c.b16 %v4904, %v4902
        %v6153 = vpack.c.b16 %v4907, %v4905
        %v6154 = vpack.c.b16 %v4908, %v4906
        %v6155 = vpack.c.b16 %v4911, %v4909
        %v6156 = vpack.c.b16 %v4912, %v4910
        %v6157 = vpack.c.b16 %v4915, %v4913
        %v6158 = vpack.c.b16 %v4916, %v4914
        %v6159 = vpack.c.b16 %v4919, %v4917
        %v6160 = vpack.c.b16 %v4920, %v4918
        %v6161 = vpack.c.b16 %v4923, %v4921
        %v6162 = vpack.c.b16 %v4924, %v4922
        %v6163 = vpack.c.b16 %v4927, %v4925
        %v6164 = vpack.c.b16 %v4928, %v4926
        %v6165 = vpack.c.b16 %v4931, %v4929
        %v6166 = vpack.c.b16 %v4932, %v4930
        %v6167 = vpack.c.b16 %v4935, %v4933
        %v6168 = vpack.c.b16 %v4936, %v4934
        %v6169 = vpack.c.b16 %v4939, %v4937
        %v6170 = vpack.c.b16 %v4940, %v4938
        %v6171 = vpack.c.b16 %v4943, %v4941
        %v6172 = vpack.c.b16 %v4944, %v4942
        %v6173 = vpack.c.b16 %v4947, %v4945
        %v6174 = vpack.c.b16 %v4948, %v4946
        %v6175 = vpack.c.b16 %v4951, %v4949
        %v6176 = vpack.c.b16 %v4952, %v4950
        %v6177 = vpack.c.b16 %v4955, %v4953
        %v6178 = vpack.c.b16 %v4956, %v4954
        %v6179 = vpack.c.b16 %v4959, %v4957
        %v6180 = vpack.c.b16 %v4960, %v4958
        %v6181 = vpack.c.b16 %v4963, %v4961
        %v6182 = vpack.c.b16 %v4964, %v4962
        %v6183 = vpack.c.b16 %v4967, %v4965
        %v6184 = vpack.c.b16 %v4968, %v4966
        %v6185 = vpack.c.b16 %v4971, %v4969
        %v6186 = vpack.c.b16 %v4972, %v4970
        %v6187 = vpack.c.b16 %v4975, %v4973
        %v6188 = vpack.c.b16 %v4976, %v4974
        %v6189 = vpack.c.b16 %v4979, %v4977
        %v6190 = vpack.c.b16 %v4980, %v4978
        %v6191 = vpack.c.b16 %v4983, %v4981
        %v6192 = vpack.c.b16 %v4984, %v4982
        %v6193 = vpack.c.b16 %v4987, %v4985
        %v6194 = vpack.c.b16 %v4988, %v4986
        %v6195 = vpack.c.b16 %v4991, %v4989
        %v6196 = vpack.c.b16 %v4992, %v4990
        %v6197 = vpack.c.b16 %v4995, %v4993
        %v6198 = vpack.c.b16 %v4996, %v4994
        %v6199 = vpack.c.b16 %v4999, %v4997
        %v6200 = vpack.c.b16 %v5000, %v4998
        %v6201 = vpack.c.b16 %v5003, %v5001
        %v6202 = vpack.c.b16 %v5004, %v5002
        %v6203 = vpack.c.b16 %v5007, %v5005
        %v6204 = vpack.c.b16 %v5008, %v5006
        %v6205 = vpack.c.b16 %v5011, %v5009
        %v6206 = vpack.c.b16 %v5012, %v5010
        %v6207 = vpack.c.b16 %v5015, %v5013
        %v6208 = vpack.c.b16 %v5016, %v5014
        %v6209 = vpack.c.b16 %v5019, %v5017
        %v6210 = vpack.c.b16 %v5020, %v5018
        %v6211 = vpack.c.b16 %v5023, %v5021
        %v6212 = vpack.c.b16 %v5024, %v5022
        %v6213 = vpack.c.b16 %v5027, %v5025
        %v6214 = vpack.c.b16 %v5028, %v5026
        %v6215 = vpack.c.b16 %v5031, %v5029
        %v6216 = vpack.c.b16 %v5032, %v5030
        %v6217 = vpack.c.b16 %v5035, %v5033
        %v6218 = vpack.c.b16 %v5036, %v5034
        %v6219 = vpack.c.b16 %v5039, %v5037
        %v6220 = vpack.c.b16 %v5040, %v5038
        %v6221 = vpack.c.b16 %v5043, %v5041
        %v6222 = vpack.c.b16 %v5044, %v5042
        %v6223 = vpack.c.b16 %v5047, %v5045
        %v6224 = vpack.c.b16 %v5048, %v5046
        %v6225 = vpack.c.b16 %v5051, %v5049
        %v6226 = vpack.c.b16 %v5052, %v5050
        %v6227 = vpack.c.b16 %v5055, %v5053
        %v6228 = vpack.c.b16 %v5056, %v5054
        %v6229 = vpack.c.b16 %v5059, %v5057
        %v6230 = vpack.c.b16 %v5060, %v5058
        %v6231 = vpack.c.b16 %v5063, %v5061
        %v6232 = vpack.c.b16 %v5064, %v5062
        %v6233 = vpack.c.b16 %v5067, %v5065
        %v6234 = vpack.c.b16 %v5068, %v5066
        %v6235 = vpack.c.b16 %v5071, %v5069
        %v6236 = vpack.c.b16 %v5072, %v5070
        %v6237 = vpack.c.b16 %v5075, %v5073
        %v6238 = vpack.c.b16 %v5076, %v5074
        %v6239 = vpack.c.b16 %v5079, %v5077
        %v6240 = vpack.c.b16 %v5080, %v5078
        %v6241 = vpack.c.b16 %v5083, %v5081
        %v6242 = vpack.c.b16 %v5084, %v5082
        %v6243 = vpack.c.b16 %v5087, %v5085
        %v6244 = vpack.c.b16 %v5088, %v5086
        %v6245 = vpack.c.b16 %v5091, %v5089
        %v6246 = vpack.c.b16 %v5092, %v5090
        %v6247 = vpack.c.b16 %v5095, %v5093
        %v6248 = vpack.c.b16 %v5096, %v5094
        %v6249 = vpack.c.b16 %v5099, %v5097
        %v6250 = vpack.c.b16 %v5100, %v5098
        %v6251 = vpack.c.b16 %v5103, %v5101
        %v6252 = vpack.c.b16 %v5104, %v5102
        %v6253 = vpack.c.b16 %v5107, %v5105
        %v6254 = vpack.c.b16 %v5108, %v5106
        %v6255 = vpack.c.b16 %v5111, %v5109
        %v6256 = vpack.c.b16 %v5112, %v5110
        %v6257 = vpack.c.b16 %v5115, %v5113
        %v6258 = vpack.c.b16 %v5116, %v5114
        %v6259 = vpack.c.b16 %v5119, %v5117
        %v6260 = vpack.c.b16 %v5120, %v5118
        %v6261 = vpack.c.b16 %v5123, %v5121
        %v6262 = vpack.c.b16 %v5124, %v5122
        %v6263 = vpack.c.b16 %v5127, %v5125
        %v6264 = vpack.c.b16 %v5128, %v5126
        %v6265 = vpack.c.b16 %v5131, %v5129
        %v6266 = vpack.c.b16 %v5132, %v5130
        %v6267 = vpack.c.b16 %v5135, %v5133
        %v6268 = vpack.c.b16 %v5136, %v5134
        %v6269 = vpack.c.b16 %v5139, %v5137
        %v6270 = vpack.c.b16 %v5140, %v5138
        %v6271 = vpack.c.b16 %v5143, %v5141
        %v6272 = vpack.c.b16 %v5144, %v5142
        %v6273 = vpack.c.b16 %v5147, %v5145
        %v6274 = vpack.c.b16 %v5148, %v5146
        %v6275 = vpack.c.b16 %v5151, %v5149
        %v6276 = vpack.c.b16 %v5152, %v5150
        %v6277 = vpack.c.b16 %v5155, %v5153
        %v6278 = vpack.c.b16 %v5156, %v5154
        %v6279 = vpack.c.b16 %v5159, %v5157
        %v6280 = vpack.c.b16 %v5160, %v5158
        %v6281 = vpack.c.b16 %v5163, %v5161
        %v6282 = vpack.c.b16 %v5164, %v5162
        %v6283 = vpack.c.b16 %v5167, %v5165
        %v6284 = vpack.c.b16 %v5168, %v5166
        %v6285 = vpack.c.b16 %v5171, %v5169
        %v6286 = vpack.c.b16 %v5172, %v5170
        %v6287 = vpack.c.b16 %v5175, %v5173
        %v6288 = vpack.c.b16 %v5176, %v5174
        %v6289 = vpack.c.b16 %v5179, %v5177
        %v6290 = vpack.c.b16 %v5180, %v5178
        %v6291 = vpack.c.b16 %v5183, %v5181
        %v6292 = vpack.c.b16 %v5184, %v5182
        %v6293 = vpack.c.b16 %v5187, %v5185
        %v6294 = vpack.c.b16 %v5188, %v5186
        %v6295 = vpack.c.b16 %v5191, %v5189
        %v6296 = vpack.c.b16 %v5192, %v5190
        %v6297 = vpack.c.b16 %v5195, %v5193
        %v6298 = vpack.c.b16 %v5196, %v5194
        %v6299 = vpack.c.b16 %v5199, %v5197
        %v6300 = vpack.c.b16 %v5200, %v5198
        %v6301 = vpack.c.b16 %v5203, %v5201
        %v6302 = vpack.c.b16 %v5204, %v5202
        %v6303 = vpack.c.b16 %v5207, %v5205
        %v6304 = vpack.c.b16 %v5208, %v5206
        %v6305 = vpack.c.b16 %v5211, %v5209
        %v6306 = vpack.c.b16 %v5212, %v5210
        %v6307 = vpack.c.b16 %v5215, %v5213
        %v6308 = vpack.c.b16 %v5216, %v5214
        %v6309 = vpack.c.b16 %v5219, %v5217
        %v6310 = vpack.c.b16 %v5220, %v5218
        %v6311 = vpack.c.b16 %v5223, %v5221
        %v6312 = vpack.c.b16 %v5224, %v5222
        %v6313 = vpack.c.b16 %v5227, %v5225
        %v6314 = vpack.c.b16 %v5228, %v5226
        %v6315 = vpack.c.b16 %v5231, %v5229
        %v6316 = vpack.c.b16 %v5232, %v5230
        %v6317 = vpack.c.b16 %v5235, %v5233
        %v6318 = vpack.c.b16 %v5236, %v5234
        %v6319 = vpack.c.b16 %v5239, %v5237
        %v6320 = vpack.c.b16 %v5240, %v5238
        %v6321 = vpack.c.b16 %v5243, %v5241
        %v6322 = vpack.c.b16 %v5244, %v5242
        %v6323 = vpack.c.b16 %v5247, %v5245
        %v6324 = vpack.c.b16 %v5248, %v5246
        %v6325 = vpack.c.b16 %v5251, %v5249
        %v6326 = vpack.c.b16 %v5252, %v5250
        %v6327 = vpack.c.b16 %v5255, %v5253
        %v6328 = vpack.c.b16 %v5256, %v5254
        %v6329 = vpack.c.b16 %v5259, %v5257
        %v6330 = vpack.c.b16 %v5260, %v5258
        %v6331 = vpack.c.b16 %v5263, %v5261
        %v6332 = vpack.c.b16 %v5264, %v5262
        %v6333 = vpack.c.b16 %v5267, %v5265
        %v6334 = vpack.c.b16 %v5268, %v5266
        %v6335 = vpack.c.b16 %v5271, %v5269
        %v6336 = vpack.c.b16 %v5272, %v5270
        %v6337 = vpack.c.b16 %v5275, %v5273
        %v6338 = vpack.c.b16 %v5276, %v5274
        %v6339 = vpack.c.b16 %v5279, %v5277
        %v6340 = vpack.c.b16 %v5280, %v5278
        %v6341 = vpack.c.b16 %v5283, %v5281
        %v6342 = vpack.c.b16 %v5284, %v5282
        %v6343 = vpack.c.b16 %v5287, %v5285
        %v6344 = vpack.c.b16 %v5288, %v5286
        %7401 = vmatprep.subr.bf16.mxu0 %v5290
        %7402 = vmatpush1.bf16.msra.mxu0 %v5289
        %7403 = vmatprep.subr.bf16.mxu0 %v5292
        %7404 = vmatpush1.bf16.msra.mxu0 %v5291
        %7405 = vmatprep.subr.bf16.mxu0 %v5294
        %7406 = vmatpush1.bf16.msra.mxu0 %v5293
        %7407 = vmatprep.subr.bf16.mxu0 %v5296
        %7408 = vmatpush1.bf16.msra.mxu0 %v5295
        %7409 = vmatprep.subr.bf16.mxu0 %v5298
        %7410 = vmatpush1.bf16.msra.mxu0 %v5297
        %7411 = vmatprep.subr.bf16.mxu0 %v5300
        %7412 = vmatpush1.bf16.msra.mxu0 %v5299
        %7413 = vmatprep.subr.bf16.mxu0 %v5302
        %7414 = vmatpush1.bf16.msra.mxu0 %v5301
        %7415 = vmatprep.subr.bf16.mxu0 %v5304
        %7416 = vmatpush1.bf16.msra.mxu0 %v5303
        %7417 = vmatprep.subr.bf16.mxu0 %v5306
        %7418 = vmatpush1.bf16.msra.mxu0 %v5305
        %7419 = vmatprep.subr.bf16.mxu0 %v5308
        %7420 = vmatpush1.bf16.msra.mxu0 %v5307
        %7421 = vmatprep.subr.bf16.mxu0 %v5310
        %7422 = vmatpush1.bf16.msra.mxu0 %v5309
        %7423 = vmatprep.subr.bf16.mxu0 %v5312
        %7424 = vmatpush1.bf16.msra.mxu0 %v5311
        %7425 = vmatprep.subr.bf16.mxu0 %v5314
        %7426 = vmatpush1.bf16.msra.mxu0 %v5313
        %7427 = vmatprep.subr.bf16.mxu0 %v5316
        %7428 = vmatpush1.bf16.msra.mxu0 %v5315
        %7429 = vmatprep.subr.bf16.mxu0 %v5318
        %7430 = vmatpush1.bf16.msra.mxu0 %v5317
        %7431 = vmatprep.subr.bf16.mxu0 %v5320
        %7432 = vmatpush1.bf16.msra.mxu0 %v5319
        %7433 = vmatprep.mubr.bf16.mxu0 %v1858
        %7434 = vmatmul.mubr.bf16.gmra.mrb[0].mxu0 %v1857
        %v7435 = vpop.f32.mrb[0].mxu0
        %v7436 = vadd.f32 %v1454, %v7435
        %v7437 = vpop.f32.mrb[0].mxu0
        %v7438 = vadd.f32 %v1458, %v7437
        %v7439 = vpop.f32.mrb[0].mxu0
        %v7440 = vadd.f32 %v1454, %v7439
        %v7441 = vpop.f32.mrb[0].mxu0
        %v7442 = vadd.f32 %v1458, %v7441
        %7443 = vmatprep.mubr.bf16.mxu0 %v1924
        %7444 = vmatmul.mubr.bf16.gmra.mrb[0].mxu0 %v1923
        %v7445 = vpop.f32.mrb[0].mxu0
        %v7446 = vadd.f32 %v1454, %v7445
        %v7447 = vpop.f32.mrb[0].mxu0
        %v7448 = vadd.f32 %v1458, %v7447
        %v7449 = vpop.f32.mrb[0].mxu0
        %v7450 = vadd.f32 %v1454, %v7449
        %v7451 = vpop.f32.mrb[0].mxu0
        %v7452 = vadd.f32 %v1458, %v7451
        %7453 = vdwg.mxu0
        %7454 = vmatprep.subr.bf16.mxu0 %v5322
        %7455 = vmatpush1.bf16.msra.mxu0 %v5321
        %7456 = vmatprep.subr.bf16.mxu0 %v5324
        %7457 = vmatpush1.bf16.msra.mxu0 %v5323
        %7458 = vmatprep.subr.bf16.mxu0 %v5326
        %7459 = vmatpush1.bf16.msra.mxu0 %v5325
        %7460 = vmatprep.subr.bf16.mxu0 %v5328
        %7461 = vmatpush1.bf16.msra.mxu0 %v5327
        %7462 = vmatprep.subr.bf16.mxu0 %v5330
        %7463 = vmatpush1.bf16.msra.mxu0 %v5329
        %7464 = vmatprep.subr.bf16.mxu0 %v5332
        %7465 = vmatpush1.bf16.msra.mxu0 %v5331
        %7466 = vmatprep.subr.bf16.mxu0 %v5334
        %7467 = vmatpush1.bf16.msra.mxu0 %v5333
        %7468 = vmatprep.subr.bf16.mxu0 %v5336
        %7469 = vmatpush1.bf16.msra.mxu0 %v5335
        %7470 = vmatprep.subr.bf16.mxu0 %v5338
        %7471 = vmatpush1.bf16.msra.mxu0 %v5337
        %7472 = vmatprep.subr.bf16.mxu0 %v5340
        %7473 = vmatpush1.bf16.msra.mxu0 %v5339
        %7474 = vmatprep.subr.bf16.mxu0 %v5342
        %7475 = vmatpush1.bf16.msra.mxu0 %v5341
        %7476 = vmatprep.subr.bf16.mxu0 %v5344
        %7477 = vmatpush1.bf16.msra.mxu0 %v5343
        %7478 = vmatprep.subr.bf16.mxu0 %v5346
        %7479 = vmatpush1.bf16.msra.mxu0 %v5345
        %7480 = vmatprep.subr.bf16.mxu0 %v5348
        %7481 = vmatpush1.bf16.msra.mxu0 %v5347
        %7482 = vmatprep.subr.bf16.mxu0 %v5350
        %7483 = vmatpush1.bf16.msra.mxu0 %v5349
        %7484 = vmatprep.subr.bf16.mxu0 %v5352
        %7485 = vmatpush1.bf16.msra.mxu0 %v5351
        %7486 = vmatprep.mubr.bf16.mxu0 %v1860
        %7487 = vmatmul.mubr.bf16.gmra.mrb[0].mxu0 %v1859
        %v7488 = vpop.f32.mrb[0].mxu0
        %v7489 = vadd.f32 %v7436, %v7488
        %v7490 = vpop.f32.mrb[0].mxu0
        %v7491 = vadd.f32 %v7438, %v7490
        %v7492 = vpop.f32.mrb[0].mxu0
        %v7493 = vadd.f32 %v7440, %v7492
        %v7494 = vpop.f32.mrb[0].mxu0
        %v7495 = vadd.f32 %v7442, %v7494
        %7496 = vmatprep.mubr.bf16.mxu0 %v1926
        %7497 = vmatmul.mubr.bf16.gmra.mrb[0].mxu0 %v1925
        %v7498 = vpop.f32.mrb[0].mxu0
        %v7499 = vadd.f32 %v7446, %v7498
        %v7500 = vpop.f32.mrb[0].mxu0
        %v7501 = vadd.f32 %v7448, %v7500
        %v7502 = vpop.f32.mrb[0].mxu0
        %v7503 = vadd.f32 %v7450, %v7502
        %v7504 = vpop.f32.mrb[0].mxu0
        %v7505 = vadd.f32 %v7452, %v7504
        %7506 = vdwg.mxu0
        %7507 = vmatprep.subr.bf16.mxu0 %v5354
        %7508 = vmatpush1.bf16.msra.mxu0 %v5353
        %7509 = vmatprep.subr.bf16.mxu0 %v5356
        %7510 = vmatpush1.bf16.msra.mxu0 %v5355
        %7511 = vmatprep.subr.bf16.mxu0 %v5358
        %7512 = vmatpush1.bf16.msra.mxu0 %v5357
        %7513 = vmatprep.subr.bf16.mxu0 %v5360
        %7514 = vmatpush1.bf16.msra.mxu0 %v5359
        %7515 = vmatprep.subr.bf16.mxu0 %v5362
        %7516 = vmatpush1.bf16.msra.mxu0 %v5361
        %7517 = vmatprep.subr.bf16.mxu0 %v5364
        %7518 = vmatpush1.bf16.msra.mxu0 %v5363
        %7519 = vmatprep.subr.bf16.mxu0 %v5366
        %7520 = vmatpush1.bf16.msra.mxu0 %v5365
        %7521 = vmatprep.subr.bf16.mxu0 %v5368
        %7522 = vmatpush1.bf16.msra.mxu0 %v5367
        %7523 = vmatprep.subr.bf16.mxu0 %v5370
        %7524 = vmatpush1.bf16.msra.mxu0 %v5369
        %7525 = vmatprep.subr.bf16.mxu0 %v5372
        %7526 = vmatpush1.bf16.msra.mxu0 %v5371
        %7527 = vmatprep.subr.bf16.mxu0 %v5374
        %7528 = vmatpush1.bf16.msra.mxu0 %v5373
        %7529 = vmatprep.subr.bf16.mxu0 %v5376
        %7530 = vmatpush1.bf16.msra.mxu0 %v5375
        %7531 = vmatprep.subr.bf16.mxu0 %v5378
        %7532 = vmatpush1.bf16.msra.mxu0 %v5377
        %7533 = vmatprep.subr.bf16.mxu0 %v5380
        %7534 = vmatpush1.bf16.msra.mxu0 %v5379
        %7535 = vmatprep.subr.bf16.mxu0 %v5382
        %7536 = vmatpush1.bf16.msra.mxu0 %v5381
        %7537 = vmatprep.subr.bf16.mxu0 %v5384
        %7538 = vmatpush1.bf16.msra.mxu0 %v5383
        %7539 = vmatprep.mubr.bf16.mxu0 %v1862
        %7540 = vmatmul.mubr.bf16.gmra.mrb[0].mxu0 %v1861
        %v7541 = vpop.f32.mrb[0].mxu0
        %v7542 = vadd.f32 %v7489, %v7541
        %v7543 = vpop.f32.mrb[0].mxu0
        %v7544 = vadd.f32 %v7491, %v7543
        %v7545 = vpop.f32.mrb[0].mxu0
        %v7546 = vadd.f32 %v7493, %v7545
        %v7547 = vpop.f32.mrb[0].mxu0
        %v7548 = vadd.f32 %v7495, %v7547
        %7549 = vmatprep.mubr.bf16.mxu0 %v1928
        %7550 = vmatmul.mubr.bf16.gmra.mrb[0].mxu0 %v1927
        %v7551 = vpop.f32.mrb[0].mxu0
        %v7552 = vadd.f32 %v7499, %v7551
        %v7553 = vpop.f32.mrb[0].mxu0
        %v7554 = vadd.f32 %v7501, %v7553
        %v7555 = vpop.f32.mrb[0].mxu0
        %v7556 = vadd.f32 %v7503, %v7555
        %v7557 = vpop.f32.mrb[0].mxu0
        %v7558 = vadd.f32 %v7505, %v7557
        %7559 = vdwg.mxu0
        %7560 = vmatprep.subr.bf16.mxu0 %v5386
        %7561 = vmatpush1.bf16.msra.mxu0 %v5385
        %7562 = vmatprep.subr.bf16.mxu0 %v5388
        %7563 = vmatpush1.bf16.msra.mxu0 %v5387
        %7564 = vmatprep.subr.bf16.mxu0 %v5390
        %7565 = vmatpush1.bf16.msra.mxu0 %v5389
        %7566 = vmatprep.subr.bf16.mxu0 %v5392
        %7567 = vmatpush1.bf16.msra.mxu0 %v5391
        %7568 = vmatprep.subr.bf16.mxu0 %v5394
        %7569 = vmatpush1.bf16.msra.mxu0 %v5393
        %7570 = vmatprep.subr.bf16.mxu0 %v5396
        %7571 = vmatpush1.bf16.msra.mxu0 %v5395
        %7572 = vmatprep.subr.bf16.mxu0 %v5398
        %7573 = vmatpush1.bf16.msra.mxu0 %v5397
        %7574 = vmatprep.subr.bf16.mxu0 %v5400
        %7575 = vmatpush1.bf16.msra.mxu0 %v5399
        %7576 = vmatprep.subr.bf16.mxu0 %v5402
        %7577 = vmatpush1.bf16.msra.mxu0 %v5401
        %7578 = vmatprep.subr.bf16.mxu0 %v5404
        %7579 = vmatpush1.bf16.msra.mxu0 %v5403
        %7580 = vmatprep.subr.bf16.mxu0 %v5406
        %7581 = vmatpush1.bf16.msra.mxu0 %v5405
        %7582 = vmatprep.subr.bf16.mxu0 %v5408
        %7583 = vmatpush1.bf16.msra.mxu0 %v5407
        %7584 = vmatprep.subr.bf16.mxu0 %v5410
        %7585 = vmatpush1.bf16.msra.mxu0 %v5409
        %7586 = vmatprep.subr.bf16.mxu0 %v5412
        %7587 = vmatpush1.bf16.msra.mxu0 %v5411
        %7588 = vmatprep.subr.bf16.mxu0 %v5414
        %7589 = vmatpush1.bf16.msra.mxu0 %v5413
        %7590 = vmatprep.subr.bf16.mxu0 %v5416
        %7591 = vmatpush1.bf16.msra.mxu0 %v5415
        %7592 = vmatprep.mubr.bf16.mxu0 %v1864
        %7593 = vmatmul.mubr.bf16.gmra.mrb[0].mxu0 %v1863
        %v7594 = vpop.f32.mrb[0].mxu0
        %v7595 = vadd.f32 %v7542, %v7594
        %v7596 = vpop.f32.mrb[0].mxu0
        %v7597 = vadd.f32 %v7544, %v7596
        %v7598 = vpop.f32.mrb[0].mxu0
        %v7599 = vadd.f32 %v7546, %v7598
        %v7600 = vpop.f32.mrb[0].mxu0
        %v7601 = vadd.f32 %v7548, %v7600
        %7602 = vmatprep.mubr.bf16.mxu0 %v1930
        %7603 = vmatmul.mubr.bf16.gmra.mrb[0].mxu0 %v1929
        %v7604 = vpop.f32.mrb[0].mxu0
        %v7605 = vadd.f32 %v7552, %v7604
        %v7606 = vpop.f32.mrb[0].mxu0
        %v7607 = vadd.f32 %v7554, %v7606
        %v7608 = vpop.f32.mrb[0].mxu0
        %v7609 = vadd.f32 %v7556, %v7608
        %v7610 = vpop.f32.mrb[0].mxu0
        %v7611 = vadd.f32 %v7558, %v7610
        %7612 = vdwg.mxu0
        %7613 = vmatprep.subr.bf16.mxu0 %v5418
        %7614 = vmatpush1.bf16.msra.mxu0 %v5417
        %7615 = vmatprep.subr.bf16.mxu0 %v5420
        %7616 = vmatpush1.bf16.msra.mxu0 %v5419
        %7617 = vmatprep.subr.bf16.mxu0 %v5422
        %7618 = vmatpush1.bf16.msra.mxu0 %v5421
        %7619 = vmatprep.subr.bf16.mxu0 %v5424
        %7620 = vmatpush1.bf16.msra.mxu0 %v5423
        %7621 = vmatprep.subr.bf16.mxu0 %v5426
        %7622 = vmatpush1.bf16.msra.mxu0 %v5425
        %7623 = vmatprep.subr.bf16.mxu0 %v5428
        %7624 = vmatpush1.bf16.msra.mxu0 %v5427
        %7625 = vmatprep.subr.bf16.mxu0 %v5430
        %7626 = vmatpush1.bf16.msra.mxu0 %v5429
        %7627 = vmatprep.subr.bf16.mxu0 %v5432
        %7628 = vmatpush1.bf16.msra.mxu0 %v5431
        %7629 = vmatprep.subr.bf16.mxu0 %v5434
        %7630 = vmatpush1.bf16.msra.mxu0 %v5433
        %7631 = vmatprep.subr.bf16.mxu0 %v5436
        %7632 = vmatpush1.bf16.msra.mxu0 %v5435
        %7633 = vmatprep.subr.bf16.mxu0 %v5438
        %7634 = vmatpush1.bf16.msra.mxu0 %v5437
        %7635 = vmatprep.subr.bf16.mxu0 %v5440
        %7636 = vmatpush1.bf16.msra.mxu0 %v5439
        %7637 = vmatprep.subr.bf16.mxu0 %v5442
        %7638 = vmatpush1.bf16.msra.mxu0 %v5441
        %7639 = vmatprep.subr.bf16.mxu0 %v5444
        %7640 = vmatpush1.bf16.msra.mxu0 %v5443
        %7641 = vmatprep.subr.bf16.mxu0 %v5446
        %7642 = vmatpush1.bf16.msra.mxu0 %v5445
        %7643 = vmatprep.subr.bf16.mxu0 %v5448
        %7644 = vmatpush1.bf16.msra.mxu0 %v5447
        %7645 = vmatprep.mubr.bf16.mxu0 %v1866
        %7646 = vmatmul.mubr.bf16.gmra.mrb[0].mxu0 %v1865
        %v7647 = vpop.f32.mrb[0].mxu0
        %v7648 = vadd.f32 %v7595, %v7647
        %v7649 = vpop.f32.mrb[0].mxu0
        %v7650 = vadd.f32 %v7597, %v7649
        %v7651 = vpop.f32.mrb[0].mxu0
        %v7652 = vadd.f32 %v7599, %v7651
        %v7653 = vpop.f32.mrb[0].mxu0
        %v7654 = vadd.f32 %v7601, %v7653
        %7655 = vmatprep.mubr.bf16.mxu0 %v1932
        %7656 = vmatmul.mubr.bf16.gmra.mrb[0].mxu0 %v1931
        %v7657 = vpop.f32.mrb[0].mxu0
        %v7658 = vadd.f32 %v7605, %v7657
        %v7659 = vpop.f32.mrb[0].mxu0
        %v7660 = vadd.f32 %v7607, %v7659
        %v7661 = vpop.f32.mrb[0].mxu0
        %v7662 = vadd.f32 %v7609, %v7661
        %v7663 = vpop.f32.mrb[0].mxu0
        %v7664 = vadd.f32 %v7611, %v7663
        %7665 = vdwg.mxu0
        %7666 = vmatprep.subr.bf16.mxu0 %v5450
        %7667 = vmatpush1.bf16.msra.mxu0 %v5449
        %7668 = vmatprep.subr.bf16.mxu0 %v5452
        %7669 = vmatpush1.bf16.msra.mxu0 %v5451
        %7670 = vmatprep.subr.bf16.mxu0 %v5454
        %7671 = vmatpush1.bf16.msra.mxu0 %v5453
        %7672 = vmatprep.subr.bf16.mxu0 %v5456
        %7673 = vmatpush1.bf16.msra.mxu0 %v5455
        %7674 = vmatprep.subr.bf16.mxu0 %v5458
        %7675 = vmatpush1.bf16.msra.mxu0 %v5457
        %7676 = vmatprep.subr.bf16.mxu0 %v5460
        %7677 = vmatpush1.bf16.msra.mxu0 %v5459
        %7678 = vmatprep.subr.bf16.mxu0 %v5462
        %7679 = vmatpush1.bf16.msra.mxu0 %v5461
        %7680 = vmatprep.subr.bf16.mxu0 %v5464
        %7681 = vmatpush1.bf16.msra.mxu0 %v5463
        %7682 = vmatprep.subr.bf16.mxu0 %v5466
        %7683 = vmatpush1.bf16.msra.mxu0 %v5465
        %7684 = vmatprep.subr.bf16.mxu0 %v5468
        %7685 = vmatpush1.bf16.msra.mxu0 %v5467
        %7686 = vmatprep.subr.bf16.mxu0 %v5470
        %7687 = vmatpush1.bf16.msra.mxu0 %v5469
        %7688 = vmatprep.subr.bf16.mxu0 %v5472
        %7689 = vmatpush1.bf16.msra.mxu0 %v5471
        %7690 = vmatprep.subr.bf16.mxu0 %v5474
        %7691 = vmatpush1.bf16.msra.mxu0 %v5473
        %7692 = vmatprep.subr.bf16.mxu0 %v5476
        %7693 = vmatpush1.bf16.msra.mxu0 %v5475
        %7694 = vmatprep.subr.bf16.mxu0 %v5478
        %7695 = vmatpush1.bf16.msra.mxu0 %v5477
        %7696 = vmatprep.subr.bf16.mxu0 %v5480
        %7697 = vmatpush1.bf16.msra.mxu0 %v5479
        %7698 = vmatprep.mubr.bf16.mxu0 %v1868
        %7699 = vmatmul.mubr.bf16.gmra.mrb[0].mxu0 %v1867
        %v7700 = vpop.f32.mrb[0].mxu0
        %v7701 = vadd.f32 %v7648, %v7700
        %v7702 = vpop.f32.mrb[0].mxu0
        %v7703 = vadd.f32 %v7650, %v7702
        %v7704 = vpop.f32.mrb[0].mxu0
        %v7705 = vadd.f32 %v7652, %v7704
        %v7706 = vpop.f32.mrb[0].mxu0
        %v7707 = vadd.f32 %v7654, %v7706
        %7708 = vmatprep.mubr.bf16.mxu0 %v1934
        %7709 = vmatmul.mubr.bf16.gmra.mrb[0].mxu0 %v1933
        %v7710 = vpop.f32.mrb[0].mxu0
        %v7711 = vadd.f32 %v7658, %v7710
        %v7712 = vpop.f32.mrb[0].mxu0
        %v7713 = vadd.f32 %v7660, %v7712
        %v7714 = vpop.f32.mrb[0].mxu0
        %v7715 = vadd.f32 %v7662, %v7714
        %v7716 = vpop.f32.mrb[0].mxu0
        %v7717 = vadd.f32 %v7664, %v7716
        %7718 = vdwg.mxu0
        %7719 = vmatprep.subr.bf16.mxu0 %v5482
        %7720 = vmatpush1.bf16.msra.mxu0 %v5481
        %7721 = vmatprep.subr.bf16.mxu0 %v5484
        %7722 = vmatpush1.bf16.msra.mxu0 %v5483
        %7723 = vmatprep.subr.bf16.mxu0 %v5486
        %7724 = vmatpush1.bf16.msra.mxu0 %v5485
        %7725 = vmatprep.subr.bf16.mxu0 %v5488
        %7726 = vmatpush1.bf16.msra.mxu0 %v5487
        %7727 = vmatprep.subr.bf16.mxu0 %v5490
        %7728 = vmatpush1.bf16.msra.mxu0 %v5489
        %7729 = vmatprep.subr.bf16.mxu0 %v5492
        %7730 = vmatpush1.bf16.msra.mxu0 %v5491
        %7731 = vmatprep.subr.bf16.mxu0 %v5494
        %7732 = vmatpush1.bf16.msra.mxu0 %v5493
        %7733 = vmatprep.subr.bf16.mxu0 %v5496
        %7734 = vmatpush1.bf16.msra.mxu0 %v5495
        %7735 = vmatprep.subr.bf16.mxu0 %v5498
        %7736 = vmatpush1.bf16.msra.mxu0 %v5497
        %7737 = vmatprep.subr.bf16.mxu0 %v5500
        %7738 = vmatpush1.bf16.msra.mxu0 %v5499
        %7739 = vmatprep.subr.bf16.mxu0 %v5502
        %7740 = vmatpush1.bf16.msra.mxu0 %v5501
        %7741 = vmatprep.subr.bf16.mxu0 %v5504
        %7742 = vmatpush1.bf16.msra.mxu0 %v5503
        %7743 = vmatprep.subr.bf16.mxu0 %v5506
        %7744 = vmatpush1.bf16.msra.mxu0 %v5505
        %7745 = vmatprep.subr.bf16.mxu0 %v5508
        %7746 = vmatpush1.bf16.msra.mxu0 %v5507
        %7747 = vmatprep.subr.bf16.mxu0 %v5510
        %7748 = vmatpush1.bf16.msra.mxu0 %v5509
        %7749 = vmatprep.subr.bf16.mxu0 %v5512
        %7750 = vmatpush1.bf16.msra.mxu0 %v5511
        %7751 = vmatprep.mubr.bf16.mxu0 %v1870
        %7752 = vmatmul.mubr.bf16.gmra.mrb[0].mxu0 %v1869
        %v7753 = vpop.f32.mrb[0].mxu0
        %v7754 = vadd.f32 %v7701, %v7753
        %v7755 = vpop.f32.mrb[0].mxu0
        %v7756 = vadd.f32 %v7703, %v7755
        %v7757 = vpop.f32.mrb[0].mxu0
        %v7758 = vadd.f32 %v7705, %v7757
        %v7759 = vpop.f32.mrb[0].mxu0
        %v7760 = vadd.f32 %v7707, %v7759
        %7761 = vmatprep.mubr.bf16.mxu0 %v1936
        %7762 = vmatmul.mubr.bf16.gmra.mrb[0].mxu0 %v1935
        %v7763 = vpop.f32.mrb[0].mxu0
        %v7764 = vadd.f32 %v7711, %v7763
        %v7765 = vpop.f32.mrb[0].mxu0
        %v7766 = vadd.f32 %v7713, %v7765
        %v7767 = vpop.f32.mrb[0].mxu0
        %v7768 = vadd.f32 %v7715, %v7767
        %v7769 = vpop.f32.mrb[0].mxu0
        %v7770 = vadd.f32 %v7717, %v7769
        %7771 = vdwg.mxu0
        %7772 = vmatprep.subr.bf16.mxu0 %v5514
        %7773 = vmatpush1.bf16.msra.mxu0 %v5513
        %7774 = vmatprep.subr.bf16.mxu0 %v5516
        %7775 = vmatpush1.bf16.msra.mxu0 %v5515
        %7776 = vmatprep.subr.bf16.mxu0 %v5518
        %7777 = vmatpush1.bf16.msra.mxu0 %v5517
        %7778 = vmatprep.subr.bf16.mxu0 %v5520
        %7779 = vmatpush1.bf16.msra.mxu0 %v5519
        %7780 = vmatprep.subr.bf16.mxu0 %v5522
        %7781 = vmatpush1.bf16.msra.mxu0 %v5521
        %7782 = vmatprep.subr.bf16.mxu0 %v5524
        %7783 = vmatpush1.bf16.msra.mxu0 %v5523
        %7784 = vmatprep.subr.bf16.mxu0 %v5526
        %7785 = vmatpush1.bf16.msra.mxu0 %v5525
        %7786 = vmatprep.subr.bf16.mxu0 %v5528
        %7787 = vmatpush1.bf16.msra.mxu0 %v5527
        %7788 = vmatprep.subr.bf16.mxu0 %v5530
        %7789 = vmatpush1.bf16.msra.mxu0 %v5529
        %7790 = vmatprep.subr.bf16.mxu0 %v5532
        %7791 = vmatpush1.bf16.msra.mxu0 %v5531
        %7792 = vmatprep.subr.bf16.mxu0 %v5534
        %7793 = vmatpush1.bf16.msra.mxu0 %v5533
        %7794 = vmatprep.subr.bf16.mxu0 %v5536
        %7795 = vmatpush1.bf16.msra.mxu0 %v5535
        %7796 = vmatprep.subr.bf16.mxu0 %v5538
        %7797 = vmatpush1.bf16.msra.mxu0 %v5537
        %7798 = vmatprep.subr.bf16.mxu0 %v5540
        %7799 = vmatpush1.bf16.msra.mxu0 %v5539
        %7800 = vmatprep.subr.bf16.mxu0 %v5542
        %7801 = vmatpush1.bf16.msra.mxu0 %v5541
        %7802 = vmatprep.subr.bf16.mxu0 %v5544
        %7803 = vmatpush1.bf16.msra.mxu0 %v5543
        %7804 = vmatprep.mubr.bf16.mxu0 %v1872
        %7805 = vmatmul.mubr.bf16.gmra.mrb[0].mxu0 %v1871
        %v7806 = vpop.f32.mrb[0].mxu0
        %v7807 = vadd.f32 %v7754, %v7806
        %v7808 = vpop.f32.mrb[0].mxu0
        %v7809 = vadd.f32 %v7756, %v7808
        %v7810 = vpop.f32.mrb[0].mxu0
        %v7811 = vadd.f32 %v7758, %v7810
        %v7812 = vpop.f32.mrb[0].mxu0
        %v7813 = vadd.f32 %v7760, %v7812
        %7814 = vmatprep.mubr.bf16.mxu0 %v1938
        %7815 = vmatmul.mubr.bf16.gmra.mrb[0].mxu0 %v1937
        %v7816 = vpop.f32.mrb[0].mxu0
        %v7817 = vadd.f32 %v7764, %v7816
        %v7818 = vpop.f32.mrb[0].mxu0
        %v7819 = vadd.f32 %v7766, %v7818
        %v7820 = vpop.f32.mrb[0].mxu0
        %v7821 = vadd.f32 %v7768, %v7820
        %v7822 = vpop.f32.mrb[0].mxu0
        %v7823 = vadd.f32 %v7770, %v7822
        %7824 = vdwg.mxu0
        %7825 = vmatprep.subr.bf16.mxu0 %v5546
        %7826 = vmatpush1.bf16.msra.mxu0 %v5545
        %7827 = vmatprep.subr.bf16.mxu0 %v5548
        %7828 = vmatpush1.bf16.msra.mxu0 %v5547
        %7829 = vmatprep.subr.bf16.mxu0 %v5550
        %7830 = vmatpush1.bf16.msra.mxu0 %v5549
        %7831 = vmatprep.subr.bf16.mxu0 %v5552
        %7832 = vmatpush1.bf16.msra.mxu0 %v5551
        %7833 = vmatprep.subr.bf16.mxu0 %v5554
        %7834 = vmatpush1.bf16.msra.mxu0 %v5553
        %7835 = vmatprep.subr.bf16.mxu0 %v5556
        %7836 = vmatpush1.bf16.msra.mxu0 %v5555
        %7837 = vmatprep.subr.bf16.mxu0 %v5558
        %7838 = vmatpush1.bf16.msra.mxu0 %v5557
        %7839 = vmatprep.subr.bf16.mxu0 %v5560
        %7840 = vmatpush1.bf16.msra.mxu0 %v5559
        %7841 = vmatprep.subr.bf16.mxu0 %v5562
        %7842 = vmatpush1.bf16.msra.mxu0 %v5561
        %7843 = vmatprep.subr.bf16.mxu0 %v5564
        %7844 = vmatpush1.bf16.msra.mxu0 %v5563
        %7845 = vmatprep.subr.bf16.mxu0 %v5566
        %7846 = vmatpush1.bf16.msra.mxu0 %v5565
        %7847 = vmatprep.subr.bf16.mxu0 %v5568
        %7848 = vmatpush1.bf16.msra.mxu0 %v5567
        %7849 = vmatprep.subr.bf16.mxu0 %v5570
        %7850 = vmatpush1.bf16.msra.mxu0 %v5569
        %7851 = vmatprep.subr.bf16.mxu0 %v5572
        %7852 = vmatpush1.bf16.msra.mxu0 %v5571
        %7853 = vmatprep.subr.bf16.mxu0 %v5574
        %7854 = vmatpush1.bf16.msra.mxu0 %v5573
        %7855 = vmatprep.subr.bf16.mxu0 %v5576
        %7856 = vmatpush1.bf16.msra.mxu0 %v5575
        %7857 = vmatprep.mubr.bf16.mxu0 %v1874
        %7858 = vmatmul.mubr.bf16.gmra.mrb[0].mxu0 %v1873
        %v7859 = vpop.f32.mrb[0].mxu0
        %v7860 = vadd.f32 %v7807, %v7859
        %v7861 = vpop.f32.mrb[0].mxu0
        %v7862 = vadd.f32 %v7809, %v7861
        %v7863 = vpop.f32.mrb[0].mxu0
        %v7864 = vadd.f32 %v7811, %v7863
        %v7865 = vpop.f32.mrb[0].mxu0
        %v7866 = vadd.f32 %v7813, %v7865
        %7867 = vmatprep.mubr.bf16.mxu0 %v1940
        %7868 = vmatmul.mubr.bf16.gmra.mrb[0].mxu0 %v1939
        %v7869 = vpop.f32.mrb[0].mxu0
        %v7870 = vadd.f32 %v7817, %v7869
        %v7871 = vpop.f32.mrb[0].mxu0
        %v7872 = vadd.f32 %v7819, %v7871
        %v7873 = vpop.f32.mrb[0].mxu0
        %v7874 = vadd.f32 %v7821, %v7873
        %v7875 = vpop.f32.mrb[0].mxu0
        %v7876 = vadd.f32 %v7823, %v7875
        %7877 = vdwg.mxu0
        %7878 = vmatprep.subr.bf16.mxu0 %v5578
        %7879 = vmatpush1.bf16.msra.mxu0 %v5577
        %7880 = vmatprep.subr.bf16.mxu0 %v5580
        %7881 = vmatpush1.bf16.msra.mxu0 %v5579
        %7882 = vmatprep.subr.bf16.mxu0 %v5582
        %7883 = vmatpush1.bf16.msra.mxu0 %v5581
        %7884 = vmatprep.subr.bf16.mxu0 %v5584
        %7885 = vmatpush1.bf16.msra.mxu0 %v5583
        %7886 = vmatprep.subr.bf16.mxu0 %v5586
        %7887 = vmatpush1.bf16.msra.mxu0 %v5585
        %7888 = vmatprep.subr.bf16.mxu0 %v5588
        %7889 = vmatpush1.bf16.msra.mxu0 %v5587
        %7890 = vmatprep.subr.bf16.mxu0 %v5590
        %7891 = vmatpush1.bf16.msra.mxu0 %v5589
        %7892 = vmatprep.subr.bf16.mxu0 %v5592
        %7893 = vmatpush1.bf16.msra.mxu0 %v5591
        %7894 = vmatprep.subr.bf16.mxu0 %v5594
        %7895 = vmatpush1.bf16.msra.mxu0 %v5593
        %7896 = vmatprep.subr.bf16.mxu0 %v5596
        %7897 = vmatpush1.bf16.msra.mxu0 %v5595
        %7898 = vmatprep.subr.bf16.mxu0 %v5598
        %7899 = vmatpush1.bf16.msra.mxu0 %v5597
        %7900 = vmatprep.subr.bf16.mxu0 %v5600
        %7901 = vmatpush1.bf16.msra.mxu0 %v5599
        %7902 = vmatprep.subr.bf16.mxu0 %v5602
        %7903 = vmatpush1.bf16.msra.mxu0 %v5601
        %7904 = vmatprep.subr.bf16.mxu0 %v5604
        %7905 = vmatpush1.bf16.msra.mxu0 %v5603
        %7906 = vmatprep.subr.bf16.mxu0 %v5606
        %7907 = vmatpush1.bf16.msra.mxu0 %v5605
        %7908 = vmatprep.subr.bf16.mxu0 %v5608
        %7909 = vmatpush1.bf16.msra.mxu0 %v5607
        %7910 = vmatprep.mubr.bf16.mxu0 %v1876
        %7911 = vmatmul.mubr.bf16.gmra.mrb[0].mxu0 %v1875
        %v7912 = vpop.f32.mrb[0].mxu0
        %v7913 = vadd.f32 %v7860, %v7912
        %v7914 = vpop.f32.mrb[0].mxu0
        %v7915 = vadd.f32 %v7862, %v7914
        %v7916 = vpop.f32.mrb[0].mxu0
        %v7917 = vadd.f32 %v7864, %v7916
        %v7918 = vpop.f32.mrb[0].mxu0
        %v7919 = vadd.f32 %v7866, %v7918
        %7920 = vmatprep.mubr.bf16.mxu0 %v1942
        %7921 = vmatmul.mubr.bf16.gmra.mrb[0].mxu0 %v1941
        %v7922 = vpop.f32.mrb[0].mxu0
        %v7923 = vadd.f32 %v7870, %v7922
        %v7924 = vpop.f32.mrb[0].mxu0
        %v7925 = vadd.f32 %v7872, %v7924
        %v7926 = vpop.f32.mrb[0].mxu0
        %v7927 = vadd.f32 %v7874, %v7926
        %v7928 = vpop.f32.mrb[0].mxu0
        %v7929 = vadd.f32 %v7876, %v7928
        %7930 = vdwg.mxu0
        %7931 = vmatprep.subr.bf16.mxu0 %v5610
        %7932 = vmatpush1.bf16.msra.mxu0 %v5609
        %7933 = vmatprep.subr.bf16.mxu0 %v5612
        %7934 = vmatpush1.bf16.msra.mxu0 %v5611
        %7935 = vmatprep.subr.bf16.mxu0 %v5614
        %7936 = vmatpush1.bf16.msra.mxu0 %v5613
        %7937 = vmatprep.subr.bf16.mxu0 %v5616
        %7938 = vmatpush1.bf16.msra.mxu0 %v5615
        %7939 = vmatprep.subr.bf16.mxu0 %v5618
        %7940 = vmatpush1.bf16.msra.mxu0 %v5617
        %7941 = vmatprep.subr.bf16.mxu0 %v5620
        %7942 = vmatpush1.bf16.msra.mxu0 %v5619
        %7943 = vmatprep.subr.bf16.mxu0 %v5622
        %7944 = vmatpush1.bf16.msra.mxu0 %v5621
        %7945 = vmatprep.subr.bf16.mxu0 %v5624
        %7946 = vmatpush1.bf16.msra.mxu0 %v5623
        %7947 = vmatprep.subr.bf16.mxu0 %v5626
        %7948 = vmatpush1.bf16.msra.mxu0 %v5625
        %7949 = vmatprep.subr.bf16.mxu0 %v5628
        %7950 = vmatpush1.bf16.msra.mxu0 %v5627
        %7951 = vmatprep.subr.bf16.mxu0 %v5630
        %7952 = vmatpush1.bf16.msra.mxu0 %v5629
        %7953 = vmatprep.subr.bf16.mxu0 %v5632
        %7954 = vmatpush1.bf16.msra.mxu0 %v5631
        %7955 = vmatprep.subr.bf16.mxu0 %v5634
        %7956 = vmatpush1.bf16.msra.mxu0 %v5633
        %7957 = vmatprep.subr.bf16.mxu0 %v5636
        %7958 = vmatpush1.bf16.msra.mxu0 %v5635
        %7959 = vmatprep.subr.bf16.mxu0 %v5638
        %7960 = vmatpush1.bf16.msra.mxu0 %v5637
        %7961 = vmatprep.subr.bf16.mxu0 %v5640
        %7962 = vmatpush1.bf16.msra.mxu0 %v5639
        %7963 = vmatprep.mubr.bf16.mxu0 %v1878
        %7964 = vmatmul.mubr.bf16.gmra.mrb[0].mxu0 %v1877
        %v7965 = vpop.f32.mrb[0].mxu0
        %v7966 = vadd.f32 %v7913, %v7965
        %v7967 = vpop.f32.mrb[0].mxu0
        %v7968 = vadd.f32 %v7915, %v7967
        %v7969 = vpop.f32.mrb[0].mxu0
        %v7970 = vadd.f32 %v7917, %v7969
        %v7971 = vpop.f32.mrb[0].mxu0
        %v7972 = vadd.f32 %v7919, %v7971
        %7973 = vmatprep.mubr.bf16.mxu0 %v1944
        %7974 = vmatmul.mubr.bf16.gmra.mrb[0].mxu0 %v1943
        %v7975 = vpop.f32.mrb[0].mxu0
        %v7976 = vadd.f32 %v7923, %v7975
        %v7977 = vpop.f32.mrb[0].mxu0
        %v7978 = vadd.f32 %v7925, %v7977
        %v7979 = vpop.f32.mrb[0].mxu0
        %v7980 = vadd.f32 %v7927, %v7979
        %v7981 = vpop.f32.mrb[0].mxu0
        %v7982 = vadd.f32 %v7929, %v7981
        %7983 = vdwg.mxu0
        %7984 = vmatprep.subr.bf16.mxu0 %v5642
        %7985 = vmatpush1.bf16.msra.mxu0 %v5641
        %7986 = vmatprep.subr.bf16.mxu0 %v5644
        %7987 = vmatpush1.bf16.msra.mxu0 %v5643
        %7988 = vmatprep.subr.bf16.mxu0 %v5646
        %7989 = vmatpush1.bf16.msra.mxu0 %v5645
        %7990 = vmatprep.subr.bf16.mxu0 %v5648
        %7991 = vmatpush1.bf16.msra.mxu0 %v5647
        %7992 = vmatprep.subr.bf16.mxu0 %v5650
        %7993 = vmatpush1.bf16.msra.mxu0 %v5649
        %7994 = vmatprep.subr.bf16.mxu0 %v5652
        %7995 = vmatpush1.bf16.msra.mxu0 %v5651
        %7996 = vmatprep.subr.bf16.mxu0 %v5654
        %7997 = vmatpush1.bf16.msra.mxu0 %v5653
        %7998 = vmatprep.subr.bf16.mxu0 %v5656
        %7999 = vmatpush1.bf16.msra.mxu0 %v5655
        %8000 = vmatprep.subr.bf16.mxu0 %v5658
        %8001 = vmatpush1.bf16.msra.mxu0 %v5657
        %8002 = vmatprep.subr.bf16.mxu0 %v5660
        %8003 = vmatpush1.bf16.msra.mxu0 %v5659
        %8004 = vmatprep.subr.bf16.mxu0 %v5662
        %8005 = vmatpush1.bf16.msra.mxu0 %v5661
        %8006 = vmatprep.subr.bf16.mxu0 %v5664
        %8007 = vmatpush1.bf16.msra.mxu0 %v5663
        %8008 = vmatprep.subr.bf16.mxu0 %v5666
        %8009 = vmatpush1.bf16.msra.mxu0 %v5665
        %8010 = vmatprep.subr.bf16.mxu0 %v5668
        %8011 = vmatpush1.bf16.msra.mxu0 %v5667
        %8012 = vmatprep.subr.bf16.mxu0 %v5670
        %8013 = vmatpush1.bf16.msra.mxu0 %v5669
        %8014 = vmatprep.subr.bf16.mxu0 %v5672
        %8015 = vmatpush1.bf16.msra.mxu0 %v5671
        %8016 = vmatprep.mubr.bf16.mxu0 %v1880
        %8017 = vmatmul.mubr.bf16.gmra.mrb[0].mxu0 %v1879
        %v8018 = vpop.f32.mrb[0].mxu0
        %v8019 = vadd.f32 %v7966, %v8018
        %v8020 = vpop.f32.mrb[0].mxu0
        %v8021 = vadd.f32 %v7968, %v8020
        %v8022 = vpop.f32.mrb[0].mxu0
        %v8023 = vadd.f32 %v7970, %v8022
        %v8024 = vpop.f32.mrb[0].mxu0
        %v8025 = vadd.f32 %v7972, %v8024
        %8026 = vmatprep.mubr.bf16.mxu0 %v1946
        %8027 = vmatmul.mubr.bf16.gmra.mrb[0].mxu0 %v1945
        %v8028 = vpop.f32.mrb[0].mxu0
        %v8029 = vadd.f32 %v7976, %v8028
        %v8030 = vpop.f32.mrb[0].mxu0
        %v8031 = vadd.f32 %v7978, %v8030
        %v8032 = vpop.f32.mrb[0].mxu0
        %v8033 = vadd.f32 %v7980, %v8032
        %v8034 = vpop.f32.mrb[0].mxu0
        %v8035 = vadd.f32 %v7982, %v8034
        %8036 = vdwg.mxu0
        %8037 = vmatprep.subr.bf16.mxu0 %v5674
        %8038 = vmatpush1.bf16.msra.mxu0 %v5673
        %8039 = vmatprep.subr.bf16.mxu0 %v5676
        %8040 = vmatpush1.bf16.msra.mxu0 %v5675
        %8041 = vmatprep.subr.bf16.mxu0 %v5678
        %8042 = vmatpush1.bf16.msra.mxu0 %v5677
        %8043 = vmatprep.subr.bf16.mxu0 %v5680
        %8044 = vmatpush1.bf16.msra.mxu0 %v5679
        %8045 = vmatprep.subr.bf16.mxu0 %v5682
        %8046 = vmatpush1.bf16.msra.mxu0 %v5681
        %8047 = vmatprep.subr.bf16.mxu0 %v5684
        %8048 = vmatpush1.bf16.msra.mxu0 %v5683
        %8049 = vmatprep.subr.bf16.mxu0 %v5686
        %8050 = vmatpush1.bf16.msra.mxu0 %v5685
        %8051 = vmatprep.subr.bf16.mxu0 %v5688
        %8052 = vmatpush1.bf16.msra.mxu0 %v5687
        %8053 = vmatprep.subr.bf16.mxu0 %v5690
        %8054 = vmatpush1.bf16.msra.mxu0 %v5689
        %8055 = vmatprep.subr.bf16.mxu0 %v5692
        %8056 = vmatpush1.bf16.msra.mxu0 %v5691
        %8057 = vmatprep.subr.bf16.mxu0 %v5694
        %8058 = vmatpush1.bf16.msra.mxu0 %v5693
        %8059 = vmatprep.subr.bf16.mxu0 %v5696
        %8060 = vmatpush1.bf16.msra.mxu0 %v5695
        %8061 = vmatprep.subr.bf16.mxu0 %v5698
        %8062 = vmatpush1.bf16.msra.mxu0 %v5697
        %8063 = vmatprep.subr.bf16.mxu0 %v5700
        %8064 = vmatpush1.bf16.msra.mxu0 %v5699
        %8065 = vmatprep.subr.bf16.mxu0 %v5702
        %8066 = vmatpush1.bf16.msra.mxu0 %v5701
        %8067 = vmatprep.subr.bf16.mxu0 %v5704
        %8068 = vmatpush1.bf16.msra.mxu0 %v5703
        %8069 = vmatprep.mubr.bf16.mxu0 %v1882
        %8070 = vmatmul.mubr.bf16.gmra.mrb[0].mxu0 %v1881
        %v8071 = vpop.f32.mrb[0].mxu0
        %v8072 = vadd.f32 %v8019, %v8071
        %v8073 = vpop.f32.mrb[0].mxu0
        %v8074 = vadd.f32 %v8021, %v8073
        %v8075 = vpop.f32.mrb[0].mxu0
        %v8076 = vadd.f32 %v8023, %v8075
        %v8077 = vpop.f32.mrb[0].mxu0
        %v8078 = vadd.f32 %v8025, %v8077
        %8079 = vmatprep.mubr.bf16.mxu0 %v1948
        %8080 = vmatmul.mubr.bf16.gmra.mrb[0].mxu0 %v1947
        %v8081 = vpop.f32.mrb[0].mxu0
        %v8082 = vadd.f32 %v8029, %v8081
        %v8083 = vpop.f32.mrb[0].mxu0
        %v8084 = vadd.f32 %v8031, %v8083
        %v8085 = vpop.f32.mrb[0].mxu0
        %v8086 = vadd.f32 %v8033, %v8085
        %v8087 = vpop.f32.mrb[0].mxu0
        %v8088 = vadd.f32 %v8035, %v8087
        %8089 = vdwg.mxu0
        %8090 = vmatprep.subr.bf16.mxu0 %v5706
        %8091 = vmatpush1.bf16.msra.mxu0 %v5705
        %8092 = vmatprep.subr.bf16.mxu0 %v5708
        %8093 = vmatpush1.bf16.msra.mxu0 %v5707
        %8094 = vmatprep.subr.bf16.mxu0 %v5710
        %8095 = vmatpush1.bf16.msra.mxu0 %v5709
        %8096 = vmatprep.subr.bf16.mxu0 %v5712
        %8097 = vmatpush1.bf16.msra.mxu0 %v5711
        %8098 = vmatprep.subr.bf16.mxu0 %v5714
        %8099 = vmatpush1.bf16.msra.mxu0 %v5713
        %8100 = vmatprep.subr.bf16.mxu0 %v5716
        %8101 = vmatpush1.bf16.msra.mxu0 %v5715
        %8102 = vmatprep.subr.bf16.mxu0 %v5718
        %8103 = vmatpush1.bf16.msra.mxu0 %v5717
        %8104 = vmatprep.subr.bf16.mxu0 %v5720
        %8105 = vmatpush1.bf16.msra.mxu0 %v5719
        %8106 = vmatprep.subr.bf16.mxu0 %v5722
        %8107 = vmatpush1.bf16.msra.mxu0 %v5721
        %8108 = vmatprep.subr.bf16.mxu0 %v5724
        %8109 = vmatpush1.bf16.msra.mxu0 %v5723
        %8110 = vmatprep.subr.bf16.mxu0 %v5726
        %8111 = vmatpush1.bf16.msra.mxu0 %v5725
        %8112 = vmatprep.subr.bf16.mxu0 %v5728
        %8113 = vmatpush1.bf16.msra.mxu0 %v5727
        %8114 = vmatprep.subr.bf16.mxu0 %v5730
        %8115 = vmatpush1.bf16.msra.mxu0 %v5729
        %8116 = vmatprep.subr.bf16.mxu0 %v5732
        %8117 = vmatpush1.bf16.msra.mxu0 %v5731
        %8118 = vmatprep.subr.bf16.mxu0 %v5734
        %8119 = vmatpush1.bf16.msra.mxu0 %v5733
        %8120 = vmatprep.subr.bf16.mxu0 %v5736
        %8121 = vmatpush1.bf16.msra.mxu0 %v5735
        %8122 = vmatprep.mubr.bf16.mxu0 %v1884
        %8123 = vmatmul.mubr.bf16.gmra.mrb[0].mxu0 %v1883
        %v8124 = vpop.f32.mrb[0].mxu0
        %v8125 = vadd.f32 %v8072, %v8124
        %v8126 = vpop.f32.mrb[0].mxu0
        %v8127 = vadd.f32 %v8074, %v8126
        %v8128 = vpop.f32.mrb[0].mxu0
        %v8129 = vadd.f32 %v8076, %v8128
        %v8130 = vpop.f32.mrb[0].mxu0
        %v8131 = vadd.f32 %v8078, %v8130
        %8132 = vmatprep.mubr.bf16.mxu0 %v1950
        %8133 = vmatmul.mubr.bf16.gmra.mrb[0].mxu0 %v1949
        %v8134 = vpop.f32.mrb[0].mxu0
        %v8135 = vadd.f32 %v8082, %v8134
        %v8136 = vpop.f32.mrb[0].mxu0
        %v8137 = vadd.f32 %v8084, %v8136
        %v8138 = vpop.f32.mrb[0].mxu0
        %v8139 = vadd.f32 %v8086, %v8138
        %v8140 = vpop.f32.mrb[0].mxu0
        %v8141 = vadd.f32 %v8088, %v8140
        %8142 = vdwg.mxu0
        %8143 = vmatprep.subr.bf16.mxu0 %v5738
        %8144 = vmatpush1.bf16.msra.mxu0 %v5737
        %8145 = vmatprep.subr.bf16.mxu0 %v5740
        %8146 = vmatpush1.bf16.msra.mxu0 %v5739
        %8147 = vmatprep.subr.bf16.mxu0 %v5742
        %8148 = vmatpush1.bf16.msra.mxu0 %v5741
        %8149 = vmatprep.subr.bf16.mxu0 %v5744
        %8150 = vmatpush1.bf16.msra.mxu0 %v5743
        %8151 = vmatprep.subr.bf16.mxu0 %v5746
        %8152 = vmatpush1.bf16.msra.mxu0 %v5745
        %8153 = vmatprep.subr.bf16.mxu0 %v5748
        %8154 = vmatpush1.bf16.msra.mxu0 %v5747
        %8155 = vmatprep.subr.bf16.mxu0 %v5750
        %8156 = vmatpush1.bf16.msra.mxu0 %v5749
        %8157 = vmatprep.subr.bf16.mxu0 %v5752
        %8158 = vmatpush1.bf16.msra.mxu0 %v5751
        %8159 = vmatprep.subr.bf16.mxu0 %v5754
        %8160 = vmatpush1.bf16.msra.mxu0 %v5753
        %8161 = vmatprep.subr.bf16.mxu0 %v5756
        %8162 = vmatpush1.bf16.msra.mxu0 %v5755
        %8163 = vmatprep.subr.bf16.mxu0 %v5758
        %8164 = vmatpush1.bf16.msra.mxu0 %v5757
        %8165 = vmatprep.subr.bf16.mxu0 %v5760
        %8166 = vmatpush1.bf16.msra.mxu0 %v5759
        %8167 = vmatprep.subr.bf16.mxu0 %v5762
        %8168 = vmatpush1.bf16.msra.mxu0 %v5761
        %8169 = vmatprep.subr.bf16.mxu0 %v5764
        %8170 = vmatpush1.bf16.msra.mxu0 %v5763
        %8171 = vmatprep.subr.bf16.mxu0 %v5766
        %8172 = vmatpush1.bf16.msra.mxu0 %v5765
        %8173 = vmatprep.subr.bf16.mxu0 %v5768
        %8174 = vmatpush1.bf16.msra.mxu0 %v5767
        %8175 = vmatprep.mubr.bf16.mxu0 %v1886
        %8176 = vmatmul.mubr.bf16.gmra.mrb[0].mxu0 %v1885
        %v8177 = vpop.f32.mrb[0].mxu0
        %v8178 = vadd.f32 %v8125, %v8177
        %v8179 = vpop.f32.mrb[0].mxu0
        %v8180 = vadd.f32 %v8127, %v8179
        %v8181 = vpop.f32.mrb[0].mxu0
        %v8182 = vadd.f32 %v8129, %v8181
        %v8183 = vpop.f32.mrb[0].mxu0
        %v8184 = vadd.f32 %v8131, %v8183
        %8185 = vmatprep.mubr.bf16.mxu0 %v1952
        %8186 = vmatmul.mubr.bf16.gmra.mrb[0].mxu0 %v1951
        %v8187 = vpop.f32.mrb[0].mxu0
        %v8188 = vadd.f32 %v8135, %v8187
        %v8189 = vpop.f32.mrb[0].mxu0
        %v8190 = vadd.f32 %v8137, %v8189
        %v8191 = vpop.f32.mrb[0].mxu0
        %v8192 = vadd.f32 %v8139, %v8191
        %v8193 = vpop.f32.mrb[0].mxu0
        %v8194 = vadd.f32 %v8141, %v8193
        %8195 = vdwg.mxu0
        %8196 = vmatprep.subr.bf16.mxu0 %v5770
        %8197 = vmatpush1.bf16.msra.mxu0 %v5769
        %8198 = vmatprep.subr.bf16.mxu0 %v5772
        %8199 = vmatpush1.bf16.msra.mxu0 %v5771
        %8200 = vmatprep.subr.bf16.mxu0 %v5774
        %8201 = vmatpush1.bf16.msra.mxu0 %v5773
        %8202 = vmatprep.subr.bf16.mxu0 %v5776
        %8203 = vmatpush1.bf16.msra.mxu0 %v5775
        %8204 = vmatprep.subr.bf16.mxu0 %v5778
        %8205 = vmatpush1.bf16.msra.mxu0 %v5777
        %8206 = vmatprep.subr.bf16.mxu0 %v5780
        %8207 = vmatpush1.bf16.msra.mxu0 %v5779
        %8208 = vmatprep.subr.bf16.mxu0 %v5782
        %8209 = vmatpush1.bf16.msra.mxu0 %v5781
        %8210 = vmatprep.subr.bf16.mxu0 %v5784
        %8211 = vmatpush1.bf16.msra.mxu0 %v5783
        %8212 = vmatprep.subr.bf16.mxu0 %v5786
        %8213 = vmatpush1.bf16.msra.mxu0 %v5785
        %8214 = vmatprep.subr.bf16.mxu0 %v5788
        %8215 = vmatpush1.bf16.msra.mxu0 %v5787
        %8216 = vmatprep.subr.bf16.mxu0 %v5790
        %8217 = vmatpush1.bf16.msra.mxu0 %v5789
        %8218 = vmatprep.subr.bf16.mxu0 %v5792
        %8219 = vmatpush1.bf16.msra.mxu0 %v5791
        %8220 = vmatprep.subr.bf16.mxu0 %v5794
        %8221 = vmatpush1.bf16.msra.mxu0 %v5793
        %8222 = vmatprep.subr.bf16.mxu0 %v5796
        %8223 = vmatpush1.bf16.msra.mxu0 %v5795
        %8224 = vmatprep.subr.bf16.mxu0 %v5798
        %8225 = vmatpush1.bf16.msra.mxu0 %v5797
        %8226 = vmatprep.subr.bf16.mxu0 %v5800
        %8227 = vmatpush1.bf16.msra.mxu0 %v5799
        %8228 = vmatprep.mubr.bf16.mxu0 %v1888
        %8229 = vmatmul.mubr.bf16.gmra.mrb[0].mxu0 %v1887
        %v8230 = vpop.f32.mrb[0].mxu0
        %v8231 = vadd.f32 %v8178, %v8230
        %v8232 = vpop.f32.mrb[0].mxu0
        %v8233 = vadd.f32 %v8180, %v8232
        %v8234 = vpop.f32.mrb[0].mxu0
        %v8235 = vadd.f32 %v8182, %v8234
        %v8236 = vpop.f32.mrb[0].mxu0
        %v8237 = vadd.f32 %v8184, %v8236
        %8238 = vmatprep.mubr.bf16.mxu0 %v1954
        %8239 = vmatmul.mubr.bf16.gmra.mrb[0].mxu0 %v1953
        %v8240 = vpop.f32.mrb[0].mxu0
        %v8241 = vadd.f32 %v8188, %v8240
        %v8242 = vpop.f32.mrb[0].mxu0
        %v8243 = vadd.f32 %v8190, %v8242
        %v8244 = vpop.f32.mrb[0].mxu0
        %v8245 = vadd.f32 %v8192, %v8244
        %v8246 = vpop.f32.mrb[0].mxu0
        %v8247 = vadd.f32 %v8194, %v8246
        %8248 = vdwg.mxu0
        %8249 = vmatprep.subr.bf16.mxu0 %v5802
        %8250 = vmatpush1.bf16.msra.mxu0 %v5801
        %8251 = vmatprep.subr.bf16.mxu0 %v5804
        %8252 = vmatpush1.bf16.msra.mxu0 %v5803
        %8253 = vmatprep.subr.bf16.mxu0 %v5806
        %8254 = vmatpush1.bf16.msra.mxu0 %v5805
        %8255 = vmatprep.subr.bf16.mxu0 %v5808
        %8256 = vmatpush1.bf16.msra.mxu0 %v5807
        %8257 = vmatprep.subr.bf16.mxu0 %v5810
        %8258 = vmatpush1.bf16.msra.mxu0 %v5809
        %8259 = vmatprep.subr.bf16.mxu0 %v5812
        %8260 = vmatpush1.bf16.msra.mxu0 %v5811
        %8261 = vmatprep.subr.bf16.mxu0 %v5814
        %8262 = vmatpush1.bf16.msra.mxu0 %v5813
        %8263 = vmatprep.subr.bf16.mxu0 %v5816
        %8264 = vmatpush1.bf16.msra.mxu0 %v5815
        %8265 = vmatprep.subr.bf16.mxu0 %v5818
        %8266 = vmatpush1.bf16.msra.mxu0 %v5817
        %8267 = vmatprep.subr.bf16.mxu0 %v5820
        %8268 = vmatpush1.bf16.msra.mxu0 %v5819
        %8269 = vmatprep.subr.bf16.mxu0 %v5822
        %8270 = vmatpush1.bf16.msra.mxu0 %v5821
        %8271 = vmatprep.subr.bf16.mxu0 %v5824
        %8272 = vmatpush1.bf16.msra.mxu0 %v5823
        %8273 = vmatprep.subr.bf16.mxu0 %v5826
        %8274 = vmatpush1.bf16.msra.mxu0 %v5825
        %8275 = vmatprep.subr.bf16.mxu0 %v5828
        %8276 = vmatpush1.bf16.msra.mxu0 %v5827
        %8277 = vmatprep.subr.bf16.mxu0 %v5830
        %8278 = vmatpush1.bf16.msra.mxu0 %v5829
        %8279 = vmatprep.subr.bf16.mxu0 %v5832
        %8280 = vmatpush1.bf16.msra.mxu0 %v5831
        %8281 = vmatprep.mubr.bf16.mxu0 %v1890
        %8282 = vmatmul.mubr.bf16.gmra.mrb[0].mxu0 %v1889
        %v8283 = vpop.f32.mrb[0].mxu0
        %v8284 = vadd.f32 %v8231, %v8283
        %v8285 = vpop.f32.mrb[0].mxu0
        %v8286 = vadd.f32 %v8233, %v8285
        %v8287 = vpop.f32.mrb[0].mxu0
        %v8288 = vadd.f32 %v8235, %v8287
        %v8289 = vpop.f32.mrb[0].mxu0
        %v8290 = vadd.f32 %v8237, %v8289
        %8291 = vmatprep.mubr.bf16.mxu0 %v1956
        %8292 = vmatmul.mubr.bf16.gmra.mrb[0].mxu0 %v1955
        %v8293 = vpop.f32.mrb[0].mxu0
        %v8294 = vadd.f32 %v8241, %v8293
        %v8295 = vpop.f32.mrb[0].mxu0
        %v8296 = vadd.f32 %v8243, %v8295
        %v8297 = vpop.f32.mrb[0].mxu0
        %v8298 = vadd.f32 %v8245, %v8297
        %v8299 = vpop.f32.mrb[0].mxu0
        %v8300 = vadd.f32 %v8247, %v8299
        %8301 = vdwg.mxu0
        %8302 = vmatprep.subr.bf16.mxu0 %v5834
        %8303 = vmatpush1.bf16.msra.mxu0 %v5833
        %8304 = vmatprep.subr.bf16.mxu0 %v5836
        %8305 = vmatpush1.bf16.msra.mxu0 %v5835
        %8306 = vmatprep.subr.bf16.mxu0 %v5838
        %8307 = vmatpush1.bf16.msra.mxu0 %v5837
        %8308 = vmatprep.subr.bf16.mxu0 %v5840
        %8309 = vmatpush1.bf16.msra.mxu0 %v5839
        %8310 = vmatprep.subr.bf16.mxu0 %v5842
        %8311 = vmatpush1.bf16.msra.mxu0 %v5841
        %8312 = vmatprep.subr.bf16.mxu0 %v5844
        %8313 = vmatpush1.bf16.msra.mxu0 %v5843
        %8314 = vmatprep.subr.bf16.mxu0 %v5846
        %8315 = vmatpush1.bf16.msra.mxu0 %v5845
        %8316 = vmatprep.subr.bf16.mxu0 %v5848
        %8317 = vmatpush1.bf16.msra.mxu0 %v5847
        %8318 = vmatprep.subr.bf16.mxu0 %v5850
        %8319 = vmatpush1.bf16.msra.mxu0 %v5849
        %8320 = vmatprep.subr.bf16.mxu0 %v5852
        %8321 = vmatpush1.bf16.msra.mxu0 %v5851
        %8322 = vmatprep.subr.bf16.mxu0 %v5854
        %8323 = vmatpush1.bf16.msra.mxu0 %v5853
        %8324 = vmatprep.subr.bf16.mxu0 %v5856
        %8325 = vmatpush1.bf16.msra.mxu0 %v5855
        %8326 = vmatprep.subr.bf16.mxu0 %v5858
        %8327 = vmatpush1.bf16.msra.mxu0 %v5857
        %8328 = vmatprep.subr.bf16.mxu0 %v5860
        %8329 = vmatpush1.bf16.msra.mxu0 %v5859
        %8330 = vmatprep.subr.bf16.mxu0 %v5862
        %8331 = vmatpush1.bf16.msra.mxu0 %v5861
        %8332 = vmatprep.subr.bf16.mxu0 %v5864
        %8333 = vmatpush1.bf16.msra.mxu0 %v5863
        %8334 = vmatprep.mubr.bf16.mxu0 %v1892
        %8335 = vmatmul.mubr.bf16.gmra.mrb[0].mxu0 %v1891
        %v8336 = vpop.f32.mrb[0].mxu0
        %v8337 = vadd.f32 %v8284, %v8336
        %v8338 = vpop.f32.mrb[0].mxu0
        %v8339 = vadd.f32 %v8286, %v8338
        %v8340 = vpop.f32.mrb[0].mxu0
        %v8341 = vadd.f32 %v8288, %v8340
        %v8342 = vpop.f32.mrb[0].mxu0
        %v8343 = vadd.f32 %v8290, %v8342
        %8344 = vmatprep.mubr.bf16.mxu0 %v1958
        %8345 = vmatmul.mubr.bf16.gmra.mrb[0].mxu0 %v1957
        %v8346 = vpop.f32.mrb[0].mxu0
        %v8347 = vadd.f32 %v8294, %v8346
        %v8348 = vpop.f32.mrb[0].mxu0
        %v8349 = vadd.f32 %v8296, %v8348
        %v8350 = vpop.f32.mrb[0].mxu0
        %v8351 = vadd.f32 %v8298, %v8350
        %v8352 = vpop.f32.mrb[0].mxu0
        %v8353 = vadd.f32 %v8300, %v8352
        %8354 = vdwg.mxu0
        %8355 = vmatprep.subr.bf16.mxu0 %v5866
        %8356 = vmatpush1.bf16.msra.mxu0 %v5865
        %8357 = vmatprep.subr.bf16.mxu0 %v5868
        %8358 = vmatpush1.bf16.msra.mxu0 %v5867
        %8359 = vmatprep.subr.bf16.mxu0 %v5870
        %8360 = vmatpush1.bf16.msra.mxu0 %v5869
        %8361 = vmatprep.subr.bf16.mxu0 %v5872
        %8362 = vmatpush1.bf16.msra.mxu0 %v5871
        %8363 = vmatprep.subr.bf16.mxu0 %v5874
        %8364 = vmatpush1.bf16.msra.mxu0 %v5873
        %8365 = vmatprep.subr.bf16.mxu0 %v5876
        %8366 = vmatpush1.bf16.msra.mxu0 %v5875
        %8367 = vmatprep.subr.bf16.mxu0 %v5878
        %8368 = vmatpush1.bf16.msra.mxu0 %v5877
        %8369 = vmatprep.subr.bf16.mxu0 %v5880
        %8370 = vmatpush1.bf16.msra.mxu0 %v5879
        %8371 = vmatprep.subr.bf16.mxu0 %v5882
        %8372 = vmatpush1.bf16.msra.mxu0 %v5881
        %8373 = vmatprep.subr.bf16.mxu0 %v5884
        %8374 = vmatpush1.bf16.msra.mxu0 %v5883
        %8375 = vmatprep.subr.bf16.mxu0 %v5886
        %8376 = vmatpush1.bf16.msra.mxu0 %v5885
        %8377 = vmatprep.subr.bf16.mxu0 %v5888
        %8378 = vmatpush1.bf16.msra.mxu0 %v5887
        %8379 = vmatprep.subr.bf16.mxu0 %v5890
        %8380 = vmatpush1.bf16.msra.mxu0 %v5889
        %8381 = vmatprep.subr.bf16.mxu0 %v5892
        %8382 = vmatpush1.bf16.msra.mxu0 %v5891
        %8383 = vmatprep.subr.bf16.mxu0 %v5894
        %8384 = vmatpush1.bf16.msra.mxu0 %v5893
        %8385 = vmatprep.subr.bf16.mxu0 %v5896
        %8386 = vmatpush1.bf16.msra.mxu0 %v5895
        %8387 = vmatprep.mubr.bf16.mxu0 %v1894
        %8388 = vmatmul.mubr.bf16.gmra.mrb[0].mxu0 %v1893
        %v8389 = vpop.f32.mrb[0].mxu0
        %v8390 = vadd.f32 %v8337, %v8389
        %v8391 = vpop.f32.mrb[0].mxu0
        %v8392 = vadd.f32 %v8339, %v8391
        %v8393 = vpop.f32.mrb[0].mxu0
        %v8394 = vadd.f32 %v8341, %v8393
        %v8395 = vpop.f32.mrb[0].mxu0
        %v8396 = vadd.f32 %v8343, %v8395
        %8397 = vmatprep.mubr.bf16.mxu0 %v1960
        %8398 = vmatmul.mubr.bf16.gmra.mrb[0].mxu0 %v1959
        %v8399 = vpop.f32.mrb[0].mxu0
        %v8400 = vadd.f32 %v8347, %v8399
        %v8401 = vpop.f32.mrb[0].mxu0
        %v8402 = vadd.f32 %v8349, %v8401
        %v8403 = vpop.f32.mrb[0].mxu0
        %v8404 = vadd.f32 %v8351, %v8403
        %v8405 = vpop.f32.mrb[0].mxu0
        %v8406 = vadd.f32 %v8353, %v8405
        %8407 = vdwg.mxu0
        %8408 = vmatprep.subr.bf16.mxu0 %v5898
        %8409 = vmatpush1.bf16.msra.mxu0 %v5897
        %8410 = vmatprep.subr.bf16.mxu0 %v5900
        %8411 = vmatpush1.bf16.msra.mxu0 %v5899
        %8412 = vmatprep.subr.bf16.mxu0 %v5902
        %8413 = vmatpush1.bf16.msra.mxu0 %v5901
        %8414 = vmatprep.subr.bf16.mxu0 %v5904
        %8415 = vmatpush1.bf16.msra.mxu0 %v5903
        %8416 = vmatprep.subr.bf16.mxu0 %v5906
        %8417 = vmatpush1.bf16.msra.mxu0 %v5905
        %8418 = vmatprep.subr.bf16.mxu0 %v5908
        %8419 = vmatpush1.bf16.msra.mxu0 %v5907
        %8420 = vmatprep.subr.bf16.mxu0 %v5910
        %8421 = vmatpush1.bf16.msra.mxu0 %v5909
        %8422 = vmatprep.subr.bf16.mxu0 %v5912
        %8423 = vmatpush1.bf16.msra.mxu0 %v5911
        %8424 = vmatprep.subr.bf16.mxu0 %v5914
        %8425 = vmatpush1.bf16.msra.mxu0 %v5913
        %8426 = vmatprep.subr.bf16.mxu0 %v5916
        %8427 = vmatpush1.bf16.msra.mxu0 %v5915
        %8428 = vmatprep.subr.bf16.mxu0 %v5918
        %8429 = vmatpush1.bf16.msra.mxu0 %v5917
        %8430 = vmatprep.subr.bf16.mxu0 %v5920
        %8431 = vmatpush1.bf16.msra.mxu0 %v5919
        %8432 = vmatprep.subr.bf16.mxu0 %v5922
        %8433 = vmatpush1.bf16.msra.mxu0 %v5921
        %8434 = vmatprep.subr.bf16.mxu0 %v5924
        %8435 = vmatpush1.bf16.msra.mxu0 %v5923
        %8436 = vmatprep.subr.bf16.mxu0 %v5926
        %8437 = vmatpush1.bf16.msra.mxu0 %v5925
        %8438 = vmatprep.subr.bf16.mxu0 %v5928
        %8439 = vmatpush1.bf16.msra.mxu0 %v5927
        %8440 = vmatprep.mubr.bf16.mxu0 %v1896
        %8441 = vmatmul.mubr.bf16.gmra.mrb[0].mxu0 %v1895
        %v8442 = vpop.f32.mrb[0].mxu0
        %v8443 = vadd.f32 %v8390, %v8442
        %v8444 = vpop.f32.mrb[0].mxu0
        %v8445 = vadd.f32 %v8392, %v8444
        %v8446 = vpop.f32.mrb[0].mxu0
        %v8447 = vadd.f32 %v8394, %v8446
        %v8448 = vpop.f32.mrb[0].mxu0
        %v8449 = vadd.f32 %v8396, %v8448
        %8450 = vmatprep.mubr.bf16.mxu0 %v1962
        %8451 = vmatmul.mubr.bf16.gmra.mrb[0].mxu0 %v1961
        %v8452 = vpop.f32.mrb[0].mxu0
        %v8453 = vadd.f32 %v8400, %v8452
        %v8454 = vpop.f32.mrb[0].mxu0
        %v8455 = vadd.f32 %v8402, %v8454
        %v8456 = vpop.f32.mrb[0].mxu0
        %v8457 = vadd.f32 %v8404, %v8456
        %v8458 = vpop.f32.mrb[0].mxu0
        %v8459 = vadd.f32 %v8406, %v8458
        %8460 = vdwg.mxu0
        %8461 = vmatprep.subr.bf16.mxu0 %v5930
        %8462 = vmatpush1.bf16.msra.mxu0 %v5929
        %8463 = vmatprep.subr.bf16.mxu0 %v5932
        %8464 = vmatpush1.bf16.msra.mxu0 %v5931
        %8465 = vmatprep.subr.bf16.mxu0 %v5934
        %8466 = vmatpush1.bf16.msra.mxu0 %v5933
        %8467 = vmatprep.subr.bf16.mxu0 %v5936
        %8468 = vmatpush1.bf16.msra.mxu0 %v5935
        %8469 = vmatprep.subr.bf16.mxu0 %v5938
        %8470 = vmatpush1.bf16.msra.mxu0 %v5937
        %8471 = vmatprep.subr.bf16.mxu0 %v5940
        %8472 = vmatpush1.bf16.msra.mxu0 %v5939
        %8473 = vmatprep.subr.bf16.mxu0 %v5942
        %8474 = vmatpush1.bf16.msra.mxu0 %v5941
        %8475 = vmatprep.subr.bf16.mxu0 %v5944
        %8476 = vmatpush1.bf16.msra.mxu0 %v5943
        %8477 = vmatprep.subr.bf16.mxu0 %v5946
        %8478 = vmatpush1.bf16.msra.mxu0 %v5945
        %8479 = vmatprep.subr.bf16.mxu0 %v5948
        %8480 = vmatpush1.bf16.msra.mxu0 %v5947
        %8481 = vmatprep.subr.bf16.mxu0 %v5950
        %8482 = vmatpush1.bf16.msra.mxu0 %v5949
        %8483 = vmatprep.subr.bf16.mxu0 %v5952
        %8484 = vmatpush1.bf16.msra.mxu0 %v5951
        %8485 = vmatprep.subr.bf16.mxu0 %v5954
        %8486 = vmatpush1.bf16.msra.mxu0 %v5953
        %8487 = vmatprep.subr.bf16.mxu0 %v5956
        %8488 = vmatpush1.bf16.msra.mxu0 %v5955
        %8489 = vmatprep.subr.bf16.mxu0 %v5958
        %8490 = vmatpush1.bf16.msra.mxu0 %v5957
        %8491 = vmatprep.subr.bf16.mxu0 %v5960
        %8492 = vmatpush1.bf16.msra.mxu0 %v5959
        %8493 = vmatprep.mubr.bf16.mxu0 %v1898
        %8494 = vmatmul.mubr.bf16.gmra.mrb[0].mxu0 %v1897
        %v8495 = vpop.f32.mrb[0].mxu0
        %v8496 = vadd.f32 %v8443, %v8495
        %v8497 = vpop.f32.mrb[0].mxu0
        %v8498 = vadd.f32 %v8445, %v8497
        %v8499 = vpop.f32.mrb[0].mxu0
        %v8500 = vadd.f32 %v8447, %v8499
        %v8501 = vpop.f32.mrb[0].mxu0
        %v8502 = vadd.f32 %v8449, %v8501
        %8503 = vmatprep.mubr.bf16.mxu0 %v1964
        %8504 = vmatmul.mubr.bf16.gmra.mrb[0].mxu0 %v1963
        %v8505 = vpop.f32.mrb[0].mxu0
        %v8506 = vadd.f32 %v8453, %v8505
        %v8507 = vpop.f32.mrb[0].mxu0
        %v8508 = vadd.f32 %v8455, %v8507
        %v8509 = vpop.f32.mrb[0].mxu0
        %v8510 = vadd.f32 %v8457, %v8509
        %v8511 = vpop.f32.mrb[0].mxu0
        %v8512 = vadd.f32 %v8459, %v8511
        %8513 = vdwg.mxu0
        %8514 = vmatprep.subr.bf16.mxu0 %v5962
        %8515 = vmatpush1.bf16.msra.mxu0 %v5961
        %8516 = vmatprep.subr.bf16.mxu0 %v5964
        %8517 = vmatpush1.bf16.msra.mxu0 %v5963
        %8518 = vmatprep.subr.bf16.mxu0 %v5966
        %8519 = vmatpush1.bf16.msra.mxu0 %v5965
        %8520 = vmatprep.subr.bf16.mxu0 %v5968
        %8521 = vmatpush1.bf16.msra.mxu0 %v5967
        %8522 = vmatprep.subr.bf16.mxu0 %v5970
        %8523 = vmatpush1.bf16.msra.mxu0 %v5969
        %8524 = vmatprep.subr.bf16.mxu0 %v5972
        %8525 = vmatpush1.bf16.msra.mxu0 %v5971
        %8526 = vmatprep.subr.bf16.mxu0 %v5974
        %8527 = vmatpush1.bf16.msra.mxu0 %v5973
        %8528 = vmatprep.subr.bf16.mxu0 %v5976
        %8529 = vmatpush1.bf16.msra.mxu0 %v5975
        %8530 = vmatprep.subr.bf16.mxu0 %v5978
        %8531 = vmatpush1.bf16.msra.mxu0 %v5977
        %8532 = vmatprep.subr.bf16.mxu0 %v5980
        %8533 = vmatpush1.bf16.msra.mxu0 %v5979
        %8534 = vmatprep.subr.bf16.mxu0 %v5982
        %8535 = vmatpush1.bf16.msra.mxu0 %v5981
        %8536 = vmatprep.subr.bf16.mxu0 %v5984
        %8537 = vmatpush1.bf16.msra.mxu0 %v5983
        %8538 = vmatprep.subr.bf16.mxu0 %v5986
        %8539 = vmatpush1.bf16.msra.mxu0 %v5985
        %8540 = vmatprep.subr.bf16.mxu0 %v5988
        %8541 = vmatpush1.bf16.msra.mxu0 %v5987
        %8542 = vmatprep.subr.bf16.mxu0 %v5990
        %8543 = vmatpush1.bf16.msra.mxu0 %v5989
        %8544 = vmatprep.subr.bf16.mxu0 %v5992
        %8545 = vmatpush1.bf16.msra.mxu0 %v5991
        %8546 = vmatprep.mubr.bf16.mxu0 %v1900
        %8547 = vmatmul.mubr.bf16.gmra.mrb[0].mxu0 %v1899
        %v8548 = vpop.f32.mrb[0].mxu0
        %v8549 = vadd.f32 %v8496, %v8548
        %v8550 = vpop.f32.mrb[0].mxu0
        %v8551 = vadd.f32 %v8498, %v8550
        %v8552 = vpop.f32.mrb[0].mxu0
        %v8553 = vadd.f32 %v8500, %v8552
        %v8554 = vpop.f32.mrb[0].mxu0
        %v8555 = vadd.f32 %v8502, %v8554
        %8556 = vmatprep.mubr.bf16.mxu0 %v1966
        %8557 = vmatmul.mubr.bf16.gmra.mrb[0].mxu0 %v1965
        %v8558 = vpop.f32.mrb[0].mxu0
        %v8559 = vadd.f32 %v8506, %v8558
        %v8560 = vpop.f32.mrb[0].mxu0
        %v8561 = vadd.f32 %v8508, %v8560
        %v8562 = vpop.f32.mrb[0].mxu0
        %v8563 = vadd.f32 %v8510, %v8562
        %v8564 = vpop.f32.mrb[0].mxu0
        %v8565 = vadd.f32 %v8512, %v8564
        %8566 = vdwg.mxu0
        %8567 = vmatprep.subr.bf16.mxu0 %v5994
        %8568 = vmatpush1.bf16.msra.mxu0 %v5993
        %8569 = vmatprep.subr.bf16.mxu0 %v5996
        %8570 = vmatpush1.bf16.msra.mxu0 %v5995
        %8571 = vmatprep.subr.bf16.mxu0 %v5998
        %8572 = vmatpush1.bf16.msra.mxu0 %v5997
        %8573 = vmatprep.subr.bf16.mxu0 %v6000
        %8574 = vmatpush1.bf16.msra.mxu0 %v5999
        %8575 = vmatprep.subr.bf16.mxu0 %v6002
        %8576 = vmatpush1.bf16.msra.mxu0 %v6001
        %8577 = vmatprep.subr.bf16.mxu0 %v6004
        %8578 = vmatpush1.bf16.msra.mxu0 %v6003
        %8579 = vmatprep.subr.bf16.mxu0 %v6006
        %8580 = vmatpush1.bf16.msra.mxu0 %v6005
        %8581 = vmatprep.subr.bf16.mxu0 %v6008
        %8582 = vmatpush1.bf16.msra.mxu0 %v6007
        %8583 = vmatprep.subr.bf16.mxu0 %v6010
        %8584 = vmatpush1.bf16.msra.mxu0 %v6009
        %8585 = vmatprep.subr.bf16.mxu0 %v6012
        %8586 = vmatpush1.bf16.msra.mxu0 %v6011
        %8587 = vmatprep.subr.bf16.mxu0 %v6014
        %8588 = vmatpush1.bf16.msra.mxu0 %v6013
        %8589 = vmatprep.subr.bf16.mxu0 %v6016
        %8590 = vmatpush1.bf16.msra.mxu0 %v6015
        %8591 = vmatprep.subr.bf16.mxu0 %v6018
        %8592 = vmatpush1.bf16.msra.mxu0 %v6017
        %8593 = vmatprep.subr.bf16.mxu0 %v6020
        %8594 = vmatpush1.bf16.msra.mxu0 %v6019
        %8595 = vmatprep.subr.bf16.mxu0 %v6022
        %8596 = vmatpush1.bf16.msra.mxu0 %v6021
        %8597 = vmatprep.subr.bf16.mxu0 %v6024
        %8598 = vmatpush1.bf16.msra.mxu0 %v6023
        %8599 = vmatprep.mubr.bf16.mxu0 %v1902
        %8600 = vmatmul.mubr.bf16.gmra.mrb[0].mxu0 %v1901
        %v8601 = vpop.f32.mrb[0].mxu0
        %v8602 = vadd.f32 %v8549, %v8601
        %v8603 = vpop.f32.mrb[0].mxu0
        %v8604 = vadd.f32 %v8551, %v8603
        %v8605 = vpop.f32.mrb[0].mxu0
        %v8606 = vadd.f32 %v8553, %v8605
        %v8607 = vpop.f32.mrb[0].mxu0
        %v8608 = vadd.f32 %v8555, %v8607
        %8609 = vmatprep.mubr.bf16.mxu0 %v1968
        %8610 = vmatmul.mubr.bf16.gmra.mrb[0].mxu0 %v1967
        %v8611 = vpop.f32.mrb[0].mxu0
        %v8612 = vadd.f32 %v8559, %v8611
        %v8613 = vpop.f32.mrb[0].mxu0
        %v8614 = vadd.f32 %v8561, %v8613
        %v8615 = vpop.f32.mrb[0].mxu0
        %v8616 = vadd.f32 %v8563, %v8615
        %v8617 = vpop.f32.mrb[0].mxu0
        %v8618 = vadd.f32 %v8565, %v8617
        %8619 = vdwg.mxu0
        %8620 = vmatprep.subr.bf16.mxu0 %v6026
        %8621 = vmatpush1.bf16.msra.mxu0 %v6025
        %8622 = vmatprep.subr.bf16.mxu0 %v6028
        %8623 = vmatpush1.bf16.msra.mxu0 %v6027
        %8624 = vmatprep.subr.bf16.mxu0 %v6030
        %8625 = vmatpush1.bf16.msra.mxu0 %v6029
        %8626 = vmatprep.subr.bf16.mxu0 %v6032
        %8627 = vmatpush1.bf16.msra.mxu0 %v6031
        %8628 = vmatprep.subr.bf16.mxu0 %v6034
        %8629 = vmatpush1.bf16.msra.mxu0 %v6033
        %8630 = vmatprep.subr.bf16.mxu0 %v6036
        %8631 = vmatpush1.bf16.msra.mxu0 %v6035
        %8632 = vmatprep.subr.bf16.mxu0 %v6038
        %8633 = vmatpush1.bf16.msra.mxu0 %v6037
        %8634 = vmatprep.subr.bf16.mxu0 %v6040
        %8635 = vmatpush1.bf16.msra.mxu0 %v6039
        %8636 = vmatprep.subr.bf16.mxu0 %v6042
        %8637 = vmatpush1.bf16.msra.mxu0 %v6041
        %8638 = vmatprep.subr.bf16.mxu0 %v6044
        %8639 = vmatpush1.bf16.msra.mxu0 %v6043
        %8640 = vmatprep.subr.bf16.mxu0 %v6046
        %8641 = vmatpush1.bf16.msra.mxu0 %v6045
        %8642 = vmatprep.subr.bf16.mxu0 %v6048
        %8643 = vmatpush1.bf16.msra.mxu0 %v6047
        %8644 = vmatprep.subr.bf16.mxu0 %v6050
        %8645 = vmatpush1.bf16.msra.mxu0 %v6049
        %8646 = vmatprep.subr.bf16.mxu0 %v6052
        %8647 = vmatpush1.bf16.msra.mxu0 %v6051
        %8648 = vmatprep.subr.bf16.mxu0 %v6054
        %8649 = vmatpush1.bf16.msra.mxu0 %v6053
        %8650 = vmatprep.subr.bf16.mxu0 %v6056
        %8651 = vmatpush1.bf16.msra.mxu0 %v6055
        %8652 = vmatprep.mubr.bf16.mxu0 %v1904
        %8653 = vmatmul.mubr.bf16.gmra.mrb[0].mxu0 %v1903
        %v8654 = vpop.f32.mrb[0].mxu0
        %v8655 = vadd.f32 %v8602, %v8654
        %v8656 = vpop.f32.mrb[0].mxu0
        %v8657 = vadd.f32 %v8604, %v8656
        %v8658 = vpop.f32.mrb[0].mxu0
        %v8659 = vadd.f32 %v8606, %v8658
        %v8660 = vpop.f32.mrb[0].mxu0
        %v8661 = vadd.f32 %v8608, %v8660
        %8662 = vmatprep.mubr.bf16.mxu0 %v1970
        %8663 = vmatmul.mubr.bf16.gmra.mrb[0].mxu0 %v1969
        %v8664 = vpop.f32.mrb[0].mxu0
        %v8665 = vadd.f32 %v8612, %v8664
        %v8666 = vpop.f32.mrb[0].mxu0
        %v8667 = vadd.f32 %v8614, %v8666
        %v8668 = vpop.f32.mrb[0].mxu0
        %v8669 = vadd.f32 %v8616, %v8668
        %v8670 = vpop.f32.mrb[0].mxu0
        %v8671 = vadd.f32 %v8618, %v8670
        %8672 = vdwg.mxu0
        %8673 = vmatprep.subr.bf16.mxu0 %v6058
        %8674 = vmatpush1.bf16.msra.mxu0 %v6057
        %8675 = vmatprep.subr.bf16.mxu0 %v6060
        %8676 = vmatpush1.bf16.msra.mxu0 %v6059
        %8677 = vmatprep.subr.bf16.mxu0 %v6062
        %8678 = vmatpush1.bf16.msra.mxu0 %v6061
        %8679 = vmatprep.subr.bf16.mxu0 %v6064
        %8680 = vmatpush1.bf16.msra.mxu0 %v6063
        %8681 = vmatprep.subr.bf16.mxu0 %v6066
        %8682 = vmatpush1.bf16.msra.mxu0 %v6065
        %8683 = vmatprep.subr.bf16.mxu0 %v6068
        %8684 = vmatpush1.bf16.msra.mxu0 %v6067
        %8685 = vmatprep.subr.bf16.mxu0 %v6070
        %8686 = vmatpush1.bf16.msra.mxu0 %v6069
        %8687 = vmatprep.subr.bf16.mxu0 %v6072
        %8688 = vmatpush1.bf16.msra.mxu0 %v6071
        %8689 = vmatprep.subr.bf16.mxu0 %v6074
        %8690 = vmatpush1.bf16.msra.mxu0 %v6073
        %8691 = vmatprep.subr.bf16.mxu0 %v6076
        %8692 = vmatpush1.bf16.msra.mxu0 %v6075
        %8693 = vmatprep.subr.bf16.mxu0 %v6078
        %8694 = vmatpush1.bf16.msra.mxu0 %v6077
        %8695 = vmatprep.subr.bf16.mxu0 %v6080
        %8696 = vmatpush1.bf16.msra.mxu0 %v6079
        %8697 = vmatprep.subr.bf16.mxu0 %v6082
        %8698 = vmatpush1.bf16.msra.mxu0 %v6081
        %8699 = vmatprep.subr.bf16.mxu0 %v6084
        %8700 = vmatpush1.bf16.msra.mxu0 %v6083
        %8701 = vmatprep.subr.bf16.mxu0 %v6086
        %8702 = vmatpush1.bf16.msra.mxu0 %v6085
        %8703 = vmatprep.subr.bf16.mxu0 %v6088
        %8704 = vmatpush1.bf16.msra.mxu0 %v6087
        %8705 = vmatprep.mubr.bf16.mxu0 %v1906
        %8706 = vmatmul.mubr.bf16.gmra.mrb[0].mxu0 %v1905
        %v8707 = vpop.f32.mrb[0].mxu0
        %v8708 = vadd.f32 %v8655, %v8707
        %v8709 = vpop.f32.mrb[0].mxu0
        %v8710 = vadd.f32 %v8657, %v8709
        %v8711 = vpop.f32.mrb[0].mxu0
        %v8712 = vadd.f32 %v8659, %v8711
        %v8713 = vpop.f32.mrb[0].mxu0
        %v8714 = vadd.f32 %v8661, %v8713
        %8715 = vmatprep.mubr.bf16.mxu0 %v1972
        %8716 = vmatmul.mubr.bf16.gmra.mrb[0].mxu0 %v1971
        %v8717 = vpop.f32.mrb[0].mxu0
        %v8718 = vadd.f32 %v8665, %v8717
        %v8719 = vpop.f32.mrb[0].mxu0
        %v8720 = vadd.f32 %v8667, %v8719
        %v8721 = vpop.f32.mrb[0].mxu0
        %v8722 = vadd.f32 %v8669, %v8721
        %v8723 = vpop.f32.mrb[0].mxu0
        %v8724 = vadd.f32 %v8671, %v8723
        %8725 = vdwg.mxu0
        %8726 = vmatprep.subr.bf16.mxu0 %v6090
        %8727 = vmatpush1.bf16.msra.mxu0 %v6089
        %8728 = vmatprep.subr.bf16.mxu0 %v6092
        %8729 = vmatpush1.bf16.msra.mxu0 %v6091
        %8730 = vmatprep.subr.bf16.mxu0 %v6094
        %8731 = vmatpush1.bf16.msra.mxu0 %v6093
        %8732 = vmatprep.subr.bf16.mxu0 %v6096
        %8733 = vmatpush1.bf16.msra.mxu0 %v6095
        %8734 = vmatprep.subr.bf16.mxu0 %v6098
        %8735 = vmatpush1.bf16.msra.mxu0 %v6097
        %8736 = vmatprep.subr.bf16.mxu0 %v6100
        %8737 = vmatpush1.bf16.msra.mxu0 %v6099
        %8738 = vmatprep.subr.bf16.mxu0 %v6102
        %8739 = vmatpush1.bf16.msra.mxu0 %v6101
        %8740 = vmatprep.subr.bf16.mxu0 %v6104
        %8741 = vmatpush1.bf16.msra.mxu0 %v6103
        %8742 = vmatprep.subr.bf16.mxu0 %v6106
        %8743 = vmatpush1.bf16.msra.mxu0 %v6105
        %8744 = vmatprep.subr.bf16.mxu0 %v6108
        %8745 = vmatpush1.bf16.msra.mxu0 %v6107
        %8746 = vmatprep.subr.bf16.mxu0 %v6110
        %8747 = vmatpush1.bf16.msra.mxu0 %v6109
        %8748 = vmatprep.subr.bf16.mxu0 %v6112
        %8749 = vmatpush1.bf16.msra.mxu0 %v6111
        %8750 = vmatprep.subr.bf16.mxu0 %v6114
        %8751 = vmatpush1.bf16.msra.mxu0 %v6113
        %8752 = vmatprep.subr.bf16.mxu0 %v6116
        %8753 = vmatpush1.bf16.msra.mxu0 %v6115
        %8754 = vmatprep.subr.bf16.mxu0 %v6118
        %8755 = vmatpush1.bf16.msra.mxu0 %v6117
        %8756 = vmatprep.subr.bf16.mxu0 %v6120
        %8757 = vmatpush1.bf16.msra.mxu0 %v6119
        %8758 = vmatprep.mubr.bf16.mxu0 %v1908
        %8759 = vmatmul.mubr.bf16.gmra.mrb[0].mxu0 %v1907
        %v8760 = vpop.f32.mrb[0].mxu0
        %v8761 = vadd.f32 %v8708, %v8760
        %v8762 = vpop.f32.mrb[0].mxu0
        %v8763 = vadd.f32 %v8710, %v8762
        %v8764 = vpop.f32.mrb[0].mxu0
        %v8765 = vadd.f32 %v8712, %v8764
        %v8766 = vpop.f32.mrb[0].mxu0
        %v8767 = vadd.f32 %v8714, %v8766
        %8768 = vmatprep.mubr.bf16.mxu0 %v1974
        %8769 = vmatmul.mubr.bf16.gmra.mrb[0].mxu0 %v1973
        %v8770 = vpop.f32.mrb[0].mxu0
        %v8771 = vadd.f32 %v8718, %v8770
        %v8772 = vpop.f32.mrb[0].mxu0
        %v8773 = vadd.f32 %v8720, %v8772
        %v8774 = vpop.f32.mrb[0].mxu0
        %v8775 = vadd.f32 %v8722, %v8774
        %v8776 = vpop.f32.mrb[0].mxu0
        %v8777 = vadd.f32 %v8724, %v8776
        %8778 = vdwg.mxu0
        %8779 = vmatprep.subr.bf16.mxu0 %v6122
        %8780 = vmatpush1.bf16.msra.mxu0 %v6121
        %8781 = vmatprep.subr.bf16.mxu0 %v6124
        %8782 = vmatpush1.bf16.msra.mxu0 %v6123
        %8783 = vmatprep.subr.bf16.mxu0 %v6126
        %8784 = vmatpush1.bf16.msra.mxu0 %v6125
        %8785 = vmatprep.subr.bf16.mxu0 %v6128
        %8786 = vmatpush1.bf16.msra.mxu0 %v6127
        %8787 = vmatprep.subr.bf16.mxu0 %v6130
        %8788 = vmatpush1.bf16.msra.mxu0 %v6129
        %8789 = vmatprep.subr.bf16.mxu0 %v6132
        %8790 = vmatpush1.bf16.msra.mxu0 %v6131
        %8791 = vmatprep.subr.bf16.mxu0 %v6134
        %8792 = vmatpush1.bf16.msra.mxu0 %v6133
        %8793 = vmatprep.subr.bf16.mxu0 %v6136
        %8794 = vmatpush1.bf16.msra.mxu0 %v6135
        %8795 = vmatprep.subr.bf16.mxu0 %v6138
        %8796 = vmatpush1.bf16.msra.mxu0 %v6137
        %8797 = vmatprep.subr.bf16.mxu0 %v6140
        %8798 = vmatpush1.bf16.msra.mxu0 %v6139
        %8799 = vmatprep.subr.bf16.mxu0 %v6142
        %8800 = vmatpush1.bf16.msra.mxu0 %v6141
        %8801 = vmatprep.subr.bf16.mxu0 %v6144
        %8802 = vmatpush1.bf16.msra.mxu0 %v6143
        %8803 = vmatprep.subr.bf16.mxu0 %v6146
        %8804 = vmatpush1.bf16.msra.mxu0 %v6145
        %8805 = vmatprep.subr.bf16.mxu0 %v6148
        %8806 = vmatpush1.bf16.msra.mxu0 %v6147
        %8807 = vmatprep.subr.bf16.mxu0 %v6150
        %8808 = vmatpush1.bf16.msra.mxu0 %v6149
        %8809 = vmatprep.subr.bf16.mxu0 %v6152
        %8810 = vmatpush1.bf16.msra.mxu0 %v6151
        %8811 = vmatprep.mubr.bf16.mxu0 %v1910
        %8812 = vmatmul.mubr.bf16.gmra.mrb[0].mxu0 %v1909
        %v8813 = vpop.f32.mrb[0].mxu0
        %v8814 = vadd.f32 %v8761, %v8813
        %v8815 = vpop.f32.mrb[0].mxu0
        %v8816 = vadd.f32 %v8763, %v8815
        %v8817 = vpop.f32.mrb[0].mxu0
        %v8818 = vadd.f32 %v8765, %v8817
        %v8819 = vpop.f32.mrb[0].mxu0
        %v8820 = vadd.f32 %v8767, %v8819
        %8821 = vmatprep.mubr.bf16.mxu0 %v1976
        %8822 = vmatmul.mubr.bf16.gmra.mrb[0].mxu0 %v1975
        %v8823 = vpop.f32.mrb[0].mxu0
        %v8824 = vadd.f32 %v8771, %v8823
        %v8825 = vpop.f32.mrb[0].mxu0
        %v8826 = vadd.f32 %v8773, %v8825
        %v8827 = vpop.f32.mrb[0].mxu0
        %v8828 = vadd.f32 %v8775, %v8827
        %v8829 = vpop.f32.mrb[0].mxu0
        %v8830 = vadd.f32 %v8777, %v8829
        %8831 = vdwg.mxu0
        %8832 = vmatprep.subr.bf16.mxu0 %v6154
        %8833 = vmatpush1.bf16.msra.mxu0 %v6153
        %8834 = vmatprep.subr.bf16.mxu0 %v6156
        %8835 = vmatpush1.bf16.msra.mxu0 %v6155
        %8836 = vmatprep.subr.bf16.mxu0 %v6158
        %8837 = vmatpush1.bf16.msra.mxu0 %v6157
        %8838 = vmatprep.subr.bf16.mxu0 %v6160
        %8839 = vmatpush1.bf16.msra.mxu0 %v6159
        %8840 = vmatprep.subr.bf16.mxu0 %v6162
        %8841 = vmatpush1.bf16.msra.mxu0 %v6161
        %8842 = vmatprep.subr.bf16.mxu0 %v6164
        %8843 = vmatpush1.bf16.msra.mxu0 %v6163
        %8844 = vmatprep.subr.bf16.mxu0 %v6166
        %8845 = vmatpush1.bf16.msra.mxu0 %v6165
        %8846 = vmatprep.subr.bf16.mxu0 %v6168
        %8847 = vmatpush1.bf16.msra.mxu0 %v6167
        %8848 = vmatprep.subr.bf16.mxu0 %v6170
        %8849 = vmatpush1.bf16.msra.mxu0 %v6169
        %8850 = vmatprep.subr.bf16.mxu0 %v6172
        %8851 = vmatpush1.bf16.msra.mxu0 %v6171
        %8852 = vmatprep.subr.bf16.mxu0 %v6174
        %8853 = vmatpush1.bf16.msra.mxu0 %v6173
        %8854 = vmatprep.subr.bf16.mxu0 %v6176
        %8855 = vmatpush1.bf16.msra.mxu0 %v6175
        %8856 = vmatprep.subr.bf16.mxu0 %v6178
        %8857 = vmatpush1.bf16.msra.mxu0 %v6177
        %8858 = vmatprep.subr.bf16.mxu0 %v6180
        %8859 = vmatpush1.bf16.msra.mxu0 %v6179
        %8860 = vmatprep.subr.bf16.mxu0 %v6182
        %8861 = vmatpush1.bf16.msra.mxu0 %v6181
        %8862 = vmatprep.subr.bf16.mxu0 %v6184
        %8863 = vmatpush1.bf16.msra.mxu0 %v6183
        %8864 = vmatprep.mubr.bf16.mxu0 %v1912
        %8865 = vmatmul.mubr.bf16.gmra.mrb[0].mxu0 %v1911
        %v8866 = vpop.f32.mrb[0].mxu0
        %v8867 = vadd.f32 %v8814, %v8866
        %v8868 = vpop.f32.mrb[0].mxu0
        %v8869 = vadd.f32 %v8816, %v8868
        %v8870 = vpop.f32.mrb[0].mxu0
        %v8871 = vadd.f32 %v8818, %v8870
        %v8872 = vpop.f32.mrb[0].mxu0
        %v8873 = vadd.f32 %v8820, %v8872
        %8874 = vmatprep.mubr.bf16.mxu0 %v1978
        %8875 = vmatmul.mubr.bf16.gmra.mrb[0].mxu0 %v1977
        %v8876 = vpop.f32.mrb[0].mxu0
        %v8877 = vadd.f32 %v8824, %v8876
        %v8878 = vpop.f32.mrb[0].mxu0
        %v8879 = vadd.f32 %v8826, %v8878
        %v8880 = vpop.f32.mrb[0].mxu0
        %v8881 = vadd.f32 %v8828, %v8880
        %v8882 = vpop.f32.mrb[0].mxu0
        %v8883 = vadd.f32 %v8830, %v8882
        %8884 = vdwg.mxu0
        %8885 = vmatprep.subr.bf16.mxu0 %v6186
        %8886 = vmatpush1.bf16.msra.mxu0 %v6185
        %8887 = vmatprep.subr.bf16.mxu0 %v6188
        %8888 = vmatpush1.bf16.msra.mxu0 %v6187
        %8889 = vmatprep.subr.bf16.mxu0 %v6190
        %8890 = vmatpush1.bf16.msra.mxu0 %v6189
        %8891 = vmatprep.subr.bf16.mxu0 %v6192
        %8892 = vmatpush1.bf16.msra.mxu0 %v6191
        %8893 = vmatprep.subr.bf16.mxu0 %v6194
        %8894 = vmatpush1.bf16.msra.mxu0 %v6193
        %8895 = vmatprep.subr.bf16.mxu0 %v6196
        %8896 = vmatpush1.bf16.msra.mxu0 %v6195
        %8897 = vmatprep.subr.bf16.mxu0 %v6198
        %8898 = vmatpush1.bf16.msra.mxu0 %v6197
        %8899 = vmatprep.subr.bf16.mxu0 %v6200
        %8900 = vmatpush1.bf16.msra.mxu0 %v6199
        %8901 = vmatprep.subr.bf16.mxu0 %v6202
        %8902 = vmatpush1.bf16.msra.mxu0 %v6201
        %8903 = vmatprep.subr.bf16.mxu0 %v6204
        %8904 = vmatpush1.bf16.msra.mxu0 %v6203
        %8905 = vmatprep.subr.bf16.mxu0 %v6206
        %8906 = vmatpush1.bf16.msra.mxu0 %v6205
        %8907 = vmatprep.subr.bf16.mxu0 %v6208
        %8908 = vmatpush1.bf16.msra.mxu0 %v6207
        %8909 = vmatprep.subr.bf16.mxu0 %v6210
        %8910 = vmatpush1.bf16.msra.mxu0 %v6209
        %8911 = vmatprep.subr.bf16.mxu0 %v6212
        %8912 = vmatpush1.bf16.msra.mxu0 %v6211
        %8913 = vmatprep.subr.bf16.mxu0 %v6214
        %8914 = vmatpush1.bf16.msra.mxu0 %v6213
        %8915 = vmatprep.subr.bf16.mxu0 %v6216
        %8916 = vmatpush1.bf16.msra.mxu0 %v6215
        %8917 = vmatprep.mubr.bf16.mxu0 %v1914
        %8918 = vmatmul.mubr.bf16.gmra.mrb[0].mxu0 %v1913
        %v8919 = vpop.f32.mrb[0].mxu0
        %v8920 = vadd.f32 %v8867, %v8919
        %v8921 = vpop.f32.mrb[0].mxu0
        %v8922 = vadd.f32 %v8869, %v8921
        %v8923 = vpop.f32.mrb[0].mxu0
        %v8924 = vadd.f32 %v8871, %v8923
        %v8925 = vpop.f32.mrb[0].mxu0
        %v8926 = vadd.f32 %v8873, %v8925
        %8927 = vmatprep.mubr.bf16.mxu0 %v1980
        %8928 = vmatmul.mubr.bf16.gmra.mrb[0].mxu0 %v1979
        %v8929 = vpop.f32.mrb[0].mxu0
        %v8930 = vadd.f32 %v8877, %v8929
        %v8931 = vpop.f32.mrb[0].mxu0
        %v8932 = vadd.f32 %v8879, %v8931
        %v8933 = vpop.f32.mrb[0].mxu0
        %v8934 = vadd.f32 %v8881, %v8933
        %v8935 = vpop.f32.mrb[0].mxu0
        %v8936 = vadd.f32 %v8883, %v8935
        %8937 = vdwg.mxu0
        %8938 = vmatprep.subr.bf16.mxu0 %v6218
        %8939 = vmatpush1.bf16.msra.mxu0 %v6217
        %8940 = vmatprep.subr.bf16.mxu0 %v6220
        %8941 = vmatpush1.bf16.msra.mxu0 %v6219
        %8942 = vmatprep.subr.bf16.mxu0 %v6222
        %8943 = vmatpush1.bf16.msra.mxu0 %v6221
        %8944 = vmatprep.subr.bf16.mxu0 %v6224
        %8945 = vmatpush1.bf16.msra.mxu0 %v6223
        %8946 = vmatprep.subr.bf16.mxu0 %v6226
        %8947 = vmatpush1.bf16.msra.mxu0 %v6225
        %8948 = vmatprep.subr.bf16.mxu0 %v6228
        %8949 = vmatpush1.bf16.msra.mxu0 %v6227
        %8950 = vmatprep.subr.bf16.mxu0 %v6230
        %8951 = vmatpush1.bf16.msra.mxu0 %v6229
        %8952 = vmatprep.subr.bf16.mxu0 %v6232
        %8953 = vmatpush1.bf16.msra.mxu0 %v6231
        %8954 = vmatprep.subr.bf16.mxu0 %v6234
        %8955 = vmatpush1.bf16.msra.mxu0 %v6233
        %8956 = vmatprep.subr.bf16.mxu0 %v6236
        %8957 = vmatpush1.bf16.msra.mxu0 %v6235
        %8958 = vmatprep.subr.bf16.mxu0 %v6238
        %8959 = vmatpush1.bf16.msra.mxu0 %v6237
        %8960 = vmatprep.subr.bf16.mxu0 %v6240
        %8961 = vmatpush1.bf16.msra.mxu0 %v6239
        %8962 = vmatprep.subr.bf16.mxu0 %v6242
        %8963 = vmatpush1.bf16.msra.mxu0 %v6241
        %8964 = vmatprep.subr.bf16.mxu0 %v6244
        %8965 = vmatpush1.bf16.msra.mxu0 %v6243
        %8966 = vmatprep.subr.bf16.mxu0 %v6246
        %8967 = vmatpush1.bf16.msra.mxu0 %v6245
        %8968 = vmatprep.subr.bf16.mxu0 %v6248
        %8969 = vmatpush1.bf16.msra.mxu0 %v6247
        %8970 = vmatprep.mubr.bf16.mxu0 %v1916
        %8971 = vmatmul.mubr.bf16.gmra.mrb[0].mxu0 %v1915
        %v8972 = vpop.f32.mrb[0].mxu0
        %v8973 = vadd.f32 %v8920, %v8972
        %v8974 = vpop.f32.mrb[0].mxu0
        %v8975 = vadd.f32 %v8922, %v8974
        %v8976 = vpop.f32.mrb[0].mxu0
        %v8977 = vadd.f32 %v8924, %v8976
        %v8978 = vpop.f32.mrb[0].mxu0
        %v8979 = vadd.f32 %v8926, %v8978
        %8980 = vmatprep.mubr.bf16.mxu0 %v1982
        %8981 = vmatmul.mubr.bf16.gmra.mrb[0].mxu0 %v1981
        %v8982 = vpop.f32.mrb[0].mxu0
        %v8983 = vadd.f32 %v8930, %v8982
        %v8984 = vpop.f32.mrb[0].mxu0
        %v8985 = vadd.f32 %v8932, %v8984
        %v8986 = vpop.f32.mrb[0].mxu0
        %v8987 = vadd.f32 %v8934, %v8986
        %v8988 = vpop.f32.mrb[0].mxu0
        %v8989 = vadd.f32 %v8936, %v8988
        %8990 = vdwg.mxu0
        %8991 = vmatprep.subr.bf16.mxu0 %v6250
        %8992 = vmatpush1.bf16.msra.mxu0 %v6249
        %8993 = vmatprep.subr.bf16.mxu0 %v6252
        %8994 = vmatpush1.bf16.msra.mxu0 %v6251
        %8995 = vmatprep.subr.bf16.mxu0 %v6254
        %8996 = vmatpush1.bf16.msra.mxu0 %v6253
        %8997 = vmatprep.subr.bf16.mxu0 %v6256
        %8998 = vmatpush1.bf16.msra.mxu0 %v6255
        %8999 = vmatprep.subr.bf16.mxu0 %v6258
        %9000 = vmatpush1.bf16.msra.mxu0 %v6257
        %9001 = vmatprep.subr.bf16.mxu0 %v6260
        %9002 = vmatpush1.bf16.msra.mxu0 %v6259
        %9003 = vmatprep.subr.bf16.mxu0 %v6262
        %9004 = vmatpush1.bf16.msra.mxu0 %v6261
        %9005 = vmatprep.subr.bf16.mxu0 %v6264
        %9006 = vmatpush1.bf16.msra.mxu0 %v6263
        %9007 = vmatprep.subr.bf16.mxu0 %v6266
        %9008 = vmatpush1.bf16.msra.mxu0 %v6265
        %9009 = vmatprep.subr.bf16.mxu0 %v6268
        %9010 = vmatpush1.bf16.msra.mxu0 %v6267
        %9011 = vmatprep.subr.bf16.mxu0 %v6270
        %9012 = vmatpush1.bf16.msra.mxu0 %v6269
        %9013 = vmatprep.subr.bf16.mxu0 %v6272
        %9014 = vmatpush1.bf16.msra.mxu0 %v6271
        %9015 = vmatprep.subr.bf16.mxu0 %v6274
        %9016 = vmatpush1.bf16.msra.mxu0 %v6273
        %9017 = vmatprep.subr.bf16.mxu0 %v6276
        %9018 = vmatpush1.bf16.msra.mxu0 %v6275
        %9019 = vmatprep.subr.bf16.mxu0 %v6278
        %9020 = vmatpush1.bf16.msra.mxu0 %v6277
        %9021 = vmatprep.subr.bf16.mxu0 %v6280
        %9022 = vmatpush1.bf16.msra.mxu0 %v6279
        %9023 = vmatprep.mubr.bf16.mxu0 %v1918
        %9024 = vmatmul.mubr.bf16.gmra.mrb[0].mxu0 %v1917
        %v9025 = vpop.f32.mrb[0].mxu0
        %v9026 = vadd.f32 %v8973, %v9025
        %v9027 = vpop.f32.mrb[0].mxu0
        %v9028 = vadd.f32 %v8975, %v9027
        %v9029 = vpop.f32.mrb[0].mxu0
        %v9030 = vadd.f32 %v8977, %v9029
        %v9031 = vpop.f32.mrb[0].mxu0
        %v9032 = vadd.f32 %v8979, %v9031
        %9033 = vmatprep.mubr.bf16.mxu0 %v1984
        %9034 = vmatmul.mubr.bf16.gmra.mrb[0].mxu0 %v1983
        %v9035 = vpop.f32.mrb[0].mxu0
        %v9036 = vadd.f32 %v8983, %v9035
        %v9037 = vpop.f32.mrb[0].mxu0
        %v9038 = vadd.f32 %v8985, %v9037
        %v9039 = vpop.f32.mrb[0].mxu0
        %v9040 = vadd.f32 %v8987, %v9039
        %v9041 = vpop.f32.mrb[0].mxu0
        %v9042 = vadd.f32 %v8989, %v9041
        %9043 = vdwg.mxu0
        %9044 = vmatprep.subr.bf16.mxu0 %v6282
        %9045 = vmatpush1.bf16.msra.mxu0 %v6281
        %9046 = vmatprep.subr.bf16.mxu0 %v6284
        %9047 = vmatpush1.bf16.msra.mxu0 %v6283
        %9048 = vmatprep.subr.bf16.mxu0 %v6286
        %9049 = vmatpush1.bf16.msra.mxu0 %v6285
        %9050 = vmatprep.subr.bf16.mxu0 %v6288
        %9051 = vmatpush1.bf16.msra.mxu0 %v6287
        %9052 = vmatprep.subr.bf16.mxu0 %v6290
        %9053 = vmatpush1.bf16.msra.mxu0 %v6289
        %9054 = vmatprep.subr.bf16.mxu0 %v6292
        %9055 = vmatpush1.bf16.msra.mxu0 %v6291
        %9056 = vmatprep.subr.bf16.mxu0 %v6294
        %9057 = vmatpush1.bf16.msra.mxu0 %v6293
        %9058 = vmatprep.subr.bf16.mxu0 %v6296
        %9059 = vmatpush1.bf16.msra.mxu0 %v6295
        %9060 = vmatprep.subr.bf16.mxu0 %v6298
        %9061 = vmatpush1.bf16.msra.mxu0 %v6297
        %9062 = vmatprep.subr.bf16.mxu0 %v6300
        %9063 = vmatpush1.bf16.msra.mxu0 %v6299
        %9064 = vmatprep.subr.bf16.mxu0 %v6302
        %9065 = vmatpush1.bf16.msra.mxu0 %v6301
        %9066 = vmatprep.subr.bf16.mxu0 %v6304
        %9067 = vmatpush1.bf16.msra.mxu0 %v6303
        %9068 = vmatprep.subr.bf16.mxu0 %v6306
        %9069 = vmatpush1.bf16.msra.mxu0 %v6305
        %9070 = vmatprep.subr.bf16.mxu0 %v6308
        %9071 = vmatpush1.bf16.msra.mxu0 %v6307
        %9072 = vmatprep.subr.bf16.mxu0 %v6310
        %9073 = vmatpush1.bf16.msra.mxu0 %v6309
        %9074 = vmatprep.subr.bf16.mxu0 %v6312
        %9075 = vmatpush1.bf16.msra.mxu0 %v6311
        %9076 = vmatprep.mubr.bf16.mxu0 %v1920
        %9077 = vmatmul.mubr.bf16.gmra.mrb[0].mxu0 %v1919
        %v9078 = vpop.f32.mrb[0].mxu0
        %v9079 = vadd.f32 %v9026, %v9078
        %v9080 = vpop.f32.mrb[0].mxu0
        %v9081 = vadd.f32 %v9028, %v9080
        %v9082 = vpop.f32.mrb[0].mxu0
        %v9083 = vadd.f32 %v9030, %v9082
        %v9084 = vpop.f32.mrb[0].mxu0
        %v9085 = vadd.f32 %v9032, %v9084
        %9086 = vmatprep.mubr.bf16.mxu0 %v1986
        %9087 = vmatmul.mubr.bf16.gmra.mrb[0].mxu0 %v1985
        %v9088 = vpop.f32.mrb[0].mxu0
        %v9089 = vadd.f32 %v9036, %v9088
        %v9090 = vpop.f32.mrb[0].mxu0
        %v9091 = vadd.f32 %v9038, %v9090
        %v9092 = vpop.f32.mrb[0].mxu0
        %v9093 = vadd.f32 %v9040, %v9092
        %v9094 = vpop.f32.mrb[0].mxu0
        %v9095 = vadd.f32 %v9042, %v9094
        %9096 = vdwg.mxu0
        %9097 = vmatprep.subr.bf16.mxu0 %v6314
        %9098 = vmatpush1.bf16.msra.mxu0 %v6313
        %9099 = vmatprep.subr.bf16.mxu0 %v6316
        %9100 = vmatpush1.bf16.msra.mxu0 %v6315
        %9101 = vmatprep.subr.bf16.mxu0 %v6318
        %9102 = vmatpush1.bf16.msra.mxu0 %v6317
        %9103 = vmatprep.subr.bf16.mxu0 %v6320
        %9104 = vmatpush1.bf16.msra.mxu0 %v6319
        %9105 = vmatprep.subr.bf16.mxu0 %v6322
        %9106 = vmatpush1.bf16.msra.mxu0 %v6321
        %9107 = vmatprep.subr.bf16.mxu0 %v6324
        %9108 = vmatpush1.bf16.msra.mxu0 %v6323
        %9109 = vmatprep.subr.bf16.mxu0 %v6326
        %9110 = vmatpush1.bf16.msra.mxu0 %v6325
        %9111 = vmatprep.subr.bf16.mxu0 %v6328
        %9112 = vmatpush1.bf16.msra.mxu0 %v6327
        %9113 = vmatprep.subr.bf16.mxu0 %v6330
        %9114 = vmatpush1.bf16.msra.mxu0 %v6329
        %9115 = vmatprep.subr.bf16.mxu0 %v6332
        %9116 = vmatpush1.bf16.msra.mxu0 %v6331
        %9117 = vmatprep.subr.bf16.mxu0 %v6334
        %9118 = vmatpush1.bf16.msra.mxu0 %v6333
        %9119 = vmatprep.subr.bf16.mxu0 %v6336
        %9120 = vmatpush1.bf16.msra.mxu0 %v6335
        %9121 = vmatprep.subr.bf16.mxu0 %v6338
        %9122 = vmatpush1.bf16.msra.mxu0 %v6337
        %9123 = vmatprep.subr.bf16.mxu0 %v6340
        %9124 = vmatpush1.bf16.msra.mxu0 %v6339
        %9125 = vmatprep.subr.bf16.mxu0 %v6342
        %9126 = vmatpush1.bf16.msra.mxu0 %v6341
        %9127 = vmatprep.subr.bf16.mxu0 %v6344
        %9128 = vmatpush1.bf16.msra.mxu0 %v6343
        %9129 = vmatprep.mubr.bf16.mxu0 %v1922
        %9130 = vmatmul.mubr.bf16.gmra.mrb[0].mxu0 %v1921
        %v9131 = vpop.f32.mrb[0].mxu0
        %v9132 = vadd.f32 %v9079, %v9131
        %v9133 = vpop.f32.mrb[0].mxu0
        %v9134 = vadd.f32 %v9081, %v9133
        %v9135 = vpop.f32.mrb[0].mxu0
        %v9136 = vadd.f32 %v9083, %v9135
        %v9137 = vpop.f32.mrb[0].mxu0
        %v9138 = vadd.f32 %v9085, %v9137
        %9139 = vmatprep.mubr.bf16.mxu0 %v1988
        %9140 = vmatmul.mubr.bf16.gmra.mrb[0].mxu0 %v1987
        %v9141 = vpop.f32.mrb[0].mxu0
        %v9142 = vadd.f32 %v9089, %v9141
        %v9143 = vpop.f32.mrb[0].mxu0
        %v9144 = vadd.f32 %v9091, %v9143
        %v9145 = vpop.f32.mrb[0].mxu0
        %v9146 = vadd.f32 %v9093, %v9145
        %v9147 = vpop.f32.mrb[0].mxu0
        %v9148 = vadd.f32 %v9095, %v9147
        %9149 = vdwg.mxu0
        %v9150 = vpack.c.bf16 %v9136, %v9132
        %v9151 = vpack.c.bf16 %v9138, %v9134
        %v9152 = vpack.c.bf16 %v9146, %v9142
        %v9153 = vpack.c.bf16 %v9148, %v9144
        %v9154 = vld [vmem:[%s253] sm:$0xf]
        %v9155 = vld [vmem:[%s253 + $0x4] sm:$0xf]
        %v9156 = vld [vmem:[%s253 + $0x8] sm:$0xf]
        %v9157 = vld [vmem:[%s253 + $0xc] sm:$0xf]
        %v9158 = vld [vmem:[%s253 + $0x10] sm:$0xf]
        %v9159 = vld [vmem:[%s253 + $0x14] sm:$0xf]
        %v9160 = vld [vmem:[%s253 + $0x18] sm:$0xf]
        %v9161 = vld [vmem:[%s253 + $0x1c] sm:$0xf]
        %v9162 = vld [vmem:[%s253 + $0x20] sm:$0xf]
        %v9163 = vld [vmem:[%s253 + $0x24] sm:$0xf]
        %v9164 = vld [vmem:[%s253 + $0x28] sm:$0xf]
        %v9165 = vld [vmem:[%s253 + $0x2c] sm:$0xf]
        %v9166 = vld [vmem:[%s253 + $0x30] sm:$0xf]
        %v9167 = vld [vmem:[%s253 + $0x34] sm:$0xf]
        %v9168 = vld [vmem:[%s253 + $0x38] sm:$0xf]
        %v9169 = vld [vmem:[%s253 + $0x3c] sm:$0xf]
        %v9170 = vld [vmem:[%s253 + $0x40] sm:$0xf]
        %v9171 = vld [vmem:[%s253 + $0x44] sm:$0xf]
        %v9172 = vld [vmem:[%s253 + $0x48] sm:$0xf]
        %v9173 = vld [vmem:[%s253 + $0x4c] sm:$0xf]
        %v9174 = vld [vmem:[%s253 + $0x50] sm:$0xf]
        %v9175 = vld [vmem:[%s253 + $0x54] sm:$0xf]
        %v9176 = vld [vmem:[%s253 + $0x58] sm:$0xf]
        %v9177 = vld [vmem:[%s253 + $0x5c] sm:$0xf]
        %v9178 = vld [vmem:[%s253 + $0x60] sm:$0xf]
        %v9179 = vld [vmem:[%s253 + $0x64] sm:$0xf]
        %v9180 = vld [vmem:[%s253 + $0x68] sm:$0xf]
        %v9181 = vld [vmem:[%s253 + $0x6c] sm:$0xf]
        %v9182 = vld [vmem:[%s253 + $0x70] sm:$0xf]
        %v9183 = vld [vmem:[%s253 + $0x74] sm:$0xf]
        %v9184 = vld [vmem:[%s253 + $0x78] sm:$0xf]
        %v9185 = vld [vmem:[%s253 + $0x7c] sm:$0xf]
        %v9218 = vunpack.c.l.b16 %v9154
        %v9219 = vunpack.c.l.b16 %v9155
        %v9220 = vunpack.c.l.b16 %v9156
        %v9221 = vunpack.c.l.b16 %v9157
        %v9222 = vunpack.c.l.b16 %v9158
        %v9223 = vunpack.c.l.b16 %v9159
        %v9224 = vunpack.c.l.b16 %v9160
        %v9225 = vunpack.c.l.b16 %v9161
        %v9226 = vunpack.c.l.b16 %v9162
        %v9227 = vunpack.c.l.b16 %v9163
        %v9228 = vunpack.c.l.b16 %v9164
        %v9229 = vunpack.c.l.b16 %v9165
        %v9230 = vunpack.c.l.b16 %v9166
        %v9231 = vunpack.c.l.b16 %v9167
        %v9232 = vunpack.c.l.b16 %v9168
        %v9233 = vunpack.c.l.b16 %v9169
        %v9234 = vunpack.c.l.b16 %v9170
        %v9235 = vunpack.c.l.b16 %v9171
        %v9236 = vunpack.c.l.b16 %v9172
        %v9237 = vunpack.c.l.b16 %v9173
        %v9238 = vunpack.c.l.b16 %v9174
        %v9239 = vunpack.c.l.b16 %v9175
        %v9240 = vunpack.c.l.b16 %v9176
        %v9241 = vunpack.c.l.b16 %v9177
        %v9242 = vunpack.c.l.b16 %v9178
        %v9243 = vunpack.c.l.b16 %v9179
        %v9244 = vunpack.c.l.b16 %v9180
        %v9245 = vunpack.c.l.b16 %v9181
        %v9246 = vunpack.c.l.b16 %v9182
        %v9247 = vunpack.c.l.b16 %v9183
        %v9248 = vunpack.c.l.b16 %v9184
        %v9249 = vunpack.c.l.b16 %v9185
        %v9250 = vpack.c.b16 %v9219, %v9218
        %v9251 = vpack.c.b16 %v9221, %v9220
        %v9252 = vpack.c.b16 %v9223, %v9222
        %v9253 = vpack.c.b16 %v9225, %v9224
        %v9254 = vpack.c.b16 %v9227, %v9226
        %v9255 = vpack.c.b16 %v9229, %v9228
        %v9256 = vpack.c.b16 %v9231, %v9230
        %v9257 = vpack.c.b16 %v9233, %v9232
        %v9258 = vpack.c.b16 %v9235, %v9234
        %v9259 = vpack.c.b16 %v9237, %v9236
        %v9260 = vpack.c.b16 %v9239, %v9238
        %v9261 = vpack.c.b16 %v9241, %v9240
        %v9262 = vpack.c.b16 %v9243, %v9242
        %v9263 = vpack.c.b16 %v9245, %v9244
        %v9264 = vpack.c.b16 %v9247, %v9246
        %v9265 = vpack.c.b16 %v9249, %v9248
        %9282 = vmatprep.subr.bf16.mxu0 0
        %9283 = vmatpush1.bf16.msra.mxu0 %v9250
        %9284 = vmatprep.subr.bf16.mxu0 0
        %9285 = vmatpush1.bf16.msra.mxu0 %v9251
        %9286 = vmatprep.subr.bf16.mxu0 0
        %9287 = vmatpush1.bf16.msra.mxu0 %v9252
        %9288 = vmatprep.subr.bf16.mxu0 0
        %9289 = vmatpush1.bf16.msra.mxu0 %v9253
        %9290 = vmatprep.subr.bf16.mxu0 0
        %9291 = vmatpush1.bf16.msra.mxu0 %v9254
        %9292 = vmatprep.subr.bf16.mxu0 0
        %9293 = vmatpush1.bf16.msra.mxu0 %v9255
        %9294 = vmatprep.subr.bf16.mxu0 0
        %9295 = vmatpush1.bf16.msra.mxu0 %v9256
        %9296 = vmatprep.subr.bf16.mxu0 0
        %9297 = vmatpush1.bf16.msra.mxu0 %v9257
        %9298 = vmatprep.subr.bf16.mxu0 0
        %9299 = vmatpush1.bf16.msra.mxu0 %v9258
        %9300 = vmatprep.subr.bf16.mxu0 0
        %9301 = vmatpush1.bf16.msra.mxu0 %v9259
        %9302 = vmatprep.subr.bf16.mxu0 0
        %9303 = vmatpush1.bf16.msra.mxu0 %v9260
        %9304 = vmatprep.subr.bf16.mxu0 0
        %9305 = vmatpush1.bf16.msra.mxu0 %v9261
        %9306 = vmatprep.subr.bf16.mxu0 0
        %9307 = vmatpush1.bf16.msra.mxu0 %v9262
        %9308 = vmatprep.subr.bf16.mxu0 0
        %9309 = vmatpush1.bf16.msra.mxu0 %v9263
        %9310 = vmatprep.subr.bf16.mxu0 0
        %9311 = vmatpush1.bf16.msra.mxu0 %v9264
        %9312 = vmatprep.subr.bf16.mxu0 0
        %9313 = vmatpush1.bf16.msra.mxu0 %v9265
        %9314 = vmatprep.mubr.bf16.mxu0 %v9151
        %9315 = vmatmul.mubr.bf16.gmra.mrb[0].mxu0 %v9150
        %v9316 = vpop.f32.mrb[0].mxu0
        %v9317 = vadd.f32 0.0, %v9316
        %v9318 = vpop.f32.mrb[0].mxu0
        %v9319 = vpop.f32.mrb[0].mxu0
        %v9320 = vadd.f32 0.0, %v9319
        %v9321 = vpop.f32.mrb[0].mxu0
        %9322 = vmatprep.mubr.bf16.mxu0 %v9153
        %9323 = vmatmul.mubr.bf16.gmra.mrb[0].mxu0 %v9152
        %v9324 = vpop.f32.mrb[0].mxu0
        %v9325 = vadd.f32 0.0, %v9324
        %v9326 = vpop.f32.mrb[0].mxu0
        %v9327 = vpop.f32.mrb[0].mxu0
        %v9328 = vadd.f32 0.0, %v9327
        %v9329 = vpop.f32.mrb[0].mxu0
        %9330 = vdwg.mxu0
        %9331 = vst [vmem:[%s259] sm:$0xff] %v9317
        %9332 = vst [vmem:[%s259 + $0x8] sm:$0xff] %v9320
        %9333 = vst [vmem:[%s259 + $0x10] sm:$0xff] %v9325
        %9334 = vst [vmem:[%s259 + $0x18] sm:$0xff] %v9328
        %p9335 = scmp.lt.s32.totalorder %s18, 7
        %s9336 = scalar_select %p9335, %s18, 7
        %s9337 = smul.addr %s9336, 4
        %s9338 = smul.addr %s9337, 8
        %s9339 = scalar_lea.vmem %s4, %s9338
        // Predicated region
        $region41: #{simple_linear_model_forward.1} parent=35 // pred_check
          %p9340 = pneg %p135
        $region42: #{simple_linear_model_forward.1} parent=35 // pred_check_branch
          %9342 = sbr.rel (%p9340) target = $region44
        $region43: #{simple_linear_model_forward.1} parent=35 // pred_region
          _
        $region44: #{simple_linear_model_forward.1} parent=35 // pred_fallthru
          _
      $region36: #{simple_linear_model_forward.1} parent=5 // pred_fallthru
        _
      %p9343 = scmp.le.s32.totalorder 2, %s13
      // Predicated region
      $region45: #{simple_linear_model_forward.1} parent=5 // pred_check
        %p9344 = pneg %p9343
      $region46: #{simple_linear_model_forward.1} parent=5 // pred_check_branch
        %9346 = sbr.rel (%p9344) target = $region48
      $region47: #{simple_linear_model_forward.1} parent=5 // pred_region
        %s9347 = ssub.s32 %s13, 2
        // Predicated region
        $region49: #{simple_linear_model_forward.1} parent=47 // pred_check
          %p9348 = pneg %p141
        $region50: #{simple_linear_model_forward.1} parent=47 // pred_check_branch
          %9350 = sbr.rel (%p9348) target = $region52
        $region51: #{simple_linear_model_forward.1} parent=47 // pred_region
          %p9351 = scmp.lt.s32.totalorder %s19, 7
          %s9352 = scalar_select %p9351, %s19, 7
          %s9353 = smul.addr %s9352, 4
          %s9354 = smul.addr %s9353, 8
          %s9355 = scalar_lea.vmem %s4, %s9354
        $region52: #{simple_linear_model_forward.1} parent=47 // pred_fallthru
          _
      $region48: #{simple_linear_model_forward.1} parent=5 // pred_fallthru
        _
    $region6: #{simple_linear_model_forward.1} parent=1 // loop_footer
      %s17 = sadd.s32 1, %s13
    $region7: #{simple_linear_model_forward.1} parent=1 // loop_footer_branch
      %12 = sbr.rel target = $region3
    $region8: #{simple_linear_model_forward.1} parent=1 // loop_exit
      _
    %9356 = vsyncpa [#allocation3], 1
    %s9357 = scalar_lea.sflag [#allocation3], 1
    %9358 = vsyncpa %s9357, 1

</llo_original>
